<compile_context>
chip_gen: v6e
topology: v6e:2x2x1
jax: 0.10.0
libtpu: 0.0.40
codegen_flags: <defaults>
</compile_context>

<pallas_src>
import functools

import numpy as np
import jax
import jax.numpy as jnp
from jax.experimental import pallas as pl
from jax.experimental.pallas import tpu as pltpu

# Hyperparameters fixed by the PyTorch module.
D_K = D_V = 64
D_MODEL = 512
N_HEADS = 8
D_FF = 2048
N_LAYERS = 1
IN_FEAT = 5          # src_emb = nn.Linear(5, d_model)
LN_EPS = 1e-5
F_PAD = 8            # pad the tiny 5-wide input features up to 8 sublanes


def _layer_norm(x):
    # nn.LayerNorm(d_model) with default init: gamma=1, beta=0, biased variance.
    mean = jnp.mean(x, axis=-1, keepdims=True)
    var = jnp.mean((x - mean) ** 2, axis=-1, keepdims=True)
    return (x - mean) * jax.lax.rsqrt(var + LN_EPS)


# ----------------------------------------------------------------------------
# Fused encoder kernel: embedding + pos-enc + (constant-mask) MHA + FFN.
# Single invocation (no grid): all weights land in VMEM once, single-buffered.
# ----------------------------------------------------------------------------
def _encoder_kernel(x_ref, w_emb_ref, posb_ref, wv_ref, wo_ref, w1_ref, w2_ref,
                    o_ref, *, batch, seq_len):
    # ---- src_emb (Linear 5->512, K padded to 8) + (pos_table + bias), pre-merged.
    h0 = jnp.dot(x_ref[...], w_emb_ref[...],
                 preferred_element_type=jnp.float32) + posb_ref[...]       # (B*L, D)
    # TODO(synk): nn.Dropout(p=0.1) uses eval-mode (identity) semantics here.

    # ---- Multi-head self-attention under the hard-coded all-ones pad mask.
    # get_attn_pad_mask returns all ones -> masked_fill_ sets every score to -1e9
    # -> softmax is exactly uniform (1/L), independent of W_Q/W_K.  So:
    #   context[l] = (1/L) * sum_m V[m]  (same row for every position, per batch),
    # and the head-concat folds into the ordinary (512,512) W_O matmul.
    v = jnp.dot(h0, wv_ref[...], preferred_element_type=jnp.float32)       # (B*L, D)
    ctx = jnp.mean(v.reshape(batch, seq_len, D_MODEL), axis=1)             # (B, D)
    mha = jnp.dot(ctx, wo_ref[...], preferred_element_type=jnp.float32)    # (B, D)
    mha_rows = jnp.broadcast_to(mha[:, None, :], (batch, seq_len, D_MODEL))
    mha_rows = mha_rows.reshape(batch * seq_len, D_MODEL)
    x1 = _layer_norm(mha_rows + h0)                                        # + residual

    # ---- Position-wise FFN + residual + LayerNorm (w1/w2 fully resident in VMEM).
    hid = jnp.maximum(
        jnp.dot(x1, w1_ref[...], preferred_element_type=jnp.float32), 0.0)
    ffn = jnp.dot(hid, w2_ref[...], preferred_element_type=jnp.float32) + x1
    o_ref[...] = _layer_norm(ffn)


def _encoder_forward_impl(x, params):
    B, L, F = x.shape
    assert len(params["layers"]) == N_LAYERS == 1  # reference module has n_layers = 1
    layer = params["layers"][0]

    # One-time, tiny wrapper-side re-layouts (fused under jit):
    x_flat = jnp.pad(x, ((0, 0), (0, 0), (0, F_PAD - F))).reshape(B * L, F_PAD)
    w_emb = jnp.pad(params["w_emb"], ((0, F_PAD - F), (0, 0)))             # (8, 512)
    # Pre-add the embedding bias into the positional rows, tiled per batch element.
    posb = jnp.tile(params["pos_table"][:L] + params["b_emb"][None, :], (B, 1))  # (B*L, 512)

    kernel = functools.partial(_encoder_kernel, batch=B, seq_len=L)

    enc_flat = pl.pallas_call(
        kernel,
        out_shape=jax.ShapeDtypeStruct((B * L, D_MODEL), jnp.float32),
        # No grid: whole arrays are single blocks resident in VMEM (~10.5 MiB of
        # weights, single-buffered, loaded exactly once, no megacore duplication).
        compiler_params=pltpu.CompilerParams(
            vmem_limit_bytes=32 * 1024 * 1024,
        ),
    )(x_flat, w_emb, posb, layer["wv"], layer["wo"], layer["w1"], layer["w2"])

    enc = enc_flat.reshape(B, L, D_MODEL)
    # All-ones pad mask => masked_fill(-1e9) everywhere => exactly uniform attention.
    attn = jnp.full((B, N_HEADS, L, L), 1.0 / L, dtype=jnp.float32)
    return enc, [attn]


encoder_forward = jax.jit(_encoder_forward_impl)


# ----------------------------------------------------------------------------
# Pure-JAX reference following the PyTorch math literally (W_Q/W_K, scores,
# mask fill, softmax, per-head context, concat, W_O).  Used only to verify the
# constant-attention shortcut in __main__.
# ----------------------------------------------------------------------------
def _reference_forward(x, params):
    layer = params["layers"][0]
    B, L, _ = x.shape
    hp = jax.lax.Precision.HIGHEST
    h0 = (jnp.einsum('blf,fd->bld', x, params["w_emb"], precision=hp)
          + params["b_emb"] + params["pos_table"][:L])

    def heads(w, dh):
        return jnp.einsum('bld,dhk->bhlk', h0, w.reshape(D_MODEL, N_HEADS, dh),
                          precision=hp)

    q = heads(layer["wq"], D_K)
    k = heads(layer["wk"], D_K)
    v = heads(layer["wv"], D_V)
    scores = jnp.einsum('bhlk,bhmk->bhlm', q, k, precision=hp) / np.sqrt(D_K)
    mask = jnp.ones_like(scores)                      # get_attn_pad_mask -> all ones
    scores = jnp.where(mask != 0.0, jnp.float32(-1e9), scores)
    attn = jax.nn.softmax(scores, axis=-1)
    ctx = jnp.einsum('bhlm,bhmk->bhlk', attn, v, precision=hp)
    ctx = jnp.transpose(ctx, (0, 2, 1, 3)).reshape(B, L, N_HEADS * D_V)
    out = jnp.einsum('blk,kd->bld', ctx, layer["wo"], precision=hp)
    x1 = _layer_norm(out + h0)
    hid = jnp.maximum(jnp.einsum('bld,df->blf', x1, layer["w1"], precision=hp), 0.0)
    ffn = jnp.einsum('blf,fd->bld', hid, layer["w2"], precision=hp) + x1
    return _layer_norm(ffn), attn


# ----------------------------------------------------------------------------
# Parameter setup (deterministic, synthetic) + positional table (exact formula
# from the PyTorch PositionalEncoding).
# ----------------------------------------------------------------------------
def make_pos_table(max_len, d_model):
    pos_table = np.array(
        [[pos / np.power(10000, 2 * i / d_model) for i in range(d_model)]
         if pos != 0 else np.zeros(d_model) for pos in range(max_len)])
    pos_table[1:, 0::2] = np.sin(pos_table[1:, 0::2])
    pos_table[1:, 1::2] = np.cos(pos_table[1:, 1::2])
    return jnp.asarray(pos_table, dtype=jnp.float32)


def init_params(key, max_len):
    keys = jax.random.split(key, 2 + N_LAYERS * 6)

    def lin(k, fan_in, fan_out):
        # Weights stored as (in_features, out_features) so kernels compute y = x @ W,
        # equivalent to nn.Linear's y = x @ W.T with the transposed weight.
        return (jax.random.normal(k, (fan_in, fan_out), jnp.float32)
                / jnp.sqrt(jnp.float32(fan_in)))

    params = {
        "w_emb": lin(keys[0], IN_FEAT, D_MODEL),
        "b_emb": 0.02 * jax.random.normal(keys[1], (D_MODEL,), jnp.float32),
        "pos_table": make_pos_table(max_len, D_MODEL),
        "layers": [],
    }
    for li in range(N_LAYERS):
        kq, kk, kv, ko, k1, k2 = keys[2 + 6 * li: 2 + 6 * (li + 1)]
        params["layers"].append({
            # wq/wk are part of the module's parameter set but (under the all-ones
            # pad mask) provably cannot influence the output; the kernel omits them.
            "wq": lin(kq, D_MODEL, D_K * N_HEADS),
            "wk": lin(kk, D_MODEL, D_K * N_HEADS),
            "wv": lin(kv, D_MODEL, D_V * N_HEADS),
            "wo": lin(ko, N_HEADS * D_V, D_MODEL),
            "w1": lin(k1, D_MODEL, D_FF),
            "w2": lin(k2, D_FF, D_MODEL),
        })
    return params


if __name__ == "__main__":
    key = jax.random.PRNGKey(0)
    k_in, k_par = jax.random.split(key)
    B, L = 2, 8
    x = jax.random.normal(k_in, (B, L, IN_FEAT), dtype=jnp.float32)
    params = init_params(k_par, max_len=L)

    enc_out, attns = encoder_forward(x, params)
    enc_out = jax.block_until_ready(enc_out)
    attns = [jax.block_until_ready(a) for a in attns]

    assert enc_out.shape == (B, L, D_MODEL)
    assert len(attns) == N_LAYERS and attns[0].shape == (B, N_HEADS, L, L)
    assert bool(jnp.all(jnp.isfinite(enc_out)))
    # All-ones pad mask => masked_fill(-1e9) everywhere => exactly uniform attention.
    assert bool(jnp.allclose(attns[0], 1.0 / L, atol=1e-6))

    # Check the fused kernel against the literal (unoptimized) reference math.
    ref_out, ref_attn = _reference_forward(x, params)
    assert bool(jnp.allclose(attns[0], ref_attn, atol=1e-6))
    assert bool(jnp.allclose(enc_out, ref_out, rtol=2e-3, atol=2e-3))

    print("KERNEL_OK")
</pallas_src>

<mosaic_0001>
module attributes {stable_mosaic.version = 11 : i64} {
  func.func @_encoder_kernel(%arg0: memref<16x8xf32, #tpu.memory_space<vmem>>, %arg1: memref<8x512xf32, #tpu.memory_space<vmem>>, %arg2: memref<16x512xf32, #tpu.memory_space<vmem>>, %arg3: memref<512x512xf32, #tpu.memory_space<vmem>>, %arg4: memref<512x512xf32, #tpu.memory_space<vmem>>, %arg5: memref<512x2048xf32, #tpu.memory_space<vmem>>, %arg6: memref<2048x512xf32, #tpu.memory_space<vmem>>, %arg7: memref<16x512xf32, #tpu.memory_space<vmem>>) attributes {dimension_semantics = [], scalar_prefetch = 0 : i64, scratch_operands = 0 : i64, tpu.core_type = #tpu.core_type<tc>} {
    %c0 = arith.constant 0 : index
    %c0_0 = arith.constant 0 : index
    %0 = vector.load %arg0[%c0, %c0_0] : memref<16x8xf32, #tpu.memory_space<vmem>>, vector<16x8xf32>
    %c0_1 = arith.constant 0 : index
    %c0_2 = arith.constant 0 : index
    %1 = vector.load %arg1[%c0_1, %c0_2] : memref<8x512xf32, #tpu.memory_space<vmem>>, vector<8x512xf32>
    %cst = arith.constant dense<0.000000e+00> : vector<16x512xf32>
    %2 = tpu.matmul %0, %1, %cst {dimension_numbers = #tpu.dot_dimension_numbers<[1], [0], [0], [1], [0, 0, 1, 1], [], []>} : vector<16x8xf32>, vector<8x512xf32>, vector<16x512xf32> -> vector<16x512xf32>
    %c0_3 = arith.constant 0 : index
    %c0_4 = arith.constant 0 : index
    %3 = vector.load %arg2[%c0_3, %c0_4] : memref<16x512xf32, #tpu.memory_space<vmem>>, vector<16x512xf32>
    %4 = arith.addf %2, %3 : vector<16x512xf32>
    %c0_5 = arith.constant 0 : index
    %c0_6 = arith.constant 0 : index
    %5 = vector.load %arg3[%c0_5, %c0_6] : memref<512x512xf32, #tpu.memory_space<vmem>>, vector<512x512xf32>
    %cst_7 = arith.constant dense<0.000000e+00> : vector<16x512xf32>
    %6 = tpu.matmul %4, %5, %cst_7 {dimension_numbers = #tpu.dot_dimension_numbers<[1], [0], [0], [1], [0, 0, 1, 1], [], []>} : vector<16x512xf32>, vector<512x512xf32>, vector<16x512xf32> -> vector<16x512xf32>
    %7 = vector.shape_cast %6 : vector<16x512xf32> to vector<2x8x512xf32>
    %cst_8 = arith.constant dense<0.000000e+00> : vector<2x512xf32>
    %8 = vector.multi_reduction <add>, %7, %cst_8 [1] : vector<2x8x512xf32> to vector<2x512xf32>
    %cst_9 = arith.constant 8.000000e+00 : f32
    %9 = vector.broadcast %cst_9 : f32 to vector<2x512xf32>
    %10 = arith.divf %8, %9 : vector<2x512xf32>
    %c0_10 = arith.constant 0 : index
    %c0_11 = arith.constant 0 : index
    %11 = vector.load %arg4[%c0_10, %c0_11] : memref<512x512xf32, #tpu.memory_space<vmem>>, vector<512x512xf32>
    %cst_12 = arith.constant dense<0.000000e+00> : vector<2x512xf32>
    %12 = tpu.matmul %10, %11, %cst_12 {dimension_numbers = #tpu.dot_dimension_numbers<[1], [0], [0], [1], [0, 0, 1, 1], [], []>} : vector<2x512xf32>, vector<512x512xf32>, vector<2x512xf32> -> vector<2x512xf32>
    %13 = vector.shape_cast %12 : vector<2x512xf32> to vector<2x1x512xf32>
    %14 = vector.shape_cast %13 : vector<2x1x512xf32> to vector<2x1x512xf32>
    %15 = vector.broadcast %14 : vector<2x1x512xf32> to vector<2x8x512xf32>
    %16 = vector.shape_cast %15 : vector<2x8x512xf32> to vector<16x512xf32>
    %17 = arith.addf %16, %4 : vector<16x512xf32>
    %cst_13 = arith.constant dense<0.000000e+00> : vector<16xf32>
    %18 = vector.multi_reduction <add>, %17, %cst_13 [1] : vector<16x512xf32> to vector<16xf32>
    %19 = vector.shape_cast %18 : vector<16xf32> to vector<16x1xf32>
    %cst_14 = arith.constant 5.120000e+02 : f32
    %20 = vector.broadcast %cst_14 : f32 to vector<16x1xf32>
    %21 = arith.divf %19, %20 : vector<16x1xf32>
    %22 = vector.broadcast %21 : vector<16x1xf32> to vector<16x512xf32>
    %23 = arith.subf %17, %22 : vector<16x512xf32>
    %24 = arith.mulf %23, %23 : vector<16x512xf32>
    %cst_15 = arith.constant dense<0.000000e+00> : vector<16xf32>
    %25 = vector.multi_reduction <add>, %24, %cst_15 [1] : vector<16x512xf32> to vector<16xf32>
    %26 = vector.shape_cast %25 : vector<16xf32> to vector<16x1xf32>
    %cst_16 = arith.constant 5.120000e+02 : f32
    %27 = vector.broadcast %cst_16 : f32 to vector<16x1xf32>
    %28 = arith.divf %26, %27 : vector<16x1xf32>
    %29 = vector.broadcast %21 : vector<16x1xf32> to vector<16x512xf32>
    %30 = arith.subf %17, %29 : vector<16x512xf32>
    %cst_17 = arith.constant 9.99999974E-6 : f32
    %31 = vector.broadcast %cst_17 : f32 to vector<16x1xf32>
    %32 = arith.addf %28, %31 : vector<16x1xf32>
    %33 = math.rsqrt %32 : vector<16x1xf32>
    %34 = vector.broadcast %33 : vector<16x1xf32> to vector<16x512xf32>
    %35 = arith.mulf %30, %34 : vector<16x512xf32>
    %c0_18 = arith.constant 0 : index
    %c0_19 = arith.constant 0 : index
    %36 = vector.load %arg5[%c0_18, %c0_19] : memref<512x2048xf32, #tpu.memory_space<vmem>>, vector<512x2048xf32>
    %cst_20 = arith.constant dense<0.000000e+00> : vector<16x2048xf32>
    %37 = tpu.matmul %35, %36, %cst_20 {dimension_numbers = #tpu.dot_dimension_numbers<[1], [0], [0], [1], [0, 0, 1, 1], [], []>} : vector<16x512xf32>, vector<512x2048xf32>, vector<16x2048xf32> -> vector<16x2048xf32>
    %cst_21 = arith.constant 0.000000e+00 : f32
    %38 = vector.broadcast %cst_21 : f32 to vector<16x2048xf32>
    %39 = arith.maximumf %37, %38 : vector<16x2048xf32>
    %c0_22 = arith.constant 0 : index
    %c0_23 = arith.constant 0 : index
    %40 = vector.load %arg6[%c0_22, %c0_23] : memref<2048x512xf32, #tpu.memory_space<vmem>>, vector<2048x512xf32>
    %cst_24 = arith.constant dense<0.000000e+00> : vector<16x512xf32>
    %41 = tpu.matmul %39, %40, %cst_24 {dimension_numbers = #tpu.dot_dimension_numbers<[1], [0], [0], [1], [0, 0, 1, 1], [], []>} : vector<16x2048xf32>, vector<2048x512xf32>, vector<16x512xf32> -> vector<16x512xf32>
    %42 = arith.addf %41, %35 : vector<16x512xf32>
    %cst_25 = arith.constant dense<0.000000e+00> : vector<16xf32>
    %43 = vector.multi_reduction <add>, %42, %cst_25 [1] : vector<16x512xf32> to vector<16xf32>
    %44 = vector.shape_cast %43 : vector<16xf32> to vector<16x1xf32>
    %cst_26 = arith.constant 5.120000e+02 : f32
    %45 = vector.broadcast %cst_26 : f32 to vector<16x1xf32>
    %46 = arith.divf %44, %45 : vector<16x1xf32>
    %47 = vector.broadcast %46 : vector<16x1xf32> to vector<16x512xf32>
    %48 = arith.subf %42, %47 : vector<16x512xf32>
    %49 = arith.mulf %48, %48 : vector<16x512xf32>
    %cst_27 = arith.constant dense<0.000000e+00> : vector<16xf32>
    %50 = vector.multi_reduction <add>, %49, %cst_27 [1] : vector<16x512xf32> to vector<16xf32>
    %51 = vector.shape_cast %50 : vector<16xf32> to vector<16x1xf32>
    %cst_28 = arith.constant 5.120000e+02 : f32
    %52 = vector.broadcast %cst_28 : f32 to vector<16x1xf32>
    %53 = arith.divf %51, %52 : vector<16x1xf32>
    %54 = vector.broadcast %46 : vector<16x1xf32> to vector<16x512xf32>
    %55 = arith.subf %42, %54 : vector<16x512xf32>
    %cst_29 = arith.constant 9.99999974E-6 : f32
    %56 = vector.broadcast %cst_29 : f32 to vector<16x1xf32>
    %57 = arith.addf %53, %56 : vector<16x1xf32>
    %58 = math.rsqrt %57 : vector<16x1xf32>
    %59 = vector.broadcast %58 : vector<16x1xf32> to vector<16x512xf32>
    %60 = arith.mulf %55, %59 : vector<16x512xf32>
    %c0_30 = arith.constant 0 : index
    %c0_31 = arith.constant 0 : index
    %61 = vector.load %arg7[%c0_30, %c0_31] : memref<16x512xf32, #tpu.memory_space<vmem>>, vector<16x512xf32>
    tpu.vector_store %arg7[%c0_30, %c0_31], %60 {strides = array<i32>} : memref<16x512xf32, #tpu.memory_space<vmem>>, vector<16x512xf32>,
    return
  }
}

</mosaic_0001>

<llo_original>
// kernel: _encoder_forward_impl.1
$region0: #{_encoder_forward_impl.1}
  #allocation0 [shape = 'u32[]', space=smem, size = 0x4, offset = 0x4, fixed_abs, tag = 'smem constant byte address 0x4 - core index']
  #allocation1 [shape = 'u32[144,128]{1,0:T(1,128)}', space=vmem, size = 0x12000, scoped, tag = 'internal scratch']
  %s0 = inlined_call_operand.vmem [shape: f32[16,8], index: 0, kind: input, shape index: {}]
  %s1 = inlined_call_operand.vmem [shape: f32[8,512], index: 1, kind: input, shape index: {}]
  %s2 = inlined_call_operand.vmem [shape: f32[16,512], index: 2, kind: input, shape index: {}]
  %s3 = inlined_call_operand.hbm [shape: f32[512,512], index: 3, kind: input, shape index: {}]
  %s4 = inlined_call_operand.hbm [shape: f32[512,512], index: 4, kind: input, shape index: {}]
  %s5 = inlined_call_operand.hbm [shape: f32[512,2048], index: 5, kind: input, shape index: {}]
  %s6 = inlined_call_operand.hbm [shape: f32[2048,512], index: 6, kind: input, shape index: {}]
  %s7 = inlined_call_operand.hbm [shape: f32[16,512], index: 7, kind: output, shape index: {}]
  %s8 = sld [smem:[#allocation0]]
  $region54: #{_encoder_forward_impl.1} parent=0
    _
  %s10 = ssub.s32 1, %s8
  %s11 = scalar_select 0, %s10, %s8
  $region1: #{_encoder_forward_impl.1} parent=0
    #allocation2 [shape = 'u8[1048576]{0}', space=vmem, size = 0x100000, scoped, tag = 'input window, operand 3, single buffered']
    #allocation3 [shape = 's32[1]{0}', space=sflag, size = 0x4, scoped, tag = 'scoped memory for _encoder_forward_impl.1']
    #allocation4 [shape = 's32[1]{0}', space=sflag, size = 0x4, scoped, tag = 'scoped memory for _encoder_forward_impl.1']
    #allocation5 [shape = 'u8[1048576]{0}', space=vmem, size = 0x100000, scoped, tag = 'input window, operand 4, single buffered']
    #allocation6 [shape = 's32[1]{0}', space=sflag, size = 0x4, scoped, tag = 'scoped memory for _encoder_forward_impl.1']
    #allocation7 [shape = 'u8[4194304]{0}', space=vmem, size = 0x400000, scoped, tag = 'input window, operand 5, single buffered']
    #allocation8 [shape = 'u8[4194304]{0}', space=vmem, size = 0x400000, scoped, tag = 'input window, operand 6, single buffered']
    #allocation9 [shape = 's32[1]{0}', space=sflag, size = 0x4, scoped, tag = 'scoped memory for _encoder_forward_impl.1']
    #allocation10 [shape = 'u8[32768]{0}', space=vmem, size = 0x8000, scoped, tag = 'output window, operand 0, single buffered']
    %12 = vsyncpa [#allocation3], 0
    %13 = vsyncpa [#allocation6], 0
    %14 = vsyncpa [#allocation9], 0
    %15 = vsyncpa [#allocation4], 0
    // Predicated region
    $region2: #{_encoder_forward_impl.1} parent=1 // pred_check
      _
    $region3: #{_encoder_forward_impl.1} parent=1 // pred_check_branch
      %17 = sbr.rel (0) target = $region5
    $region4: #{_encoder_forward_impl.1} parent=1 // pred_region
      _
    $region5: #{_encoder_forward_impl.1} parent=1 // pred_fallthru
      _
    // Predicated region
    $region6: #{_encoder_forward_impl.1} parent=1 // pred_check
      _
    $region7: #{_encoder_forward_impl.1} parent=1 // pred_check_branch
      %19 = sbr.rel (0) target = $region9
    $region8: #{_encoder_forward_impl.1} parent=1 // pred_region
      _
    $region9: #{_encoder_forward_impl.1} parent=1 // pred_fallthru
      _
    // Predicated region
    $region10: #{_encoder_forward_impl.1} parent=1 // pred_check
      _
    $region11: #{_encoder_forward_impl.1} parent=1 // pred_check_branch
      %21 = sbr.rel (0) target = $region13
    $region12: #{_encoder_forward_impl.1} parent=1 // pred_region
      _
    $region13: #{_encoder_forward_impl.1} parent=1 // pred_fallthru
      _
    // Predicated region
    $region14: #{_encoder_forward_impl.1} parent=1 // pred_check
      _
    $region15: #{_encoder_forward_impl.1} parent=1 // pred_check_branch
      %23 = sbr.rel (0) target = $region17
    $region16: #{_encoder_forward_impl.1} parent=1 // pred_region
      %s25 = ssub.s32 32768, 32768
      %26 = vsyncadd [#allocation3], %s25
      %s27 = sshll.u32 [#allocation2], 4
      %s28 = int_to_ptr.vmem [resolvable:$true] %s27
      %33 = dma.hbm_to_vmem [thread:$0]  %s3, 32768, %s28, [#allocation3], 512, 512, 32
    $region17: #{_encoder_forward_impl.1} parent=1 // pred_fallthru
      _
    // Predicated region
    $region18: #{_encoder_forward_impl.1} parent=1 // pred_check
      _
    $region19: #{_encoder_forward_impl.1} parent=1 // pred_check_branch
      %35 = sbr.rel (0) target = $region21
    $region20: #{_encoder_forward_impl.1} parent=1 // pred_region
      %s37 = ssub.s32 32768, 32768
      %38 = vsyncadd [#allocation6], %s37
      %s39 = sshll.u32 [#allocation5], 4
      %s40 = int_to_ptr.vmem [resolvable:$true] %s39
      %45 = dma.hbm_to_vmem [thread:$0]  %s4, 32768, %s40, [#allocation6], 512, 512, 32
    $region21: #{_encoder_forward_impl.1} parent=1 // pred_fallthru
      _
    // Predicated region
    $region22: #{_encoder_forward_impl.1} parent=1 // pred_check
      _
    $region23: #{_encoder_forward_impl.1} parent=1 // pred_check_branch
      %47 = sbr.rel (0) target = $region25
    $region24: #{_encoder_forward_impl.1} parent=1 // pred_region
      %s49 = ssub.s32 131072, 131072
      %50 = vsyncadd [#allocation6], %s49
      %s51 = sshll.u32 [#allocation7], 4
      %s52 = int_to_ptr.vmem [resolvable:$true] %s51
      %57 = dma.hbm_to_vmem [thread:$0]  %s5, 131072, %s52, [#allocation6], 2048, 2048, 128
    $region25: #{_encoder_forward_impl.1} parent=1 // pred_fallthru
      _
    // Predicated region
    $region26: #{_encoder_forward_impl.1} parent=1 // pred_check
      _
    $region27: #{_encoder_forward_impl.1} parent=1 // pred_check_branch
      %59 = sbr.rel (0) target = $region29
    $region28: #{_encoder_forward_impl.1} parent=1 // pred_region
      %s61 = ssub.s32 131072, 131072
      %62 = vsyncadd [#allocation9], %s61
      %s63 = sshll.u32 [#allocation8], 4
      %s64 = int_to_ptr.vmem [resolvable:$true] %s63
      %69 = dma.hbm_to_vmem [thread:$0]  %s6, 131072, %s64, [#allocation9], 512, 512, 32
    $region29: #{_encoder_forward_impl.1} parent=1 // pred_fallthru
      _
    // Predicated region
    $region30: #{_encoder_forward_impl.1} parent=1 // pred_check
      _
    $region31: #{_encoder_forward_impl.1} parent=1 // pred_check_branch
      %71 = sbr.rel (0) target = $region33
    $region32: #{_encoder_forward_impl.1} parent=1 // pred_region
      %72 = dma.done [#allocation3], 32768
    $region33: #{_encoder_forward_impl.1} parent=1 // pred_fallthru
      _
    // Predicated region
    $region34: #{_encoder_forward_impl.1} parent=1 // pred_check
      _
    $region35: #{_encoder_forward_impl.1} parent=1 // pred_check_branch
      %74 = sbr.rel (0) target = $region37
    $region36: #{_encoder_forward_impl.1} parent=1 // pred_region
      %75 = dma.done [#allocation6], 32768
    $region37: #{_encoder_forward_impl.1} parent=1 // pred_fallthru
      _
    // Predicated region
    $region38: #{_encoder_forward_impl.1} parent=1 // pred_check
      _
    $region39: #{_encoder_forward_impl.1} parent=1 // pred_check_branch
      %77 = sbr.rel (0) target = $region41
    $region40: #{_encoder_forward_impl.1} parent=1 // pred_region
      %78 = dma.done [#allocation6], 131072
    $region41: #{_encoder_forward_impl.1} parent=1 // pred_fallthru
      _
    // Predicated region
    $region42: #{_encoder_forward_impl.1} parent=1 // pred_check
      _
    $region43: #{_encoder_forward_impl.1} parent=1 // pred_check_branch
      %80 = sbr.rel (0) target = $region45
    $region44: #{_encoder_forward_impl.1} parent=1 // pred_region
      %81 = dma.done [#allocation9], 131072
    $region45: #{_encoder_forward_impl.1} parent=1 // pred_fallthru
      _
    %v82 = vld [vmem:[%s0] sm:$0xff]
    %v83 = vld [vmem:[%s0 + $0x8] sm:$0xff]
    %v84 = vld [vmem:[%s1] sm:$0xff]
    %v85 = vld [vmem:[%s1 + $0x8] sm:$0xff]
    %v86 = vld [vmem:[%s1 + $0x10] sm:$0xff]
    %v87 = vld [vmem:[%s1 + $0x18] sm:$0xff]
    %v88 = vld [vmem:[%s2] sm:$0xff]
    %v89 = vld [vmem:[%s2 + $0x8] sm:$0xff]
    %v90 = vld [vmem:[%s2 + $0x10] sm:$0xff]
    %v91 = vld [vmem:[%s2 + $0x18] sm:$0xff]
    %v92 = vld [vmem:[%s2 + $0x20] sm:$0xff]
    %v93 = vld [vmem:[%s2 + $0x28] sm:$0xff]
    %v94 = vld [vmem:[%s2 + $0x30] sm:$0xff]
    %v95 = vld [vmem:[%s2 + $0x38] sm:$0xff]
    %vm96 = vcmask 64512
    %v98 = vsel %vm96, %v82, 0
    %v101 = vsel %vm96, %v83, 0
    %103 = vmatprep.subr.mxu0 0.0
    %104 = vmatpush1.msra.mxu0 0.0
    %105 = vmatprep.subr.mxu0 0.0
    %106 = vmatpush1.msra.mxu0 0.0
    %107 = vmatprep.subr.mxu0 0.0
    %108 = vmatpush1.msra.mxu0 0.0
    %109 = vmatprep.subr.mxu0 0.0
    %110 = vmatpush1.msra.mxu0 0.0
    %111 = vmatprep.subr.mxu0 0.0
    %112 = vmatpush1.msra.mxu0 0.0
    %113 = vmatprep.subr.mxu0 0.0
    %114 = vmatpush1.msra.mxu0 0.0
    %115 = vmatprep.subr.mxu0 0.0
    %116 = vmatpush1.msra.mxu0 0.0
    %117 = vmatprep.subr.mxu0 0.0
    %118 = vmatpush1.msra.mxu0 0.0
    %119 = vmatprep.subr.mxu0 0.0
    %120 = vmatpush1.msra.mxu0 0.0
    %121 = vmatprep.subr.mxu0 0.0
    %122 = vmatpush1.msra.mxu0 0.0
    %123 = vmatprep.subr.mxu0 0.0
    %124 = vmatpush1.msra.mxu0 0.0
    %125 = vmatprep.subr.mxu0 0.0
    %126 = vmatpush1.msra.mxu0 0.0
    %127 = vmatprep.subr.mxu0 0.0
    %128 = vmatpush1.msra.mxu0 0.0
    %129 = vmatprep.subr.mxu0 0.0
    %130 = vmatpush1.msra.mxu0 0.0
    %131 = vmatprep.subr.mxu0 0.0
    %132 = vmatpush1.msra.mxu0 0.0
    %133 = vmatprep.subr.mxu0 %v85
    %134 = vmatpush1.msra.mxu0 %v84
    %135 = vmatprep.subr.mxu0 0.0
    %136 = vmatpush2.msra.mxu0 0.0
    %137 = vmatprep.subr.mxu0 0.0
    %138 = vmatpush2.msra.mxu0 0.0
    %139 = vmatprep.subr.mxu0 0.0
    %140 = vmatpush2.msra.mxu0 0.0
    %141 = vmatprep.subr.mxu0 0.0
    %142 = vmatpush2.msra.mxu0 0.0
    %143 = vmatprep.subr.mxu0 0.0
    %144 = vmatpush2.msra.mxu0 0.0
    %145 = vmatprep.subr.mxu0 0.0
    %146 = vmatpush2.msra.mxu0 0.0
    %147 = vmatprep.subr.mxu0 0.0
    %148 = vmatpush2.msra.mxu0 0.0
    %149 = vmatprep.subr.mxu0 0.0
    %150 = vmatpush2.msra.mxu0 0.0
    %151 = vmatprep.subr.mxu0 0.0
    %152 = vmatpush2.msra.mxu0 0.0
    %153 = vmatprep.subr.mxu0 0.0
    %154 = vmatpush2.msra.mxu0 0.0
    %155 = vmatprep.subr.mxu0 0.0
    %156 = vmatpush2.msra.mxu0 0.0
    %157 = vmatprep.subr.mxu0 0.0
    %158 = vmatpush2.msra.mxu0 0.0
    %159 = vmatprep.subr.mxu0 0.0
    %160 = vmatpush2.msra.mxu0 0.0
    %161 = vmatprep.subr.mxu0 0.0
    %162 = vmatpush2.msra.mxu0 0.0
    %163 = vmatprep.subr.mxu0 0.0
    %164 = vmatpush2.msra.mxu0 0.0
    %165 = vmatprep.subr.mxu0 0.0
    %166 = vmatpush2.msra.mxu0 0.0
    %167 = vmatprep.mubr.f32.mxu0 0.0
    %168 = vmatmul.mubr.f32.gmra.mxu0 %v98
    %v169 = vpop.f32.mrf.mxu0
    %v170 = vadd.f32 %v88, %v169
    %v171 = vpop.f32.mrf.mxu0
    %v172 = vadd.f32 %v89, %v171
    %173 = vmatprep.mubr.f32.mxu0 0.0
    %174 = vmatmul.mubr.f32.gmra.mxu0 %v101
    %v175 = vpop.f32.mrf.mxu0
    %v176 = vadd.f32 %v92, %v175
    %v177 = vpop.f32.mrf.mxu0
    %v178 = vadd.f32 %v93, %v177
    %179 = vdwg.mxu0
    %180 = vmatprep.subr.mxu0 0.0
    %181 = vmatpush1.msra.mxu0 0.0
    %182 = vmatprep.subr.mxu0 0.0
    %183 = vmatpush1.msra.mxu0 0.0
    %184 = vmatprep.subr.mxu0 0.0
    %185 = vmatpush1.msra.mxu0 0.0
    %186 = vmatprep.subr.mxu0 0.0
    %187 = vmatpush1.msra.mxu0 0.0
    %188 = vmatprep.subr.mxu0 0.0
    %189 = vmatpush1.msra.mxu0 0.0
    %190 = vmatprep.subr.mxu0 0.0
    %191 = vmatpush1.msra.mxu0 0.0
    %192 = vmatprep.subr.mxu0 0.0
    %193 = vmatpush1.msra.mxu0 0.0
    %194 = vmatprep.subr.mxu0 0.0
    %195 = vmatpush1.msra.mxu0 0.0
    %196 = vmatprep.subr.mxu0 0.0
    %197 = vmatpush1.msra.mxu0 0.0
    %198 = vmatprep.subr.mxu0 0.0
    %199 = vmatpush1.msra.mxu0 0.0
    %200 = vmatprep.subr.mxu0 0.0
    %201 = vmatpush1.msra.mxu0 0.0
    %202 = vmatprep.subr.mxu0 0.0
    %203 = vmatpush1.msra.mxu0 0.0
    %204 = vmatprep.subr.mxu0 0.0
    %205 = vmatpush1.msra.mxu0 0.0
    %206 = vmatprep.subr.mxu0 0.0
    %207 = vmatpush1.msra.mxu0 0.0
    %208 = vmatprep.subr.mxu0 0.0
    %209 = vmatpush1.msra.mxu0 0.0
    %210 = vmatprep.subr.mxu0 %v87
    %211 = vmatpush1.msra.mxu0 %v86
    %212 = vmatprep.subr.mxu0 0.0
    %213 = vmatpush2.msra.mxu0 0.0
    %214 = vmatprep.subr.mxu0 0.0
    %215 = vmatpush2.msra.mxu0 0.0
    %216 = vmatprep.subr.mxu0 0.0
    %217 = vmatpush2.msra.mxu0 0.0
    %218 = vmatprep.subr.mxu0 0.0
    %219 = vmatpush2.msra.mxu0 0.0
    %220 = vmatprep.subr.mxu0 0.0
    %221 = vmatpush2.msra.mxu0 0.0
    %222 = vmatprep.subr.mxu0 0.0
    %223 = vmatpush2.msra.mxu0 0.0
    %224 = vmatprep.subr.mxu0 0.0
    %225 = vmatpush2.msra.mxu0 0.0
    %226 = vmatprep.subr.mxu0 0.0
    %227 = vmatpush2.msra.mxu0 0.0
    %228 = vmatprep.subr.mxu0 0.0
    %229 = vmatpush2.msra.mxu0 0.0
    %230 = vmatprep.subr.mxu0 0.0
    %231 = vmatpush2.msra.mxu0 0.0
    %232 = vmatprep.subr.mxu0 0.0
    %233 = vmatpush2.msra.mxu0 0.0
    %234 = vmatprep.subr.mxu0 0.0
    %235 = vmatpush2.msra.mxu0 0.0
    %236 = vmatprep.subr.mxu0 0.0
    %237 = vmatpush2.msra.mxu0 0.0
    %238 = vmatprep.subr.mxu0 0.0
    %239 = vmatpush2.msra.mxu0 0.0
    %240 = vmatprep.subr.mxu0 0.0
    %241 = vmatpush2.msra.mxu0 0.0
    %242 = vmatprep.subr.mxu0 0.0
    %243 = vmatpush2.msra.mxu0 0.0
    %244 = vmatprep.mubr.f32.mxu0 0.0
    %245 = vmatmul.mubr.f32.gmra.mxu0 %v98
    %v246 = vpop.f32.mrf.mxu0
    %v247 = vadd.f32 %v90, %v246
    %v248 = vpop.f32.mrf.mxu0
    %v249 = vadd.f32 %v91, %v248
    %250 = vmatprep.mubr.f32.mxu0 0.0
    %251 = vmatmul.mubr.f32.gmra.mxu0 %v101
    %v252 = vpop.f32.mrf.mxu0
    %v253 = vadd.f32 %v94, %v252
    %v254 = vpop.f32.mrf.mxu0
    %v255 = vadd.f32 %v95, %v254
    %256 = vdwg.mxu0
    %v257 = vld [vmem:[#allocation2] sm:$0xff]
    %v258 = vld [vmem:[#allocation2 + $0x8] sm:$0xff]
    %v259 = vld [vmem:[#allocation2 + $0x10] sm:$0xff]
    %v260 = vld [vmem:[#allocation2 + $0x18] sm:$0xff]
    %v261 = vld [vmem:[#allocation2 + $0x20] sm:$0xff]
    %v262 = vld [vmem:[#allocation2 + $0x28] sm:$0xff]
    %v263 = vld [vmem:[#allocation2 + $0x30] sm:$0xff]
    %v264 = vld [vmem:[#allocation2 + $0x38] sm:$0xff]
    %v265 = vld [vmem:[#allocation2 + $0x40] sm:$0xff]
    %v266 = vld [vmem:[#allocation2 + $0x48] sm:$0xff]
    %v267 = vld [vmem:[#allocation2 + $0x50] sm:$0xff]
    %v268 = vld [vmem:[#allocation2 + $0x58] sm:$0xff]
    %v269 = vld [vmem:[#allocation2 + $0x60] sm:$0xff]
    %v270 = vld [vmem:[#allocation2 + $0x68] sm:$0xff]
    %v271 = vld [vmem:[#allocation2 + $0x70] sm:$0xff]
    %v272 = vld [vmem:[#allocation2 + $0x78] sm:$0xff]
    %v273 = vld [vmem:[#allocation2 + $0x80] sm:$0xff]
    %v274 = vld [vmem:[#allocation2 + $0x88] sm:$0xff]
    %v275 = vld [vmem:[#allocation2 + $0x90] sm:$0xff]
    %v276 = vld [vmem:[#allocation2 + $0x98] sm:$0xff]
    %v277 = vld [vmem:[#allocation2 + $0xa0] sm:$0xff]
    %v278 = vld [vmem:[#allocation2 + $0xa8] sm:$0xff]
    %v279 = vld [vmem:[#allocation2 + $0xb0] sm:$0xff]
    %v280 = vld [vmem:[#allocation2 + $0xb8] sm:$0xff]
    %v281 = vld [vmem:[#allocation2 + $0xc0] sm:$0xff]
    %v282 = vld [vmem:[#allocation2 + $0xc8] sm:$0xff]
    %v283 = vld [vmem:[#allocation2 + $0xd0] sm:$0xff]
    %v284 = vld [vmem:[#allocation2 + $0xd8] sm:$0xff]
    %v285 = vld [vmem:[#allocation2 + $0xe0] sm:$0xff]
    %v286 = vld [vmem:[#allocation2 + $0xe8] sm:$0xff]
    %v287 = vld [vmem:[#allocation2 + $0xf0] sm:$0xff]
    %v288 = vld [vmem:[#allocation2 + $0xf8] sm:$0xff]
    %v289 = vld [vmem:[#allocation2 + $0x100] sm:$0xff]
    %v290 = vld [vmem:[#allocation2 + $0x108] sm:$0xff]
    %v291 = vld [vmem:[#allocation2 + $0x110] sm:$0xff]
    %v292 = vld [vmem:[#allocation2 + $0x118] sm:$0xff]
    %v293 = vld [vmem:[#allocation2 + $0x120] sm:$0xff]
    %v294 = vld [vmem:[#allocation2 + $0x128] sm:$0xff]
    %v295 = vld [vmem:[#allocation2 + $0x130] sm:$0xff]
    %v296 = vld [vmem:[#allocation2 + $0x138] sm:$0xff]
    %v297 = vld [vmem:[#allocation2 + $0x140] sm:$0xff]
    %v298 = vld [vmem:[#allocation2 + $0x148] sm:$0xff]
    %v299 = vld [vmem:[#allocation2 + $0x150] sm:$0xff]
    %v300 = vld [vmem:[#allocation2 + $0x158] sm:$0xff]
    %v301 = vld [vmem:[#allocation2 + $0x160] sm:$0xff]
    %v302 = vld [vmem:[#allocation2 + $0x168] sm:$0xff]
    %v303 = vld [vmem:[#allocation2 + $0x170] sm:$0xff]
    %v304 = vld [vmem:[#allocation2 + $0x178] sm:$0xff]
    %v305 = vld [vmem:[#allocation2 + $0x180] sm:$0xff]
    %v306 = vld [vmem:[#allocation2 + $0x188] sm:$0xff]
    %v307 = vld [vmem:[#allocation2 + $0x190] sm:$0xff]
    %v308 = vld [vmem:[#allocation2 + $0x198] sm:$0xff]
    %v309 = vld [vmem:[#allocation2 + $0x1a0] sm:$0xff]
    %v310 = vld [vmem:[#allocation2 + $0x1a8] sm:$0xff]
    %v311 = vld [vmem:[#allocation2 + $0x1b0] sm:$0xff]
    %v312 = vld [vmem:[#allocation2 + $0x1b8] sm:$0xff]
    %v313 = vld [vmem:[#allocation2 + $0x1c0] sm:$0xff]
    %v314 = vld [vmem:[#allocation2 + $0x1c8] sm:$0xff]
    %v315 = vld [vmem:[#allocation2 + $0x1d0] sm:$0xff]
    %v316 = vld [vmem:[#allocation2 + $0x1d8] sm:$0xff]
    %v317 = vld [vmem:[#allocation2 + $0x1e0] sm:$0xff]
    %v318 = vld [vmem:[#allocation2 + $0x1e8] sm:$0xff]
    %v319 = vld [vmem:[#allocation2 + $0x1f0] sm:$0xff]
    %v320 = vld [vmem:[#allocation2 + $0x1f8] sm:$0xff]
    %v321 = vld [vmem:[#allocation2 + $0x200] sm:$0xff]
    %v322 = vld [vmem:[#allocation2 + $0x208] sm:$0xff]
    %v323 = vld [vmem:[#allocation2 + $0x210] sm:$0xff]
    %v324 = vld [vmem:[#allocation2 + $0x218] sm:$0xff]
    %v325 = vld [vmem:[#allocation2 + $0x220] sm:$0xff]
    %v326 = vld [vmem:[#allocation2 + $0x228] sm:$0xff]
    %v327 = vld [vmem:[#allocation2 + $0x230] sm:$0xff]
    %v328 = vld [vmem:[#allocation2 + $0x238] sm:$0xff]
    %v329 = vld [vmem:[#allocation2 + $0x240] sm:$0xff]
    %v330 = vld [vmem:[#allocation2 + $0x248] sm:$0xff]
    %v331 = vld [vmem:[#allocation2 + $0x250] sm:$0xff]
    %v332 = vld [vmem:[#allocation2 + $0x258] sm:$0xff]
    %v333 = vld [vmem:[#allocation2 + $0x260] sm:$0xff]
    %v334 = vld [vmem:[#allocation2 + $0x268] sm:$0xff]
    %v335 = vld [vmem:[#allocation2 + $0x270] sm:$0xff]
    %v336 = vld [vmem:[#allocation2 + $0x278] sm:$0xff]
    %v337 = vld [vmem:[#allocation2 + $0x280] sm:$0xff]
    %v338 = vld [vmem:[#allocation2 + $0x288] sm:$0xff]
    %v339 = vld [vmem:[#allocation2 + $0x290] sm:$0xff]
    %v340 = vld [vmem:[#allocation2 + $0x298] sm:$0xff]
    %v341 = vld [vmem:[#allocation2 + $0x2a0] sm:$0xff]
    %v342 = vld [vmem:[#allocation2 + $0x2a8] sm:$0xff]
    %v343 = vld [vmem:[#allocation2 + $0x2b0] sm:$0xff]
    %v344 = vld [vmem:[#allocation2 + $0x2b8] sm:$0xff]
    %v345 = vld [vmem:[#allocation2 + $0x2c0] sm:$0xff]
    %v346 = vld [vmem:[#allocation2 + $0x2c8] sm:$0xff]
    %v347 = vld [vmem:[#allocation2 + $0x2d0] sm:$0xff]
    %v348 = vld [vmem:[#allocation2 + $0x2d8] sm:$0xff]
    %v349 = vld [vmem:[#allocation2 + $0x2e0] sm:$0xff]
    %v350 = vld [vmem:[#allocation2 + $0x2e8] sm:$0xff]
    %v351 = vld [vmem:[#allocation2 + $0x2f0] sm:$0xff]
    %v352 = vld [vmem:[#allocation2 + $0x2f8] sm:$0xff]
    %v353 = vld [vmem:[#allocation2 + $0x300] sm:$0xff]
    %v354 = vld [vmem:[#allocation2 + $0x308] sm:$0xff]
    %v355 = vld [vmem:[#allocation2 + $0x310] sm:$0xff]
    %v356 = vld [vmem:[#allocation2 + $0x318] sm:$0xff]
    %v357 = vld [vmem:[#allocation2 + $0x320] sm:$0xff]
    %v358 = vld [vmem:[#allocation2 + $0x328] sm:$0xff]
    %v359 = vld [vmem:[#allocation2 + $0x330] sm:$0xff]
    %v360 = vld [vmem:[#allocation2 + $0x338] sm:$0xff]
    %v361 = vld [vmem:[#allocation2 + $0x340] sm:$0xff]
    %v362 = vld [vmem:[#allocation2 + $0x348] sm:$0xff]
    %v363 = vld [vmem:[#allocation2 + $0x350] sm:$0xff]
    %v364 = vld [vmem:[#allocation2 + $0x358] sm:$0xff]
    %v365 = vld [vmem:[#allocation2 + $0x360] sm:$0xff]
    %v366 = vld [vmem:[#allocation2 + $0x368] sm:$0xff]
    %v367 = vld [vmem:[#allocation2 + $0x370] sm:$0xff]
    %v368 = vld [vmem:[#allocation2 + $0x378] sm:$0xff]
    %v369 = vld [vmem:[#allocation2 + $0x380] sm:$0xff]
    %v370 = vld [vmem:[#allocation2 + $0x388] sm:$0xff]
    %v371 = vld [vmem:[#allocation2 + $0x390] sm:$0xff]
    %v372 = vld [vmem:[#allocation2 + $0x398] sm:$0xff]
    %v373 = vld [vmem:[#allocation2 + $0x3a0] sm:$0xff]
    %v374 = vld [vmem:[#allocation2 + $0x3a8] sm:$0xff]
    %v375 = vld [vmem:[#allocation2 + $0x3b0] sm:$0xff]
    %v376 = vld [vmem:[#allocation2 + $0x3b8] sm:$0xff]
    %v377 = vld [vmem:[#allocation2 + $0x3c0] sm:$0xff]
    %v378 = vld [vmem:[#allocation2 + $0x3c8] sm:$0xff]
    %v379 = vld [vmem:[#allocation2 + $0x3d0] sm:$0xff]
    %v380 = vld [vmem:[#allocation2 + $0x3d8] sm:$0xff]
    %v381 = vld [vmem:[#allocation2 + $0x3e0] sm:$0xff]
    %v382 = vld [vmem:[#allocation2 + $0x3e8] sm:$0xff]
    %v383 = vld [vmem:[#allocation2 + $0x3f0] sm:$0xff]
    %v384 = vld [vmem:[#allocation2 + $0x3f8] sm:$0xff]
    %v385 = vld [vmem:[#allocation2 + $0x400] sm:$0xff]
    %v386 = vld [vmem:[#allocation2 + $0x408] sm:$0xff]
    %v387 = vld [vmem:[#allocation2 + $0x410] sm:$0xff]
    %v388 = vld [vmem:[#allocation2 + $0x418] sm:$0xff]
    %v389 = vld [vmem:[#allocation2 + $0x420] sm:$0xff]
    %v390 = vld [vmem:[#allocation2 + $0x428] sm:$0xff]
    %v391 = vld [vmem:[#allocation2 + $0x430] sm:$0xff]
    %v392 = vld [vmem:[#allocation2 + $0x438] sm:$0xff]
    %v393 = vld [vmem:[#allocation2 + $0x440] sm:$0xff]
    %v394 = vld [vmem:[#allocation2 + $0x448] sm:$0xff]
    %v395 = vld [vmem:[#allocation2 + $0x450] sm:$0xff]
    %v396 = vld [vmem:[#allocation2 + $0x458] sm:$0xff]
    %v397 = vld [vmem:[#allocation2 + $0x460] sm:$0xff]
    %v398 = vld [vmem:[#allocation2 + $0x468] sm:$0xff]
    %v399 = vld [vmem:[#allocation2 + $0x470] sm:$0xff]
    %v400 = vld [vmem:[#allocation2 + $0x478] sm:$0xff]
    %v401 = vld [vmem:[#allocation2 + $0x480] sm:$0xff]
    %v402 = vld [vmem:[#allocation2 + $0x488] sm:$0xff]
    %v403 = vld [vmem:[#allocation2 + $0x490] sm:$0xff]
    %v404 = vld [vmem:[#allocation2 + $0x498] sm:$0xff]
    %v405 = vld [vmem:[#allocation2 + $0x4a0] sm:$0xff]
    %v406 = vld [vmem:[#allocation2 + $0x4a8] sm:$0xff]
    %v407 = vld [vmem:[#allocation2 + $0x4b0] sm:$0xff]
    %v408 = vld [vmem:[#allocation2 + $0x4b8] sm:$0xff]
    %v409 = vld [vmem:[#allocation2 + $0x4c0] sm:$0xff]
    %v410 = vld [vmem:[#allocation2 + $0x4c8] sm:$0xff]
    %v411 = vld [vmem:[#allocation2 + $0x4d0] sm:$0xff]
    %v412 = vld [vmem:[#allocation2 + $0x4d8] sm:$0xff]
    %v413 = vld [vmem:[#allocation2 + $0x4e0] sm:$0xff]
    %v414 = vld [vmem:[#allocation2 + $0x4e8] sm:$0xff]
    %v415 = vld [vmem:[#allocation2 + $0x4f0] sm:$0xff]
    %v416 = vld [vmem:[#allocation2 + $0x4f8] sm:$0xff]
    %v417 = vld [vmem:[#allocation2 + $0x500] sm:$0xff]
    %v418 = vld [vmem:[#allocation2 + $0x508] sm:$0xff]
    %v419 = vld [vmem:[#allocation2 + $0x510] sm:$0xff]
    %v420 = vld [vmem:[#allocation2 + $0x518] sm:$0xff]
    %v421 = vld [vmem:[#allocation2 + $0x520] sm:$0xff]
    %v422 = vld [vmem:[#allocation2 + $0x528] sm:$0xff]
    %v423 = vld [vmem:[#allocation2 + $0x530] sm:$0xff]
    %v424 = vld [vmem:[#allocation2 + $0x538] sm:$0xff]
    %v425 = vld [vmem:[#allocation2 + $0x540] sm:$0xff]
    %v426 = vld [vmem:[#allocation2 + $0x548] sm:$0xff]
    %v427 = vld [vmem:[#allocation2 + $0x550] sm:$0xff]
    %v428 = vld [vmem:[#allocation2 + $0x558] sm:$0xff]
    %v429 = vld [vmem:[#allocation2 + $0x560] sm:$0xff]
    %v430 = vld [vmem:[#allocation2 + $0x568] sm:$0xff]
    %v431 = vld [vmem:[#allocation2 + $0x570] sm:$0xff]
    %v432 = vld [vmem:[#allocation2 + $0x578] sm:$0xff]
    %v433 = vld [vmem:[#allocation2 + $0x580] sm:$0xff]
    %v434 = vld [vmem:[#allocation2 + $0x588] sm:$0xff]
    %v435 = vld [vmem:[#allocation2 + $0x590] sm:$0xff]
    %v436 = vld [vmem:[#allocation2 + $0x598] sm:$0xff]
    %v437 = vld [vmem:[#allocation2 + $0x5a0] sm:$0xff]
    %v438 = vld [vmem:[#allocation2 + $0x5a8] sm:$0xff]
    %v439 = vld [vmem:[#allocation2 + $0x5b0] sm:$0xff]
    %v440 = vld [vmem:[#allocation2 + $0x5b8] sm:$0xff]
    %v441 = vld [vmem:[#allocation2 + $0x5c0] sm:$0xff]
    %v442 = vld [vmem:[#allocation2 + $0x5c8] sm:$0xff]
    %v443 = vld [vmem:[#allocation2 + $0x5d0] sm:$0xff]
    %v444 = vld [vmem:[#allocation2 + $0x5d8] sm:$0xff]
    %v445 = vld [vmem:[#allocation2 + $0x5e0] sm:$0xff]
    %v446 = vld [vmem:[#allocation2 + $0x5e8] sm:$0xff]
    %v447 = vld [vmem:[#allocation2 + $0x5f0] sm:$0xff]
    %v448 = vld [vmem:[#allocation2 + $0x5f8] sm:$0xff]
    %v449 = vld [vmem:[#allocation2 + $0x600] sm:$0xff]
    %v450 = vld [vmem:[#allocation2 + $0x608] sm:$0xff]
    %v451 = vld [vmem:[#allocation2 + $0x610] sm:$0xff]
    %v452 = vld [vmem:[#allocation2 + $0x618] sm:$0xff]
    %v453 = vld [vmem:[#allocation2 + $0x620] sm:$0xff]
    %v454 = vld [vmem:[#allocation2 + $0x628] sm:$0xff]
    %v455 = vld [vmem:[#allocation2 + $0x630] sm:$0xff]
    %v456 = vld [vmem:[#allocation2 + $0x638] sm:$0xff]
    %v457 = vld [vmem:[#allocation2 + $0x640] sm:$0xff]
    %v458 = vld [vmem:[#allocation2 + $0x648] sm:$0xff]
    %v459 = vld [vmem:[#allocation2 + $0x650] sm:$0xff]
    %v460 = vld [vmem:[#allocation2 + $0x658] sm:$0xff]
    %v461 = vld [vmem:[#allocation2 + $0x660] sm:$0xff]
    %v462 = vld [vmem:[#allocation2 + $0x668] sm:$0xff]
    %v463 = vld [vmem:[#allocation2 + $0x670] sm:$0xff]
    %v464 = vld [vmem:[#allocation2 + $0x678] sm:$0xff]
    %v465 = vld [vmem:[#allocation2 + $0x680] sm:$0xff]
    %v466 = vld [vmem:[#allocation2 + $0x688] sm:$0xff]
    %v467 = vld [vmem:[#allocation2 + $0x690] sm:$0xff]
    %v468 = vld [vmem:[#allocation2 + $0x698] sm:$0xff]
    %v469 = vld [vmem:[#allocation2 + $0x6a0] sm:$0xff]
    %v470 = vld [vmem:[#allocation2 + $0x6a8] sm:$0xff]
    %v471 = vld [vmem:[#allocation2 + $0x6b0] sm:$0xff]
    %v472 = vld [vmem:[#allocation2 + $0x6b8] sm:$0xff]
    %v473 = vld [vmem:[#allocation2 + $0x6c0] sm:$0xff]
    %v474 = vld [vmem:[#allocation2 + $0x6c8] sm:$0xff]
    %v475 = vld [vmem:[#allocation2 + $0x6d0] sm:$0xff]
    %v476 = vld [vmem:[#allocation2 + $0x6d8] sm:$0xff]
    %v477 = vld [vmem:[#allocation2 + $0x6e0] sm:$0xff]
    %v478 = vld [vmem:[#allocation2 + $0x6e8] sm:$0xff]
    %v479 = vld [vmem:[#allocation2 + $0x6f0] sm:$0xff]
    %v480 = vld [vmem:[#allocation2 + $0x6f8] sm:$0xff]
    %v481 = vld [vmem:[#allocation2 + $0x700] sm:$0xff]
    %v482 = vld [vmem:[#allocation2 + $0x708] sm:$0xff]
    %v483 = vld [vmem:[#allocation2 + $0x710] sm:$0xff]
    %v484 = vld [vmem:[#allocation2 + $0x718] sm:$0xff]
    %v485 = vld [vmem:[#allocation2 + $0x720] sm:$0xff]
    %v486 = vld [vmem:[#allocation2 + $0x728] sm:$0xff]
    %v487 = vld [vmem:[#allocation2 + $0x730] sm:$0xff]
    %v488 = vld [vmem:[#allocation2 + $0x738] sm:$0xff]
    %v489 = vld [vmem:[#allocation2 + $0x740] sm:$0xff]
    %v490 = vld [vmem:[#allocation2 + $0x748] sm:$0xff]
    %v491 = vld [vmem:[#allocation2 + $0x750] sm:$0xff]
    %v492 = vld [vmem:[#allocation2 + $0x758] sm:$0xff]
    %v493 = vld [vmem:[#allocation2 + $0x760] sm:$0xff]
    %v494 = vld [vmem:[#allocation2 + $0x768] sm:$0xff]
    %v495 = vld [vmem:[#allocation2 + $0x770] sm:$0xff]
    %v496 = vld [vmem:[#allocation2 + $0x778] sm:$0xff]
    %v497 = vld [vmem:[#allocation2 + $0x780] sm:$0xff]
    %v498 = vld [vmem:[#allocation2 + $0x788] sm:$0xff]
    %v499 = vld [vmem:[#allocation2 + $0x790] sm:$0xff]
    %v500 = vld [vmem:[#allocation2 + $0x798] sm:$0xff]
    %v501 = vld [vmem:[#allocation2 + $0x7a0] sm:$0xff]
    %v502 = vld [vmem:[#allocation2 + $0x7a8] sm:$0xff]
    %v503 = vld [vmem:[#allocation2 + $0x7b0] sm:$0xff]
    %v504 = vld [vmem:[#allocation2 + $0x7b8] sm:$0xff]
    %v505 = vld [vmem:[#allocation2 + $0x7c0] sm:$0xff]
    %v506 = vld [vmem:[#allocation2 + $0x7c8] sm:$0xff]
    %v507 = vld [vmem:[#allocation2 + $0x7d0] sm:$0xff]
    %v508 = vld [vmem:[#allocation2 + $0x7d8] sm:$0xff]
    %v509 = vld [vmem:[#allocation2 + $0x7e0] sm:$0xff]
    %v510 = vld [vmem:[#allocation2 + $0x7e8] sm:$0xff]
    %v511 = vld [vmem:[#allocation2 + $0x7f0] sm:$0xff]
    %v512 = vld [vmem:[#allocation2 + $0x7f8] sm:$0xff]
    %513 = vmatprep.subr.mxu0 %v318
    %514 = vmatpush1.msra.mxu0 %v317
    %515 = vmatprep.subr.mxu0 %v314
    %516 = vmatpush1.msra.mxu0 %v313
    %517 = vmatprep.subr.mxu0 %v310
    %518 = vmatpush1.msra.mxu0 %v309
    %519 = vmatprep.subr.mxu0 %v306
    %520 = vmatpush1.msra.mxu0 %v305
    %521 = vmatprep.subr.mxu0 %v302
    %522 = vmatpush1.msra.mxu0 %v301
    %523 = vmatprep.subr.mxu0 %v298
    %524 = vmatpush1.msra.mxu0 %v297
    %525 = vmatprep.subr.mxu0 %v294
    %526 = vmatpush1.msra.mxu0 %v293
    %527 = vmatprep.subr.mxu0 %v290
    %528 = vmatpush1.msra.mxu0 %v289
    %529 = vmatprep.subr.mxu0 %v286
    %530 = vmatpush1.msra.mxu0 %v285
    %531 = vmatprep.subr.mxu0 %v282
    %532 = vmatpush1.msra.mxu0 %v281
    %533 = vmatprep.subr.mxu0 %v278
    %534 = vmatpush1.msra.mxu0 %v277
    %535 = vmatprep.subr.mxu0 %v274
    %536 = vmatpush1.msra.mxu0 %v273
    %537 = vmatprep.subr.mxu0 %v270
    %538 = vmatpush1.msra.mxu0 %v269
    %539 = vmatprep.subr.mxu0 %v266
    %540 = vmatpush1.msra.mxu0 %v265
    %541 = vmatprep.subr.mxu0 %v262
    %542 = vmatpush1.msra.mxu0 %v261
    %543 = vmatprep.subr.mxu0 %v258
    %544 = vmatpush1.msra.mxu0 %v257
    %545 = vmatprep.subr.mxu0 %v382
    %546 = vmatpush2.msra.mxu0 %v381
    %547 = vmatprep.subr.mxu0 %v378
    %548 = vmatpush2.msra.mxu0 %v377
    %549 = vmatprep.subr.mxu0 %v374
    %550 = vmatpush2.msra.mxu0 %v373
    %551 = vmatprep.subr.mxu0 %v370
    %552 = vmatpush2.msra.mxu0 %v369
    %553 = vmatprep.subr.mxu0 %v366
    %554 = vmatpush2.msra.mxu0 %v365
    %555 = vmatprep.subr.mxu0 %v362
    %556 = vmatpush2.msra.mxu0 %v361
    %557 = vmatprep.subr.mxu0 %v358
    %558 = vmatpush2.msra.mxu0 %v357
    %559 = vmatprep.subr.mxu0 %v354
    %560 = vmatpush2.msra.mxu0 %v353
    %561 = vmatprep.subr.mxu0 %v350
    %562 = vmatpush2.msra.mxu0 %v349
    %563 = vmatprep.subr.mxu0 %v346
    %564 = vmatpush2.msra.mxu0 %v345
    %565 = vmatprep.subr.mxu0 %v342
    %566 = vmatpush2.msra.mxu0 %v341
    %567 = vmatprep.subr.mxu0 %v338
    %568 = vmatpush2.msra.mxu0 %v337
    %569 = vmatprep.subr.mxu0 %v334
    %570 = vmatpush2.msra.mxu0 %v333
    %571 = vmatprep.subr.mxu0 %v330
    %572 = vmatpush2.msra.mxu0 %v329
    %573 = vmatprep.subr.mxu0 %v326
    %574 = vmatpush2.msra.mxu0 %v325
    %575 = vmatprep.subr.mxu0 %v322
    %576 = vmatpush2.msra.mxu0 %v321
    %577 = vmatprep.mubr.f32.mxu0 %v172
    %578 = vmatmul.mubr.f32.gmra.mxu0 %v170
    %v579 = vpop.f32.mrf.mxu0
    %v580 = vadd.f32 0.0, %v579
    %v581 = vpop.f32.mrf.mxu0
    %v582 = vadd.f32 0.0, %v581
    %583 = vmatprep.mubr.f32.mxu0 %v178
    %584 = vmatmul.mubr.f32.gmra.mxu0 %v176
    %v585 = vpop.f32.mrf.mxu0
    %v586 = vadd.f32 0.0, %v585
    %v587 = vpop.f32.mrf.mxu0
    %v588 = vadd.f32 0.0, %v587
    %589 = vdwg.mxu0
    %590 = vmatprep.subr.mxu0 %v446
    %591 = vmatpush1.msra.mxu0 %v445
    %592 = vmatprep.subr.mxu0 %v442
    %593 = vmatpush1.msra.mxu0 %v441
    %594 = vmatprep.subr.mxu0 %v438
    %595 = vmatpush1.msra.mxu0 %v437
    %596 = vmatprep.subr.mxu0 %v434
    %597 = vmatpush1.msra.mxu0 %v433
    %598 = vmatprep.subr.mxu0 %v430
    %599 = vmatpush1.msra.mxu0 %v429
    %600 = vmatprep.subr.mxu0 %v426
    %601 = vmatpush1.msra.mxu0 %v425
    %602 = vmatprep.subr.mxu0 %v422
    %603 = vmatpush1.msra.mxu0 %v421
    %604 = vmatprep.subr.mxu0 %v418
    %605 = vmatpush1.msra.mxu0 %v417
    %606 = vmatprep.subr.mxu0 %v414
    %607 = vmatpush1.msra.mxu0 %v413
    %608 = vmatprep.subr.mxu0 %v410
    %609 = vmatpush1.msra.mxu0 %v409
    %610 = vmatprep.subr.mxu0 %v406
    %611 = vmatpush1.msra.mxu0 %v405
    %612 = vmatprep.subr.mxu0 %v402
    %613 = vmatpush1.msra.mxu0 %v401
    %614 = vmatprep.subr.mxu0 %v398
    %615 = vmatpush1.msra.mxu0 %v397
    %616 = vmatprep.subr.mxu0 %v394
    %617 = vmatpush1.msra.mxu0 %v393
    %618 = vmatprep.subr.mxu0 %v390
    %619 = vmatpush1.msra.mxu0 %v389
    %620 = vmatprep.subr.mxu0 %v386
    %621 = vmatpush1.msra.mxu0 %v385
    %622 = vmatprep.subr.mxu0 %v510
    %623 = vmatpush2.msra.mxu0 %v509
    %624 = vmatprep.subr.mxu0 %v506
    %625 = vmatpush2.msra.mxu0 %v505
    %626 = vmatprep.subr.mxu0 %v502
    %627 = vmatpush2.msra.mxu0 %v501
    %628 = vmatprep.subr.mxu0 %v498
    %629 = vmatpush2.msra.mxu0 %v497
    %630 = vmatprep.subr.mxu0 %v494
    %631 = vmatpush2.msra.mxu0 %v493
    %632 = vmatprep.subr.mxu0 %v490
    %633 = vmatpush2.msra.mxu0 %v489
    %634 = vmatprep.subr.mxu0 %v486
    %635 = vmatpush2.msra.mxu0 %v485
    %636 = vmatprep.subr.mxu0 %v482
    %637 = vmatpush2.msra.mxu0 %v481
    %638 = vmatprep.subr.mxu0 %v478
    %639 = vmatpush2.msra.mxu0 %v477
    %640 = vmatprep.subr.mxu0 %v474
    %641 = vmatpush2.msra.mxu0 %v473
    %642 = vmatprep.subr.mxu0 %v470
    %643 = vmatpush2.msra.mxu0 %v469
    %644 = vmatprep.subr.mxu0 %v466
    %645 = vmatpush2.msra.mxu0 %v465
    %646 = vmatprep.subr.mxu0 %v462
    %647 = vmatpush2.msra.mxu0 %v461
    %648 = vmatprep.subr.mxu0 %v458
    %649 = vmatpush2.msra.mxu0 %v457
    %650 = vmatprep.subr.mxu0 %v454
    %651 = vmatpush2.msra.mxu0 %v453
    %652 = vmatprep.subr.mxu0 %v450
    %653 = vmatpush2.msra.mxu0 %v449
    %654 = vmatprep.mubr.f32.mxu0 %v249
    %655 = vmatmul.mubr.f32.gmra.mxu0 %v247
    %v656 = vpop.f32.mrf.mxu0
    %v657 = vadd.f32 %v580, %v656
    %v658 = vpop.f32.mrf.mxu0
    %v659 = vadd.f32 %v582, %v658
    %660 = vmatprep.mubr.f32.mxu0 %v255
    %661 = vmatmul.mubr.f32.gmra.mxu0 %v253
    %v662 = vpop.f32.mrf.mxu0
    %v663 = vadd.f32 %v586, %v662
    %v664 = vpop.f32.mrf.mxu0
    %v665 = vadd.f32 %v588, %v664
    %666 = vdwg.mxu0
    %667 = vmatprep.subr.mxu0 %v320
    %668 = vmatpush1.msra.mxu0 %v319
    %669 = vmatprep.subr.mxu0 %v316
    %670 = vmatpush1.msra.mxu0 %v315
    %671 = vmatprep.subr.mxu0 %v312
    %672 = vmatpush1.msra.mxu0 %v311
    %673 = vmatprep.subr.mxu0 %v308
    %674 = vmatpush1.msra.mxu0 %v307
    %675 = vmatprep.subr.mxu0 %v304
    %676 = vmatpush1.msra.mxu0 %v303
    %677 = vmatprep.subr.mxu0 %v300
    %678 = vmatpush1.msra.mxu0 %v299
    %679 = vmatprep.subr.mxu0 %v296
    %680 = vmatpush1.msra.mxu0 %v295
    %681 = vmatprep.subr.mxu0 %v292
    %682 = vmatpush1.msra.mxu0 %v291
    %683 = vmatprep.subr.mxu0 %v288
    %684 = vmatpush1.msra.mxu0 %v287
    %685 = vmatprep.subr.mxu0 %v284
    %686 = vmatpush1.msra.mxu0 %v283
    %687 = vmatprep.subr.mxu0 %v280
    %688 = vmatpush1.msra.mxu0 %v279
    %689 = vmatprep.subr.mxu0 %v276
    %690 = vmatpush1.msra.mxu0 %v275
    %691 = vmatprep.subr.mxu0 %v272
    %692 = vmatpush1.msra.mxu0 %v271
    %693 = vmatprep.subr.mxu0 %v268
    %694 = vmatpush1.msra.mxu0 %v267
    %695 = vmatprep.subr.mxu0 %v264
    %696 = vmatpush1.msra.mxu0 %v263
    %697 = vmatprep.subr.mxu0 %v260
    %698 = vmatpush1.msra.mxu0 %v259
    %699 = vmatprep.subr.mxu0 %v384
    %700 = vmatpush2.msra.mxu0 %v383
    %701 = vmatprep.subr.mxu0 %v380
    %702 = vmatpush2.msra.mxu0 %v379
    %703 = vmatprep.subr.mxu0 %v376
    %704 = vmatpush2.msra.mxu0 %v375
    %705 = vmatprep.subr.mxu0 %v372
    %706 = vmatpush2.msra.mxu0 %v371
    %707 = vmatprep.subr.mxu0 %v368
    %708 = vmatpush2.msra.mxu0 %v367
    %709 = vmatprep.subr.mxu0 %v364
    %710 = vmatpush2.msra.mxu0 %v363
    %711 = vmatprep.subr.mxu0 %v360
    %712 = vmatpush2.msra.mxu0 %v359
    %713 = vmatprep.subr.mxu0 %v356
    %714 = vmatpush2.msra.mxu0 %v355
    %715 = vmatprep.subr.mxu0 %v352
    %716 = vmatpush2.msra.mxu0 %v351
    %717 = vmatprep.subr.mxu0 %v348
    %718 = vmatpush2.msra.mxu0 %v347
    %719 = vmatprep.subr.mxu0 %v344
    %720 = vmatpush2.msra.mxu0 %v343
    %721 = vmatprep.subr.mxu0 %v340
    %722 = vmatpush2.msra.mxu0 %v339
    %723 = vmatprep.subr.mxu0 %v336
    %724 = vmatpush2.msra.mxu0 %v335
    %725 = vmatprep.subr.mxu0 %v332
    %726 = vmatpush2.msra.mxu0 %v331
    %727 = vmatprep.subr.mxu0 %v328
    %728 = vmatpush2.msra.mxu0 %v327
    %729 = vmatprep.subr.mxu0 %v324
    %730 = vmatpush2.msra.mxu0 %v323
    %731 = vmatprep.mubr.f32.mxu0 %v172
    %732 = vmatmul.mubr.f32.gmra.mxu0 %v170
    %v733 = vpop.f32.mrf.mxu0
    %v734 = vadd.f32 0.0, %v733
    %v735 = vpop.f32.mrf.mxu0
    %v736 = vadd.f32 0.0, %v735
    %737 = vmatprep.mubr.f32.mxu0 %v178
    %738 = vmatmul.mubr.f32.gmra.mxu0 %v176
    %v739 = vpop.f32.mrf.mxu0
    %v740 = vadd.f32 0.0, %v739
    %v741 = vpop.f32.mrf.mxu0
    %v742 = vadd.f32 0.0, %v741
    %743 = vdwg.mxu0
    %744 = vmatprep.subr.mxu0 %v448
    %745 = vmatpush1.msra.mxu0 %v447
    %746 = vmatprep.subr.mxu0 %v444
    %747 = vmatpush1.msra.mxu0 %v443
    %748 = vmatprep.subr.mxu0 %v440
    %749 = vmatpush1.msra.mxu0 %v439
    %750 = vmatprep.subr.mxu0 %v436
    %751 = vmatpush1.msra.mxu0 %v435
    %752 = vmatprep.subr.mxu0 %v432
    %753 = vmatpush1.msra.mxu0 %v431
    %754 = vmatprep.subr.mxu0 %v428
    %755 = vmatpush1.msra.mxu0 %v427
    %756 = vmatprep.subr.mxu0 %v424
    %757 = vmatpush1.msra.mxu0 %v423
    %758 = vmatprep.subr.mxu0 %v420
    %759 = vmatpush1.msra.mxu0 %v419
    %760 = vmatprep.subr.mxu0 %v416
    %761 = vmatpush1.msra.mxu0 %v415
    %762 = vmatprep.subr.mxu0 %v412
    %763 = vmatpush1.msra.mxu0 %v411
    %764 = vmatprep.subr.mxu0 %v408
    %765 = vmatpush1.msra.mxu0 %v407
    %766 = vmatprep.subr.mxu0 %v404
    %767 = vmatpush1.msra.mxu0 %v403
    %768 = vmatprep.subr.mxu0 %v400
    %769 = vmatpush1.msra.mxu0 %v399
    %770 = vmatprep.subr.mxu0 %v396
    %771 = vmatpush1.msra.mxu0 %v395
    %772 = vmatprep.subr.mxu0 %v392
    %773 = vmatpush1.msra.mxu0 %v391
    %774 = vmatprep.subr.mxu0 %v388
    %775 = vmatpush1.msra.mxu0 %v387
    %776 = vmatprep.subr.mxu0 %v512
    %777 = vmatpush2.msra.mxu0 %v511
    %778 = vmatprep.subr.mxu0 %v508
    %779 = vmatpush2.msra.mxu0 %v507
    %780 = vmatprep.subr.mxu0 %v504
    %781 = vmatpush2.msra.mxu0 %v503
    %782 = vmatprep.subr.mxu0 %v500
    %783 = vmatpush2.msra.mxu0 %v499
    %784 = vmatprep.subr.mxu0 %v496
    %785 = vmatpush2.msra.mxu0 %v495
    %786 = vmatprep.subr.mxu0 %v492
    %787 = vmatpush2.msra.mxu0 %v491
    %788 = vmatprep.subr.mxu0 %v488
    %789 = vmatpush2.msra.mxu0 %v487
    %790 = vmatprep.subr.mxu0 %v484
    %791 = vmatpush2.msra.mxu0 %v483
    %792 = vmatprep.subr.mxu0 %v480
    %793 = vmatpush2.msra.mxu0 %v479
    %794 = vmatprep.subr.mxu0 %v476
    %795 = vmatpush2.msra.mxu0 %v475
    %796 = vmatprep.subr.mxu0 %v472
    %797 = vmatpush2.msra.mxu0 %v471
    %798 = vmatprep.subr.mxu0 %v468
    %799 = vmatpush2.msra.mxu0 %v467
    %800 = vmatprep.subr.mxu0 %v464
    %801 = vmatpush2.msra.mxu0 %v463
    %802 = vmatprep.subr.mxu0 %v460
    %803 = vmatpush2.msra.mxu0 %v459
    %804 = vmatprep.subr.mxu0 %v456
    %805 = vmatpush2.msra.mxu0 %v455
    %806 = vmatprep.subr.mxu0 %v452
    %807 = vmatpush2.msra.mxu0 %v451
    %808 = vmatprep.mubr.f32.mxu0 %v249
    %809 = vmatmul.mubr.f32.gmra.mxu0 %v247
    %v810 = vpop.f32.mrf.mxu0
    %v811 = vadd.f32 %v734, %v810
    %v812 = vpop.f32.mrf.mxu0
    %v813 = vadd.f32 %v736, %v812
    %814 = vmatprep.mubr.f32.mxu0 %v255
    %815 = vmatmul.mubr.f32.gmra.mxu0 %v253
    %v816 = vpop.f32.mrf.mxu0
    %v817 = vadd.f32 %v740, %v816
    %v818 = vpop.f32.mrf.mxu0
    %v819 = vadd.f32 %v742, %v818
    %820 = vdwg.mxu0
    %v821 = vrot.slane %v657, 4
    %v822 = vadd.f32 %v657, %v821
    %v823 = vrot.slane %v822, 2
    %v824 = vadd.f32 %v822, %v823
    %v825 = vrot.slane %v824, 1
    %v826 = vadd.f32 %v824, %v825
    %v827 = vrot.slane %v659, 4
    %v828 = vadd.f32 %v659, %v827
    %v829 = vrot.slane %v828, 2
    %v830 = vadd.f32 %v828, %v829
    %v831 = vrot.slane %v830, 1
    %v832 = vadd.f32 %v830, %v831
    %v833 = vrot.slane %v811, 4
    %v834 = vadd.f32 %v811, %v833
    %v835 = vrot.slane %v834, 2
    %v836 = vadd.f32 %v834, %v835
    %v837 = vrot.slane %v836, 1
    %v838 = vadd.f32 %v836, %v837
    %v839 = vrot.slane %v813, 4
    %v840 = vadd.f32 %v813, %v839
    %v841 = vrot.slane %v840, 2
    %v842 = vadd.f32 %v840, %v841
    %v843 = vrot.slane %v842, 1
    %v844 = vadd.f32 %v842, %v843
    %v845 = vrot.slane %v663, 4
    %v846 = vadd.f32 %v663, %v845
    %v847 = vrot.slane %v846, 2
    %v848 = vadd.f32 %v846, %v847
    %v849 = vrot.slane %v848, 1
    %v850 = vadd.f32 %v848, %v849
    %v851 = vrot.slane %v665, 4
    %v852 = vadd.f32 %v665, %v851
    %v853 = vrot.slane %v852, 2
    %v854 = vadd.f32 %v852, %v853
    %v855 = vrot.slane %v854, 1
    %v856 = vadd.f32 %v854, %v855
    %v857 = vrot.slane %v817, 4
    %v858 = vadd.f32 %v817, %v857
    %v859 = vrot.slane %v858, 2
    %v860 = vadd.f32 %v858, %v859
    %v861 = vrot.slane %v860, 1
    %v862 = vadd.f32 %v860, %v861
    %v863 = vrot.slane %v819, 4
    %v864 = vadd.f32 %v819, %v863
    %v865 = vrot.slane %v864, 2
    %v866 = vadd.f32 %v864, %v865
    %v867 = vrot.slane %v866, 1
    %v868 = vadd.f32 %v866, %v867
    %v869 = vrcp.pop 8.0
    %v870 = vmul.f32 %v826, %v869
    %v871 = vmul.f32 %v832, %v869
    %v872 = vmul.f32 %v838, %v869
    %v873 = vmul.f32 %v844, %v869
    %v874 = vmul.f32 %v850, %v869
    %v875 = vmul.f32 %v856, %v869
    %v876 = vmul.f32 %v862, %v869
    %v877 = vmul.f32 %v868, %v869
    %v878 = vld [vmem:[#allocation5] sm:$0xff]
    %v879 = vld [vmem:[#allocation5 + $0x8] sm:$0xff]
    %v880 = vld [vmem:[#allocation5 + $0x10] sm:$0xff]
    %v881 = vld [vmem:[#allocation5 + $0x18] sm:$0xff]
    %v882 = vld [vmem:[#allocation5 + $0x20] sm:$0xff]
    %v883 = vld [vmem:[#allocation5 + $0x28] sm:$0xff]
    %v884 = vld [vmem:[#allocation5 + $0x30] sm:$0xff]
    %v885 = vld [vmem:[#allocation5 + $0x38] sm:$0xff]
    %v886 = vld [vmem:[#allocation5 + $0x40] sm:$0xff]
    %v887 = vld [vmem:[#allocation5 + $0x48] sm:$0xff]
    %v888 = vld [vmem:[#allocation5 + $0x50] sm:$0xff]
    %v889 = vld [vmem:[#allocation5 + $0x58] sm:$0xff]
    %v890 = vld [vmem:[#allocation5 + $0x60] sm:$0xff]
    %v891 = vld [vmem:[#allocation5 + $0x68] sm:$0xff]
    %v892 = vld [vmem:[#allocation5 + $0x70] sm:$0xff]
    %v893 = vld [vmem:[#allocation5 + $0x78] sm:$0xff]
    %v894 = vld [vmem:[#allocation5 + $0x80] sm:$0xff]
    %v895 = vld [vmem:[#allocation5 + $0x88] sm:$0xff]
    %v896 = vld [vmem:[#allocation5 + $0x90] sm:$0xff]
    %v897 = vld [vmem:[#allocation5 + $0x98] sm:$0xff]
    %v898 = vld [vmem:[#allocation5 + $0xa0] sm:$0xff]
    %v899 = vld [vmem:[#allocation5 + $0xa8] sm:$0xff]
    %v900 = vld [vmem:[#allocation5 + $0xb0] sm:$0xff]
    %v901 = vld [vmem:[#allocation5 + $0xb8] sm:$0xff]
    %v902 = vld [vmem:[#allocation5 + $0xc0] sm:$0xff]
    %v903 = vld [vmem:[#allocation5 + $0xc8] sm:$0xff]
    %v904 = vld [vmem:[#allocation5 + $0xd0] sm:$0xff]
    %v905 = vld [vmem:[#allocation5 + $0xd8] sm:$0xff]
    %v906 = vld [vmem:[#allocation5 + $0xe0] sm:$0xff]
    %v907 = vld [vmem:[#allocation5 + $0xe8] sm:$0xff]
    %v908 = vld [vmem:[#allocation5 + $0xf0] sm:$0xff]
    %v909 = vld [vmem:[#allocation5 + $0xf8] sm:$0xff]
    %v910 = vld [vmem:[#allocation5 + $0x100] sm:$0xff]
    %v911 = vld [vmem:[#allocation5 + $0x108] sm:$0xff]
    %v912 = vld [vmem:[#allocation5 + $0x110] sm:$0xff]
    %v913 = vld [vmem:[#allocation5 + $0x118] sm:$0xff]
    %v914 = vld [vmem:[#allocation5 + $0x120] sm:$0xff]
    %v915 = vld [vmem:[#allocation5 + $0x128] sm:$0xff]
    %v916 = vld [vmem:[#allocation5 + $0x130] sm:$0xff]
    %v917 = vld [vmem:[#allocation5 + $0x138] sm:$0xff]
    %v918 = vld [vmem:[#allocation5 + $0x140] sm:$0xff]
    %v919 = vld [vmem:[#allocation5 + $0x148] sm:$0xff]
    %v920 = vld [vmem:[#allocation5 + $0x150] sm:$0xff]
    %v921 = vld [vmem:[#allocation5 + $0x158] sm:$0xff]
    %v922 = vld [vmem:[#allocation5 + $0x160] sm:$0xff]
    %v923 = vld [vmem:[#allocation5 + $0x168] sm:$0xff]
    %v924 = vld [vmem:[#allocation5 + $0x170] sm:$0xff]
    %v925 = vld [vmem:[#allocation5 + $0x178] sm:$0xff]
    %v926 = vld [vmem:[#allocation5 + $0x180] sm:$0xff]
    %v927 = vld [vmem:[#allocation5 + $0x188] sm:$0xff]
    %v928 = vld [vmem:[#allocation5 + $0x190] sm:$0xff]
    %v929 = vld [vmem:[#allocation5 + $0x198] sm:$0xff]
    %v930 = vld [vmem:[#allocation5 + $0x1a0] sm:$0xff]
    %v931 = vld [vmem:[#allocation5 + $0x1a8] sm:$0xff]
    %v932 = vld [vmem:[#allocation5 + $0x1b0] sm:$0xff]
    %v933 = vld [vmem:[#allocation5 + $0x1b8] sm:$0xff]
    %v934 = vld [vmem:[#allocation5 + $0x1c0] sm:$0xff]
    %v935 = vld [vmem:[#allocation5 + $0x1c8] sm:$0xff]
    %v936 = vld [vmem:[#allocation5 + $0x1d0] sm:$0xff]
    %v937 = vld [vmem:[#allocation5 + $0x1d8] sm:$0xff]
    %v938 = vld [vmem:[#allocation5 + $0x1e0] sm:$0xff]
    %v939 = vld [vmem:[#allocation5 + $0x1e8] sm:$0xff]
    %v940 = vld [vmem:[#allocation5 + $0x1f0] sm:$0xff]
    %v941 = vld [vmem:[#allocation5 + $0x1f8] sm:$0xff]
    %v942 = vld [vmem:[#allocation5 + $0x200] sm:$0xff]
    %v943 = vld [vmem:[#allocation5 + $0x208] sm:$0xff]
    %v944 = vld [vmem:[#allocation5 + $0x210] sm:$0xff]
    %v945 = vld [vmem:[#allocation5 + $0x218] sm:$0xff]
    %v946 = vld [vmem:[#allocation5 + $0x220] sm:$0xff]
    %v947 = vld [vmem:[#allocation5 + $0x228] sm:$0xff]
    %v948 = vld [vmem:[#allocation5 + $0x230] sm:$0xff]
    %v949 = vld [vmem:[#allocation5 + $0x238] sm:$0xff]
    %v950 = vld [vmem:[#allocation5 + $0x240] sm:$0xff]
    %v951 = vld [vmem:[#allocation5 + $0x248] sm:$0xff]
    %v952 = vld [vmem:[#allocation5 + $0x250] sm:$0xff]
    %v953 = vld [vmem:[#allocation5 + $0x258] sm:$0xff]
    %v954 = vld [vmem:[#allocation5 + $0x260] sm:$0xff]
    %v955 = vld [vmem:[#allocation5 + $0x268] sm:$0xff]
    %v956 = vld [vmem:[#allocation5 + $0x270] sm:$0xff]
    %v957 = vld [vmem:[#allocation5 + $0x278] sm:$0xff]
    %v958 = vld [vmem:[#allocation5 + $0x280] sm:$0xff]
    %v959 = vld [vmem:[#allocation5 + $0x288] sm:$0xff]
    %v960 = vld [vmem:[#allocation5 + $0x290] sm:$0xff]
    %v961 = vld [vmem:[#allocation5 + $0x298] sm:$0xff]
    %v962 = vld [vmem:[#allocation5 + $0x2a0] sm:$0xff]
    %v963 = vld [vmem:[#allocation5 + $0x2a8] sm:$0xff]
    %v964 = vld [vmem:[#allocation5 + $0x2b0] sm:$0xff]
    %v965 = vld [vmem:[#allocation5 + $0x2b8] sm:$0xff]
    %v966 = vld [vmem:[#allocation5 + $0x2c0] sm:$0xff]
    %v967 = vld [vmem:[#allocation5 + $0x2c8] sm:$0xff]
    %v968 = vld [vmem:[#allocation5 + $0x2d0] sm:$0xff]
    %v969 = vld [vmem:[#allocation5 + $0x2d8] sm:$0xff]
    %v970 = vld [vmem:[#allocation5 + $0x2e0] sm:$0xff]
    %v971 = vld [vmem:[#allocation5 + $0x2e8] sm:$0xff]
    %v972 = vld [vmem:[#allocation5 + $0x2f0] sm:$0xff]
    %v973 = vld [vmem:[#allocation5 + $0x2f8] sm:$0xff]
    %v974 = vld [vmem:[#allocation5 + $0x300] sm:$0xff]
    %v975 = vld [vmem:[#allocation5 + $0x308] sm:$0xff]
    %v976 = vld [vmem:[#allocation5 + $0x310] sm:$0xff]
    %v977 = vld [vmem:[#allocation5 + $0x318] sm:$0xff]
    %v978 = vld [vmem:[#allocation5 + $0x320] sm:$0xff]
    %v979 = vld [vmem:[#allocation5 + $0x328] sm:$0xff]
    %v980 = vld [vmem:[#allocation5 + $0x330] sm:$0xff]
    %v981 = vld [vmem:[#allocation5 + $0x338] sm:$0xff]
    %v982 = vld [vmem:[#allocation5 + $0x340] sm:$0xff]
    %v983 = vld [vmem:[#allocation5 + $0x348] sm:$0xff]
    %v984 = vld [vmem:[#allocation5 + $0x350] sm:$0xff]
    %v985 = vld [vmem:[#allocation5 + $0x358] sm:$0xff]
    %v986 = vld [vmem:[#allocation5 + $0x360] sm:$0xff]
    %v987 = vld [vmem:[#allocation5 + $0x368] sm:$0xff]
    %v988 = vld [vmem:[#allocation5 + $0x370] sm:$0xff]
    %v989 = vld [vmem:[#allocation5 + $0x378] sm:$0xff]
    %v990 = vld [vmem:[#allocation5 + $0x380] sm:$0xff]
    %v991 = vld [vmem:[#allocation5 + $0x388] sm:$0xff]
    %v992 = vld [vmem:[#allocation5 + $0x390] sm:$0xff]
    %v993 = vld [vmem:[#allocation5 + $0x398] sm:$0xff]
    %v994 = vld [vmem:[#allocation5 + $0x3a0] sm:$0xff]
    %v995 = vld [vmem:[#allocation5 + $0x3a8] sm:$0xff]
    %v996 = vld [vmem:[#allocation5 + $0x3b0] sm:$0xff]
    %v997 = vld [vmem:[#allocation5 + $0x3b8] sm:$0xff]
    %v998 = vld [vmem:[#allocation5 + $0x3c0] sm:$0xff]
    %v999 = vld [vmem:[#allocation5 + $0x3c8] sm:$0xff]
    %v1000 = vld [vmem:[#allocation5 + $0x3d0] sm:$0xff]
    %v1001 = vld [vmem:[#allocation5 + $0x3d8] sm:$0xff]
    %v1002 = vld [vmem:[#allocation5 + $0x3e0] sm:$0xff]
    %v1003 = vld [vmem:[#allocation5 + $0x3e8] sm:$0xff]
    %v1004 = vld [vmem:[#allocation5 + $0x3f0] sm:$0xff]
    %v1005 = vld [vmem:[#allocation5 + $0x3f8] sm:$0xff]
    %v1006 = vld [vmem:[#allocation5 + $0x400] sm:$0xff]
    %v1007 = vld [vmem:[#allocation5 + $0x408] sm:$0xff]
    %v1008 = vld [vmem:[#allocation5 + $0x410] sm:$0xff]
    %v1009 = vld [vmem:[#allocation5 + $0x418] sm:$0xff]
    %v1010 = vld [vmem:[#allocation5 + $0x420] sm:$0xff]
    %v1011 = vld [vmem:[#allocation5 + $0x428] sm:$0xff]
    %v1012 = vld [vmem:[#allocation5 + $0x430] sm:$0xff]
    %v1013 = vld [vmem:[#allocation5 + $0x438] sm:$0xff]
    %v1014 = vld [vmem:[#allocation5 + $0x440] sm:$0xff]
    %v1015 = vld [vmem:[#allocation5 + $0x448] sm:$0xff]
    %v1016 = vld [vmem:[#allocation5 + $0x450] sm:$0xff]
    %v1017 = vld [vmem:[#allocation5 + $0x458] sm:$0xff]
    %v1018 = vld [vmem:[#allocation5 + $0x460] sm:$0xff]
    %v1019 = vld [vmem:[#allocation5 + $0x468] sm:$0xff]
    %v1020 = vld [vmem:[#allocation5 + $0x470] sm:$0xff]
    %v1021 = vld [vmem:[#allocation5 + $0x478] sm:$0xff]
    %v1022 = vld [vmem:[#allocation5 + $0x480] sm:$0xff]
    %v1023 = vld [vmem:[#allocation5 + $0x488] sm:$0xff]
    %v1024 = vld [vmem:[#allocation5 + $0x490] sm:$0xff]
    %v1025 = vld [vmem:[#allocation5 + $0x498] sm:$0xff]
    %v1026 = vld [vmem:[#allocation5 + $0x4a0] sm:$0xff]
    %v1027 = vld [vmem:[#allocation5 + $0x4a8] sm:$0xff]
    %v1028 = vld [vmem:[#allocation5 + $0x4b0] sm:$0xff]
    %v1029 = vld [vmem:[#allocation5 + $0x4b8] sm:$0xff]
    %v1030 = vld [vmem:[#allocation5 + $0x4c0] sm:$0xff]
    %v1031 = vld [vmem:[#allocation5 + $0x4c8] sm:$0xff]
    %v1032 = vld [vmem:[#allocation5 + $0x4d0] sm:$0xff]
    %v1033 = vld [vmem:[#allocation5 + $0x4d8] sm:$0xff]
    %v1034 = vld [vmem:[#allocation5 + $0x4e0] sm:$0xff]
    %v1035 = vld [vmem:[#allocation5 + $0x4e8] sm:$0xff]
    %v1036 = vld [vmem:[#allocation5 + $0x4f0] sm:$0xff]
    %v1037 = vld [vmem:[#allocation5 + $0x4f8] sm:$0xff]
    %v1038 = vld [vmem:[#allocation5 + $0x500] sm:$0xff]
    %v1039 = vld [vmem:[#allocation5 + $0x508] sm:$0xff]
    %v1040 = vld [vmem:[#allocation5 + $0x510] sm:$0xff]
    %v1041 = vld [vmem:[#allocation5 + $0x518] sm:$0xff]
    %v1042 = vld [vmem:[#allocation5 + $0x520] sm:$0xff]
    %v1043 = vld [vmem:[#allocation5 + $0x528] sm:$0xff]
    %v1044 = vld [vmem:[#allocation5 + $0x530] sm:$0xff]
    %v1045 = vld [vmem:[#allocation5 + $0x538] sm:$0xff]
    %v1046 = vld [vmem:[#allocation5 + $0x540] sm:$0xff]
    %v1047 = vld [vmem:[#allocation5 + $0x548] sm:$0xff]
    %v1048 = vld [vmem:[#allocation5 + $0x550] sm:$0xff]
    %v1049 = vld [vmem:[#allocation5 + $0x558] sm:$0xff]
    %v1050 = vld [vmem:[#allocation5 + $0x560] sm:$0xff]
    %v1051 = vld [vmem:[#allocation5 + $0x568] sm:$0xff]
    %v1052 = vld [vmem:[#allocation5 + $0x570] sm:$0xff]
    %v1053 = vld [vmem:[#allocation5 + $0x578] sm:$0xff]
    %v1054 = vld [vmem:[#allocation5 + $0x580] sm:$0xff]
    %v1055 = vld [vmem:[#allocation5 + $0x588] sm:$0xff]
    %v1056 = vld [vmem:[#allocation5 + $0x590] sm:$0xff]
    %v1057 = vld [vmem:[#allocation5 + $0x598] sm:$0xff]
    %v1058 = vld [vmem:[#allocation5 + $0x5a0] sm:$0xff]
    %v1059 = vld [vmem:[#allocation5 + $0x5a8] sm:$0xff]
    %v1060 = vld [vmem:[#allocation5 + $0x5b0] sm:$0xff]
    %v1061 = vld [vmem:[#allocation5 + $0x5b8] sm:$0xff]
    %v1062 = vld [vmem:[#allocation5 + $0x5c0] sm:$0xff]
    %v1063 = vld [vmem:[#allocation5 + $0x5c8] sm:$0xff]
    %v1064 = vld [vmem:[#allocation5 + $0x5d0] sm:$0xff]
    %v1065 = vld [vmem:[#allocation5 + $0x5d8] sm:$0xff]
    %v1066 = vld [vmem:[#allocation5 + $0x5e0] sm:$0xff]
    %v1067 = vld [vmem:[#allocation5 + $0x5e8] sm:$0xff]
    %v1068 = vld [vmem:[#allocation5 + $0x5f0] sm:$0xff]
    %v1069 = vld [vmem:[#allocation5 + $0x5f8] sm:$0xff]
    %v1070 = vld [vmem:[#allocation5 + $0x600] sm:$0xff]
    %v1071 = vld [vmem:[#allocation5 + $0x608] sm:$0xff]
    %v1072 = vld [vmem:[#allocation5 + $0x610] sm:$0xff]
    %v1073 = vld [vmem:[#allocation5 + $0x618] sm:$0xff]
    %v1074 = vld [vmem:[#allocation5 + $0x620] sm:$0xff]
    %v1075 = vld [vmem:[#allocation5 + $0x628] sm:$0xff]
    %v1076 = vld [vmem:[#allocation5 + $0x630] sm:$0xff]
    %v1077 = vld [vmem:[#allocation5 + $0x638] sm:$0xff]
    %v1078 = vld [vmem:[#allocation5 + $0x640] sm:$0xff]
    %v1079 = vld [vmem:[#allocation5 + $0x648] sm:$0xff]
    %v1080 = vld [vmem:[#allocation5 + $0x650] sm:$0xff]
    %v1081 = vld [vmem:[#allocation5 + $0x658] sm:$0xff]
    %v1082 = vld [vmem:[#allocation5 + $0x660] sm:$0xff]
    %v1083 = vld [vmem:[#allocation5 + $0x668] sm:$0xff]
    %v1084 = vld [vmem:[#allocation5 + $0x670] sm:$0xff]
    %v1085 = vld [vmem:[#allocation5 + $0x678] sm:$0xff]
    %v1086 = vld [vmem:[#allocation5 + $0x680] sm:$0xff]
    %v1087 = vld [vmem:[#allocation5 + $0x688] sm:$0xff]
    %v1088 = vld [vmem:[#allocation5 + $0x690] sm:$0xff]
    %v1089 = vld [vmem:[#allocation5 + $0x698] sm:$0xff]
    %v1090 = vld [vmem:[#allocation5 + $0x6a0] sm:$0xff]
    %v1091 = vld [vmem:[#allocation5 + $0x6a8] sm:$0xff]
    %v1092 = vld [vmem:[#allocation5 + $0x6b0] sm:$0xff]
    %v1093 = vld [vmem:[#allocation5 + $0x6b8] sm:$0xff]
    %v1094 = vld [vmem:[#allocation5 + $0x6c0] sm:$0xff]
    %v1095 = vld [vmem:[#allocation5 + $0x6c8] sm:$0xff]
    %v1096 = vld [vmem:[#allocation5 + $0x6d0] sm:$0xff]
    %v1097 = vld [vmem:[#allocation5 + $0x6d8] sm:$0xff]
    %v1098 = vld [vmem:[#allocation5 + $0x6e0] sm:$0xff]
    %v1099 = vld [vmem:[#allocation5 + $0x6e8] sm:$0xff]
    %v1100 = vld [vmem:[#allocation5 + $0x6f0] sm:$0xff]
    %v1101 = vld [vmem:[#allocation5 + $0x6f8] sm:$0xff]
    %v1102 = vld [vmem:[#allocation5 + $0x700] sm:$0xff]
    %v1103 = vld [vmem:[#allocation5 + $0x708] sm:$0xff]
    %v1104 = vld [vmem:[#allocation5 + $0x710] sm:$0xff]
    %v1105 = vld [vmem:[#allocation5 + $0x718] sm:$0xff]
    %v1106 = vld [vmem:[#allocation5 + $0x720] sm:$0xff]
    %v1107 = vld [vmem:[#allocation5 + $0x728] sm:$0xff]
    %v1108 = vld [vmem:[#allocation5 + $0x730] sm:$0xff]
    %v1109 = vld [vmem:[#allocation5 + $0x738] sm:$0xff]
    %v1110 = vld [vmem:[#allocation5 + $0x740] sm:$0xff]
    %v1111 = vld [vmem:[#allocation5 + $0x748] sm:$0xff]
    %v1112 = vld [vmem:[#allocation5 + $0x750] sm:$0xff]
    %v1113 = vld [vmem:[#allocation5 + $0x758] sm:$0xff]
    %v1114 = vld [vmem:[#allocation5 + $0x760] sm:$0xff]
    %v1115 = vld [vmem:[#allocation5 + $0x768] sm:$0xff]
    %v1116 = vld [vmem:[#allocation5 + $0x770] sm:$0xff]
    %v1117 = vld [vmem:[#allocation5 + $0x778] sm:$0xff]
    %v1118 = vld [vmem:[#allocation5 + $0x780] sm:$0xff]
    %v1119 = vld [vmem:[#allocation5 + $0x788] sm:$0xff]
    %v1120 = vld [vmem:[#allocation5 + $0x790] sm:$0xff]
    %v1121 = vld [vmem:[#allocation5 + $0x798] sm:$0xff]
    %v1122 = vld [vmem:[#allocation5 + $0x7a0] sm:$0xff]
    %v1123 = vld [vmem:[#allocation5 + $0x7a8] sm:$0xff]
    %v1124 = vld [vmem:[#allocation5 + $0x7b0] sm:$0xff]
    %v1125 = vld [vmem:[#allocation5 + $0x7b8] sm:$0xff]
    %v1126 = vld [vmem:[#allocation5 + $0x7c0] sm:$0xff]
    %v1127 = vld [vmem:[#allocation5 + $0x7c8] sm:$0xff]
    %v1128 = vld [vmem:[#allocation5 + $0x7d0] sm:$0xff]
    %v1129 = vld [vmem:[#allocation5 + $0x7d8] sm:$0xff]
    %v1130 = vld [vmem:[#allocation5 + $0x7e0] sm:$0xff]
    %v1131 = vld [vmem:[#allocation5 + $0x7e8] sm:$0xff]
    %v1132 = vld [vmem:[#allocation5 + $0x7f0] sm:$0xff]
    %v1133 = vld [vmem:[#allocation5 + $0x7f8] sm:$0xff]
    %vm1142 = vcmask 1041409
    %v1143 = vsel %vm1142, %v874, %v870
    %v1144 = vsel %vm1142, %v875, %v871
    %v1145 = vsel %vm1142, %v876, %v872
    %v1146 = vsel %vm1142, %v877, %v873
    %1151 = vmatprep.subr.mxu0 %v939
    %1152 = vmatpush1.msra.mxu0 %v938
    %1153 = vmatprep.subr.mxu0 %v935
    %1154 = vmatpush1.msra.mxu0 %v934
    %1155 = vmatprep.subr.mxu0 %v931
    %1156 = vmatpush1.msra.mxu0 %v930
    %1157 = vmatprep.subr.mxu0 %v927
    %1158 = vmatpush1.msra.mxu0 %v926
    %1159 = vmatprep.subr.mxu0 %v923
    %1160 = vmatpush1.msra.mxu0 %v922
    %1161 = vmatprep.subr.mxu0 %v919
    %1162 = vmatpush1.msra.mxu0 %v918
    %1163 = vmatprep.subr.mxu0 %v915
    %1164 = vmatpush1.msra.mxu0 %v914
    %1165 = vmatprep.subr.mxu0 %v911
    %1166 = vmatpush1.msra.mxu0 %v910
    %1167 = vmatprep.subr.mxu0 %v907
    %1168 = vmatpush1.msra.mxu0 %v906
    %1169 = vmatprep.subr.mxu0 %v903
    %1170 = vmatpush1.msra.mxu0 %v902
    %1171 = vmatprep.subr.mxu0 %v899
    %1172 = vmatpush1.msra.mxu0 %v898
    %1173 = vmatprep.subr.mxu0 %v895
    %1174 = vmatpush1.msra.mxu0 %v894
    %1175 = vmatprep.subr.mxu0 %v891
    %1176 = vmatpush1.msra.mxu0 %v890
    %1177 = vmatprep.subr.mxu0 %v887
    %1178 = vmatpush1.msra.mxu0 %v886
    %1179 = vmatprep.subr.mxu0 %v883
    %1180 = vmatpush1.msra.mxu0 %v882
    %1181 = vmatprep.subr.mxu0 %v879
    %1182 = vmatpush1.msra.mxu0 %v878
    %1183 = vmatprep.subr.mxu0 %v1003
    %1184 = vmatpush2.msra.mxu0 %v1002
    %1185 = vmatprep.subr.mxu0 %v999
    %1186 = vmatpush2.msra.mxu0 %v998
    %1187 = vmatprep.subr.mxu0 %v995
    %1188 = vmatpush2.msra.mxu0 %v994
    %1189 = vmatprep.subr.mxu0 %v991
    %1190 = vmatpush2.msra.mxu0 %v990
    %1191 = vmatprep.subr.mxu0 %v987
    %1192 = vmatpush2.msra.mxu0 %v986
    %1193 = vmatprep.subr.mxu0 %v983
    %1194 = vmatpush2.msra.mxu0 %v982
    %1195 = vmatprep.subr.mxu0 %v979
    %1196 = vmatpush2.msra.mxu0 %v978
    %1197 = vmatprep.subr.mxu0 %v975
    %1198 = vmatpush2.msra.mxu0 %v974
    %1199 = vmatprep.subr.mxu0 %v971
    %1200 = vmatpush2.msra.mxu0 %v970
    %1201 = vmatprep.subr.mxu0 %v967
    %1202 = vmatpush2.msra.mxu0 %v966
    %1203 = vmatprep.subr.mxu0 %v963
    %1204 = vmatpush2.msra.mxu0 %v962
    %1205 = vmatprep.subr.mxu0 %v959
    %1206 = vmatpush2.msra.mxu0 %v958
    %1207 = vmatprep.subr.mxu0 %v955
    %1208 = vmatpush2.msra.mxu0 %v954
    %1209 = vmatprep.subr.mxu0 %v951
    %1210 = vmatpush2.msra.mxu0 %v950
    %1211 = vmatprep.subr.mxu0 %v947
    %1212 = vmatpush2.msra.mxu0 %v946
    %1213 = vmatprep.subr.mxu0 %v943
    %1214 = vmatpush2.msra.mxu0 %v942
    %1215 = vmatprep.mubr.f32.mxu0 %v1144
    %1216 = vmatmul.mubr.f32.gmra.mxu0 %v1143
    %v1217 = vpop.f32.mrf.mxu0
    %v1218 = vadd.f32 0.0, %v1217
    %v1219 = vpop.f32.mrf.mxu0
    %v1220 = vadd.f32 0.0, %v1219
    %1221 = vdwg.mxu0
    %1222 = vmatprep.subr.mxu0 %v1067
    %1223 = vmatpush1.msra.mxu0 %v1066
    %1224 = vmatprep.subr.mxu0 %v1063
    %1225 = vmatpush1.msra.mxu0 %v1062
    %1226 = vmatprep.subr.mxu0 %v1059
    %1227 = vmatpush1.msra.mxu0 %v1058
    %1228 = vmatprep.subr.mxu0 %v1055
    %1229 = vmatpush1.msra.mxu0 %v1054
    %1230 = vmatprep.subr.mxu0 %v1051
    %1231 = vmatpush1.msra.mxu0 %v1050
    %1232 = vmatprep.subr.mxu0 %v1047
    %1233 = vmatpush1.msra.mxu0 %v1046
    %1234 = vmatprep.subr.mxu0 %v1043
    %1235 = vmatpush1.msra.mxu0 %v1042
    %1236 = vmatprep.subr.mxu0 %v1039
    %1237 = vmatpush1.msra.mxu0 %v1038
    %1238 = vmatprep.subr.mxu0 %v1035
    %1239 = vmatpush1.msra.mxu0 %v1034
    %1240 = vmatprep.subr.mxu0 %v1031
    %1241 = vmatpush1.msra.mxu0 %v1030
    %1242 = vmatprep.subr.mxu0 %v1027
    %1243 = vmatpush1.msra.mxu0 %v1026
    %1244 = vmatprep.subr.mxu0 %v1023
    %1245 = vmatpush1.msra.mxu0 %v1022
    %1246 = vmatprep.subr.mxu0 %v1019
    %1247 = vmatpush1.msra.mxu0 %v1018
    %1248 = vmatprep.subr.mxu0 %v1015
    %1249 = vmatpush1.msra.mxu0 %v1014
    %1250 = vmatprep.subr.mxu0 %v1011
    %1251 = vmatpush1.msra.mxu0 %v1010
    %1252 = vmatprep.subr.mxu0 %v1007
    %1253 = vmatpush1.msra.mxu0 %v1006
    %1254 = vmatprep.subr.mxu0 %v1131
    %1255 = vmatpush2.msra.mxu0 %v1130
    %1256 = vmatprep.subr.mxu0 %v1127
    %1257 = vmatpush2.msra.mxu0 %v1126
    %1258 = vmatprep.subr.mxu0 %v1123
    %1259 = vmatpush2.msra.mxu0 %v1122
    %1260 = vmatprep.subr.mxu0 %v1119
    %1261 = vmatpush2.msra.mxu0 %v1118
    %1262 = vmatprep.subr.mxu0 %v1115
    %1263 = vmatpush2.msra.mxu0 %v1114
    %1264 = vmatprep.subr.mxu0 %v1111
    %1265 = vmatpush2.msra.mxu0 %v1110
    %1266 = vmatprep.subr.mxu0 %v1107
    %1267 = vmatpush2.msra.mxu0 %v1106
    %1268 = vmatprep.subr.mxu0 %v1103
    %1269 = vmatpush2.msra.mxu0 %v1102
    %1270 = vmatprep.subr.mxu0 %v1099
    %1271 = vmatpush2.msra.mxu0 %v1098
    %1272 = vmatprep.subr.mxu0 %v1095
    %1273 = vmatpush2.msra.mxu0 %v1094
    %1274 = vmatprep.subr.mxu0 %v1091
    %1275 = vmatpush2.msra.mxu0 %v1090
    %1276 = vmatprep.subr.mxu0 %v1087
    %1277 = vmatpush2.msra.mxu0 %v1086
    %1278 = vmatprep.subr.mxu0 %v1083
    %1279 = vmatpush2.msra.mxu0 %v1082
    %1280 = vmatprep.subr.mxu0 %v1079
    %1281 = vmatpush2.msra.mxu0 %v1078
    %1282 = vmatprep.subr.mxu0 %v1075
    %1283 = vmatpush2.msra.mxu0 %v1074
    %1284 = vmatprep.subr.mxu0 %v1071
    %1285 = vmatpush2.msra.mxu0 %v1070
    %1286 = vmatprep.mubr.f32.mxu0 %v1146
    %1287 = vmatmul.mubr.f32.gmra.mxu0 %v1145
    %v1288 = vpop.f32.mrf.mxu0
    %v1289 = vadd.f32 %v1218, %v1288
    %v1290 = vpop.f32.mrf.mxu0
    %v1291 = vadd.f32 %v1220, %v1290
    %1292 = vdwg.mxu0
    %1293 = vmatprep.subr.mxu0 %v941
    %1294 = vmatpush1.msra.mxu0 %v940
    %1295 = vmatprep.subr.mxu0 %v937
    %1296 = vmatpush1.msra.mxu0 %v936
    %1297 = vmatprep.subr.mxu0 %v933
    %1298 = vmatpush1.msra.mxu0 %v932
    %1299 = vmatprep.subr.mxu0 %v929
    %1300 = vmatpush1.msra.mxu0 %v928
    %1301 = vmatprep.subr.mxu0 %v925
    %1302 = vmatpush1.msra.mxu0 %v924
    %1303 = vmatprep.subr.mxu0 %v921
    %1304 = vmatpush1.msra.mxu0 %v920
    %1305 = vmatprep.subr.mxu0 %v917
    %1306 = vmatpush1.msra.mxu0 %v916
    %1307 = vmatprep.subr.mxu0 %v913
    %1308 = vmatpush1.msra.mxu0 %v912
    %1309 = vmatprep.subr.mxu0 %v909
    %1310 = vmatpush1.msra.mxu0 %v908
    %1311 = vmatprep.subr.mxu0 %v905
    %1312 = vmatpush1.msra.mxu0 %v904
    %1313 = vmatprep.subr.mxu0 %v901
    %1314 = vmatpush1.msra.mxu0 %v900
    %1315 = vmatprep.subr.mxu0 %v897
    %1316 = vmatpush1.msra.mxu0 %v896
    %1317 = vmatprep.subr.mxu0 %v893
    %1318 = vmatpush1.msra.mxu0 %v892
    %1319 = vmatprep.subr.mxu0 %v889
    %1320 = vmatpush1.msra.mxu0 %v888
    %1321 = vmatprep.subr.mxu0 %v885
    %1322 = vmatpush1.msra.mxu0 %v884
    %1323 = vmatprep.subr.mxu0 %v881
    %1324 = vmatpush1.msra.mxu0 %v880
    %1325 = vmatprep.subr.mxu0 %v1005
    %1326 = vmatpush2.msra.mxu0 %v1004
    %1327 = vmatprep.subr.mxu0 %v1001
    %1328 = vmatpush2.msra.mxu0 %v1000
    %1329 = vmatprep.subr.mxu0 %v997
    %1330 = vmatpush2.msra.mxu0 %v996
    %1331 = vmatprep.subr.mxu0 %v993
    %1332 = vmatpush2.msra.mxu0 %v992
    %1333 = vmatprep.subr.mxu0 %v989
    %1334 = vmatpush2.msra.mxu0 %v988
    %1335 = vmatprep.subr.mxu0 %v985
    %1336 = vmatpush2.msra.mxu0 %v984
    %1337 = vmatprep.subr.mxu0 %v981
    %1338 = vmatpush2.msra.mxu0 %v980
    %1339 = vmatprep.subr.mxu0 %v977
    %1340 = vmatpush2.msra.mxu0 %v976
    %1341 = vmatprep.subr.mxu0 %v973
    %1342 = vmatpush2.msra.mxu0 %v972
    %1343 = vmatprep.subr.mxu0 %v969
    %1344 = vmatpush2.msra.mxu0 %v968
    %1345 = vmatprep.subr.mxu0 %v965
    %1346 = vmatpush2.msra.mxu0 %v964
    %1347 = vmatprep.subr.mxu0 %v961
    %1348 = vmatpush2.msra.mxu0 %v960
    %1349 = vmatprep.subr.mxu0 %v957
    %1350 = vmatpush2.msra.mxu0 %v956
    %1351 = vmatprep.subr.mxu0 %v953
    %1352 = vmatpush2.msra.mxu0 %v952
    %1353 = vmatprep.subr.mxu0 %v949
    %1354 = vmatpush2.msra.mxu0 %v948
    %1355 = vmatprep.subr.mxu0 %v945
    %1356 = vmatpush2.msra.mxu0 %v944
    %1357 = vmatprep.mubr.f32.mxu0 %v1144
    %1358 = vmatmul.mubr.f32.gmra.mxu0 %v1143
    %v1359 = vpop.f32.mrf.mxu0
    %v1360 = vadd.f32 0.0, %v1359
    %v1361 = vpop.f32.mrf.mxu0
    %v1362 = vadd.f32 0.0, %v1361
    %1363 = vdwg.mxu0
    %1364 = vmatprep.subr.mxu0 %v1069
    %1365 = vmatpush1.msra.mxu0 %v1068
    %1366 = vmatprep.subr.mxu0 %v1065
    %1367 = vmatpush1.msra.mxu0 %v1064
    %1368 = vmatprep.subr.mxu0 %v1061
    %1369 = vmatpush1.msra.mxu0 %v1060
    %1370 = vmatprep.subr.mxu0 %v1057
    %1371 = vmatpush1.msra.mxu0 %v1056
    %1372 = vmatprep.subr.mxu0 %v1053
    %1373 = vmatpush1.msra.mxu0 %v1052
    %1374 = vmatprep.subr.mxu0 %v1049
    %1375 = vmatpush1.msra.mxu0 %v1048
    %1376 = vmatprep.subr.mxu0 %v1045
    %1377 = vmatpush1.msra.mxu0 %v1044
    %1378 = vmatprep.subr.mxu0 %v1041
    %1379 = vmatpush1.msra.mxu0 %v1040
    %1380 = vmatprep.subr.mxu0 %v1037
    %1381 = vmatpush1.msra.mxu0 %v1036
    %1382 = vmatprep.subr.mxu0 %v1033
    %1383 = vmatpush1.msra.mxu0 %v1032
    %1384 = vmatprep.subr.mxu0 %v1029
    %1385 = vmatpush1.msra.mxu0 %v1028
    %1386 = vmatprep.subr.mxu0 %v1025
    %1387 = vmatpush1.msra.mxu0 %v1024
    %1388 = vmatprep.subr.mxu0 %v1021
    %1389 = vmatpush1.msra.mxu0 %v1020
    %1390 = vmatprep.subr.mxu0 %v1017
    %1391 = vmatpush1.msra.mxu0 %v1016
    %1392 = vmatprep.subr.mxu0 %v1013
    %1393 = vmatpush1.msra.mxu0 %v1012
    %1394 = vmatprep.subr.mxu0 %v1009
    %1395 = vmatpush1.msra.mxu0 %v1008
    %1396 = vmatprep.subr.mxu0 %v1133
    %1397 = vmatpush2.msra.mxu0 %v1132
    %1398 = vmatprep.subr.mxu0 %v1129
    %1399 = vmatpush2.msra.mxu0 %v1128
    %1400 = vmatprep.subr.mxu0 %v1125
    %1401 = vmatpush2.msra.mxu0 %v1124
    %1402 = vmatprep.subr.mxu0 %v1121
    %1403 = vmatpush2.msra.mxu0 %v1120
    %1404 = vmatprep.subr.mxu0 %v1117
    %1405 = vmatpush2.msra.mxu0 %v1116
    %1406 = vmatprep.subr.mxu0 %v1113
    %1407 = vmatpush2.msra.mxu0 %v1112
    %1408 = vmatprep.subr.mxu0 %v1109
    %1409 = vmatpush2.msra.mxu0 %v1108
    %1410 = vmatprep.subr.mxu0 %v1105
    %1411 = vmatpush2.msra.mxu0 %v1104
    %1412 = vmatprep.subr.mxu0 %v1101
    %1413 = vmatpush2.msra.mxu0 %v1100
    %1414 = vmatprep.subr.mxu0 %v1097
    %1415 = vmatpush2.msra.mxu0 %v1096
    %1416 = vmatprep.subr.mxu0 %v1093
    %1417 = vmatpush2.msra.mxu0 %v1092
    %1418 = vmatprep.subr.mxu0 %v1089
    %1419 = vmatpush2.msra.mxu0 %v1088
    %1420 = vmatprep.subr.mxu0 %v1085
    %1421 = vmatpush2.msra.mxu0 %v1084
    %1422 = vmatprep.subr.mxu0 %v1081
    %1423 = vmatpush2.msra.mxu0 %v1080
    %1424 = vmatprep.subr.mxu0 %v1077
    %1425 = vmatpush2.msra.mxu0 %v1076
    %1426 = vmatprep.subr.mxu0 %v1073
    %1427 = vmatpush2.msra.mxu0 %v1072
    %1428 = vmatprep.mubr.f32.mxu0 %v1146
    %1429 = vmatmul.mubr.f32.gmra.mxu0 %v1145
    %v1430 = vpop.f32.mrf.mxu0
    %v1431 = vadd.f32 %v1360, %v1430
    %v1432 = vpop.f32.mrf.mxu0
    %v1433 = vadd.f32 %v1362, %v1432
    %1434 = vdwg.mxu0
    %v1439 = vcombine.low %v1289, %v1291
    %v1440 = vcombine.low %v1431, %v1433
    %v1442 = vunpack.c.l.s4 1966171168
    %v1443 = vunpack.c.0.s8 %v1442
    %v1444 = vlaneseq
    %v1445 = vshrl.u32 %v1444, 7
    %v1446 = vsub.s32 %v1443, %v1445
    %v1447 = vrot.slane %v1439, %v1446
    %v1449 = vunpack.c.l.s4 1966171168
    %v1450 = vunpack.c.0.s8 %v1449
    %v1451 = vlaneseq
    %v1452 = vshrl.u32 %v1451, 7
    %v1453 = vsub.s32 %v1450, %v1452
    %v1454 = vrot.slane %v1440, %v1453
    %v1455 = vcombine.low %v1447, %v1454
    %v1456 = vcombine.high %v1447, %v1454
    %v1458 = vunpack.c.l.s4 1966171168
    %v1459 = vunpack.c.0.s8 %v1458
    %v1460 = vlaneseq
    %v1461 = vshrl.u32 %v1460, 7
    %v1462 = vsub.s32 %v1459, %v1461
    %v1463 = vrot.slane %v1455, %v1462
    %v1465 = vunpack.c.l.s4 1966171168
    %v1466 = vunpack.c.0.s8 %v1465
    %v1467 = vlaneseq
    %v1468 = vshrl.u32 %v1467, 7
    %v1469 = vsub.s32 %v1466, %v1468
    %v1470 = vrot.slane %v1456, %v1469
    %v1471 = vlaneseq
    %v1472 = vshrl.u32 %v1471, 7
    %v1473 = vsub.s32 0, %v1472
    %v1474 = vrot.slane %v1463, %v1473
    %v1475 = vlaneseq
    %v1476 = vshrl.u32 %v1475, 7
    %v1477 = vsub.s32 1, %v1476
    %v1478 = vrot.slane %v1463, %v1477
    %v1479 = vlaneseq
    %v1480 = vshrl.u32 %v1479, 7
    %v1481 = vsub.s32 2, %v1480
    %v1482 = vrot.slane %v1463, %v1481
    %v1483 = vlaneseq
    %v1484 = vshrl.u32 %v1483, 7
    %v1485 = vsub.s32 3, %v1484
    %v1486 = vrot.slane %v1463, %v1485
    %v1487 = vlaneseq
    %v1488 = vshrl.u32 %v1487, 7
    %v1489 = vsub.s32 0, %v1488
    %v1490 = vrot.slane %v1470, %v1489
    %v1491 = vlaneseq
    %v1492 = vshrl.u32 %v1491, 7
    %v1493 = vsub.s32 1, %v1492
    %v1494 = vrot.slane %v1470, %v1493
    %v1495 = vlaneseq
    %v1496 = vshrl.u32 %v1495, 7
    %v1497 = vsub.s32 2, %v1496
    %v1498 = vrot.slane %v1470, %v1497
    %v1499 = vlaneseq
    %v1500 = vshrl.u32 %v1499, 7
    %v1501 = vsub.s32 3, %v1500
    %v1502 = vrot.slane %v1470, %v1501
    %v1511 = vadd.f32 %v1474, %v170
    %v1512 = vadd.f32 %v1478, %v172
    %v1513 = vadd.f32 %v1482, %v247
    %v1514 = vadd.f32 %v1486, %v249
    %v1515 = vadd.f32 %v1490, %v176
    %v1516 = vadd.f32 %v1494, %v178
    %v1517 = vadd.f32 %v1498, %v253
    %v1518 = vadd.f32 %v1502, %v255
    %v1519 = vadd.f32 %v1511, %v1512
    %v1520 = vadd.f32 %v1519, %v1513
    %v1521 = vadd.f32 %v1520, %v1514
    %1522 = vadd.xlane.f32.xlu0 %v1521
    %v1523 = vpop.xlane.xlu0 %1522
    %v1524 = vadd.f32 %v1515, %v1516
    %v1525 = vadd.f32 %v1524, %v1517
    %v1526 = vadd.f32 %v1525, %v1518
    %1527 = vadd.xlane.f32.xlu0 %v1526
    %v1528 = vpop.xlane.xlu0 %1527
    %v1529 = vrcp.pop 512.0
    %v1530 = vmul.f32 %v1523, %v1529
    %v1531 = vmul.f32 %v1528, %v1529
    %v1532 = vsub.f32 %v1511, %v1530
    %v1533 = vsub.f32 %v1512, %v1530
    %v1534 = vsub.f32 %v1513, %v1530
    %v1535 = vsub.f32 %v1514, %v1530
    %v1536 = vsub.f32 %v1515, %v1531
    %v1537 = vsub.f32 %v1516, %v1531
    %v1538 = vsub.f32 %v1517, %v1531
    %v1539 = vsub.f32 %v1518, %v1531
    %v1540 = vmul.f32 %v1532, %v1532
    %v1541 = vmul.f32 %v1533, %v1533
    %v1542 = vmul.f32 %v1534, %v1534
    %v1543 = vmul.f32 %v1535, %v1535
    %v1544 = vmul.f32 %v1536, %v1536
    %v1545 = vmul.f32 %v1537, %v1537
    %v1546 = vmul.f32 %v1538, %v1538
    %v1547 = vmul.f32 %v1539, %v1539
    %v1548 = vadd.f32 %v1540, %v1541
    %v1549 = vadd.f32 %v1548, %v1542
    %v1550 = vadd.f32 %v1549, %v1543
    %1551 = vadd.xlane.f32.xlu0 %v1550
    %v1552 = vpop.xlane.xlu0 %1551
    %v1553 = vadd.f32 %v1544, %v1545
    %v1554 = vadd.f32 %v1553, %v1546
    %v1555 = vadd.f32 %v1554, %v1547
    %1556 = vadd.xlane.f32.xlu0 %v1555
    %v1557 = vpop.xlane.xlu0 %1556
    %v1558 = vmul.f32 %v1552, %v1529
    %v1559 = vmul.f32 %v1557, %v1529
    %v1560 = vadd.f32 %v1558, 1e-05
    %v1561 = vadd.f32 %v1559, 1e-05
    %v1562 = vrsqrt.pop %v1560
    %v1563 = vrsqrt.pop %v1561
    %v1564 = vmul.f32 %v1532, %v1562
    %v1565 = vmul.f32 %v1533, %v1562
    %v1566 = vmul.f32 %v1534, %v1562
    %v1567 = vmul.f32 %v1535, %v1562
    %v1568 = vmul.f32 %v1536, %v1563
    %v1569 = vmul.f32 %v1537, %v1563
    %v1570 = vmul.f32 %v1538, %v1563
    %v1571 = vmul.f32 %v1539, %v1563
    %v1572 = vld [vmem:[#allocation7] sm:$0xff]
    %v1573 = vld [vmem:[#allocation7 + $0x8] sm:$0xff]
    %v1574 = vld [vmem:[#allocation7 + $0x10] sm:$0xff]
    %v1575 = vld [vmem:[#allocation7 + $0x18] sm:$0xff]
    %v1576 = vld [vmem:[#allocation7 + $0x20] sm:$0xff]
    %v1577 = vld [vmem:[#allocation7 + $0x28] sm:$0xff]
    %v1578 = vld [vmem:[#allocation7 + $0x30] sm:$0xff]
    %v1579 = vld [vmem:[#allocation7 + $0x38] sm:$0xff]
    %v1580 = vld [vmem:[#allocation7 + $0x40] sm:$0xff]
    %v1581 = vld [vmem:[#allocation7 + $0x48] sm:$0xff]
    %v1582 = vld [vmem:[#allocation7 + $0x50] sm:$0xff]
    %v1583 = vld [vmem:[#allocation7 + $0x58] sm:$0xff]
    %v1584 = vld [vmem:[#allocation7 + $0x60] sm:$0xff]
    %v1585 = vld [vmem:[#allocation7 + $0x68] sm:$0xff]
    %v1586 = vld [vmem:[#allocation7 + $0x70] sm:$0xff]
    %v1587 = vld [vmem:[#allocation7 + $0x78] sm:$0xff]
    %v1588 = vld [vmem:[#allocation7 + $0x80] sm:$0xff]
    %v1589 = vld [vmem:[#allocation7 + $0x88] sm:$0xff]
    %v1590 = vld [vmem:[#allocation7 + $0x90] sm:$0xff]
    %v1591 = vld [vmem:[#allocation7 + $0x98] sm:$0xff]
    %v1592 = vld [vmem:[#allocation7 + $0xa0] sm:$0xff]
    %v1593 = vld [vmem:[#allocation7 + $0xa8] sm:$0xff]
    %v1594 = vld [vmem:[#allocation7 + $0xb0] sm:$0xff]
    %v1595 = vld [vmem:[#allocation7 + $0xb8] sm:$0xff]
    %v1596 = vld [vmem:[#allocation7 + $0xc0] sm:$0xff]
    %v1597 = vld [vmem:[#allocation7 + $0xc8] sm:$0xff]
    %v1598 = vld [vmem:[#allocation7 + $0xd0] sm:$0xff]
    %v1599 = vld [vmem:[#allocation7 + $0xd8] sm:$0xff]
    %v1600 = vld [vmem:[#allocation7 + $0xe0] sm:$0xff]
    %v1601 = vld [vmem:[#allocation7 + $0xe8] sm:$0xff]
    %v1602 = vld [vmem:[#allocation7 + $0xf0] sm:$0xff]
    %v1603 = vld [vmem:[#allocation7 + $0xf8] sm:$0xff]
    %v1604 = vld [vmem:[#allocation7 + $0x100] sm:$0xff]
    %v1605 = vld [vmem:[#allocation7 + $0x108] sm:$0xff]
    %v1606 = vld [vmem:[#allocation7 + $0x110] sm:$0xff]
    %v1607 = vld [vmem:[#allocation7 + $0x118] sm:$0xff]
    %v1608 = vld [vmem:[#allocation7 + $0x120] sm:$0xff]
    %v1609 = vld [vmem:[#allocation7 + $0x128] sm:$0xff]
    %v1610 = vld [vmem:[#allocation7 + $0x130] sm:$0xff]
    %v1611 = vld [vmem:[#allocation7 + $0x138] sm:$0xff]
    %v1612 = vld [vmem:[#allocation7 + $0x140] sm:$0xff]
    %v1613 = vld [vmem:[#allocation7 + $0x148] sm:$0xff]
    %v1614 = vld [vmem:[#allocation7 + $0x150] sm:$0xff]
    %v1615 = vld [vmem:[#allocation7 + $0x158] sm:$0xff]
    %v1616 = vld [vmem:[#allocation7 + $0x160] sm:$0xff]
    %v1617 = vld [vmem:[#allocation7 + $0x168] sm:$0xff]
    %v1618 = vld [vmem:[#allocation7 + $0x170] sm:$0xff]
    %v1619 = vld [vmem:[#allocation7 + $0x178] sm:$0xff]
    %v1620 = vld [vmem:[#allocation7 + $0x180] sm:$0xff]
    %v1621 = vld [vmem:[#allocation7 + $0x188] sm:$0xff]
    %v1622 = vld [vmem:[#allocation7 + $0x190] sm:$0xff]
    %v1623 = vld [vmem:[#allocation7 + $0x198] sm:$0xff]
    %v1624 = vld [vmem:[#allocation7 + $0x1a0] sm:$0xff]
    %v1625 = vld [vmem:[#allocation7 + $0x1a8] sm:$0xff]
    %v1626 = vld [vmem:[#allocation7 + $0x1b0] sm:$0xff]
    %v1627 = vld [vmem:[#allocation7 + $0x1b8] sm:$0xff]
    %v1628 = vld [vmem:[#allocation7 + $0x1c0] sm:$0xff]
    %v1629 = vld [vmem:[#allocation7 + $0x1c8] sm:$0xff]
    %v1630 = vld [vmem:[#allocation7 + $0x1d0] sm:$0xff]
    %v1631 = vld [vmem:[#allocation7 + $0x1d8] sm:$0xff]
    %v1632 = vld [vmem:[#allocation7 + $0x1e0] sm:$0xff]
    %v1633 = vld [vmem:[#allocation7 + $0x1e8] sm:$0xff]
    %v1634 = vld [vmem:[#allocation7 + $0x1f0] sm:$0xff]
    %v1635 = vld [vmem:[#allocation7 + $0x1f8] sm:$0xff]
    %v1636 = vld [vmem:[#allocation7 + $0x200] sm:$0xff]
    %v1637 = vld [vmem:[#allocation7 + $0x208] sm:$0xff]
    %v1638 = vld [vmem:[#allocation7 + $0x210] sm:$0xff]
    %v1639 = vld [vmem:[#allocation7 + $0x218] sm:$0xff]
    %v1640 = vld [vmem:[#allocation7 + $0x220] sm:$0xff]
    %v1641 = vld [vmem:[#allocation7 + $0x228] sm:$0xff]
    %v1642 = vld [vmem:[#allocation7 + $0x230] sm:$0xff]
    %v1643 = vld [vmem:[#allocation7 + $0x238] sm:$0xff]
    %v1644 = vld [vmem:[#allocation7 + $0x240] sm:$0xff]
    %v1645 = vld [vmem:[#allocation7 + $0x248] sm:$0xff]
    %v1646 = vld [vmem:[#allocation7 + $0x250] sm:$0xff]
    %v1647 = vld [vmem:[#allocation7 + $0x258] sm:$0xff]
    %v1648 = vld [vmem:[#allocation7 + $0x260] sm:$0xff]
    %v1649 = vld [vmem:[#allocation7 + $0x268] sm:$0xff]
    %v1650 = vld [vmem:[#allocation7 + $0x270] sm:$0xff]
    %v1651 = vld [vmem:[#allocation7 + $0x278] sm:$0xff]
    %v1652 = vld [vmem:[#allocation7 + $0x280] sm:$0xff]
    %v1653 = vld [vmem:[#allocation7 + $0x288] sm:$0xff]
    %v1654 = vld [vmem:[#allocation7 + $0x290] sm:$0xff]
    %v1655 = vld [vmem:[#allocation7 + $0x298] sm:$0xff]
    %v1656 = vld [vmem:[#allocation7 + $0x2a0] sm:$0xff]
    %v1657 = vld [vmem:[#allocation7 + $0x2a8] sm:$0xff]
    %v1658 = vld [vmem:[#allocation7 + $0x2b0] sm:$0xff]
    %v1659 = vld [vmem:[#allocation7 + $0x2b8] sm:$0xff]
    %v1660 = vld [vmem:[#allocation7 + $0x2c0] sm:$0xff]
    %v1661 = vld [vmem:[#allocation7 + $0x2c8] sm:$0xff]
    %v1662 = vld [vmem:[#allocation7 + $0x2d0] sm:$0xff]
    %v1663 = vld [vmem:[#allocation7 + $0x2d8] sm:$0xff]
    %v1664 = vld [vmem:[#allocation7 + $0x2e0] sm:$0xff]
    %v1665 = vld [vmem:[#allocation7 + $0x2e8] sm:$0xff]
    %v1666 = vld [vmem:[#allocation7 + $0x2f0] sm:$0xff]
    %v1667 = vld [vmem:[#allocation7 + $0x2f8] sm:$0xff]
    %v1668 = vld [vmem:[#allocation7 + $0x300] sm:$0xff]
    %v1669 = vld [vmem:[#allocation7 + $0x308] sm:$0xff]
    %v1670 = vld [vmem:[#allocation7 + $0x310] sm:$0xff]
    %v1671 = vld [vmem:[#allocation7 + $0x318] sm:$0xff]
    %v1672 = vld [vmem:[#allocation7 + $0x320] sm:$0xff]
    %v1673 = vld [vmem:[#allocation7 + $0x328] sm:$0xff]
    %v1674 = vld [vmem:[#allocation7 + $0x330] sm:$0xff]
    %v1675 = vld [vmem:[#allocation7 + $0x338] sm:$0xff]
    %v1676 = vld [vmem:[#allocation7 + $0x340] sm:$0xff]
    %v1677 = vld [vmem:[#allocation7 + $0x348] sm:$0xff]
    %v1678 = vld [vmem:[#allocation7 + $0x350] sm:$0xff]
    %v1679 = vld [vmem:[#allocation7 + $0x358] sm:$0xff]
    %v1680 = vld [vmem:[#allocation7 + $0x360] sm:$0xff]
    %v1681 = vld [vmem:[#allocation7 + $0x368] sm:$0xff]
    %v1682 = vld [vmem:[#allocation7 + $0x370] sm:$0xff]
    %v1683 = vld [vmem:[#allocation7 + $0x378] sm:$0xff]
    %v1684 = vld [vmem:[#allocation7 + $0x380] sm:$0xff]
    %v1685 = vld [vmem:[#allocation7 + $0x388] sm:$0xff]
    %v1686 = vld [vmem:[#allocation7 + $0x390] sm:$0xff]
    %v1687 = vld [vmem:[#allocation7 + $0x398] sm:$0xff]
    %v1688 = vld [vmem:[#allocation7 + $0x3a0] sm:$0xff]
    %v1689 = vld [vmem:[#allocation7 + $0x3a8] sm:$0xff]
    %v1690 = vld [vmem:[#allocation7 + $0x3b0] sm:$0xff]
    %v1691 = vld [vmem:[#allocation7 + $0x3b8] sm:$0xff]
    %v1692 = vld [vmem:[#allocation7 + $0x3c0] sm:$0xff]
    %v1693 = vld [vmem:[#allocation7 + $0x3c8] sm:$0xff]
    %v1694 = vld [vmem:[#allocation7 + $0x3d0] sm:$0xff]
    %v1695 = vld [vmem:[#allocation7 + $0x3d8] sm:$0xff]
    %v1696 = vld [vmem:[#allocation7 + $0x3e0] sm:$0xff]
    %v1697 = vld [vmem:[#allocation7 + $0x3e8] sm:$0xff]
    %v1698 = vld [vmem:[#allocation7 + $0x3f0] sm:$0xff]
    %v1699 = vld [vmem:[#allocation7 + $0x3f8] sm:$0xff]
    %v1700 = vld [vmem:[#allocation7 + $0x400] sm:$0xff]
    %v1701 = vld [vmem:[#allocation7 + $0x408] sm:$0xff]
    %v1702 = vld [vmem:[#allocation7 + $0x410] sm:$0xff]
    %v1703 = vld [vmem:[#allocation7 + $0x418] sm:$0xff]
    %v1704 = vld [vmem:[#allocation7 + $0x420] sm:$0xff]
    %v1705 = vld [vmem:[#allocation7 + $0x428] sm:$0xff]
    %v1706 = vld [vmem:[#allocation7 + $0x430] sm:$0xff]
    %v1707 = vld [vmem:[#allocation7 + $0x438] sm:$0xff]
    %v1708 = vld [vmem:[#allocation7 + $0x440] sm:$0xff]
    %v1709 = vld [vmem:[#allocation7 + $0x448] sm:$0xff]
    %v1710 = vld [vmem:[#allocation7 + $0x450] sm:$0xff]
    %v1711 = vld [vmem:[#allocation7 + $0x458] sm:$0xff]
    %v1712 = vld [vmem:[#allocation7 + $0x460] sm:$0xff]
    %v1713 = vld [vmem:[#allocation7 + $0x468] sm:$0xff]
    %v1714 = vld [vmem:[#allocation7 + $0x470] sm:$0xff]
    %v1715 = vld [vmem:[#allocation7 + $0x478] sm:$0xff]
    %v1716 = vld [vmem:[#allocation7 + $0x480] sm:$0xff]
    %v1717 = vld [vmem:[#allocation7 + $0x488] sm:$0xff]
    %v1718 = vld [vmem:[#allocation7 + $0x490] sm:$0xff]
    %v1719 = vld [vmem:[#allocation7 + $0x498] sm:$0xff]
    %v1720 = vld [vmem:[#allocation7 + $0x4a0] sm:$0xff]
    %v1721 = vld [vmem:[#allocation7 + $0x4a8] sm:$0xff]
    %v1722 = vld [vmem:[#allocation7 + $0x4b0] sm:$0xff]
    %v1723 = vld [vmem:[#allocation7 + $0x4b8] sm:$0xff]
    %v1724 = vld [vmem:[#allocation7 + $0x4c0] sm:$0xff]
    %v1725 = vld [vmem:[#allocation7 + $0x4c8] sm:$0xff]
    %v1726 = vld [vmem:[#allocation7 + $0x4d0] sm:$0xff]
    %v1727 = vld [vmem:[#allocation7 + $0x4d8] sm:$0xff]
    %v1728 = vld [vmem:[#allocation7 + $0x4e0] sm:$0xff]
    %v1729 = vld [vmem:[#allocation7 + $0x4e8] sm:$0xff]
    %v1730 = vld [vmem:[#allocation7 + $0x4f0] sm:$0xff]
    %v1731 = vld [vmem:[#allocation7 + $0x4f8] sm:$0xff]
    %v1732 = vld [vmem:[#allocation7 + $0x500] sm:$0xff]
    %v1733 = vld [vmem:[#allocation7 + $0x508] sm:$0xff]
    %v1734 = vld [vmem:[#allocation7 + $0x510] sm:$0xff]
    %v1735 = vld [vmem:[#allocation7 + $0x518] sm:$0xff]
    %v1736 = vld [vmem:[#allocation7 + $0x520] sm:$0xff]
    %v1737 = vld [vmem:[#allocation7 + $0x528] sm:$0xff]
    %v1738 = vld [vmem:[#allocation7 + $0x530] sm:$0xff]
    %v1739 = vld [vmem:[#allocation7 + $0x538] sm:$0xff]
    %v1740 = vld [vmem:[#allocation7 + $0x540] sm:$0xff]
    %v1741 = vld [vmem:[#allocation7 + $0x548] sm:$0xff]
    %v1742 = vld [vmem:[#allocation7 + $0x550] sm:$0xff]
    %v1743 = vld [vmem:[#allocation7 + $0x558] sm:$0xff]
    %v1744 = vld [vmem:[#allocation7 + $0x560] sm:$0xff]
    %v1745 = vld [vmem:[#allocation7 + $0x568] sm:$0xff]
    %v1746 = vld [vmem:[#allocation7 + $0x570] sm:$0xff]
    %v1747 = vld [vmem:[#allocation7 + $0x578] sm:$0xff]
    %v1748 = vld [vmem:[#allocation7 + $0x580] sm:$0xff]
    %v1749 = vld [vmem:[#allocation7 + $0x588] sm:$0xff]
    %v1750 = vld [vmem:[#allocation7 + $0x590] sm:$0xff]
    %v1751 = vld [vmem:[#allocation7 + $0x598] sm:$0xff]
    %v1752 = vld [vmem:[#allocation7 + $0x5a0] sm:$0xff]
    %v1753 = vld [vmem:[#allocation7 + $0x5a8] sm:$0xff]
    %v1754 = vld [vmem:[#allocation7 + $0x5b0] sm:$0xff]
    %v1755 = vld [vmem:[#allocation7 + $0x5b8] sm:$0xff]
    %v1756 = vld [vmem:[#allocation7 + $0x5c0] sm:$0xff]
    %v1757 = vld [vmem:[#allocation7 + $0x5c8] sm:$0xff]
    %v1758 = vld [vmem:[#allocation7 + $0x5d0] sm:$0xff]
    %v1759 = vld [vmem:[#allocation7 + $0x5d8] sm:$0xff]
    %v1760 = vld [vmem:[#allocation7 + $0x5e0] sm:$0xff]
    %v1761 = vld [vmem:[#allocation7 + $0x5e8] sm:$0xff]
    %v1762 = vld [vmem:[#allocation7 + $0x5f0] sm:$0xff]
    %v1763 = vld [vmem:[#allocation7 + $0x5f8] sm:$0xff]
    %v1764 = vld [vmem:[#allocation7 + $0x600] sm:$0xff]
    %v1765 = vld [vmem:[#allocation7 + $0x608] sm:$0xff]
    %v1766 = vld [vmem:[#allocation7 + $0x610] sm:$0xff]
    %v1767 = vld [vmem:[#allocation7 + $0x618] sm:$0xff]
    %v1768 = vld [vmem:[#allocation7 + $0x620] sm:$0xff]
    %v1769 = vld [vmem:[#allocation7 + $0x628] sm:$0xff]
    %v1770 = vld [vmem:[#allocation7 + $0x630] sm:$0xff]
    %v1771 = vld [vmem:[#allocation7 + $0x638] sm:$0xff]
    %v1772 = vld [vmem:[#allocation7 + $0x640] sm:$0xff]
    %v1773 = vld [vmem:[#allocation7 + $0x648] sm:$0xff]
    %v1774 = vld [vmem:[#allocation7 + $0x650] sm:$0xff]
    %v1775 = vld [vmem:[#allocation7 + $0x658] sm:$0xff]
    %v1776 = vld [vmem:[#allocation7 + $0x660] sm:$0xff]
    %v1777 = vld [vmem:[#allocation7 + $0x668] sm:$0xff]
    %v1778 = vld [vmem:[#allocation7 + $0x670] sm:$0xff]
    %v1779 = vld [vmem:[#allocation7 + $0x678] sm:$0xff]
    %v1780 = vld [vmem:[#allocation7 + $0x680] sm:$0xff]
    %v1781 = vld [vmem:[#allocation7 + $0x688] sm:$0xff]
    %v1782 = vld [vmem:[#allocation7 + $0x690] sm:$0xff]
    %v1783 = vld [vmem:[#allocation7 + $0x698] sm:$0xff]
    %v1784 = vld [vmem:[#allocation7 + $0x6a0] sm:$0xff]
    %v1785 = vld [vmem:[#allocation7 + $0x6a8] sm:$0xff]
    %v1786 = vld [vmem:[#allocation7 + $0x6b0] sm:$0xff]
    %v1787 = vld [vmem:[#allocation7 + $0x6b8] sm:$0xff]
    %v1788 = vld [vmem:[#allocation7 + $0x6c0] sm:$0xff]
    %v1789 = vld [vmem:[#allocation7 + $0x6c8] sm:$0xff]
    %v1790 = vld [vmem:[#allocation7 + $0x6d0] sm:$0xff]
    %v1791 = vld [vmem:[#allocation7 + $0x6d8] sm:$0xff]
    %v1792 = vld [vmem:[#allocation7 + $0x6e0] sm:$0xff]
    %v1793 = vld [vmem:[#allocation7 + $0x6e8] sm:$0xff]
    %v1794 = vld [vmem:[#allocation7 + $0x6f0] sm:$0xff]
    %v1795 = vld [vmem:[#allocation7 + $0x6f8] sm:$0xff]
    %v1796 = vld [vmem:[#allocation7 + $0x700] sm:$0xff]
    %v1797 = vld [vmem:[#allocation7 + $0x708] sm:$0xff]
    %v1798 = vld [vmem:[#allocation7 + $0x710] sm:$0xff]
    %v1799 = vld [vmem:[#allocation7 + $0x718] sm:$0xff]
    %v1800 = vld [vmem:[#allocation7 + $0x720] sm:$0xff]
    %v1801 = vld [vmem:[#allocation7 + $0x728] sm:$0xff]
    %v1802 = vld [vmem:[#allocation7 + $0x730] sm:$0xff]
    %v1803 = vld [vmem:[#allocation7 + $0x738] sm:$0xff]
    %v1804 = vld [vmem:[#allocation7 + $0x740] sm:$0xff]
    %v1805 = vld [vmem:[#allocation7 + $0x748] sm:$0xff]
    %v1806 = vld [vmem:[#allocation7 + $0x750] sm:$0xff]
    %v1807 = vld [vmem:[#allocation7 + $0x758] sm:$0xff]
    %v1808 = vld [vmem:[#allocation7 + $0x760] sm:$0xff]
    %v1809 = vld [vmem:[#allocation7 + $0x768] sm:$0xff]
    %v1810 = vld [vmem:[#allocation7 + $0x770] sm:$0xff]
    %v1811 = vld [vmem:[#allocation7 + $0x778] sm:$0xff]
    %v1812 = vld [vmem:[#allocation7 + $0x780] sm:$0xff]
    %v1813 = vld [vmem:[#allocation7 + $0x788] sm:$0xff]
    %v1814 = vld [vmem:[#allocation7 + $0x790] sm:$0xff]
    %v1815 = vld [vmem:[#allocation7 + $0x798] sm:$0xff]
    %v1816 = vld [vmem:[#allocation7 + $0x7a0] sm:$0xff]
    %v1817 = vld [vmem:[#allocation7 + $0x7a8] sm:$0xff]
    %v1818 = vld [vmem:[#allocation7 + $0x7b0] sm:$0xff]
    %v1819 = vld [vmem:[#allocation7 + $0x7b8] sm:$0xff]
    %v1820 = vld [vmem:[#allocation7 + $0x7c0] sm:$0xff]
    %v1821 = vld [vmem:[#allocation7 + $0x7c8] sm:$0xff]
    %v1822 = vld [vmem:[#allocation7 + $0x7d0] sm:$0xff]
    %v1823 = vld [vmem:[#allocation7 + $0x7d8] sm:$0xff]
    %v1824 = vld [vmem:[#allocation7 + $0x7e0] sm:$0xff]
    %v1825 = vld [vmem:[#allocation7 + $0x7e8] sm:$0xff]
    %v1826 = vld [vmem:[#allocation7 + $0x7f0] sm:$0xff]
    %v1827 = vld [vmem:[#allocation7 + $0x7f8] sm:$0xff]
    %v1828 = vld [vmem:[#allocation7 + $0x800] sm:$0xff]
    %v1829 = vld [vmem:[#allocation7 + $0x808] sm:$0xff]
    %v1830 = vld [vmem:[#allocation7 + $0x810] sm:$0xff]
    %v1831 = vld [vmem:[#allocation7 + $0x818] sm:$0xff]
    %v1832 = vld [vmem:[#allocation7 + $0x820] sm:$0xff]
    %v1833 = vld [vmem:[#allocation7 + $0x828] sm:$0xff]
    %v1834 = vld [vmem:[#allocation7 + $0x830] sm:$0xff]
    %v1835 = vld [vmem:[#allocation7 + $0x838] sm:$0xff]
    %v1836 = vld [vmem:[#allocation7 + $0x840] sm:$0xff]
    %v1837 = vld [vmem:[#allocation7 + $0x848] sm:$0xff]
    %v1838 = vld [vmem:[#allocation7 + $0x850] sm:$0xff]
    %v1839 = vld [vmem:[#allocation7 + $0x858] sm:$0xff]
    %v1840 = vld [vmem:[#allocation7 + $0x860] sm:$0xff]
    %v1841 = vld [vmem:[#allocation7 + $0x868] sm:$0xff]
    %v1842 = vld [vmem:[#allocation7 + $0x870] sm:$0xff]
    %v1843 = vld [vmem:[#allocation7 + $0x878] sm:$0xff]
    %v1844 = vld [vmem:[#allocation7 + $0x880] sm:$0xff]
    %v1845 = vld [vmem:[#allocation7 + $0x888] sm:$0xff]
    %v1846 = vld [vmem:[#allocation7 + $0x890] sm:$0xff]
    %v1847 = vld [vmem:[#allocation7 + $0x898] sm:$0xff]
    %v1848 = vld [vmem:[#allocation7 + $0x8a0] sm:$0xff]
    %v1849 = vld [vmem:[#allocation7 + $0x8a8] sm:$0xff]
    %v1850 = vld [vmem:[#allocation7 + $0x8b0] sm:$0xff]
    %v1851 = vld [vmem:[#allocation7 + $0x8b8] sm:$0xff]
    %v1852 = vld [vmem:[#allocation7 + $0x8c0] sm:$0xff]
    %v1853 = vld [vmem:[#allocation7 + $0x8c8] sm:$0xff]
    %v1854 = vld [vmem:[#allocation7 + $0x8d0] sm:$0xff]
    %v1855 = vld [vmem:[#allocation7 + $0x8d8] sm:$0xff]
    %v1856 = vld [vmem:[#allocation7 + $0x8e0] sm:$0xff]
    %v1857 = vld [vmem:[#allocation7 + $0x8e8] sm:$0xff]
    %v1858 = vld [vmem:[#allocation7 + $0x8f0] sm:$0xff]
    %v1859 = vld [vmem:[#allocation7 + $0x8f8] sm:$0xff]
    %v1860 = vld [vmem:[#allocation7 + $0x900] sm:$0xff]
    %v1861 = vld [vmem:[#allocation7 + $0x908] sm:$0xff]
    %v1862 = vld [vmem:[#allocation7 + $0x910] sm:$0xff]
    %v1863 = vld [vmem:[#allocation7 + $0x918] sm:$0xff]
    %v1864 = vld [vmem:[#allocation7 + $0x920] sm:$0xff]
    %v1865 = vld [vmem:[#allocation7 + $0x928] sm:$0xff]
    %v1866 = vld [vmem:[#allocation7 + $0x930] sm:$0xff]
    %v1867 = vld [vmem:[#allocation7 + $0x938] sm:$0xff]
    %v1868 = vld [vmem:[#allocation7 + $0x940] sm:$0xff]
    %v1869 = vld [vmem:[#allocation7 + $0x948] sm:$0xff]
    %v1870 = vld [vmem:[#allocation7 + $0x950] sm:$0xff]
    %v1871 = vld [vmem:[#allocation7 + $0x958] sm:$0xff]
    %v1872 = vld [vmem:[#allocation7 + $0x960] sm:$0xff]
    %v1873 = vld [vmem:[#allocation7 + $0x968] sm:$0xff]
    %v1874 = vld [vmem:[#allocation7 + $0x970] sm:$0xff]
    %v1875 = vld [vmem:[#allocation7 + $0x978] sm:$0xff]
    %v1876 = vld [vmem:[#allocation7 + $0x980] sm:$0xff]
    %v1877 = vld [vmem:[#allocation7 + $0x988] sm:$0xff]
    %v1878 = vld [vmem:[#allocation7 + $0x990] sm:$0xff]
    %v1879 = vld [vmem:[#allocation7 + $0x998] sm:$0xff]
    %v1880 = vld [vmem:[#allocation7 + $0x9a0] sm:$0xff]
    %v1881 = vld [vmem:[#allocation7 + $0x9a8] sm:$0xff]
    %v1882 = vld [vmem:[#allocation7 + $0x9b0] sm:$0xff]
    %v1883 = vld [vmem:[#allocation7 + $0x9b8] sm:$0xff]
    %v1884 = vld [vmem:[#allocation7 + $0x9c0] sm:$0xff]
    %v1885 = vld [vmem:[#allocation7 + $0x9c8] sm:$0xff]
    %v1886 = vld [vmem:[#allocation7 + $0x9d0] sm:$0xff]
    %v1887 = vld [vmem:[#allocation7 + $0x9d8] sm:$0xff]
    %v1888 = vld [vmem:[#allocation7 + $0x9e0] sm:$0xff]
    %v1889 = vld [vmem:[#allocation7 + $0x9e8] sm:$0xff]
    %v1890 = vld [vmem:[#allocation7 + $0x9f0] sm:$0xff]
    %v1891 = vld [vmem:[#allocation7 + $0x9f8] sm:$0xff]
    %v1892 = vld [vmem:[#allocation7 + $0xa00] sm:$0xff]
    %v1893 = vld [vmem:[#allocation7 + $0xa08] sm:$0xff]
    %v1894 = vld [vmem:[#allocation7 + $0xa10] sm:$0xff]
    %v1895 = vld [vmem:[#allocation7 + $0xa18] sm:$0xff]
    %v1896 = vld [vmem:[#allocation7 + $0xa20] sm:$0xff]
    %v1897 = vld [vmem:[#allocation7 + $0xa28] sm:$0xff]
    %v1898 = vld [vmem:[#allocation7 + $0xa30] sm:$0xff]
    %v1899 = vld [vmem:[#allocation7 + $0xa38] sm:$0xff]
    %v1900 = vld [vmem:[#allocation7 + $0xa40] sm:$0xff]
    %v1901 = vld [vmem:[#allocation7 + $0xa48] sm:$0xff]
    %v1902 = vld [vmem:[#allocation7 + $0xa50] sm:$0xff]
    %v1903 = vld [vmem:[#allocation7 + $0xa58] sm:$0xff]
    %v1904 = vld [vmem:[#allocation7 + $0xa60] sm:$0xff]
    %v1905 = vld [vmem:[#allocation7 + $0xa68] sm:$0xff]
    %v1906 = vld [vmem:[#allocation7 + $0xa70] sm:$0xff]
    %v1907 = vld [vmem:[#allocation7 + $0xa78] sm:$0xff]
    %v1908 = vld [vmem:[#allocation7 + $0xa80] sm:$0xff]
    %v1909 = vld [vmem:[#allocation7 + $0xa88] sm:$0xff]
    %v1910 = vld [vmem:[#allocation7 + $0xa90] sm:$0xff]
    %v1911 = vld [vmem:[#allocation7 + $0xa98] sm:$0xff]
    %v1912 = vld [vmem:[#allocation7 + $0xaa0] sm:$0xff]
    %v1913 = vld [vmem:[#allocation7 + $0xaa8] sm:$0xff]
    %v1914 = vld [vmem:[#allocation7 + $0xab0] sm:$0xff]
    %v1915 = vld [vmem:[#allocation7 + $0xab8] sm:$0xff]
    %v1916 = vld [vmem:[#allocation7 + $0xac0] sm:$0xff]
    %v1917 = vld [vmem:[#allocation7 + $0xac8] sm:$0xff]
    %v1918 = vld [vmem:[#allocation7 + $0xad0] sm:$0xff]
    %v1919 = vld [vmem:[#allocation7 + $0xad8] sm:$0xff]
    %v1920 = vld [vmem:[#allocation7 + $0xae0] sm:$0xff]
    %v1921 = vld [vmem:[#allocation7 + $0xae8] sm:$0xff]
    %v1922 = vld [vmem:[#allocation7 + $0xaf0] sm:$0xff]
    %v1923 = vld [vmem:[#allocation7 + $0xaf8] sm:$0xff]
    %v1924 = vld [vmem:[#allocation7 + $0xb00] sm:$0xff]
    %v1925 = vld [vmem:[#allocation7 + $0xb08] sm:$0xff]
    %v1926 = vld [vmem:[#allocation7 + $0xb10] sm:$0xff]
    %v1927 = vld [vmem:[#allocation7 + $0xb18] sm:$0xff]
    %v1928 = vld [vmem:[#allocation7 + $0xb20] sm:$0xff]
    %v1929 = vld [vmem:[#allocation7 + $0xb28] sm:$0xff]
    %v1930 = vld [vmem:[#allocation7 + $0xb30] sm:$0xff]
    %v1931 = vld [vmem:[#allocation7 + $0xb38] sm:$0xff]
    %v1932 = vld [vmem:[#allocation7 + $0xb40] sm:$0xff]
    %v1933 = vld [vmem:[#allocation7 + $0xb48] sm:$0xff]
    %v1934 = vld [vmem:[#allocation7 + $0xb50] sm:$0xff]
    %v1935 = vld [vmem:[#allocation7 + $0xb58] sm:$0xff]
    %v1936 = vld [vmem:[#allocation7 + $0xb60] sm:$0xff]
    %v1937 = vld [vmem:[#allocation7 + $0xb68] sm:$0xff]
    %v1938 = vld [vmem:[#allocation7 + $0xb70] sm:$0xff]
    %v1939 = vld [vmem:[#allocation7 + $0xb78] sm:$0xff]
    %v1940 = vld [vmem:[#allocation7 + $0xb80] sm:$0xff]
    %v1941 = vld [vmem:[#allocation7 + $0xb88] sm:$0xff]
    %v1942 = vld [vmem:[#allocation7 + $0xb90] sm:$0xff]
    %v1943 = vld [vmem:[#allocation7 + $0xb98] sm:$0xff]
    %v1944 = vld [vmem:[#allocation7 + $0xba0] sm:$0xff]
    %v1945 = vld [vmem:[#allocation7 + $0xba8] sm:$0xff]
    %v1946 = vld [vmem:[#allocation7 + $0xbb0] sm:$0xff]
    %v1947 = vld [vmem:[#allocation7 + $0xbb8] sm:$0xff]
    %v1948 = vld [vmem:[#allocation7 + $0xbc0] sm:$0xff]
    %v1949 = vld [vmem:[#allocation7 + $0xbc8] sm:$0xff]
    %v1950 = vld [vmem:[#allocation7 + $0xbd0] sm:$0xff]
    %v1951 = vld [vmem:[#allocation7 + $0xbd8] sm:$0xff]
    %v1952 = vld [vmem:[#allocation7 + $0xbe0] sm:$0xff]
    %v1953 = vld [vmem:[#allocation7 + $0xbe8] sm:$0xff]
    %v1954 = vld [vmem:[#allocation7 + $0xbf0] sm:$0xff]
    %v1955 = vld [vmem:[#allocation7 + $0xbf8] sm:$0xff]
    %v1956 = vld [vmem:[#allocation7 + $0xc00] sm:$0xff]
    %v1957 = vld [vmem:[#allocation7 + $0xc08] sm:$0xff]
    %v1958 = vld [vmem:[#allocation7 + $0xc10] sm:$0xff]
    %v1959 = vld [vmem:[#allocation7 + $0xc18] sm:$0xff]
    %v1960 = vld [vmem:[#allocation7 + $0xc20] sm:$0xff]
    %v1961 = vld [vmem:[#allocation7 + $0xc28] sm:$0xff]
    %v1962 = vld [vmem:[#allocation7 + $0xc30] sm:$0xff]
    %v1963 = vld [vmem:[#allocation7 + $0xc38] sm:$0xff]
    %v1964 = vld [vmem:[#allocation7 + $0xc40] sm:$0xff]
    %v1965 = vld [vmem:[#allocation7 + $0xc48] sm:$0xff]
    %v1966 = vld [vmem:[#allocation7 + $0xc50] sm:$0xff]
    %v1967 = vld [vmem:[#allocation7 + $0xc58] sm:$0xff]
    %v1968 = vld [vmem:[#allocation7 + $0xc60] sm:$0xff]
    %v1969 = vld [vmem:[#allocation7 + $0xc68] sm:$0xff]
    %v1970 = vld [vmem:[#allocation7 + $0xc70] sm:$0xff]
    %v1971 = vld [vmem:[#allocation7 + $0xc78] sm:$0xff]
    %v1972 = vld [vmem:[#allocation7 + $0xc80] sm:$0xff]
    %v1973 = vld [vmem:[#allocation7 + $0xc88] sm:$0xff]
    %v1974 = vld [vmem:[#allocation7 + $0xc90] sm:$0xff]
    %v1975 = vld [vmem:[#allocation7 + $0xc98] sm:$0xff]
    %v1976 = vld [vmem:[#allocation7 + $0xca0] sm:$0xff]
    %v1977 = vld [vmem:[#allocation7 + $0xca8] sm:$0xff]
    %v1978 = vld [vmem:[#allocation7 + $0xcb0] sm:$0xff]
    %v1979 = vld [vmem:[#allocation7 + $0xcb8] sm:$0xff]
    %v1980 = vld [vmem:[#allocation7 + $0xcc0] sm:$0xff]
    %v1981 = vld [vmem:[#allocation7 + $0xcc8] sm:$0xff]
    %v1982 = vld [vmem:[#allocation7 + $0xcd0] sm:$0xff]
    %v1983 = vld [vmem:[#allocation7 + $0xcd8] sm:$0xff]
    %v1984 = vld [vmem:[#allocation7 + $0xce0] sm:$0xff]
    %v1985 = vld [vmem:[#allocation7 + $0xce8] sm:$0xff]
    %v1986 = vld [vmem:[#allocation7 + $0xcf0] sm:$0xff]
    %v1987 = vld [vmem:[#allocation7 + $0xcf8] sm:$0xff]
    %v1988 = vld [vmem:[#allocation7 + $0xd00] sm:$0xff]
    %v1989 = vld [vmem:[#allocation7 + $0xd08] sm:$0xff]
    %v1990 = vld [vmem:[#allocation7 + $0xd10] sm:$0xff]
    %v1991 = vld [vmem:[#allocation7 + $0xd18] sm:$0xff]
    %v1992 = vld [vmem:[#allocation7 + $0xd20] sm:$0xff]
    %v1993 = vld [vmem:[#allocation7 + $0xd28] sm:$0xff]
    %v1994 = vld [vmem:[#allocation7 + $0xd30] sm:$0xff]
    %v1995 = vld [vmem:[#allocation7 + $0xd38] sm:$0xff]
    %v1996 = vld [vmem:[#allocation7 + $0xd40] sm:$0xff]
    %v1997 = vld [vmem:[#allocation7 + $0xd48] sm:$0xff]
    %v1998 = vld [vmem:[#allocation7 + $0xd50] sm:$0xff]
    %v1999 = vld [vmem:[#allocation7 + $0xd58] sm:$0xff]
    %v2000 = vld [vmem:[#allocation7 + $0xd60] sm:$0xff]
    %v2001 = vld [vmem:[#allocation7 + $0xd68] sm:$0xff]
    %v2002 = vld [vmem:[#allocation7 + $0xd70] sm:$0xff]
    %v2003 = vld [vmem:[#allocation7 + $0xd78] sm:$0xff]
    %v2004 = vld [vmem:[#allocation7 + $0xd80] sm:$0xff]
    %v2005 = vld [vmem:[#allocation7 + $0xd88] sm:$0xff]
    %v2006 = vld [vmem:[#allocation7 + $0xd90] sm:$0xff]
    %v2007 = vld [vmem:[#allocation7 + $0xd98] sm:$0xff]
    %v2008 = vld [vmem:[#allocation7 + $0xda0] sm:$0xff]
    %v2009 = vld [vmem:[#allocation7 + $0xda8] sm:$0xff]
    %v2010 = vld [vmem:[#allocation7 + $0xdb0] sm:$0xff]
    %v2011 = vld [vmem:[#allocation7 + $0xdb8] sm:$0xff]
    %v2012 = vld [vmem:[#allocation7 + $0xdc0] sm:$0xff]
    %v2013 = vld [vmem:[#allocation7 + $0xdc8] sm:$0xff]
    %v2014 = vld [vmem:[#allocation7 + $0xdd0] sm:$0xff]
    %v2015 = vld [vmem:[#allocation7 + $0xdd8] sm:$0xff]
    %v2016 = vld [vmem:[#allocation7 + $0xde0] sm:$0xff]
    %v2017 = vld [vmem:[#allocation7 + $0xde8] sm:$0xff]
    %v2018 = vld [vmem:[#allocation7 + $0xdf0] sm:$0xff]
    %v2019 = vld [vmem:[#allocation7 + $0xdf8] sm:$0xff]
    %v2020 = vld [vmem:[#allocation7 + $0xe00] sm:$0xff]
    %v2021 = vld [vmem:[#allocation7 + $0xe08] sm:$0xff]
    %v2022 = vld [vmem:[#allocation7 + $0xe10] sm:$0xff]
    %v2023 = vld [vmem:[#allocation7 + $0xe18] sm:$0xff]
    %v2024 = vld [vmem:[#allocation7 + $0xe20] sm:$0xff]
    %v2025 = vld [vmem:[#allocation7 + $0xe28] sm:$0xff]
    %v2026 = vld [vmem:[#allocation7 + $0xe30] sm:$0xff]
    %v2027 = vld [vmem:[#allocation7 + $0xe38] sm:$0xff]
    %v2028 = vld [vmem:[#allocation7 + $0xe40] sm:$0xff]
    %v2029 = vld [vmem:[#allocation7 + $0xe48] sm:$0xff]
    %v2030 = vld [vmem:[#allocation7 + $0xe50] sm:$0xff]
    %v2031 = vld [vmem:[#allocation7 + $0xe58] sm:$0xff]
    %v2032 = vld [vmem:[#allocation7 + $0xe60] sm:$0xff]
    %v2033 = vld [vmem:[#allocation7 + $0xe68] sm:$0xff]
    %v2034 = vld [vmem:[#allocation7 + $0xe70] sm:$0xff]
    %v2035 = vld [vmem:[#allocation7 + $0xe78] sm:$0xff]
    %v2036 = vld [vmem:[#allocation7 + $0xe80] sm:$0xff]
    %v2037 = vld [vmem:[#allocation7 + $0xe88] sm:$0xff]
    %v2038 = vld [vmem:[#allocation7 + $0xe90] sm:$0xff]
    %v2039 = vld [vmem:[#allocation7 + $0xe98] sm:$0xff]
    %v2040 = vld [vmem:[#allocation7 + $0xea0] sm:$0xff]
    %v2041 = vld [vmem:[#allocation7 + $0xea8] sm:$0xff]
    %v2042 = vld [vmem:[#allocation7 + $0xeb0] sm:$0xff]
    %v2043 = vld [vmem:[#allocation7 + $0xeb8] sm:$0xff]
    %v2044 = vld [vmem:[#allocation7 + $0xec0] sm:$0xff]
    %v2045 = vld [vmem:[#allocation7 + $0xec8] sm:$0xff]
    %v2046 = vld [vmem:[#allocation7 + $0xed0] sm:$0xff]
    %v2047 = vld [vmem:[#allocation7 + $0xed8] sm:$0xff]
    %v2048 = vld [vmem:[#allocation7 + $0xee0] sm:$0xff]
    %v2049 = vld [vmem:[#allocation7 + $0xee8] sm:$0xff]
    %v2050 = vld [vmem:[#allocation7 + $0xef0] sm:$0xff]
    %v2051 = vld [vmem:[#allocation7 + $0xef8] sm:$0xff]
    %v2052 = vld [vmem:[#allocation7 + $0xf00] sm:$0xff]
    %v2053 = vld [vmem:[#allocation7 + $0xf08] sm:$0xff]
    %v2054 = vld [vmem:[#allocation7 + $0xf10] sm:$0xff]
    %v2055 = vld [vmem:[#allocation7 + $0xf18] sm:$0xff]
    %v2056 = vld [vmem:[#allocation7 + $0xf20] sm:$0xff]
    %v2057 = vld [vmem:[#allocation7 + $0xf28] sm:$0xff]
    %v2058 = vld [vmem:[#allocation7 + $0xf30] sm:$0xff]
    %v2059 = vld [vmem:[#allocation7 + $0xf38] sm:$0xff]
    %v2060 = vld [vmem:[#allocation7 + $0xf40] sm:$0xff]
    %v2061 = vld [vmem:[#allocation7 + $0xf48] sm:$0xff]
    %v2062 = vld [vmem:[#allocation7 + $0xf50] sm:$0xff]
    %v2063 = vld [vmem:[#allocation7 + $0xf58] sm:$0xff]
    %v2064 = vld [vmem:[#allocation7 + $0xf60] sm:$0xff]
    %v2065 = vld [vmem:[#allocation7 + $0xf68] sm:$0xff]
    %v2066 = vld [vmem:[#allocation7 + $0xf70] sm:$0xff]
    %v2067 = vld [vmem:[#allocation7 + $0xf78] sm:$0xff]
    %v2068 = vld [vmem:[#allocation7 + $0xf80] sm:$0xff]
    %v2069 = vld [vmem:[#allocation7 + $0xf88] sm:$0xff]
    %v2070 = vld [vmem:[#allocation7 + $0xf90] sm:$0xff]
    %v2071 = vld [vmem:[#allocation7 + $0xf98] sm:$0xff]
    %v2072 = vld [vmem:[#allocation7 + $0xfa0] sm:$0xff]
    %v2073 = vld [vmem:[#allocation7 + $0xfa8] sm:$0xff]
    %v2074 = vld [vmem:[#allocation7 + $0xfb0] sm:$0xff]
    %v2075 = vld [vmem:[#allocation7 + $0xfb8] sm:$0xff]
    %v2076 = vld [vmem:[#allocation7 + $0xfc0] sm:$0xff]
    %v2077 = vld [vmem:[#allocation7 + $0xfc8] sm:$0xff]
    %v2078 = vld [vmem:[#allocation7 + $0xfd0] sm:$0xff]
    %v2079 = vld [vmem:[#allocation7 + $0xfd8] sm:$0xff]
    %v2080 = vld [vmem:[#allocation7 + $0xfe0] sm:$0xff]
    %v2081 = vld [vmem:[#allocation7 + $0xfe8] sm:$0xff]
    %v2082 = vld [vmem:[#allocation7 + $0xff0] sm:$0xff]
    %v2083 = vld [vmem:[#allocation7 + $0xff8] sm:$0xff]
    %v2084 = vld [vmem:[#allocation7 + $0x1000] sm:$0xff]
    %v2085 = vld [vmem:[#allocation7 + $0x1008] sm:$0xff]
    %v2086 = vld [vmem:[#allocation7 + $0x1010] sm:$0xff]
    %v2087 = vld [vmem:[#allocation7 + $0x1018] sm:$0xff]
    %v2088 = vld [vmem:[#allocation7 + $0x1020] sm:$0xff]
    %v2089 = vld [vmem:[#allocation7 + $0x1028] sm:$0xff]
    %v2090 = vld [vmem:[#allocation7 + $0x1030] sm:$0xff]
    %v2091 = vld [vmem:[#allocation7 + $0x1038] sm:$0xff]
    %v2092 = vld [vmem:[#allocation7 + $0x1040] sm:$0xff]
    %v2093 = vld [vmem:[#allocation7 + $0x1048] sm:$0xff]
    %v2094 = vld [vmem:[#allocation7 + $0x1050] sm:$0xff]
    %v2095 = vld [vmem:[#allocation7 + $0x1058] sm:$0xff]
    %v2096 = vld [vmem:[#allocation7 + $0x1060] sm:$0xff]
    %v2097 = vld [vmem:[#allocation7 + $0x1068] sm:$0xff]
    %v2098 = vld [vmem:[#allocation7 + $0x1070] sm:$0xff]
    %v2099 = vld [vmem:[#allocation7 + $0x1078] sm:$0xff]
    %v2100 = vld [vmem:[#allocation7 + $0x1080] sm:$0xff]
    %v2101 = vld [vmem:[#allocation7 + $0x1088] sm:$0xff]
    %v2102 = vld [vmem:[#allocation7 + $0x1090] sm:$0xff]
    %v2103 = vld [vmem:[#allocation7 + $0x1098] sm:$0xff]
    %v2104 = vld [vmem:[#allocation7 + $0x10a0] sm:$0xff]
    %v2105 = vld [vmem:[#allocation7 + $0x10a8] sm:$0xff]
    %v2106 = vld [vmem:[#allocation7 + $0x10b0] sm:$0xff]
    %v2107 = vld [vmem:[#allocation7 + $0x10b8] sm:$0xff]
    %v2108 = vld [vmem:[#allocation7 + $0x10c0] sm:$0xff]
    %v2109 = vld [vmem:[#allocation7 + $0x10c8] sm:$0xff]
    %v2110 = vld [vmem:[#allocation7 + $0x10d0] sm:$0xff]
    %v2111 = vld [vmem:[#allocation7 + $0x10d8] sm:$0xff]
    %v2112 = vld [vmem:[#allocation7 + $0x10e0] sm:$0xff]
    %v2113 = vld [vmem:[#allocation7 + $0x10e8] sm:$0xff]
    %v2114 = vld [vmem:[#allocation7 + $0x10f0] sm:$0xff]
    %v2115 = vld [vmem:[#allocation7 + $0x10f8] sm:$0xff]
    %v2116 = vld [vmem:[#allocation7 + $0x1100] sm:$0xff]
    %v2117 = vld [vmem:[#allocation7 + $0x1108] sm:$0xff]
    %v2118 = vld [vmem:[#allocation7 + $0x1110] sm:$0xff]
    %v2119 = vld [vmem:[#allocation7 + $0x1118] sm:$0xff]
    %v2120 = vld [vmem:[#allocation7 + $0x1120] sm:$0xff]
    %v2121 = vld [vmem:[#allocation7 + $0x1128] sm:$0xff]
    %v2122 = vld [vmem:[#allocation7 + $0x1130] sm:$0xff]
    %v2123 = vld [vmem:[#allocation7 + $0x1138] sm:$0xff]
    %v2124 = vld [vmem:[#allocation7 + $0x1140] sm:$0xff]
    %v2125 = vld [vmem:[#allocation7 + $0x1148] sm:$0xff]
    %v2126 = vld [vmem:[#allocation7 + $0x1150] sm:$0xff]
    %v2127 = vld [vmem:[#allocation7 + $0x1158] sm:$0xff]
    %v2128 = vld [vmem:[#allocation7 + $0x1160] sm:$0xff]
    %v2129 = vld [vmem:[#allocation7 + $0x1168] sm:$0xff]
    %v2130 = vld [vmem:[#allocation7 + $0x1170] sm:$0xff]
    %v2131 = vld [vmem:[#allocation7 + $0x1178] sm:$0xff]
    %v2132 = vld [vmem:[#allocation7 + $0x1180] sm:$0xff]
    %v2133 = vld [vmem:[#allocation7 + $0x1188] sm:$0xff]
    %v2134 = vld [vmem:[#allocation7 + $0x1190] sm:$0xff]
    %v2135 = vld [vmem:[#allocation7 + $0x1198] sm:$0xff]
    %v2136 = vld [vmem:[#allocation7 + $0x11a0] sm:$0xff]
    %v2137 = vld [vmem:[#allocation7 + $0x11a8] sm:$0xff]
    %v2138 = vld [vmem:[#allocation7 + $0x11b0] sm:$0xff]
    %v2139 = vld [vmem:[#allocation7 + $0x11b8] sm:$0xff]
    %v2140 = vld [vmem:[#allocation7 + $0x11c0] sm:$0xff]
    %v2141 = vld [vmem:[#allocation7 + $0x11c8] sm:$0xff]
    %v2142 = vld [vmem:[#allocation7 + $0x11d0] sm:$0xff]
    %v2143 = vld [vmem:[#allocation7 + $0x11d8] sm:$0xff]
    %v2144 = vld [vmem:[#allocation7 + $0x11e0] sm:$0xff]
    %v2145 = vld [vmem:[#allocation7 + $0x11e8] sm:$0xff]
    %v2146 = vld [vmem:[#allocation7 + $0x11f0] sm:$0xff]
    %v2147 = vld [vmem:[#allocation7 + $0x11f8] sm:$0xff]
    %v2148 = vld [vmem:[#allocation7 + $0x1200] sm:$0xff]
    %v2149 = vld [vmem:[#allocation7 + $0x1208] sm:$0xff]
    %v2150 = vld [vmem:[#allocation7 + $0x1210] sm:$0xff]
    %v2151 = vld [vmem:[#allocation7 + $0x1218] sm:$0xff]
    %v2152 = vld [vmem:[#allocation7 + $0x1220] sm:$0xff]
    %v2153 = vld [vmem:[#allocation7 + $0x1228] sm:$0xff]
    %v2154 = vld [vmem:[#allocation7 + $0x1230] sm:$0xff]
    %v2155 = vld [vmem:[#allocation7 + $0x1238] sm:$0xff]
    %v2156 = vld [vmem:[#allocation7 + $0x1240] sm:$0xff]
    %v2157 = vld [vmem:[#allocation7 + $0x1248] sm:$0xff]
    %v2158 = vld [vmem:[#allocation7 + $0x1250] sm:$0xff]
    %v2159 = vld [vmem:[#allocation7 + $0x1258] sm:$0xff]
    %v2160 = vld [vmem:[#allocation7 + $0x1260] sm:$0xff]
    %v2161 = vld [vmem:[#allocation7 + $0x1268] sm:$0xff]
    %v2162 = vld [vmem:[#allocation7 + $0x1270] sm:$0xff]
    %v2163 = vld [vmem:[#allocation7 + $0x1278] sm:$0xff]
    %v2164 = vld [vmem:[#allocation7 + $0x1280] sm:$0xff]
    %v2165 = vld [vmem:[#allocation7 + $0x1288] sm:$0xff]
    %v2166 = vld [vmem:[#allocation7 + $0x1290] sm:$0xff]
    %v2167 = vld [vmem:[#allocation7 + $0x1298] sm:$0xff]
    %v2168 = vld [vmem:[#allocation7 + $0x12a0] sm:$0xff]
    %v2169 = vld [vmem:[#allocation7 + $0x12a8] sm:$0xff]
    %v2170 = vld [vmem:[#allocation7 + $0x12b0] sm:$0xff]
    %v2171 = vld [vmem:[#allocation7 + $0x12b8] sm:$0xff]
    %v2172 = vld [vmem:[#allocation7 + $0x12c0] sm:$0xff]
    %v2173 = vld [vmem:[#allocation7 + $0x12c8] sm:$0xff]
    %v2174 = vld [vmem:[#allocation7 + $0x12d0] sm:$0xff]
    %v2175 = vld [vmem:[#allocation7 + $0x12d8] sm:$0xff]
    %v2176 = vld [vmem:[#allocation7 + $0x12e0] sm:$0xff]
    %v2177 = vld [vmem:[#allocation7 + $0x12e8] sm:$0xff]
    %v2178 = vld [vmem:[#allocation7 + $0x12f0] sm:$0xff]
    %v2179 = vld [vmem:[#allocation7 + $0x12f8] sm:$0xff]
    %v2180 = vld [vmem:[#allocation7 + $0x1300] sm:$0xff]
    %v2181 = vld [vmem:[#allocation7 + $0x1308] sm:$0xff]
    %v2182 = vld [vmem:[#allocation7 + $0x1310] sm:$0xff]
    %v2183 = vld [vmem:[#allocation7 + $0x1318] sm:$0xff]
    %v2184 = vld [vmem:[#allocation7 + $0x1320] sm:$0xff]
    %v2185 = vld [vmem:[#allocation7 + $0x1328] sm:$0xff]
    %v2186 = vld [vmem:[#allocation7 + $0x1330] sm:$0xff]
    %v2187 = vld [vmem:[#allocation7 + $0x1338] sm:$0xff]
    %v2188 = vld [vmem:[#allocation7 + $0x1340] sm:$0xff]
    %v2189 = vld [vmem:[#allocation7 + $0x1348] sm:$0xff]
    %v2190 = vld [vmem:[#allocation7 + $0x1350] sm:$0xff]
    %v2191 = vld [vmem:[#allocation7 + $0x1358] sm:$0xff]
    %v2192 = vld [vmem:[#allocation7 + $0x1360] sm:$0xff]
    %v2193 = vld [vmem:[#allocation7 + $0x1368] sm:$0xff]
    %v2194 = vld [vmem:[#allocation7 + $0x1370] sm:$0xff]
    %v2195 = vld [vmem:[#allocation7 + $0x1378] sm:$0xff]
    %v2196 = vld [vmem:[#allocation7 + $0x1380] sm:$0xff]
    %v2197 = vld [vmem:[#allocation7 + $0x1388] sm:$0xff]
    %v2198 = vld [vmem:[#allocation7 + $0x1390] sm:$0xff]
    %v2199 = vld [vmem:[#allocation7 + $0x1398] sm:$0xff]
    %v2200 = vld [vmem:[#allocation7 + $0x13a0] sm:$0xff]
    %v2201 = vld [vmem:[#allocation7 + $0x13a8] sm:$0xff]
    %v2202 = vld [vmem:[#allocation7 + $0x13b0] sm:$0xff]
    %v2203 = vld [vmem:[#allocation7 + $0x13b8] sm:$0xff]
    %v2204 = vld [vmem:[#allocation7 + $0x13c0] sm:$0xff]
    %v2205 = vld [vmem:[#allocation7 + $0x13c8] sm:$0xff]
    %v2206 = vld [vmem:[#allocation7 + $0x13d0] sm:$0xff]
    %v2207 = vld [vmem:[#allocation7 + $0x13d8] sm:$0xff]
    %v2208 = vld [vmem:[#allocation7 + $0x13e0] sm:$0xff]
    %v2209 = vld [vmem:[#allocation7 + $0x13e8] sm:$0xff]
    %v2210 = vld [vmem:[#allocation7 + $0x13f0] sm:$0xff]
    %v2211 = vld [vmem:[#allocation7 + $0x13f8] sm:$0xff]
    %v2212 = vld [vmem:[#allocation7 + $0x1400] sm:$0xff]
    %v2213 = vld [vmem:[#allocation7 + $0x1408] sm:$0xff]
    %v2214 = vld [vmem:[#allocation7 + $0x1410] sm:$0xff]
    %v2215 = vld [vmem:[#allocation7 + $0x1418] sm:$0xff]
    %v2216 = vld [vmem:[#allocation7 + $0x1420] sm:$0xff]
    %v2217 = vld [vmem:[#allocation7 + $0x1428] sm:$0xff]
    %v2218 = vld [vmem:[#allocation7 + $0x1430] sm:$0xff]
    %v2219 = vld [vmem:[#allocation7 + $0x1438] sm:$0xff]
    %v2220 = vld [vmem:[#allocation7 + $0x1440] sm:$0xff]
    %v2221 = vld [vmem:[#allocation7 + $0x1448] sm:$0xff]
    %v2222 = vld [vmem:[#allocation7 + $0x1450] sm:$0xff]
    %v2223 = vld [vmem:[#allocation7 + $0x1458] sm:$0xff]
    %v2224 = vld [vmem:[#allocation7 + $0x1460] sm:$0xff]
    %v2225 = vld [vmem:[#allocation7 + $0x1468] sm:$0xff]
    %v2226 = vld [vmem:[#allocation7 + $0x1470] sm:$0xff]
    %v2227 = vld [vmem:[#allocation7 + $0x1478] sm:$0xff]
    %v2228 = vld [vmem:[#allocation7 + $0x1480] sm:$0xff]
    %v2229 = vld [vmem:[#allocation7 + $0x1488] sm:$0xff]
    %v2230 = vld [vmem:[#allocation7 + $0x1490] sm:$0xff]
    %v2231 = vld [vmem:[#allocation7 + $0x1498] sm:$0xff]
    %v2232 = vld [vmem:[#allocation7 + $0x14a0] sm:$0xff]
    %v2233 = vld [vmem:[#allocation7 + $0x14a8] sm:$0xff]
    %v2234 = vld [vmem:[#allocation7 + $0x14b0] sm:$0xff]
    %v2235 = vld [vmem:[#allocation7 + $0x14b8] sm:$0xff]
    %v2236 = vld [vmem:[#allocation7 + $0x14c0] sm:$0xff]
    %v2237 = vld [vmem:[#allocation7 + $0x14c8] sm:$0xff]
    %v2238 = vld [vmem:[#allocation7 + $0x14d0] sm:$0xff]
    %v2239 = vld [vmem:[#allocation7 + $0x14d8] sm:$0xff]
    %v2240 = vld [vmem:[#allocation7 + $0x14e0] sm:$0xff]
    %v2241 = vld [vmem:[#allocation7 + $0x14e8] sm:$0xff]
    %v2242 = vld [vmem:[#allocation7 + $0x14f0] sm:$0xff]
    %v2243 = vld [vmem:[#allocation7 + $0x14f8] sm:$0xff]
    %v2244 = vld [vmem:[#allocation7 + $0x1500] sm:$0xff]
    %v2245 = vld [vmem:[#allocation7 + $0x1508] sm:$0xff]
    %v2246 = vld [vmem:[#allocation7 + $0x1510] sm:$0xff]
    %v2247 = vld [vmem:[#allocation7 + $0x1518] sm:$0xff]
    %v2248 = vld [vmem:[#allocation7 + $0x1520] sm:$0xff]
    %v2249 = vld [vmem:[#allocation7 + $0x1528] sm:$0xff]
    %v2250 = vld [vmem:[#allocation7 + $0x1530] sm:$0xff]
    %v2251 = vld [vmem:[#allocation7 + $0x1538] sm:$0xff]
    %v2252 = vld [vmem:[#allocation7 + $0x1540] sm:$0xff]
    %v2253 = vld [vmem:[#allocation7 + $0x1548] sm:$0xff]
    %v2254 = vld [vmem:[#allocation7 + $0x1550] sm:$0xff]
    %v2255 = vld [vmem:[#allocation7 + $0x1558] sm:$0xff]
    %v2256 = vld [vmem:[#allocation7 + $0x1560] sm:$0xff]
    %v2257 = vld [vmem:[#allocation7 + $0x1568] sm:$0xff]
    %v2258 = vld [vmem:[#allocation7 + $0x1570] sm:$0xff]
    %v2259 = vld [vmem:[#allocation7 + $0x1578] sm:$0xff]
    %v2260 = vld [vmem:[#allocation7 + $0x1580] sm:$0xff]
    %v2261 = vld [vmem:[#allocation7 + $0x1588] sm:$0xff]
    %v2262 = vld [vmem:[#allocation7 + $0x1590] sm:$0xff]
    %v2263 = vld [vmem:[#allocation7 + $0x1598] sm:$0xff]
    %v2264 = vld [vmem:[#allocation7 + $0x15a0] sm:$0xff]
    %v2265 = vld [vmem:[#allocation7 + $0x15a8] sm:$0xff]
    %v2266 = vld [vmem:[#allocation7 + $0x15b0] sm:$0xff]
    %v2267 = vld [vmem:[#allocation7 + $0x15b8] sm:$0xff]
    %v2268 = vld [vmem:[#allocation7 + $0x15c0] sm:$0xff]
    %v2269 = vld [vmem:[#allocation7 + $0x15c8] sm:$0xff]
    %v2270 = vld [vmem:[#allocation7 + $0x15d0] sm:$0xff]
    %v2271 = vld [vmem:[#allocation7 + $0x15d8] sm:$0xff]
    %v2272 = vld [vmem:[#allocation7 + $0x15e0] sm:$0xff]
    %v2273 = vld [vmem:[#allocation7 + $0x15e8] sm:$0xff]
    %v2274 = vld [vmem:[#allocation7 + $0x15f0] sm:$0xff]
    %v2275 = vld [vmem:[#allocation7 + $0x15f8] sm:$0xff]
    %v2276 = vld [vmem:[#allocation7 + $0x1600] sm:$0xff]
    %v2277 = vld [vmem:[#allocation7 + $0x1608] sm:$0xff]
    %v2278 = vld [vmem:[#allocation7 + $0x1610] sm:$0xff]
    %v2279 = vld [vmem:[#allocation7 + $0x1618] sm:$0xff]
    %v2280 = vld [vmem:[#allocation7 + $0x1620] sm:$0xff]
    %v2281 = vld [vmem:[#allocation7 + $0x1628] sm:$0xff]
    %v2282 = vld [vmem:[#allocation7 + $0x1630] sm:$0xff]
    %v2283 = vld [vmem:[#allocation7 + $0x1638] sm:$0xff]
    %v2284 = vld [vmem:[#allocation7 + $0x1640] sm:$0xff]
    %v2285 = vld [vmem:[#allocation7 + $0x1648] sm:$0xff]
    %v2286 = vld [vmem:[#allocation7 + $0x1650] sm:$0xff]
    %v2287 = vld [vmem:[#allocation7 + $0x1658] sm:$0xff]
    %v2288 = vld [vmem:[#allocation7 + $0x1660] sm:$0xff]
    %v2289 = vld [vmem:[#allocation7 + $0x1668] sm:$0xff]
    %v2290 = vld [vmem:[#allocation7 + $0x1670] sm:$0xff]
    %v2291 = vld [vmem:[#allocation7 + $0x1678] sm:$0xff]
    %v2292 = vld [vmem:[#allocation7 + $0x1680] sm:$0xff]
    %v2293 = vld [vmem:[#allocation7 + $0x1688] sm:$0xff]
    %v2294 = vld [vmem:[#allocation7 + $0x1690] sm:$0xff]
    %v2295 = vld [vmem:[#allocation7 + $0x1698] sm:$0xff]
    %v2296 = vld [vmem:[#allocation7 + $0x16a0] sm:$0xff]
    %v2297 = vld [vmem:[#allocation7 + $0x16a8] sm:$0xff]
    %v2298 = vld [vmem:[#allocation7 + $0x16b0] sm:$0xff]
    %v2299 = vld [vmem:[#allocation7 + $0x16b8] sm:$0xff]
    %v2300 = vld [vmem:[#allocation7 + $0x16c0] sm:$0xff]
    %v2301 = vld [vmem:[#allocation7 + $0x16c8] sm:$0xff]
    %v2302 = vld [vmem:[#allocation7 + $0x16d0] sm:$0xff]
    %v2303 = vld [vmem:[#allocation7 + $0x16d8] sm:$0xff]
    %v2304 = vld [vmem:[#allocation7 + $0x16e0] sm:$0xff]
    %v2305 = vld [vmem:[#allocation7 + $0x16e8] sm:$0xff]
    %v2306 = vld [vmem:[#allocation7 + $0x16f0] sm:$0xff]
    %v2307 = vld [vmem:[#allocation7 + $0x16f8] sm:$0xff]
    %v2308 = vld [vmem:[#allocation7 + $0x1700] sm:$0xff]
    %v2309 = vld [vmem:[#allocation7 + $0x1708] sm:$0xff]
    %v2310 = vld [vmem:[#allocation7 + $0x1710] sm:$0xff]
    %v2311 = vld [vmem:[#allocation7 + $0x1718] sm:$0xff]
    %v2312 = vld [vmem:[#allocation7 + $0x1720] sm:$0xff]
    %v2313 = vld [vmem:[#allocation7 + $0x1728] sm:$0xff]
    %v2314 = vld [vmem:[#allocation7 + $0x1730] sm:$0xff]
    %v2315 = vld [vmem:[#allocation7 + $0x1738] sm:$0xff]
    %v2316 = vld [vmem:[#allocation7 + $0x1740] sm:$0xff]
    %v2317 = vld [vmem:[#allocation7 + $0x1748] sm:$0xff]
    %v2318 = vld [vmem:[#allocation7 + $0x1750] sm:$0xff]
    %v2319 = vld [vmem:[#allocation7 + $0x1758] sm:$0xff]
    %v2320 = vld [vmem:[#allocation7 + $0x1760] sm:$0xff]
    %v2321 = vld [vmem:[#allocation7 + $0x1768] sm:$0xff]
    %v2322 = vld [vmem:[#allocation7 + $0x1770] sm:$0xff]
    %v2323 = vld [vmem:[#allocation7 + $0x1778] sm:$0xff]
    %v2324 = vld [vmem:[#allocation7 + $0x1780] sm:$0xff]
    %v2325 = vld [vmem:[#allocation7 + $0x1788] sm:$0xff]
    %v2326 = vld [vmem:[#allocation7 + $0x1790] sm:$0xff]
    %v2327 = vld [vmem:[#allocation7 + $0x1798] sm:$0xff]
    %v2328 = vld [vmem:[#allocation7 + $0x17a0] sm:$0xff]
    %v2329 = vld [vmem:[#allocation7 + $0x17a8] sm:$0xff]
    %v2330 = vld [vmem:[#allocation7 + $0x17b0] sm:$0xff]
    %v2331 = vld [vmem:[#allocation7 + $0x17b8] sm:$0xff]
    %v2332 = vld [vmem:[#allocation7 + $0x17c0] sm:$0xff]
    %v2333 = vld [vmem:[#allocation7 + $0x17c8] sm:$0xff]
    %v2334 = vld [vmem:[#allocation7 + $0x17d0] sm:$0xff]
    %v2335 = vld [vmem:[#allocation7 + $0x17d8] sm:$0xff]
    %v2336 = vld [vmem:[#allocation7 + $0x17e0] sm:$0xff]
    %v2337 = vld [vmem:[#allocation7 + $0x17e8] sm:$0xff]
    %v2338 = vld [vmem:[#allocation7 + $0x17f0] sm:$0xff]
    %v2339 = vld [vmem:[#allocation7 + $0x17f8] sm:$0xff]
    %v2340 = vld [vmem:[#allocation7 + $0x1800] sm:$0xff]
    %v2341 = vld [vmem:[#allocation7 + $0x1808] sm:$0xff]
    %v2342 = vld [vmem:[#allocation7 + $0x1810] sm:$0xff]
    %v2343 = vld [vmem:[#allocation7 + $0x1818] sm:$0xff]
    %v2344 = vld [vmem:[#allocation7 + $0x1820] sm:$0xff]
    %v2345 = vld [vmem:[#allocation7 + $0x1828] sm:$0xff]
    %v2346 = vld [vmem:[#allocation7 + $0x1830] sm:$0xff]
    %v2347 = vld [vmem:[#allocation7 + $0x1838] sm:$0xff]
    %v2348 = vld [vmem:[#allocation7 + $0x1840] sm:$0xff]
    %v2349 = vld [vmem:[#allocation7 + $0x1848] sm:$0xff]
    %v2350 = vld [vmem:[#allocation7 + $0x1850] sm:$0xff]
    %v2351 = vld [vmem:[#allocation7 + $0x1858] sm:$0xff]
    %v2352 = vld [vmem:[#allocation7 + $0x1860] sm:$0xff]
    %v2353 = vld [vmem:[#allocation7 + $0x1868] sm:$0xff]
    %v2354 = vld [vmem:[#allocation7 + $0x1870] sm:$0xff]
    %v2355 = vld [vmem:[#allocation7 + $0x1878] sm:$0xff]
    %v2356 = vld [vmem:[#allocation7 + $0x1880] sm:$0xff]
    %v2357 = vld [vmem:[#allocation7 + $0x1888] sm:$0xff]
    %v2358 = vld [vmem:[#allocation7 + $0x1890] sm:$0xff]
    %v2359 = vld [vmem:[#allocation7 + $0x1898] sm:$0xff]
    %v2360 = vld [vmem:[#allocation7 + $0x18a0] sm:$0xff]
    %v2361 = vld [vmem:[#allocation7 + $0x18a8] sm:$0xff]
    %v2362 = vld [vmem:[#allocation7 + $0x18b0] sm:$0xff]
    %v2363 = vld [vmem:[#allocation7 + $0x18b8] sm:$0xff]
    %v2364 = vld [vmem:[#allocation7 + $0x18c0] sm:$0xff]
    %v2365 = vld [vmem:[#allocation7 + $0x18c8] sm:$0xff]
    %v2366 = vld [vmem:[#allocation7 + $0x18d0] sm:$0xff]
    %v2367 = vld [vmem:[#allocation7 + $0x18d8] sm:$0xff]
    %v2368 = vld [vmem:[#allocation7 + $0x18e0] sm:$0xff]
    %v2369 = vld [vmem:[#allocation7 + $0x18e8] sm:$0xff]
    %v2370 = vld [vmem:[#allocation7 + $0x18f0] sm:$0xff]
    %v2371 = vld [vmem:[#allocation7 + $0x18f8] sm:$0xff]
    %v2372 = vld [vmem:[#allocation7 + $0x1900] sm:$0xff]
    %v2373 = vld [vmem:[#allocation7 + $0x1908] sm:$0xff]
    %v2374 = vld [vmem:[#allocation7 + $0x1910] sm:$0xff]
    %v2375 = vld [vmem:[#allocation7 + $0x1918] sm:$0xff]
    %v2376 = vld [vmem:[#allocation7 + $0x1920] sm:$0xff]
    %v2377 = vld [vmem:[#allocation7 + $0x1928] sm:$0xff]
    %v2378 = vld [vmem:[#allocation7 + $0x1930] sm:$0xff]
    %v2379 = vld [vmem:[#allocation7 + $0x1938] sm:$0xff]
    %v2380 = vld [vmem:[#allocation7 + $0x1940] sm:$0xff]
    %v2381 = vld [vmem:[#allocation7 + $0x1948] sm:$0xff]
    %v2382 = vld [vmem:[#allocation7 + $0x1950] sm:$0xff]
    %v2383 = vld [vmem:[#allocation7 + $0x1958] sm:$0xff]
    %v2384 = vld [vmem:[#allocation7 + $0x1960] sm:$0xff]
    %v2385 = vld [vmem:[#allocation7 + $0x1968] sm:$0xff]
    %v2386 = vld [vmem:[#allocation7 + $0x1970] sm:$0xff]
    %v2387 = vld [vmem:[#allocation7 + $0x1978] sm:$0xff]
    %v2388 = vld [vmem:[#allocation7 + $0x1980] sm:$0xff]
    %v2389 = vld [vmem:[#allocation7 + $0x1988] sm:$0xff]
    %v2390 = vld [vmem:[#allocation7 + $0x1990] sm:$0xff]
    %v2391 = vld [vmem:[#allocation7 + $0x1998] sm:$0xff]
    %v2392 = vld [vmem:[#allocation7 + $0x19a0] sm:$0xff]
    %v2393 = vld [vmem:[#allocation7 + $0x19a8] sm:$0xff]
    %v2394 = vld [vmem:[#allocation7 + $0x19b0] sm:$0xff]
    %v2395 = vld [vmem:[#allocation7 + $0x19b8] sm:$0xff]
    %v2396 = vld [vmem:[#allocation7 + $0x19c0] sm:$0xff]
    %v2397 = vld [vmem:[#allocation7 + $0x19c8] sm:$0xff]
    %v2398 = vld [vmem:[#allocation7 + $0x19d0] sm:$0xff]
    %v2399 = vld [vmem:[#allocation7 + $0x19d8] sm:$0xff]
    %v2400 = vld [vmem:[#allocation7 + $0x19e0] sm:$0xff]
    %v2401 = vld [vmem:[#allocation7 + $0x19e8] sm:$0xff]
    %v2402 = vld [vmem:[#allocation7 + $0x19f0] sm:$0xff]
    %v2403 = vld [vmem:[#allocation7 + $0x19f8] sm:$0xff]
    %v2404 = vld [vmem:[#allocation7 + $0x1a00] sm:$0xff]
    %v2405 = vld [vmem:[#allocation7 + $0x1a08] sm:$0xff]
    %v2406 = vld [vmem:[#allocation7 + $0x1a10] sm:$0xff]
    %v2407 = vld [vmem:[#allocation7 + $0x1a18] sm:$0xff]
    %v2408 = vld [vmem:[#allocation7 + $0x1a20] sm:$0xff]
    %v2409 = vld [vmem:[#allocation7 + $0x1a28] sm:$0xff]
    %v2410 = vld [vmem:[#allocation7 + $0x1a30] sm:$0xff]
    %v2411 = vld [vmem:[#allocation7 + $0x1a38] sm:$0xff]
    %v2412 = vld [vmem:[#allocation7 + $0x1a40] sm:$0xff]
    %v2413 = vld [vmem:[#allocation7 + $0x1a48] sm:$0xff]
    %v2414 = vld [vmem:[#allocation7 + $0x1a50] sm:$0xff]
    %v2415 = vld [vmem:[#allocation7 + $0x1a58] sm:$0xff]
    %v2416 = vld [vmem:[#allocation7 + $0x1a60] sm:$0xff]
    %v2417 = vld [vmem:[#allocation7 + $0x1a68] sm:$0xff]
    %v2418 = vld [vmem:[#allocation7 + $0x1a70] sm:$0xff]
    %v2419 = vld [vmem:[#allocation7 + $0x1a78] sm:$0xff]
    %v2420 = vld [vmem:[#allocation7 + $0x1a80] sm:$0xff]
    %v2421 = vld [vmem:[#allocation7 + $0x1a88] sm:$0xff]
    %v2422 = vld [vmem:[#allocation7 + $0x1a90] sm:$0xff]
    %v2423 = vld [vmem:[#allocation7 + $0x1a98] sm:$0xff]
    %v2424 = vld [vmem:[#allocation7 + $0x1aa0] sm:$0xff]
    %v2425 = vld [vmem:[#allocation7 + $0x1aa8] sm:$0xff]
    %v2426 = vld [vmem:[#allocation7 + $0x1ab0] sm:$0xff]
    %v2427 = vld [vmem:[#allocation7 + $0x1ab8] sm:$0xff]
    %v2428 = vld [vmem:[#allocation7 + $0x1ac0] sm:$0xff]
    %v2429 = vld [vmem:[#allocation7 + $0x1ac8] sm:$0xff]
    %v2430 = vld [vmem:[#allocation7 + $0x1ad0] sm:$0xff]
    %v2431 = vld [vmem:[#allocation7 + $0x1ad8] sm:$0xff]
    %v2432 = vld [vmem:[#allocation7 + $0x1ae0] sm:$0xff]
    %v2433 = vld [vmem:[#allocation7 + $0x1ae8] sm:$0xff]
    %v2434 = vld [vmem:[#allocation7 + $0x1af0] sm:$0xff]
    %v2435 = vld [vmem:[#allocation7 + $0x1af8] sm:$0xff]
    %v2436 = vld [vmem:[#allocation7 + $0x1b00] sm:$0xff]
    %v2437 = vld [vmem:[#allocation7 + $0x1b08] sm:$0xff]
    %v2438 = vld [vmem:[#allocation7 + $0x1b10] sm:$0xff]
    %v2439 = vld [vmem:[#allocation7 + $0x1b18] sm:$0xff]
    %v2440 = vld [vmem:[#allocation7 + $0x1b20] sm:$0xff]
    %v2441 = vld [vmem:[#allocation7 + $0x1b28] sm:$0xff]
    %v2442 = vld [vmem:[#allocation7 + $0x1b30] sm:$0xff]
    %v2443 = vld [vmem:[#allocation7 + $0x1b38] sm:$0xff]
    %v2444 = vld [vmem:[#allocation7 + $0x1b40] sm:$0xff]
    %v2445 = vld [vmem:[#allocation7 + $0x1b48] sm:$0xff]
    %v2446 = vld [vmem:[#allocation7 + $0x1b50] sm:$0xff]
    %v2447 = vld [vmem:[#allocation7 + $0x1b58] sm:$0xff]
    %v2448 = vld [vmem:[#allocation7 + $0x1b60] sm:$0xff]
    %v2449 = vld [vmem:[#allocation7 + $0x1b68] sm:$0xff]
    %v2450 = vld [vmem:[#allocation7 + $0x1b70] sm:$0xff]
    %v2451 = vld [vmem:[#allocation7 + $0x1b78] sm:$0xff]
    %v2452 = vld [vmem:[#allocation7 + $0x1b80] sm:$0xff]
    %v2453 = vld [vmem:[#allocation7 + $0x1b88] sm:$0xff]
    %v2454 = vld [vmem:[#allocation7 + $0x1b90] sm:$0xff]
    %v2455 = vld [vmem:[#allocation7 + $0x1b98] sm:$0xff]
    %v2456 = vld [vmem:[#allocation7 + $0x1ba0] sm:$0xff]
    %v2457 = vld [vmem:[#allocation7 + $0x1ba8] sm:$0xff]
    %v2458 = vld [vmem:[#allocation7 + $0x1bb0] sm:$0xff]
    %v2459 = vld [vmem:[#allocation7 + $0x1bb8] sm:$0xff]
    %v2460 = vld [vmem:[#allocation7 + $0x1bc0] sm:$0xff]
    %v2461 = vld [vmem:[#allocation7 + $0x1bc8] sm:$0xff]
    %v2462 = vld [vmem:[#allocation7 + $0x1bd0] sm:$0xff]
    %v2463 = vld [vmem:[#allocation7 + $0x1bd8] sm:$0xff]
    %v2464 = vld [vmem:[#allocation7 + $0x1be0] sm:$0xff]
    %v2465 = vld [vmem:[#allocation7 + $0x1be8] sm:$0xff]
    %v2466 = vld [vmem:[#allocation7 + $0x1bf0] sm:$0xff]
    %v2467 = vld [vmem:[#allocation7 + $0x1bf8] sm:$0xff]
    %v2468 = vld [vmem:[#allocation7 + $0x1c00] sm:$0xff]
    %v2469 = vld [vmem:[#allocation7 + $0x1c08] sm:$0xff]
    %v2470 = vld [vmem:[#allocation7 + $0x1c10] sm:$0xff]
    %v2471 = vld [vmem:[#allocation7 + $0x1c18] sm:$0xff]
    %v2472 = vld [vmem:[#allocation7 + $0x1c20] sm:$0xff]
    %v2473 = vld [vmem:[#allocation7 + $0x1c28] sm:$0xff]
    %v2474 = vld [vmem:[#allocation7 + $0x1c30] sm:$0xff]
    %v2475 = vld [vmem:[#allocation7 + $0x1c38] sm:$0xff]
    %v2476 = vld [vmem:[#allocation7 + $0x1c40] sm:$0xff]
    %v2477 = vld [vmem:[#allocation7 + $0x1c48] sm:$0xff]
    %v2478 = vld [vmem:[#allocation7 + $0x1c50] sm:$0xff]
    %v2479 = vld [vmem:[#allocation7 + $0x1c58] sm:$0xff]
    %v2480 = vld [vmem:[#allocation7 + $0x1c60] sm:$0xff]
    %v2481 = vld [vmem:[#allocation7 + $0x1c68] sm:$0xff]
    %v2482 = vld [vmem:[#allocation7 + $0x1c70] sm:$0xff]
    %v2483 = vld [vmem:[#allocation7 + $0x1c78] sm:$0xff]
    %v2484 = vld [vmem:[#allocation7 + $0x1c80] sm:$0xff]
    %v2485 = vld [vmem:[#allocation7 + $0x1c88] sm:$0xff]
    %v2486 = vld [vmem:[#allocation7 + $0x1c90] sm:$0xff]
    %v2487 = vld [vmem:[#allocation7 + $0x1c98] sm:$0xff]
    %v2488 = vld [vmem:[#allocation7 + $0x1ca0] sm:$0xff]
    %v2489 = vld [vmem:[#allocation7 + $0x1ca8] sm:$0xff]
    %v2490 = vld [vmem:[#allocation7 + $0x1cb0] sm:$0xff]
    %v2491 = vld [vmem:[#allocation7 + $0x1cb8] sm:$0xff]
    %v2492 = vld [vmem:[#allocation7 + $0x1cc0] sm:$0xff]
    %v2493 = vld [vmem:[#allocation7 + $0x1cc8] sm:$0xff]
    %v2494 = vld [vmem:[#allocation7 + $0x1cd0] sm:$0xff]
    %v2495 = vld [vmem:[#allocation7 + $0x1cd8] sm:$0xff]
    %v2496 = vld [vmem:[#allocation7 + $0x1ce0] sm:$0xff]
    %v2497 = vld [vmem:[#allocation7 + $0x1ce8] sm:$0xff]
    %v2498 = vld [vmem:[#allocation7 + $0x1cf0] sm:$0xff]
    %v2499 = vld [vmem:[#allocation7 + $0x1cf8] sm:$0xff]
    %v2500 = vld [vmem:[#allocation7 + $0x1d00] sm:$0xff]
    %v2501 = vld [vmem:[#allocation7 + $0x1d08] sm:$0xff]
    %v2502 = vld [vmem:[#allocation7 + $0x1d10] sm:$0xff]
    %v2503 = vld [vmem:[#allocation7 + $0x1d18] sm:$0xff]
    %v2504 = vld [vmem:[#allocation7 + $0x1d20] sm:$0xff]
    %v2505 = vld [vmem:[#allocation7 + $0x1d28] sm:$0xff]
    %v2506 = vld [vmem:[#allocation7 + $0x1d30] sm:$0xff]
    %v2507 = vld [vmem:[#allocation7 + $0x1d38] sm:$0xff]
    %v2508 = vld [vmem:[#allocation7 + $0x1d40] sm:$0xff]
    %v2509 = vld [vmem:[#allocation7 + $0x1d48] sm:$0xff]
    %v2510 = vld [vmem:[#allocation7 + $0x1d50] sm:$0xff]
    %v2511 = vld [vmem:[#allocation7 + $0x1d58] sm:$0xff]
    %v2512 = vld [vmem:[#allocation7 + $0x1d60] sm:$0xff]
    %v2513 = vld [vmem:[#allocation7 + $0x1d68] sm:$0xff]
    %v2514 = vld [vmem:[#allocation7 + $0x1d70] sm:$0xff]
    %v2515 = vld [vmem:[#allocation7 + $0x1d78] sm:$0xff]
    %v2516 = vld [vmem:[#allocation7 + $0x1d80] sm:$0xff]
    %v2517 = vld [vmem:[#allocation7 + $0x1d88] sm:$0xff]
    %v2518 = vld [vmem:[#allocation7 + $0x1d90] sm:$0xff]
    %v2519 = vld [vmem:[#allocation7 + $0x1d98] sm:$0xff]
    %v2520 = vld [vmem:[#allocation7 + $0x1da0] sm:$0xff]
    %v2521 = vld [vmem:[#allocation7 + $0x1da8] sm:$0xff]
    %v2522 = vld [vmem:[#allocation7 + $0x1db0] sm:$0xff]
    %v2523 = vld [vmem:[#allocation7 + $0x1db8] sm:$0xff]
    %v2524 = vld [vmem:[#allocation7 + $0x1dc0] sm:$0xff]
    %v2525 = vld [vmem:[#allocation7 + $0x1dc8] sm:$0xff]
    %v2526 = vld [vmem:[#allocation7 + $0x1dd0] sm:$0xff]
    %v2527 = vld [vmem:[#allocation7 + $0x1dd8] sm:$0xff]
    %v2528 = vld [vmem:[#allocation7 + $0x1de0] sm:$0xff]
    %v2529 = vld [vmem:[#allocation7 + $0x1de8] sm:$0xff]
    %v2530 = vld [vmem:[#allocation7 + $0x1df0] sm:$0xff]
    %v2531 = vld [vmem:[#allocation7 + $0x1df8] sm:$0xff]
    %v2532 = vld [vmem:[#allocation7 + $0x1e00] sm:$0xff]
    %v2533 = vld [vmem:[#allocation7 + $0x1e08] sm:$0xff]
    %v2534 = vld [vmem:[#allocation7 + $0x1e10] sm:$0xff]
    %v2535 = vld [vmem:[#allocation7 + $0x1e18] sm:$0xff]
    %v2536 = vld [vmem:[#allocation7 + $0x1e20] sm:$0xff]
    %v2537 = vld [vmem:[#allocation7 + $0x1e28] sm:$0xff]
    %v2538 = vld [vmem:[#allocation7 + $0x1e30] sm:$0xff]
    %v2539 = vld [vmem:[#allocation7 + $0x1e38] sm:$0xff]
    %v2540 = vld [vmem:[#allocation7 + $0x1e40] sm:$0xff]
    %v2541 = vld [vmem:[#allocation7 + $0x1e48] sm:$0xff]
    %v2542 = vld [vmem:[#allocation7 + $0x1e50] sm:$0xff]
    %v2543 = vld [vmem:[#allocation7 + $0x1e58] sm:$0xff]
    %v2544 = vld [vmem:[#allocation7 + $0x1e60] sm:$0xff]
    %v2545 = vld [vmem:[#allocation7 + $0x1e68] sm:$0xff]
    %v2546 = vld [vmem:[#allocation7 + $0x1e70] sm:$0xff]
    %v2547 = vld [vmem:[#allocation7 + $0x1e78] sm:$0xff]
    %v2548 = vld [vmem:[#allocation7 + $0x1e80] sm:$0xff]
    %v2549 = vld [vmem:[#allocation7 + $0x1e88] sm:$0xff]
    %v2550 = vld [vmem:[#allocation7 + $0x1e90] sm:$0xff]
    %v2551 = vld [vmem:[#allocation7 + $0x1e98] sm:$0xff]
    %v2552 = vld [vmem:[#allocation7 + $0x1ea0] sm:$0xff]
    %v2553 = vld [vmem:[#allocation7 + $0x1ea8] sm:$0xff]
    %v2554 = vld [vmem:[#allocation7 + $0x1eb0] sm:$0xff]
    %v2555 = vld [vmem:[#allocation7 + $0x1eb8] sm:$0xff]
    %v2556 = vld [vmem:[#allocation7 + $0x1ec0] sm:$0xff]
    %v2557 = vld [vmem:[#allocation7 + $0x1ec8] sm:$0xff]
    %v2558 = vld [vmem:[#allocation7 + $0x1ed0] sm:$0xff]
    %v2559 = vld [vmem:[#allocation7 + $0x1ed8] sm:$0xff]
    %v2560 = vld [vmem:[#allocation7 + $0x1ee0] sm:$0xff]
    %v2561 = vld [vmem:[#allocation7 + $0x1ee8] sm:$0xff]
    %v2562 = vld [vmem:[#allocation7 + $0x1ef0] sm:$0xff]
    %v2563 = vld [vmem:[#allocation7 + $0x1ef8] sm:$0xff]
    %v2564 = vld [vmem:[#allocation7 + $0x1f00] sm:$0xff]
    %v2565 = vld [vmem:[#allocation7 + $0x1f08] sm:$0xff]
    %v2566 = vld [vmem:[#allocation7 + $0x1f10] sm:$0xff]
    %v2567 = vld [vmem:[#allocation7 + $0x1f18] sm:$0xff]
    %v2568 = vld [vmem:[#allocation7 + $0x1f20] sm:$0xff]
    %v2569 = vld [vmem:[#allocation7 + $0x1f28] sm:$0xff]
    %v2570 = vld [vmem:[#allocation7 + $0x1f30] sm:$0xff]
    %v2571 = vld [vmem:[#allocation7 + $0x1f38] sm:$0xff]
    %v2572 = vld [vmem:[#allocation7 + $0x1f40] sm:$0xff]
    %v2573 = vld [vmem:[#allocation7 + $0x1f48] sm:$0xff]
    %v2574 = vld [vmem:[#allocation7 + $0x1f50] sm:$0xff]
    %v2575 = vld [vmem:[#allocation7 + $0x1f58] sm:$0xff]
    %v2576 = vld [vmem:[#allocation7 + $0x1f60] sm:$0xff]
    %v2577 = vld [vmem:[#allocation7 + $0x1f68] sm:$0xff]
    %v2578 = vld [vmem:[#allocation7 + $0x1f70] sm:$0xff]
    %v2579 = vld [vmem:[#allocation7 + $0x1f78] sm:$0xff]
    %v2580 = vld [vmem:[#allocation7 + $0x1f80] sm:$0xff]
    %v2581 = vld [vmem:[#allocation7 + $0x1f88] sm:$0xff]
    %v2582 = vld [vmem:[#allocation7 + $0x1f90] sm:$0xff]
    %v2583 = vld [vmem:[#allocation7 + $0x1f98] sm:$0xff]
    %v2584 = vld [vmem:[#allocation7 + $0x1fa0] sm:$0xff]
    %v2585 = vld [vmem:[#allocation7 + $0x1fa8] sm:$0xff]
    %v2586 = vld [vmem:[#allocation7 + $0x1fb0] sm:$0xff]
    %v2587 = vld [vmem:[#allocation7 + $0x1fb8] sm:$0xff]
    %v2588 = vld [vmem:[#allocation7 + $0x1fc0] sm:$0xff]
    %v2589 = vld [vmem:[#allocation7 + $0x1fc8] sm:$0xff]
    %v2590 = vld [vmem:[#allocation7 + $0x1fd0] sm:$0xff]
    %v2591 = vld [vmem:[#allocation7 + $0x1fd8] sm:$0xff]
    %v2592 = vld [vmem:[#allocation7 + $0x1fe0] sm:$0xff]
    %v2593 = vld [vmem:[#allocation7 + $0x1fe8] sm:$0xff]
    %v2594 = vld [vmem:[#allocation7 + $0x1ff0] sm:$0xff]
    %v2595 = vld [vmem:[#allocation7 + $0x1ff8] sm:$0xff]
    %2596 = vmatprep.subr.mxu0 %v1813
    %2597 = vmatpush1.msra.mxu0 %v1812
    %2598 = vmatprep.subr.mxu0 %v1797
    %2599 = vmatpush1.msra.mxu0 %v1796
    %2600 = vmatprep.subr.mxu0 %v1781
    %2601 = vmatpush1.msra.mxu0 %v1780
    %2602 = vmatprep.subr.mxu0 %v1765
    %2603 = vmatpush1.msra.mxu0 %v1764
    %2604 = vmatprep.subr.mxu0 %v1749
    %2605 = vmatpush1.msra.mxu0 %v1748
    %2606 = vmatprep.subr.mxu0 %v1733
    %2607 = vmatpush1.msra.mxu0 %v1732
    %2608 = vmatprep.subr.mxu0 %v1717
    %2609 = vmatpush1.msra.mxu0 %v1716
    %2610 = vmatprep.subr.mxu0 %v1701
    %2611 = vmatpush1.msra.mxu0 %v1700
    %2612 = vmatprep.subr.mxu0 %v1685
    %2613 = vmatpush1.msra.mxu0 %v1684
    %2614 = vmatprep.subr.mxu0 %v1669
    %2615 = vmatpush1.msra.mxu0 %v1668
    %2616 = vmatprep.subr.mxu0 %v1653
    %2617 = vmatpush1.msra.mxu0 %v1652
    %2618 = vmatprep.subr.mxu0 %v1637
    %2619 = vmatpush1.msra.mxu0 %v1636
    %2620 = vmatprep.subr.mxu0 %v1621
    %2621 = vmatpush1.msra.mxu0 %v1620
    %2622 = vmatprep.subr.mxu0 %v1605
    %2623 = vmatpush1.msra.mxu0 %v1604
    %2624 = vmatprep.subr.mxu0 %v1589
    %2625 = vmatpush1.msra.mxu0 %v1588
    %2626 = vmatprep.subr.mxu0 %v1573
    %2627 = vmatpush1.msra.mxu0 %v1572
    %2628 = vmatprep.subr.mxu0 %v2069
    %2629 = vmatpush2.msra.mxu0 %v2068
    %2630 = vmatprep.subr.mxu0 %v2053
    %2631 = vmatpush2.msra.mxu0 %v2052
    %2632 = vmatprep.subr.mxu0 %v2037
    %2633 = vmatpush2.msra.mxu0 %v2036
    %2634 = vmatprep.subr.mxu0 %v2021
    %2635 = vmatpush2.msra.mxu0 %v2020
    %2636 = vmatprep.subr.mxu0 %v2005
    %2637 = vmatpush2.msra.mxu0 %v2004
    %2638 = vmatprep.subr.mxu0 %v1989
    %2639 = vmatpush2.msra.mxu0 %v1988
    %2640 = vmatprep.subr.mxu0 %v1973
    %2641 = vmatpush2.msra.mxu0 %v1972
    %2642 = vmatprep.subr.mxu0 %v1957
    %2643 = vmatpush2.msra.mxu0 %v1956
    %2644 = vmatprep.subr.mxu0 %v1941
    %2645 = vmatpush2.msra.mxu0 %v1940
    %2646 = vmatprep.subr.mxu0 %v1925
    %2647 = vmatpush2.msra.mxu0 %v1924
    %2648 = vmatprep.subr.mxu0 %v1909
    %2649 = vmatpush2.msra.mxu0 %v1908
    %2650 = vmatprep.subr.mxu0 %v1893
    %2651 = vmatpush2.msra.mxu0 %v1892
    %2652 = vmatprep.subr.mxu0 %v1877
    %2653 = vmatpush2.msra.mxu0 %v1876
    %2654 = vmatprep.subr.mxu0 %v1861
    %2655 = vmatpush2.msra.mxu0 %v1860
    %2656 = vmatprep.subr.mxu0 %v1845
    %2657 = vmatpush2.msra.mxu0 %v1844
    %2658 = vmatprep.subr.mxu0 %v1829
    %2659 = vmatpush2.msra.mxu0 %v1828
    %2660 = vmatprep.mubr.f32.mxu0 %v1565
    %2661 = vmatmul.mubr.f32.gmra.mxu0 %v1564
    %v2662 = vpop.f32.mrf.mxu0
    %v2663 = vadd.f32 0.0, %v2662
    %v2664 = vpop.f32.mrf.mxu0
    %v2665 = vadd.f32 0.0, %v2664
    %2666 = vmatprep.mubr.f32.mxu0 %v1569
    %2667 = vmatmul.mubr.f32.gmra.mxu0 %v1568
    %v2668 = vpop.f32.mrf.mxu0
    %v2669 = vadd.f32 0.0, %v2668
    %v2670 = vpop.f32.mrf.mxu0
    %v2671 = vadd.f32 0.0, %v2670
    %2672 = vdwg.mxu0
    %2673 = vmatprep.subr.mxu0 %v2325
    %2674 = vmatpush1.msra.mxu0 %v2324
    %2675 = vmatprep.subr.mxu0 %v2309
    %2676 = vmatpush1.msra.mxu0 %v2308
    %2677 = vmatprep.subr.mxu0 %v2293
    %2678 = vmatpush1.msra.mxu0 %v2292
    %2679 = vmatprep.subr.mxu0 %v2277
    %2680 = vmatpush1.msra.mxu0 %v2276
    %2681 = vmatprep.subr.mxu0 %v2261
    %2682 = vmatpush1.msra.mxu0 %v2260
    %2683 = vmatprep.subr.mxu0 %v2245
    %2684 = vmatpush1.msra.mxu0 %v2244
    %2685 = vmatprep.subr.mxu0 %v2229
    %2686 = vmatpush1.msra.mxu0 %v2228
    %2687 = vmatprep.subr.mxu0 %v2213
    %2688 = vmatpush1.msra.mxu0 %v2212
    %2689 = vmatprep.subr.mxu0 %v2197
    %2690 = vmatpush1.msra.mxu0 %v2196
    %2691 = vmatprep.subr.mxu0 %v2181
    %2692 = vmatpush1.msra.mxu0 %v2180
    %2693 = vmatprep.subr.mxu0 %v2165
    %2694 = vmatpush1.msra.mxu0 %v2164
    %2695 = vmatprep.subr.mxu0 %v2149
    %2696 = vmatpush1.msra.mxu0 %v2148
    %2697 = vmatprep.subr.mxu0 %v2133
    %2698 = vmatpush1.msra.mxu0 %v2132
    %2699 = vmatprep.subr.mxu0 %v2117
    %2700 = vmatpush1.msra.mxu0 %v2116
    %2701 = vmatprep.subr.mxu0 %v2101
    %2702 = vmatpush1.msra.mxu0 %v2100
    %2703 = vmatprep.subr.mxu0 %v2085
    %2704 = vmatpush1.msra.mxu0 %v2084
    %2705 = vmatprep.subr.mxu0 %v2581
    %2706 = vmatpush2.msra.mxu0 %v2580
    %2707 = vmatprep.subr.mxu0 %v2565
    %2708 = vmatpush2.msra.mxu0 %v2564
    %2709 = vmatprep.subr.mxu0 %v2549
    %2710 = vmatpush2.msra.mxu0 %v2548
    %2711 = vmatprep.subr.mxu0 %v2533
    %2712 = vmatpush2.msra.mxu0 %v2532
    %2713 = vmatprep.subr.mxu0 %v2517
    %2714 = vmatpush2.msra.mxu0 %v2516
    %2715 = vmatprep.subr.mxu0 %v2501
    %2716 = vmatpush2.msra.mxu0 %v2500
    %2717 = vmatprep.subr.mxu0 %v2485
    %2718 = vmatpush2.msra.mxu0 %v2484
    %2719 = vmatprep.subr.mxu0 %v2469
    %2720 = vmatpush2.msra.mxu0 %v2468
    %2721 = vmatprep.subr.mxu0 %v2453
    %2722 = vmatpush2.msra.mxu0 %v2452
    %2723 = vmatprep.subr.mxu0 %v2437
    %2724 = vmatpush2.msra.mxu0 %v2436
    %2725 = vmatprep.subr.mxu0 %v2421
    %2726 = vmatpush2.msra.mxu0 %v2420
    %2727 = vmatprep.subr.mxu0 %v2405
    %2728 = vmatpush2.msra.mxu0 %v2404
    %2729 = vmatprep.subr.mxu0 %v2389
    %2730 = vmatpush2.msra.mxu0 %v2388
    %2731 = vmatprep.subr.mxu0 %v2373
    %2732 = vmatpush2.msra.mxu0 %v2372
    %2733 = vmatprep.subr.mxu0 %v2357
    %2734 = vmatpush2.msra.mxu0 %v2356
    %2735 = vmatprep.subr.mxu0 %v2341
    %2736 = vmatpush2.msra.mxu0 %v2340
    %2737 = vmatprep.mubr.f32.mxu0 %v1567
    %2738 = vmatmul.mubr.f32.gmra.mxu0 %v1566
    %v2739 = vpop.f32.mrf.mxu0
    %v2740 = vadd.f32 %v2663, %v2739
    %v2741 = vpop.f32.mrf.mxu0
    %v2742 = vadd.f32 %v2665, %v2741
    %2743 = vmatprep.mubr.f32.mxu0 %v1571
    %2744 = vmatmul.mubr.f32.gmra.mxu0 %v1570
    %v2745 = vpop.f32.mrf.mxu0
    %v2746 = vadd.f32 %v2669, %v2745
    %v2747 = vpop.f32.mrf.mxu0
    %v2748 = vadd.f32 %v2671, %v2747
    %2749 = vdwg.mxu0
    %2750 = vmatprep.subr.mxu0 %v1815
    %2751 = vmatpush1.msra.mxu0 %v1814
    %2752 = vmatprep.subr.mxu0 %v1799
    %2753 = vmatpush1.msra.mxu0 %v1798
    %2754 = vmatprep.subr.mxu0 %v1783
    %2755 = vmatpush1.msra.mxu0 %v1782
    %2756 = vmatprep.subr.mxu0 %v1767
    %2757 = vmatpush1.msra.mxu0 %v1766
    %2758 = vmatprep.subr.mxu0 %v1751
    %2759 = vmatpush1.msra.mxu0 %v1750
    %2760 = vmatprep.subr.mxu0 %v1735
    %2761 = vmatpush1.msra.mxu0 %v1734
    %2762 = vmatprep.subr.mxu0 %v1719
    %2763 = vmatpush1.msra.mxu0 %v1718
    %2764 = vmatprep.subr.mxu0 %v1703
    %2765 = vmatpush1.msra.mxu0 %v1702
    %2766 = vmatprep.subr.mxu0 %v1687
    %2767 = vmatpush1.msra.mxu0 %v1686
    %2768 = vmatprep.subr.mxu0 %v1671
    %2769 = vmatpush1.msra.mxu0 %v1670
    %2770 = vmatprep.subr.mxu0 %v1655
    %2771 = vmatpush1.msra.mxu0 %v1654
    %2772 = vmatprep.subr.mxu0 %v1639
    %2773 = vmatpush1.msra.mxu0 %v1638
    %2774 = vmatprep.subr.mxu0 %v1623
    %2775 = vmatpush1.msra.mxu0 %v1622
    %2776 = vmatprep.subr.mxu0 %v1607
    %2777 = vmatpush1.msra.mxu0 %v1606
    %2778 = vmatprep.subr.mxu0 %v1591
    %2779 = vmatpush1.msra.mxu0 %v1590
    %2780 = vmatprep.subr.mxu0 %v1575
    %2781 = vmatpush1.msra.mxu0 %v1574
    %2782 = vmatprep.subr.mxu0 %v2071
    %2783 = vmatpush2.msra.mxu0 %v2070
    %2784 = vmatprep.subr.mxu0 %v2055
    %2785 = vmatpush2.msra.mxu0 %v2054
    %2786 = vmatprep.subr.mxu0 %v2039
    %2787 = vmatpush2.msra.mxu0 %v2038
    %2788 = vmatprep.subr.mxu0 %v2023
    %2789 = vmatpush2.msra.mxu0 %v2022
    %2790 = vmatprep.subr.mxu0 %v2007
    %2791 = vmatpush2.msra.mxu0 %v2006
    %2792 = vmatprep.subr.mxu0 %v1991
    %2793 = vmatpush2.msra.mxu0 %v1990
    %2794 = vmatprep.subr.mxu0 %v1975
    %2795 = vmatpush2.msra.mxu0 %v1974
    %2796 = vmatprep.subr.mxu0 %v1959
    %2797 = vmatpush2.msra.mxu0 %v1958
    %2798 = vmatprep.subr.mxu0 %v1943
    %2799 = vmatpush2.msra.mxu0 %v1942
    %2800 = vmatprep.subr.mxu0 %v1927
    %2801 = vmatpush2.msra.mxu0 %v1926
    %2802 = vmatprep.subr.mxu0 %v1911
    %2803 = vmatpush2.msra.mxu0 %v1910
    %2804 = vmatprep.subr.mxu0 %v1895
    %2805 = vmatpush2.msra.mxu0 %v1894
    %2806 = vmatprep.subr.mxu0 %v1879
    %2807 = vmatpush2.msra.mxu0 %v1878
    %2808 = vmatprep.subr.mxu0 %v1863
    %2809 = vmatpush2.msra.mxu0 %v1862
    %2810 = vmatprep.subr.mxu0 %v1847
    %2811 = vmatpush2.msra.mxu0 %v1846
    %2812 = vmatprep.subr.mxu0 %v1831
    %2813 = vmatpush2.msra.mxu0 %v1830
    %2814 = vmatprep.mubr.f32.mxu0 %v1565
    %2815 = vmatmul.mubr.f32.gmra.mxu0 %v1564
    %v2816 = vpop.f32.mrf.mxu0
    %v2817 = vadd.f32 0.0, %v2816
    %v2818 = vpop.f32.mrf.mxu0
    %v2819 = vadd.f32 0.0, %v2818
    %2820 = vmatprep.mubr.f32.mxu0 %v1569
    %2821 = vmatmul.mubr.f32.gmra.mxu0 %v1568
    %v2822 = vpop.f32.mrf.mxu0
    %v2823 = vadd.f32 0.0, %v2822
    %v2824 = vpop.f32.mrf.mxu0
    %v2825 = vadd.f32 0.0, %v2824
    %2826 = vdwg.mxu0
    %2827 = vmatprep.subr.mxu0 %v2327
    %2828 = vmatpush1.msra.mxu0 %v2326
    %2829 = vmatprep.subr.mxu0 %v2311
    %2830 = vmatpush1.msra.mxu0 %v2310
    %2831 = vmatprep.subr.mxu0 %v2295
    %2832 = vmatpush1.msra.mxu0 %v2294
    %2833 = vmatprep.subr.mxu0 %v2279
    %2834 = vmatpush1.msra.mxu0 %v2278
    %2835 = vmatprep.subr.mxu0 %v2263
    %2836 = vmatpush1.msra.mxu0 %v2262
    %2837 = vmatprep.subr.mxu0 %v2247
    %2838 = vmatpush1.msra.mxu0 %v2246
    %2839 = vmatprep.subr.mxu0 %v2231
    %2840 = vmatpush1.msra.mxu0 %v2230
    %2841 = vmatprep.subr.mxu0 %v2215
    %2842 = vmatpush1.msra.mxu0 %v2214
    %2843 = vmatprep.subr.mxu0 %v2199
    %2844 = vmatpush1.msra.mxu0 %v2198
    %2845 = vmatprep.subr.mxu0 %v2183
    %2846 = vmatpush1.msra.mxu0 %v2182
    %2847 = vmatprep.subr.mxu0 %v2167
    %2848 = vmatpush1.msra.mxu0 %v2166
    %2849 = vmatprep.subr.mxu0 %v2151
    %2850 = vmatpush1.msra.mxu0 %v2150
    %2851 = vmatprep.subr.mxu0 %v2135
    %2852 = vmatpush1.msra.mxu0 %v2134
    %2853 = vmatprep.subr.mxu0 %v2119
    %2854 = vmatpush1.msra.mxu0 %v2118
    %2855 = vmatprep.subr.mxu0 %v2103
    %2856 = vmatpush1.msra.mxu0 %v2102
    %2857 = vmatprep.subr.mxu0 %v2087
    %2858 = vmatpush1.msra.mxu0 %v2086
    %2859 = vmatprep.subr.mxu0 %v2583
    %2860 = vmatpush2.msra.mxu0 %v2582
    %2861 = vmatprep.subr.mxu0 %v2567
    %2862 = vmatpush2.msra.mxu0 %v2566
    %2863 = vmatprep.subr.mxu0 %v2551
    %2864 = vmatpush2.msra.mxu0 %v2550
    %2865 = vmatprep.subr.mxu0 %v2535
    %2866 = vmatpush2.msra.mxu0 %v2534
    %2867 = vmatprep.subr.mxu0 %v2519
    %2868 = vmatpush2.msra.mxu0 %v2518
    %2869 = vmatprep.subr.mxu0 %v2503
    %2870 = vmatpush2.msra.mxu0 %v2502
    %2871 = vmatprep.subr.mxu0 %v2487
    %2872 = vmatpush2.msra.mxu0 %v2486
    %2873 = vmatprep.subr.mxu0 %v2471
    %2874 = vmatpush2.msra.mxu0 %v2470
    %2875 = vmatprep.subr.mxu0 %v2455
    %2876 = vmatpush2.msra.mxu0 %v2454
    %2877 = vmatprep.subr.mxu0 %v2439
    %2878 = vmatpush2.msra.mxu0 %v2438
    %2879 = vmatprep.subr.mxu0 %v2423
    %2880 = vmatpush2.msra.mxu0 %v2422
    %2881 = vmatprep.subr.mxu0 %v2407
    %2882 = vmatpush2.msra.mxu0 %v2406
    %2883 = vmatprep.subr.mxu0 %v2391
    %2884 = vmatpush2.msra.mxu0 %v2390
    %2885 = vmatprep.subr.mxu0 %v2375
    %2886 = vmatpush2.msra.mxu0 %v2374
    %2887 = vmatprep.subr.mxu0 %v2359
    %2888 = vmatpush2.msra.mxu0 %v2358
    %2889 = vmatprep.subr.mxu0 %v2343
    %2890 = vmatpush2.msra.mxu0 %v2342
    %2891 = vmatprep.mubr.f32.mxu0 %v1567
    %2892 = vmatmul.mubr.f32.gmra.mxu0 %v1566
    %v2893 = vpop.f32.mrf.mxu0
    %v2894 = vadd.f32 %v2817, %v2893
    %v2895 = vpop.f32.mrf.mxu0
    %v2896 = vadd.f32 %v2819, %v2895
    %2897 = vmatprep.mubr.f32.mxu0 %v1571
    %2898 = vmatmul.mubr.f32.gmra.mxu0 %v1570
    %v2899 = vpop.f32.mrf.mxu0
    %v2900 = vadd.f32 %v2823, %v2899
    %v2901 = vpop.f32.mrf.mxu0
    %v2902 = vadd.f32 %v2825, %v2901
    %2903 = vdwg.mxu0
    %2904 = vmatprep.subr.mxu0 %v1817
    %2905 = vmatpush1.msra.mxu0 %v1816
    %2906 = vmatprep.subr.mxu0 %v1801
    %2907 = vmatpush1.msra.mxu0 %v1800
    %2908 = vmatprep.subr.mxu0 %v1785
    %2909 = vmatpush1.msra.mxu0 %v1784
    %2910 = vmatprep.subr.mxu0 %v1769
    %2911 = vmatpush1.msra.mxu0 %v1768
    %2912 = vmatprep.subr.mxu0 %v1753
    %2913 = vmatpush1.msra.mxu0 %v1752
    %2914 = vmatprep.subr.mxu0 %v1737
    %2915 = vmatpush1.msra.mxu0 %v1736
    %2916 = vmatprep.subr.mxu0 %v1721
    %2917 = vmatpush1.msra.mxu0 %v1720
    %2918 = vmatprep.subr.mxu0 %v1705
    %2919 = vmatpush1.msra.mxu0 %v1704
    %2920 = vmatprep.subr.mxu0 %v1689
    %2921 = vmatpush1.msra.mxu0 %v1688
    %2922 = vmatprep.subr.mxu0 %v1673
    %2923 = vmatpush1.msra.mxu0 %v1672
    %2924 = vmatprep.subr.mxu0 %v1657
    %2925 = vmatpush1.msra.mxu0 %v1656
    %2926 = vmatprep.subr.mxu0 %v1641
    %2927 = vmatpush1.msra.mxu0 %v1640
    %2928 = vmatprep.subr.mxu0 %v1625
    %2929 = vmatpush1.msra.mxu0 %v1624
    %2930 = vmatprep.subr.mxu0 %v1609
    %2931 = vmatpush1.msra.mxu0 %v1608
    %2932 = vmatprep.subr.mxu0 %v1593
    %2933 = vmatpush1.msra.mxu0 %v1592
    %2934 = vmatprep.subr.mxu0 %v1577
    %2935 = vmatpush1.msra.mxu0 %v1576
    %2936 = vmatprep.subr.mxu0 %v2073
    %2937 = vmatpush2.msra.mxu0 %v2072
    %2938 = vmatprep.subr.mxu0 %v2057
    %2939 = vmatpush2.msra.mxu0 %v2056
    %2940 = vmatprep.subr.mxu0 %v2041
    %2941 = vmatpush2.msra.mxu0 %v2040
    %2942 = vmatprep.subr.mxu0 %v2025
    %2943 = vmatpush2.msra.mxu0 %v2024
    %2944 = vmatprep.subr.mxu0 %v2009
    %2945 = vmatpush2.msra.mxu0 %v2008
    %2946 = vmatprep.subr.mxu0 %v1993
    %2947 = vmatpush2.msra.mxu0 %v1992
    %2948 = vmatprep.subr.mxu0 %v1977
    %2949 = vmatpush2.msra.mxu0 %v1976
    %2950 = vmatprep.subr.mxu0 %v1961
    %2951 = vmatpush2.msra.mxu0 %v1960
    %2952 = vmatprep.subr.mxu0 %v1945
    %2953 = vmatpush2.msra.mxu0 %v1944
    %2954 = vmatprep.subr.mxu0 %v1929
    %2955 = vmatpush2.msra.mxu0 %v1928
    %2956 = vmatprep.subr.mxu0 %v1913
    %2957 = vmatpush2.msra.mxu0 %v1912
    %2958 = vmatprep.subr.mxu0 %v1897
    %2959 = vmatpush2.msra.mxu0 %v1896
    %2960 = vmatprep.subr.mxu0 %v1881
    %2961 = vmatpush2.msra.mxu0 %v1880
    %2962 = vmatprep.subr.mxu0 %v1865
    %2963 = vmatpush2.msra.mxu0 %v1864
    %2964 = vmatprep.subr.mxu0 %v1849
    %2965 = vmatpush2.msra.mxu0 %v1848
    %2966 = vmatprep.subr.mxu0 %v1833
    %2967 = vmatpush2.msra.mxu0 %v1832
    %2968 = vmatprep.mubr.f32.mxu0 %v1565
    %2969 = vmatmul.mubr.f32.gmra.mxu0 %v1564
    %v2970 = vpop.f32.mrf.mxu0
    %v2971 = vadd.f32 0.0, %v2970
    %v2972 = vpop.f32.mrf.mxu0
    %v2973 = vadd.f32 0.0, %v2972
    %2974 = vmatprep.mubr.f32.mxu0 %v1569
    %2975 = vmatmul.mubr.f32.gmra.mxu0 %v1568
    %v2976 = vpop.f32.mrf.mxu0
    %v2977 = vadd.f32 0.0, %v2976
    %v2978 = vpop.f32.mrf.mxu0
    %v2979 = vadd.f32 0.0, %v2978
    %2980 = vdwg.mxu0
    %2981 = vmatprep.subr.mxu0 %v2329
    %2982 = vmatpush1.msra.mxu0 %v2328
    %2983 = vmatprep.subr.mxu0 %v2313
    %2984 = vmatpush1.msra.mxu0 %v2312
    %2985 = vmatprep.subr.mxu0 %v2297
    %2986 = vmatpush1.msra.mxu0 %v2296
    %2987 = vmatprep.subr.mxu0 %v2281
    %2988 = vmatpush1.msra.mxu0 %v2280
    %2989 = vmatprep.subr.mxu0 %v2265
    %2990 = vmatpush1.msra.mxu0 %v2264
    %2991 = vmatprep.subr.mxu0 %v2249
    %2992 = vmatpush1.msra.mxu0 %v2248
    %2993 = vmatprep.subr.mxu0 %v2233
    %2994 = vmatpush1.msra.mxu0 %v2232
    %2995 = vmatprep.subr.mxu0 %v2217
    %2996 = vmatpush1.msra.mxu0 %v2216
    %2997 = vmatprep.subr.mxu0 %v2201
    %2998 = vmatpush1.msra.mxu0 %v2200
    %2999 = vmatprep.subr.mxu0 %v2185
    %3000 = vmatpush1.msra.mxu0 %v2184
    %3001 = vmatprep.subr.mxu0 %v2169
    %3002 = vmatpush1.msra.mxu0 %v2168
    %3003 = vmatprep.subr.mxu0 %v2153
    %3004 = vmatpush1.msra.mxu0 %v2152
    %3005 = vmatprep.subr.mxu0 %v2137
    %3006 = vmatpush1.msra.mxu0 %v2136
    %3007 = vmatprep.subr.mxu0 %v2121
    %3008 = vmatpush1.msra.mxu0 %v2120
    %3009 = vmatprep.subr.mxu0 %v2105
    %3010 = vmatpush1.msra.mxu0 %v2104
    %3011 = vmatprep.subr.mxu0 %v2089
    %3012 = vmatpush1.msra.mxu0 %v2088
    %3013 = vmatprep.subr.mxu0 %v2585
    %3014 = vmatpush2.msra.mxu0 %v2584
    %3015 = vmatprep.subr.mxu0 %v2569
    %3016 = vmatpush2.msra.mxu0 %v2568
    %3017 = vmatprep.subr.mxu0 %v2553
    %3018 = vmatpush2.msra.mxu0 %v2552
    %3019 = vmatprep.subr.mxu0 %v2537
    %3020 = vmatpush2.msra.mxu0 %v2536
    %3021 = vmatprep.subr.mxu0 %v2521
    %3022 = vmatpush2.msra.mxu0 %v2520
    %3023 = vmatprep.subr.mxu0 %v2505
    %3024 = vmatpush2.msra.mxu0 %v2504
    %3025 = vmatprep.subr.mxu0 %v2489
    %3026 = vmatpush2.msra.mxu0 %v2488
    %3027 = vmatprep.subr.mxu0 %v2473
    %3028 = vmatpush2.msra.mxu0 %v2472
    %3029 = vmatprep.subr.mxu0 %v2457
    %3030 = vmatpush2.msra.mxu0 %v2456
    %3031 = vmatprep.subr.mxu0 %v2441
    %3032 = vmatpush2.msra.mxu0 %v2440
    %3033 = vmatprep.subr.mxu0 %v2425
    %3034 = vmatpush2.msra.mxu0 %v2424
    %3035 = vmatprep.subr.mxu0 %v2409
    %3036 = vmatpush2.msra.mxu0 %v2408
    %3037 = vmatprep.subr.mxu0 %v2393
    %3038 = vmatpush2.msra.mxu0 %v2392
    %3039 = vmatprep.subr.mxu0 %v2377
    %3040 = vmatpush2.msra.mxu0 %v2376
    %3041 = vmatprep.subr.mxu0 %v2361
    %3042 = vmatpush2.msra.mxu0 %v2360
    %3043 = vmatprep.subr.mxu0 %v2345
    %3044 = vmatpush2.msra.mxu0 %v2344
    %3045 = vmatprep.mubr.f32.mxu0 %v1567
    %3046 = vmatmul.mubr.f32.gmra.mxu0 %v1566
    %v3047 = vpop.f32.mrf.mxu0
    %v3048 = vadd.f32 %v2971, %v3047
    %v3049 = vpop.f32.mrf.mxu0
    %v3050 = vadd.f32 %v2973, %v3049
    %3051 = vmatprep.mubr.f32.mxu0 %v1571
    %3052 = vmatmul.mubr.f32.gmra.mxu0 %v1570
    %v3053 = vpop.f32.mrf.mxu0
    %v3054 = vadd.f32 %v2977, %v3053
    %v3055 = vpop.f32.mrf.mxu0
    %v3056 = vadd.f32 %v2979, %v3055
    %3057 = vdwg.mxu0
    %3058 = vmatprep.subr.mxu0 %v1819
    %3059 = vmatpush1.msra.mxu0 %v1818
    %3060 = vmatprep.subr.mxu0 %v1803
    %3061 = vmatpush1.msra.mxu0 %v1802
    %3062 = vmatprep.subr.mxu0 %v1787
    %3063 = vmatpush1.msra.mxu0 %v1786
    %3064 = vmatprep.subr.mxu0 %v1771
    %3065 = vmatpush1.msra.mxu0 %v1770
    %3066 = vmatprep.subr.mxu0 %v1755
    %3067 = vmatpush1.msra.mxu0 %v1754
    %3068 = vmatprep.subr.mxu0 %v1739
    %3069 = vmatpush1.msra.mxu0 %v1738
    %3070 = vmatprep.subr.mxu0 %v1723
    %3071 = vmatpush1.msra.mxu0 %v1722
    %3072 = vmatprep.subr.mxu0 %v1707
    %3073 = vmatpush1.msra.mxu0 %v1706
    %3074 = vmatprep.subr.mxu0 %v1691
    %3075 = vmatpush1.msra.mxu0 %v1690
    %3076 = vmatprep.subr.mxu0 %v1675
    %3077 = vmatpush1.msra.mxu0 %v1674
    %3078 = vmatprep.subr.mxu0 %v1659
    %3079 = vmatpush1.msra.mxu0 %v1658
    %3080 = vmatprep.subr.mxu0 %v1643
    %3081 = vmatpush1.msra.mxu0 %v1642
    %3082 = vmatprep.subr.mxu0 %v1627
    %3083 = vmatpush1.msra.mxu0 %v1626
    %3084 = vmatprep.subr.mxu0 %v1611
    %3085 = vmatpush1.msra.mxu0 %v1610
    %3086 = vmatprep.subr.mxu0 %v1595
    %3087 = vmatpush1.msra.mxu0 %v1594
    %3088 = vmatprep.subr.mxu0 %v1579
    %3089 = vmatpush1.msra.mxu0 %v1578
    %3090 = vmatprep.subr.mxu0 %v2075
    %3091 = vmatpush2.msra.mxu0 %v2074
    %3092 = vmatprep.subr.mxu0 %v2059
    %3093 = vmatpush2.msra.mxu0 %v2058
    %3094 = vmatprep.subr.mxu0 %v2043
    %3095 = vmatpush2.msra.mxu0 %v2042
    %3096 = vmatprep.subr.mxu0 %v2027
    %3097 = vmatpush2.msra.mxu0 %v2026
    %3098 = vmatprep.subr.mxu0 %v2011
    %3099 = vmatpush2.msra.mxu0 %v2010
    %3100 = vmatprep.subr.mxu0 %v1995
    %3101 = vmatpush2.msra.mxu0 %v1994
    %3102 = vmatprep.subr.mxu0 %v1979
    %3103 = vmatpush2.msra.mxu0 %v1978
    %3104 = vmatprep.subr.mxu0 %v1963
    %3105 = vmatpush2.msra.mxu0 %v1962
    %3106 = vmatprep.subr.mxu0 %v1947
    %3107 = vmatpush2.msra.mxu0 %v1946
    %3108 = vmatprep.subr.mxu0 %v1931
    %3109 = vmatpush2.msra.mxu0 %v1930
    %3110 = vmatprep.subr.mxu0 %v1915
    %3111 = vmatpush2.msra.mxu0 %v1914
    %3112 = vmatprep.subr.mxu0 %v1899
    %3113 = vmatpush2.msra.mxu0 %v1898
    %3114 = vmatprep.subr.mxu0 %v1883
    %3115 = vmatpush2.msra.mxu0 %v1882
    %3116 = vmatprep.subr.mxu0 %v1867
    %3117 = vmatpush2.msra.mxu0 %v1866
    %3118 = vmatprep.subr.mxu0 %v1851
    %3119 = vmatpush2.msra.mxu0 %v1850
    %3120 = vmatprep.subr.mxu0 %v1835
    %3121 = vmatpush2.msra.mxu0 %v1834
    %3122 = vmatprep.mubr.f32.mxu0 %v1565
    %3123 = vmatmul.mubr.f32.gmra.mxu0 %v1564
    %v3124 = vpop.f32.mrf.mxu0
    %v3125 = vadd.f32 0.0, %v3124
    %v3126 = vpop.f32.mrf.mxu0
    %v3127 = vadd.f32 0.0, %v3126
    %3128 = vmatprep.mubr.f32.mxu0 %v1569
    %3129 = vmatmul.mubr.f32.gmra.mxu0 %v1568
    %v3130 = vpop.f32.mrf.mxu0
    %v3131 = vadd.f32 0.0, %v3130
    %v3132 = vpop.f32.mrf.mxu0
    %v3133 = vadd.f32 0.0, %v3132
    %3134 = vdwg.mxu0
    %3135 = vmatprep.subr.mxu0 %v2331
    %3136 = vmatpush1.msra.mxu0 %v2330
    %3137 = vmatprep.subr.mxu0 %v2315
    %3138 = vmatpush1.msra.mxu0 %v2314
    %3139 = vmatprep.subr.mxu0 %v2299
    %3140 = vmatpush1.msra.mxu0 %v2298
    %3141 = vmatprep.subr.mxu0 %v2283
    %3142 = vmatpush1.msra.mxu0 %v2282
    %3143 = vmatprep.subr.mxu0 %v2267
    %3144 = vmatpush1.msra.mxu0 %v2266
    %3145 = vmatprep.subr.mxu0 %v2251
    %3146 = vmatpush1.msra.mxu0 %v2250
    %3147 = vmatprep.subr.mxu0 %v2235
    %3148 = vmatpush1.msra.mxu0 %v2234
    %3149 = vmatprep.subr.mxu0 %v2219
    %3150 = vmatpush1.msra.mxu0 %v2218
    %3151 = vmatprep.subr.mxu0 %v2203
    %3152 = vmatpush1.msra.mxu0 %v2202
    %3153 = vmatprep.subr.mxu0 %v2187
    %3154 = vmatpush1.msra.mxu0 %v2186
    %3155 = vmatprep.subr.mxu0 %v2171
    %3156 = vmatpush1.msra.mxu0 %v2170
    %3157 = vmatprep.subr.mxu0 %v2155
    %3158 = vmatpush1.msra.mxu0 %v2154
    %3159 = vmatprep.subr.mxu0 %v2139
    %3160 = vmatpush1.msra.mxu0 %v2138
    %3161 = vmatprep.subr.mxu0 %v2123
    %3162 = vmatpush1.msra.mxu0 %v2122
    %3163 = vmatprep.subr.mxu0 %v2107
    %3164 = vmatpush1.msra.mxu0 %v2106
    %3165 = vmatprep.subr.mxu0 %v2091
    %3166 = vmatpush1.msra.mxu0 %v2090
    %3167 = vmatprep.subr.mxu0 %v2587
    %3168 = vmatpush2.msra.mxu0 %v2586
    %3169 = vmatprep.subr.mxu0 %v2571
    %3170 = vmatpush2.msra.mxu0 %v2570
    %3171 = vmatprep.subr.mxu0 %v2555
    %3172 = vmatpush2.msra.mxu0 %v2554
    %3173 = vmatprep.subr.mxu0 %v2539
    %3174 = vmatpush2.msra.mxu0 %v2538
    %3175 = vmatprep.subr.mxu0 %v2523
    %3176 = vmatpush2.msra.mxu0 %v2522
    %3177 = vmatprep.subr.mxu0 %v2507
    %3178 = vmatpush2.msra.mxu0 %v2506
    %3179 = vmatprep.subr.mxu0 %v2491
    %3180 = vmatpush2.msra.mxu0 %v2490
    %3181 = vmatprep.subr.mxu0 %v2475
    %3182 = vmatpush2.msra.mxu0 %v2474
    %3183 = vmatprep.subr.mxu0 %v2459
    %3184 = vmatpush2.msra.mxu0 %v2458
    %3185 = vmatprep.subr.mxu0 %v2443
    %3186 = vmatpush2.msra.mxu0 %v2442
    %3187 = vmatprep.subr.mxu0 %v2427
    %3188 = vmatpush2.msra.mxu0 %v2426
    %3189 = vmatprep.subr.mxu0 %v2411
    %3190 = vmatpush2.msra.mxu0 %v2410
    %3191 = vmatprep.subr.mxu0 %v2395
    %3192 = vmatpush2.msra.mxu0 %v2394
    %3193 = vmatprep.subr.mxu0 %v2379
    %3194 = vmatpush2.msra.mxu0 %v2378
    %3195 = vmatprep.subr.mxu0 %v2363
    %3196 = vmatpush2.msra.mxu0 %v2362
    %3197 = vmatprep.subr.mxu0 %v2347
    %3198 = vmatpush2.msra.mxu0 %v2346
    %3199 = vmatprep.mubr.f32.mxu0 %v1567
    %3200 = vmatmul.mubr.f32.gmra.mxu0 %v1566
    %v3201 = vpop.f32.mrf.mxu0
    %v3202 = vadd.f32 %v3125, %v3201
    %v3203 = vpop.f32.mrf.mxu0
    %v3204 = vadd.f32 %v3127, %v3203
    %3205 = vmatprep.mubr.f32.mxu0 %v1571
    %3206 = vmatmul.mubr.f32.gmra.mxu0 %v1570
    %v3207 = vpop.f32.mrf.mxu0
    %v3208 = vadd.f32 %v3131, %v3207
    %v3209 = vpop.f32.mrf.mxu0
    %v3210 = vadd.f32 %v3133, %v3209
    %3211 = vdwg.mxu0
    %3212 = vmatprep.subr.mxu0 %v1821
    %3213 = vmatpush1.msra.mxu0 %v1820
    %3214 = vmatprep.subr.mxu0 %v1805
    %3215 = vmatpush1.msra.mxu0 %v1804
    %3216 = vmatprep.subr.mxu0 %v1789
    %3217 = vmatpush1.msra.mxu0 %v1788
    %3218 = vmatprep.subr.mxu0 %v1773
    %3219 = vmatpush1.msra.mxu0 %v1772
    %3220 = vmatprep.subr.mxu0 %v1757
    %3221 = vmatpush1.msra.mxu0 %v1756
    %3222 = vmatprep.subr.mxu0 %v1741
    %3223 = vmatpush1.msra.mxu0 %v1740
    %3224 = vmatprep.subr.mxu0 %v1725
    %3225 = vmatpush1.msra.mxu0 %v1724
    %3226 = vmatprep.subr.mxu0 %v1709
    %3227 = vmatpush1.msra.mxu0 %v1708
    %3228 = vmatprep.subr.mxu0 %v1693
    %3229 = vmatpush1.msra.mxu0 %v1692
    %3230 = vmatprep.subr.mxu0 %v1677
    %3231 = vmatpush1.msra.mxu0 %v1676
    %3232 = vmatprep.subr.mxu0 %v1661
    %3233 = vmatpush1.msra.mxu0 %v1660
    %3234 = vmatprep.subr.mxu0 %v1645
    %3235 = vmatpush1.msra.mxu0 %v1644
    %3236 = vmatprep.subr.mxu0 %v1629
    %3237 = vmatpush1.msra.mxu0 %v1628
    %3238 = vmatprep.subr.mxu0 %v1613
    %3239 = vmatpush1.msra.mxu0 %v1612
    %3240 = vmatprep.subr.mxu0 %v1597
    %3241 = vmatpush1.msra.mxu0 %v1596
    %3242 = vmatprep.subr.mxu0 %v1581
    %3243 = vmatpush1.msra.mxu0 %v1580
    %3244 = vmatprep.subr.mxu0 %v2077
    %3245 = vmatpush2.msra.mxu0 %v2076
    %3246 = vmatprep.subr.mxu0 %v2061
    %3247 = vmatpush2.msra.mxu0 %v2060
    %3248 = vmatprep.subr.mxu0 %v2045
    %3249 = vmatpush2.msra.mxu0 %v2044
    %3250 = vmatprep.subr.mxu0 %v2029
    %3251 = vmatpush2.msra.mxu0 %v2028
    %3252 = vmatprep.subr.mxu0 %v2013
    %3253 = vmatpush2.msra.mxu0 %v2012
    %3254 = vmatprep.subr.mxu0 %v1997
    %3255 = vmatpush2.msra.mxu0 %v1996
    %3256 = vmatprep.subr.mxu0 %v1981
    %3257 = vmatpush2.msra.mxu0 %v1980
    %3258 = vmatprep.subr.mxu0 %v1965
    %3259 = vmatpush2.msra.mxu0 %v1964
    %3260 = vmatprep.subr.mxu0 %v1949
    %3261 = vmatpush2.msra.mxu0 %v1948
    %3262 = vmatprep.subr.mxu0 %v1933
    %3263 = vmatpush2.msra.mxu0 %v1932
    %3264 = vmatprep.subr.mxu0 %v1917
    %3265 = vmatpush2.msra.mxu0 %v1916
    %3266 = vmatprep.subr.mxu0 %v1901
    %3267 = vmatpush2.msra.mxu0 %v1900
    %3268 = vmatprep.subr.mxu0 %v1885
    %3269 = vmatpush2.msra.mxu0 %v1884
    %3270 = vmatprep.subr.mxu0 %v1869
    %3271 = vmatpush2.msra.mxu0 %v1868
    %3272 = vmatprep.subr.mxu0 %v1853
    %3273 = vmatpush2.msra.mxu0 %v1852
    %3274 = vmatprep.subr.mxu0 %v1837
    %3275 = vmatpush2.msra.mxu0 %v1836
    %3276 = vmatprep.mubr.f32.mxu0 %v1565
    %3277 = vmatmul.mubr.f32.gmra.mxu0 %v1564
    %v3278 = vpop.f32.mrf.mxu0
    %v3279 = vadd.f32 0.0, %v3278
    %v3280 = vpop.f32.mrf.mxu0
    %v3281 = vadd.f32 0.0, %v3280
    %3282 = vmatprep.mubr.f32.mxu0 %v1569
    %3283 = vmatmul.mubr.f32.gmra.mxu0 %v1568
    %v3284 = vpop.f32.mrf.mxu0
    %v3285 = vadd.f32 0.0, %v3284
    %v3286 = vpop.f32.mrf.mxu0
    %v3287 = vadd.f32 0.0, %v3286
    %3288 = vdwg.mxu0
    %3289 = vmatprep.subr.mxu0 %v2333
    %3290 = vmatpush1.msra.mxu0 %v2332
    %3291 = vmatprep.subr.mxu0 %v2317
    %3292 = vmatpush1.msra.mxu0 %v2316
    %3293 = vmatprep.subr.mxu0 %v2301
    %3294 = vmatpush1.msra.mxu0 %v2300
    %3295 = vmatprep.subr.mxu0 %v2285
    %3296 = vmatpush1.msra.mxu0 %v2284
    %3297 = vmatprep.subr.mxu0 %v2269
    %3298 = vmatpush1.msra.mxu0 %v2268
    %3299 = vmatprep.subr.mxu0 %v2253
    %3300 = vmatpush1.msra.mxu0 %v2252
    %3301 = vmatprep.subr.mxu0 %v2237
    %3302 = vmatpush1.msra.mxu0 %v2236
    %3303 = vmatprep.subr.mxu0 %v2221
    %3304 = vmatpush1.msra.mxu0 %v2220
    %3305 = vmatprep.subr.mxu0 %v2205
    %3306 = vmatpush1.msra.mxu0 %v2204
    %3307 = vmatprep.subr.mxu0 %v2189
    %3308 = vmatpush1.msra.mxu0 %v2188
    %3309 = vmatprep.subr.mxu0 %v2173
    %3310 = vmatpush1.msra.mxu0 %v2172
    %3311 = vmatprep.subr.mxu0 %v2157
    %3312 = vmatpush1.msra.mxu0 %v2156
    %3313 = vmatprep.subr.mxu0 %v2141
    %3314 = vmatpush1.msra.mxu0 %v2140
    %3315 = vmatprep.subr.mxu0 %v2125
    %3316 = vmatpush1.msra.mxu0 %v2124
    %3317 = vmatprep.subr.mxu0 %v2109
    %3318 = vmatpush1.msra.mxu0 %v2108
    %3319 = vmatprep.subr.mxu0 %v2093
    %3320 = vmatpush1.msra.mxu0 %v2092
    %3321 = vmatprep.subr.mxu0 %v2589
    %3322 = vmatpush2.msra.mxu0 %v2588
    %3323 = vmatprep.subr.mxu0 %v2573
    %3324 = vmatpush2.msra.mxu0 %v2572
    %3325 = vmatprep.subr.mxu0 %v2557
    %3326 = vmatpush2.msra.mxu0 %v2556
    %3327 = vmatprep.subr.mxu0 %v2541
    %3328 = vmatpush2.msra.mxu0 %v2540
    %3329 = vmatprep.subr.mxu0 %v2525
    %3330 = vmatpush2.msra.mxu0 %v2524
    %3331 = vmatprep.subr.mxu0 %v2509
    %3332 = vmatpush2.msra.mxu0 %v2508
    %3333 = vmatprep.subr.mxu0 %v2493
    %3334 = vmatpush2.msra.mxu0 %v2492
    %3335 = vmatprep.subr.mxu0 %v2477
    %3336 = vmatpush2.msra.mxu0 %v2476
    %3337 = vmatprep.subr.mxu0 %v2461
    %3338 = vmatpush2.msra.mxu0 %v2460
    %3339 = vmatprep.subr.mxu0 %v2445
    %3340 = vmatpush2.msra.mxu0 %v2444
    %3341 = vmatprep.subr.mxu0 %v2429
    %3342 = vmatpush2.msra.mxu0 %v2428
    %3343 = vmatprep.subr.mxu0 %v2413
    %3344 = vmatpush2.msra.mxu0 %v2412
    %3345 = vmatprep.subr.mxu0 %v2397
    %3346 = vmatpush2.msra.mxu0 %v2396
    %3347 = vmatprep.subr.mxu0 %v2381
    %3348 = vmatpush2.msra.mxu0 %v2380
    %3349 = vmatprep.subr.mxu0 %v2365
    %3350 = vmatpush2.msra.mxu0 %v2364
    %3351 = vmatprep.subr.mxu0 %v2349
    %3352 = vmatpush2.msra.mxu0 %v2348
    %3353 = vmatprep.mubr.f32.mxu0 %v1567
    %3354 = vmatmul.mubr.f32.gmra.mxu0 %v1566
    %v3355 = vpop.f32.mrf.mxu0
    %v3356 = vadd.f32 %v3279, %v3355
    %v3357 = vpop.f32.mrf.mxu0
    %v3358 = vadd.f32 %v3281, %v3357
    %3359 = vmatprep.mubr.f32.mxu0 %v1571
    %3360 = vmatmul.mubr.f32.gmra.mxu0 %v1570
    %v3361 = vpop.f32.mrf.mxu0
    %v3362 = vadd.f32 %v3285, %v3361
    %v3363 = vpop.f32.mrf.mxu0
    %v3364 = vadd.f32 %v3287, %v3363
    %3365 = vdwg.mxu0
    %3366 = vmatprep.subr.mxu0 %v1823
    %3367 = vmatpush1.msra.mxu0 %v1822
    %3368 = vmatprep.subr.mxu0 %v1807
    %3369 = vmatpush1.msra.mxu0 %v1806
    %3370 = vmatprep.subr.mxu0 %v1791
    %3371 = vmatpush1.msra.mxu0 %v1790
    %3372 = vmatprep.subr.mxu0 %v1775
    %3373 = vmatpush1.msra.mxu0 %v1774
    %3374 = vmatprep.subr.mxu0 %v1759
    %3375 = vmatpush1.msra.mxu0 %v1758
    %3376 = vmatprep.subr.mxu0 %v1743
    %3377 = vmatpush1.msra.mxu0 %v1742
    %3378 = vmatprep.subr.mxu0 %v1727
    %3379 = vmatpush1.msra.mxu0 %v1726
    %3380 = vmatprep.subr.mxu0 %v1711
    %3381 = vmatpush1.msra.mxu0 %v1710
    %3382 = vmatprep.subr.mxu0 %v1695
    %3383 = vmatpush1.msra.mxu0 %v1694
    %3384 = vmatprep.subr.mxu0 %v1679
    %3385 = vmatpush1.msra.mxu0 %v1678
    %3386 = vmatprep.subr.mxu0 %v1663
    %3387 = vmatpush1.msra.mxu0 %v1662
    %3388 = vmatprep.subr.mxu0 %v1647
    %3389 = vmatpush1.msra.mxu0 %v1646
    %3390 = vmatprep.subr.mxu0 %v1631
    %3391 = vmatpush1.msra.mxu0 %v1630
    %3392 = vmatprep.subr.mxu0 %v1615
    %3393 = vmatpush1.msra.mxu0 %v1614
    %3394 = vmatprep.subr.mxu0 %v1599
    %3395 = vmatpush1.msra.mxu0 %v1598
    %3396 = vmatprep.subr.mxu0 %v1583
    %3397 = vmatpush1.msra.mxu0 %v1582
    %3398 = vmatprep.subr.mxu0 %v2079
    %3399 = vmatpush2.msra.mxu0 %v2078
    %3400 = vmatprep.subr.mxu0 %v2063
    %3401 = vmatpush2.msra.mxu0 %v2062
    %3402 = vmatprep.subr.mxu0 %v2047
    %3403 = vmatpush2.msra.mxu0 %v2046
    %3404 = vmatprep.subr.mxu0 %v2031
    %3405 = vmatpush2.msra.mxu0 %v2030
    %3406 = vmatprep.subr.mxu0 %v2015
    %3407 = vmatpush2.msra.mxu0 %v2014
    %3408 = vmatprep.subr.mxu0 %v1999
    %3409 = vmatpush2.msra.mxu0 %v1998
    %3410 = vmatprep.subr.mxu0 %v1983
    %3411 = vmatpush2.msra.mxu0 %v1982
    %3412 = vmatprep.subr.mxu0 %v1967
    %3413 = vmatpush2.msra.mxu0 %v1966
    %3414 = vmatprep.subr.mxu0 %v1951
    %3415 = vmatpush2.msra.mxu0 %v1950
    %3416 = vmatprep.subr.mxu0 %v1935
    %3417 = vmatpush2.msra.mxu0 %v1934
    %3418 = vmatprep.subr.mxu0 %v1919
    %3419 = vmatpush2.msra.mxu0 %v1918
    %3420 = vmatprep.subr.mxu0 %v1903
    %3421 = vmatpush2.msra.mxu0 %v1902
    %3422 = vmatprep.subr.mxu0 %v1887
    %3423 = vmatpush2.msra.mxu0 %v1886
    %3424 = vmatprep.subr.mxu0 %v1871
    %3425 = vmatpush2.msra.mxu0 %v1870
    %3426 = vmatprep.subr.mxu0 %v1855
    %3427 = vmatpush2.msra.mxu0 %v1854
    %3428 = vmatprep.subr.mxu0 %v1839
    %3429 = vmatpush2.msra.mxu0 %v1838
    %3430 = vmatprep.mubr.f32.mxu0 %v1565
    %3431 = vmatmul.mubr.f32.gmra.mxu0 %v1564
    %v3432 = vpop.f32.mrf.mxu0
    %v3433 = vadd.f32 0.0, %v3432
    %v3434 = vpop.f32.mrf.mxu0
    %v3435 = vadd.f32 0.0, %v3434
    %3436 = vmatprep.mubr.f32.mxu0 %v1569
    %3437 = vmatmul.mubr.f32.gmra.mxu0 %v1568
    %v3438 = vpop.f32.mrf.mxu0
    %v3439 = vadd.f32 0.0, %v3438
    %v3440 = vpop.f32.mrf.mxu0
    %v3441 = vadd.f32 0.0, %v3440
    %3442 = vdwg.mxu0
    %3443 = vmatprep.subr.mxu0 %v2335
    %3444 = vmatpush1.msra.mxu0 %v2334
    %3445 = vmatprep.subr.mxu0 %v2319
    %3446 = vmatpush1.msra.mxu0 %v2318
    %3447 = vmatprep.subr.mxu0 %v2303
    %3448 = vmatpush1.msra.mxu0 %v2302
    %3449 = vmatprep.subr.mxu0 %v2287
    %3450 = vmatpush1.msra.mxu0 %v2286
    %3451 = vmatprep.subr.mxu0 %v2271
    %3452 = vmatpush1.msra.mxu0 %v2270
    %3453 = vmatprep.subr.mxu0 %v2255
    %3454 = vmatpush1.msra.mxu0 %v2254
    %3455 = vmatprep.subr.mxu0 %v2239
    %3456 = vmatpush1.msra.mxu0 %v2238
    %3457 = vmatprep.subr.mxu0 %v2223
    %3458 = vmatpush1.msra.mxu0 %v2222
    %3459 = vmatprep.subr.mxu0 %v2207
    %3460 = vmatpush1.msra.mxu0 %v2206
    %3461 = vmatprep.subr.mxu0 %v2191
    %3462 = vmatpush1.msra.mxu0 %v2190
    %3463 = vmatprep.subr.mxu0 %v2175
    %3464 = vmatpush1.msra.mxu0 %v2174
    %3465 = vmatprep.subr.mxu0 %v2159
    %3466 = vmatpush1.msra.mxu0 %v2158
    %3467 = vmatprep.subr.mxu0 %v2143
    %3468 = vmatpush1.msra.mxu0 %v2142
    %3469 = vmatprep.subr.mxu0 %v2127
    %3470 = vmatpush1.msra.mxu0 %v2126
    %3471 = vmatprep.subr.mxu0 %v2111
    %3472 = vmatpush1.msra.mxu0 %v2110
    %3473 = vmatprep.subr.mxu0 %v2095
    %3474 = vmatpush1.msra.mxu0 %v2094
    %3475 = vmatprep.subr.mxu0 %v2591
    %3476 = vmatpush2.msra.mxu0 %v2590
    %3477 = vmatprep.subr.mxu0 %v2575
    %3478 = vmatpush2.msra.mxu0 %v2574
    %3479 = vmatprep.subr.mxu0 %v2559
    %3480 = vmatpush2.msra.mxu0 %v2558
    %3481 = vmatprep.subr.mxu0 %v2543
    %3482 = vmatpush2.msra.mxu0 %v2542
    %3483 = vmatprep.subr.mxu0 %v2527
    %3484 = vmatpush2.msra.mxu0 %v2526
    %3485 = vmatprep.subr.mxu0 %v2511
    %3486 = vmatpush2.msra.mxu0 %v2510
    %3487 = vmatprep.subr.mxu0 %v2495
    %3488 = vmatpush2.msra.mxu0 %v2494
    %3489 = vmatprep.subr.mxu0 %v2479
    %3490 = vmatpush2.msra.mxu0 %v2478
    %3491 = vmatprep.subr.mxu0 %v2463
    %3492 = vmatpush2.msra.mxu0 %v2462
    %3493 = vmatprep.subr.mxu0 %v2447
    %3494 = vmatpush2.msra.mxu0 %v2446
    %3495 = vmatprep.subr.mxu0 %v2431
    %3496 = vmatpush2.msra.mxu0 %v2430
    %3497 = vmatprep.subr.mxu0 %v2415
    %3498 = vmatpush2.msra.mxu0 %v2414
    %3499 = vmatprep.subr.mxu0 %v2399
    %3500 = vmatpush2.msra.mxu0 %v2398
    %3501 = vmatprep.subr.mxu0 %v2383
    %3502 = vmatpush2.msra.mxu0 %v2382
    %3503 = vmatprep.subr.mxu0 %v2367
    %3504 = vmatpush2.msra.mxu0 %v2366
    %3505 = vmatprep.subr.mxu0 %v2351
    %3506 = vmatpush2.msra.mxu0 %v2350
    %3507 = vmatprep.mubr.f32.mxu0 %v1567
    %3508 = vmatmul.mubr.f32.gmra.mxu0 %v1566
    %v3509 = vpop.f32.mrf.mxu0
    %v3510 = vadd.f32 %v3433, %v3509
    %v3511 = vpop.f32.mrf.mxu0
    %v3512 = vadd.f32 %v3435, %v3511
    %3513 = vmatprep.mubr.f32.mxu0 %v1571
    %3514 = vmatmul.mubr.f32.gmra.mxu0 %v1570
    %v3515 = vpop.f32.mrf.mxu0
    %v3516 = vadd.f32 %v3439, %v3515
    %v3517 = vpop.f32.mrf.mxu0
    %v3518 = vadd.f32 %v3441, %v3517
    %3519 = vdwg.mxu0
    %3520 = vmatprep.subr.mxu0 %v1825
    %3521 = vmatpush1.msra.mxu0 %v1824
    %3522 = vmatprep.subr.mxu0 %v1809
    %3523 = vmatpush1.msra.mxu0 %v1808
    %3524 = vmatprep.subr.mxu0 %v1793
    %3525 = vmatpush1.msra.mxu0 %v1792
    %3526 = vmatprep.subr.mxu0 %v1777
    %3527 = vmatpush1.msra.mxu0 %v1776
    %3528 = vmatprep.subr.mxu0 %v1761
    %3529 = vmatpush1.msra.mxu0 %v1760
    %3530 = vmatprep.subr.mxu0 %v1745
    %3531 = vmatpush1.msra.mxu0 %v1744
    %3532 = vmatprep.subr.mxu0 %v1729
    %3533 = vmatpush1.msra.mxu0 %v1728
    %3534 = vmatprep.subr.mxu0 %v1713
    %3535 = vmatpush1.msra.mxu0 %v1712
    %3536 = vmatprep.subr.mxu0 %v1697
    %3537 = vmatpush1.msra.mxu0 %v1696
    %3538 = vmatprep.subr.mxu0 %v1681
    %3539 = vmatpush1.msra.mxu0 %v1680
    %3540 = vmatprep.subr.mxu0 %v1665
    %3541 = vmatpush1.msra.mxu0 %v1664
    %3542 = vmatprep.subr.mxu0 %v1649
    %3543 = vmatpush1.msra.mxu0 %v1648
    %3544 = vmatprep.subr.mxu0 %v1633
    %3545 = vmatpush1.msra.mxu0 %v1632
    %3546 = vmatprep.subr.mxu0 %v1617
    %3547 = vmatpush1.msra.mxu0 %v1616
    %3548 = vmatprep.subr.mxu0 %v1601
    %3549 = vmatpush1.msra.mxu0 %v1600
    %3550 = vmatprep.subr.mxu0 %v1585
    %3551 = vmatpush1.msra.mxu0 %v1584
    %3552 = vmatprep.subr.mxu0 %v2081
    %3553 = vmatpush2.msra.mxu0 %v2080
    %3554 = vmatprep.subr.mxu0 %v2065
    %3555 = vmatpush2.msra.mxu0 %v2064
    %3556 = vmatprep.subr.mxu0 %v2049
    %3557 = vmatpush2.msra.mxu0 %v2048
    %3558 = vmatprep.subr.mxu0 %v2033
    %3559 = vmatpush2.msra.mxu0 %v2032
    %3560 = vmatprep.subr.mxu0 %v2017
    %3561 = vmatpush2.msra.mxu0 %v2016
    %3562 = vmatprep.subr.mxu0 %v2001
    %3563 = vmatpush2.msra.mxu0 %v2000
    %3564 = vmatprep.subr.mxu0 %v1985
    %3565 = vmatpush2.msra.mxu0 %v1984
    %3566 = vmatprep.subr.mxu0 %v1969
    %3567 = vmatpush2.msra.mxu0 %v1968
    %3568 = vmatprep.subr.mxu0 %v1953
    %3569 = vmatpush2.msra.mxu0 %v1952
    %3570 = vmatprep.subr.mxu0 %v1937
    %3571 = vmatpush2.msra.mxu0 %v1936
    %3572 = vmatprep.subr.mxu0 %v1921
    %3573 = vmatpush2.msra.mxu0 %v1920
    %3574 = vmatprep.subr.mxu0 %v1905
    %3575 = vmatpush2.msra.mxu0 %v1904
    %3576 = vmatprep.subr.mxu0 %v1889
    %3577 = vmatpush2.msra.mxu0 %v1888
    %3578 = vmatprep.subr.mxu0 %v1873
    %3579 = vmatpush2.msra.mxu0 %v1872
    %3580 = vmatprep.subr.mxu0 %v1857
    %3581 = vmatpush2.msra.mxu0 %v1856
    %3582 = vmatprep.subr.mxu0 %v1841
    %3583 = vmatpush2.msra.mxu0 %v1840
    %3584 = vmatprep.mubr.f32.mxu0 %v1565
    %3585 = vmatmul.mubr.f32.gmra.mxu0 %v1564
    %v3586 = vpop.f32.mrf.mxu0
    %v3587 = vadd.f32 0.0, %v3586
    %v3588 = vpop.f32.mrf.mxu0
    %v3589 = vadd.f32 0.0, %v3588
    %3590 = vmatprep.mubr.f32.mxu0 %v1569
    %3591 = vmatmul.mubr.f32.gmra.mxu0 %v1568
    %v3592 = vpop.f32.mrf.mxu0
    %v3593 = vadd.f32 0.0, %v3592
    %v3594 = vpop.f32.mrf.mxu0
    %v3595 = vadd.f32 0.0, %v3594
    %3596 = vdwg.mxu0
    %3597 = vmatprep.subr.mxu0 %v2337
    %3598 = vmatpush1.msra.mxu0 %v2336
    %3599 = vmatprep.subr.mxu0 %v2321
    %3600 = vmatpush1.msra.mxu0 %v2320
    %3601 = vmatprep.subr.mxu0 %v2305
    %3602 = vmatpush1.msra.mxu0 %v2304
    %3603 = vmatprep.subr.mxu0 %v2289
    %3604 = vmatpush1.msra.mxu0 %v2288
    %3605 = vmatprep.subr.mxu0 %v2273
    %3606 = vmatpush1.msra.mxu0 %v2272
    %3607 = vmatprep.subr.mxu0 %v2257
    %3608 = vmatpush1.msra.mxu0 %v2256
    %3609 = vmatprep.subr.mxu0 %v2241
    %3610 = vmatpush1.msra.mxu0 %v2240
    %3611 = vmatprep.subr.mxu0 %v2225
    %3612 = vmatpush1.msra.mxu0 %v2224
    %3613 = vmatprep.subr.mxu0 %v2209
    %3614 = vmatpush1.msra.mxu0 %v2208
    %3615 = vmatprep.subr.mxu0 %v2193
    %3616 = vmatpush1.msra.mxu0 %v2192
    %3617 = vmatprep.subr.mxu0 %v2177
    %3618 = vmatpush1.msra.mxu0 %v2176
    %3619 = vmatprep.subr.mxu0 %v2161
    %3620 = vmatpush1.msra.mxu0 %v2160
    %3621 = vmatprep.subr.mxu0 %v2145
    %3622 = vmatpush1.msra.mxu0 %v2144
    %3623 = vmatprep.subr.mxu0 %v2129
    %3624 = vmatpush1.msra.mxu0 %v2128
    %3625 = vmatprep.subr.mxu0 %v2113
    %3626 = vmatpush1.msra.mxu0 %v2112
    %3627 = vmatprep.subr.mxu0 %v2097
    %3628 = vmatpush1.msra.mxu0 %v2096
    %3629 = vmatprep.subr.mxu0 %v2593
    %3630 = vmatpush2.msra.mxu0 %v2592
    %3631 = vmatprep.subr.mxu0 %v2577
    %3632 = vmatpush2.msra.mxu0 %v2576
    %3633 = vmatprep.subr.mxu0 %v2561
    %3634 = vmatpush2.msra.mxu0 %v2560
    %3635 = vmatprep.subr.mxu0 %v2545
    %3636 = vmatpush2.msra.mxu0 %v2544
    %3637 = vmatprep.subr.mxu0 %v2529
    %3638 = vmatpush2.msra.mxu0 %v2528
    %3639 = vmatprep.subr.mxu0 %v2513
    %3640 = vmatpush2.msra.mxu0 %v2512
    %3641 = vmatprep.subr.mxu0 %v2497
    %3642 = vmatpush2.msra.mxu0 %v2496
    %3643 = vmatprep.subr.mxu0 %v2481
    %3644 = vmatpush2.msra.mxu0 %v2480
    %3645 = vmatprep.subr.mxu0 %v2465
    %3646 = vmatpush2.msra.mxu0 %v2464
    %3647 = vmatprep.subr.mxu0 %v2449
    %3648 = vmatpush2.msra.mxu0 %v2448
    %3649 = vmatprep.subr.mxu0 %v2433
    %3650 = vmatpush2.msra.mxu0 %v2432
    %3651 = vmatprep.subr.mxu0 %v2417
    %3652 = vmatpush2.msra.mxu0 %v2416
    %3653 = vmatprep.subr.mxu0 %v2401
    %3654 = vmatpush2.msra.mxu0 %v2400
    %3655 = vmatprep.subr.mxu0 %v2385
    %3656 = vmatpush2.msra.mxu0 %v2384
    %3657 = vmatprep.subr.mxu0 %v2369
    %3658 = vmatpush2.msra.mxu0 %v2368
    %3659 = vmatprep.subr.mxu0 %v2353
    %3660 = vmatpush2.msra.mxu0 %v2352
    %3661 = vmatprep.mubr.f32.mxu0 %v1567
    %3662 = vmatmul.mubr.f32.gmra.mxu0 %v1566
    %v3663 = vpop.f32.mrf.mxu0
    %v3664 = vadd.f32 %v3587, %v3663
    %v3665 = vpop.f32.mrf.mxu0
    %v3666 = vadd.f32 %v3589, %v3665
    %3667 = vmatprep.mubr.f32.mxu0 %v1571
    %3668 = vmatmul.mubr.f32.gmra.mxu0 %v1570
    %v3669 = vpop.f32.mrf.mxu0
    %v3670 = vadd.f32 %v3593, %v3669
    %v3671 = vpop.f32.mrf.mxu0
    %v3672 = vadd.f32 %v3595, %v3671
    %3673 = vdwg.mxu0
    %3674 = vmatprep.subr.mxu0 %v1827
    %3675 = vmatpush1.msra.mxu0 %v1826
    %3676 = vmatprep.subr.mxu0 %v1811
    %3677 = vmatpush1.msra.mxu0 %v1810
    %3678 = vmatprep.subr.mxu0 %v1795
    %3679 = vmatpush1.msra.mxu0 %v1794
    %3680 = vmatprep.subr.mxu0 %v1779
    %3681 = vmatpush1.msra.mxu0 %v1778
    %3682 = vmatprep.subr.mxu0 %v1763
    %3683 = vmatpush1.msra.mxu0 %v1762
    %3684 = vmatprep.subr.mxu0 %v1747
    %3685 = vmatpush1.msra.mxu0 %v1746
    %3686 = vmatprep.subr.mxu0 %v1731
    %3687 = vmatpush1.msra.mxu0 %v1730
    %3688 = vmatprep.subr.mxu0 %v1715
    %3689 = vmatpush1.msra.mxu0 %v1714
    %3690 = vmatprep.subr.mxu0 %v1699
    %3691 = vmatpush1.msra.mxu0 %v1698
    %3692 = vmatprep.subr.mxu0 %v1683
    %3693 = vmatpush1.msra.mxu0 %v1682
    %3694 = vmatprep.subr.mxu0 %v1667
    %3695 = vmatpush1.msra.mxu0 %v1666
    %3696 = vmatprep.subr.mxu0 %v1651
    %3697 = vmatpush1.msra.mxu0 %v1650
    %3698 = vmatprep.subr.mxu0 %v1635
    %3699 = vmatpush1.msra.mxu0 %v1634
    %3700 = vmatprep.subr.mxu0 %v1619
    %3701 = vmatpush1.msra.mxu0 %v1618
    %3702 = vmatprep.subr.mxu0 %v1603
    %3703 = vmatpush1.msra.mxu0 %v1602
    %3704 = vmatprep.subr.mxu0 %v1587
    %3705 = vmatpush1.msra.mxu0 %v1586
    %3706 = vmatprep.subr.mxu0 %v2083
    %3707 = vmatpush2.msra.mxu0 %v2082
    %3708 = vmatprep.subr.mxu0 %v2067
    %3709 = vmatpush2.msra.mxu0 %v2066
    %3710 = vmatprep.subr.mxu0 %v2051
    %3711 = vmatpush2.msra.mxu0 %v2050
    %3712 = vmatprep.subr.mxu0 %v2035
    %3713 = vmatpush2.msra.mxu0 %v2034
    %3714 = vmatprep.subr.mxu0 %v2019
    %3715 = vmatpush2.msra.mxu0 %v2018
    %3716 = vmatprep.subr.mxu0 %v2003
    %3717 = vmatpush2.msra.mxu0 %v2002
    %3718 = vmatprep.subr.mxu0 %v1987
    %3719 = vmatpush2.msra.mxu0 %v1986
    %3720 = vmatprep.subr.mxu0 %v1971
    %3721 = vmatpush2.msra.mxu0 %v1970
    %3722 = vmatprep.subr.mxu0 %v1955
    %3723 = vmatpush2.msra.mxu0 %v1954
    %3724 = vmatprep.subr.mxu0 %v1939
    %3725 = vmatpush2.msra.mxu0 %v1938
    %3726 = vmatprep.subr.mxu0 %v1923
    %3727 = vmatpush2.msra.mxu0 %v1922
    %3728 = vmatprep.subr.mxu0 %v1907
    %3729 = vmatpush2.msra.mxu0 %v1906
    %3730 = vmatprep.subr.mxu0 %v1891
    %3731 = vmatpush2.msra.mxu0 %v1890
    %3732 = vmatprep.subr.mxu0 %v1875
    %3733 = vmatpush2.msra.mxu0 %v1874
    %3734 = vmatprep.subr.mxu0 %v1859
    %3735 = vmatpush2.msra.mxu0 %v1858
    %3736 = vmatprep.subr.mxu0 %v1843
    %3737 = vmatpush2.msra.mxu0 %v1842
    %3738 = vmatprep.mubr.f32.mxu0 %v1565
    %3739 = vmatmul.mubr.f32.gmra.mxu0 %v1564
    %v3740 = vpop.f32.mrf.mxu0
    %v3741 = vadd.f32 0.0, %v3740
    %v3742 = vpop.f32.mrf.mxu0
    %v3743 = vadd.f32 0.0, %v3742
    %3744 = vmatprep.mubr.f32.mxu0 %v1569
    %3745 = vmatmul.mubr.f32.gmra.mxu0 %v1568
    %v3746 = vpop.f32.mrf.mxu0
    %v3747 = vadd.f32 0.0, %v3746
    %v3748 = vpop.f32.mrf.mxu0
    %v3749 = vadd.f32 0.0, %v3748
    %3750 = vdwg.mxu0
    %3751 = vmatprep.subr.mxu0 %v2339
    %3752 = vmatpush1.msra.mxu0 %v2338
    %3753 = vmatprep.subr.mxu0 %v2323
    %3754 = vmatpush1.msra.mxu0 %v2322
    %3755 = vmatprep.subr.mxu0 %v2307
    %3756 = vmatpush1.msra.mxu0 %v2306
    %3757 = vmatprep.subr.mxu0 %v2291
    %3758 = vmatpush1.msra.mxu0 %v2290
    %3759 = vmatprep.subr.mxu0 %v2275
    %3760 = vmatpush1.msra.mxu0 %v2274
    %3761 = vmatprep.subr.mxu0 %v2259
    %3762 = vmatpush1.msra.mxu0 %v2258
    %3763 = vmatprep.subr.mxu0 %v2243
    %3764 = vmatpush1.msra.mxu0 %v2242
    %3765 = vmatprep.subr.mxu0 %v2227
    %3766 = vmatpush1.msra.mxu0 %v2226
    %3767 = vmatprep.subr.mxu0 %v2211
    %3768 = vmatpush1.msra.mxu0 %v2210
    %3769 = vmatprep.subr.mxu0 %v2195
    %3770 = vmatpush1.msra.mxu0 %v2194
    %3771 = vmatprep.subr.mxu0 %v2179
    %3772 = vmatpush1.msra.mxu0 %v2178
    %3773 = vmatprep.subr.mxu0 %v2163
    %3774 = vmatpush1.msra.mxu0 %v2162
    %3775 = vmatprep.subr.mxu0 %v2147
    %3776 = vmatpush1.msra.mxu0 %v2146
    %3777 = vmatprep.subr.mxu0 %v2131
    %3778 = vmatpush1.msra.mxu0 %v2130
    %3779 = vmatprep.subr.mxu0 %v2115
    %3780 = vmatpush1.msra.mxu0 %v2114
    %3781 = vmatprep.subr.mxu0 %v2099
    %3782 = vmatpush1.msra.mxu0 %v2098
    %3783 = vmatprep.subr.mxu0 %v2595
    %3784 = vmatpush2.msra.mxu0 %v2594
    %3785 = vmatprep.subr.mxu0 %v2579
    %3786 = vmatpush2.msra.mxu0 %v2578
    %3787 = vmatprep.subr.mxu0 %v2563
    %3788 = vmatpush2.msra.mxu0 %v2562
    %3789 = vmatprep.subr.mxu0 %v2547
    %3790 = vmatpush2.msra.mxu0 %v2546
    %3791 = vmatprep.subr.mxu0 %v2531
    %3792 = vmatpush2.msra.mxu0 %v2530
    %3793 = vmatprep.subr.mxu0 %v2515
    %3794 = vmatpush2.msra.mxu0 %v2514
    %3795 = vmatprep.subr.mxu0 %v2499
    %3796 = vmatpush2.msra.mxu0 %v2498
    %3797 = vmatprep.subr.mxu0 %v2483
    %3798 = vmatpush2.msra.mxu0 %v2482
    %3799 = vmatprep.subr.mxu0 %v2467
    %3800 = vmatpush2.msra.mxu0 %v2466
    %3801 = vmatprep.subr.mxu0 %v2451
    %3802 = vmatpush2.msra.mxu0 %v2450
    %3803 = vmatprep.subr.mxu0 %v2435
    %3804 = vmatpush2.msra.mxu0 %v2434
    %3805 = vmatprep.subr.mxu0 %v2419
    %3806 = vmatpush2.msra.mxu0 %v2418
    %3807 = vmatprep.subr.mxu0 %v2403
    %3808 = vmatpush2.msra.mxu0 %v2402
    %3809 = vmatprep.subr.mxu0 %v2387
    %3810 = vmatpush2.msra.mxu0 %v2386
    %3811 = vmatprep.subr.mxu0 %v2371
    %3812 = vmatpush2.msra.mxu0 %v2370
    %3813 = vmatprep.subr.mxu0 %v2355
    %3814 = vmatpush2.msra.mxu0 %v2354
    %3815 = vmatprep.mubr.f32.mxu0 %v1567
    %3816 = vmatmul.mubr.f32.gmra.mxu0 %v1566
    %v3817 = vpop.f32.mrf.mxu0
    %v3818 = vadd.f32 %v3741, %v3817
    %v3819 = vpop.f32.mrf.mxu0
    %v3820 = vadd.f32 %v3743, %v3819
    %3821 = vmatprep.mubr.f32.mxu0 %v1571
    %3822 = vmatmul.mubr.f32.gmra.mxu0 %v1570
    %v3823 = vpop.f32.mrf.mxu0
    %v3824 = vadd.f32 %v3747, %v3823
    %v3825 = vpop.f32.mrf.mxu0
    %v3826 = vadd.f32 %v3749, %v3825
    %3827 = vdwg.mxu0
    %v3828 = vmax.f32 %v2740, 0.0
    %v3829 = vmax.f32 %v2742, 0.0
    %v3830 = vmax.f32 %v2894, 0.0
    %v3831 = vmax.f32 %v2896, 0.0
    %v3832 = vmax.f32 %v3048, 0.0
    %v3833 = vmax.f32 %v3050, 0.0
    %v3834 = vmax.f32 %v3202, 0.0
    %v3835 = vmax.f32 %v3204, 0.0
    %v3836 = vmax.f32 %v3356, 0.0
    %v3837 = vmax.f32 %v3358, 0.0
    %v3838 = vmax.f32 %v3510, 0.0
    %v3839 = vmax.f32 %v3512, 0.0
    %v3840 = vmax.f32 %v3664, 0.0
    %v3841 = vmax.f32 %v3666, 0.0
    %v3842 = vmax.f32 %v3818, 0.0
    %v3843 = vmax.f32 %v3820, 0.0
    %v3844 = vmax.f32 %v2746, 0.0
    %v3845 = vmax.f32 %v2748, 0.0
    %v3846 = vmax.f32 %v2900, 0.0
    %v3847 = vmax.f32 %v2902, 0.0
    %v3848 = vmax.f32 %v3054, 0.0
    %v3849 = vmax.f32 %v3056, 0.0
    %v3850 = vmax.f32 %v3208, 0.0
    %v3851 = vmax.f32 %v3210, 0.0
    %v3852 = vmax.f32 %v3362, 0.0
    %v3853 = vmax.f32 %v3364, 0.0
    %v3854 = vmax.f32 %v3516, 0.0
    %v3855 = vmax.f32 %v3518, 0.0
    %v3856 = vmax.f32 %v3670, 0.0
    %v3857 = vmax.f32 %v3672, 0.0
    %v3858 = vmax.f32 %v3824, 0.0
    %v3859 = vmax.f32 %v3826, 0.0
    %v3860 = vld [vmem:[#allocation8] sm:$0xff]
    %v3861 = vld [vmem:[#allocation8 + $0x8] sm:$0xff]
    %v3862 = vld [vmem:[#allocation8 + $0x10] sm:$0xff]
    %v3863 = vld [vmem:[#allocation8 + $0x18] sm:$0xff]
    %v3864 = vld [vmem:[#allocation8 + $0x20] sm:$0xff]
    %v3865 = vld [vmem:[#allocation8 + $0x28] sm:$0xff]
    %v3866 = vld [vmem:[#allocation8 + $0x30] sm:$0xff]
    %v3867 = vld [vmem:[#allocation8 + $0x38] sm:$0xff]
    %v3868 = vld [vmem:[#allocation8 + $0x40] sm:$0xff]
    %v3869 = vld [vmem:[#allocation8 + $0x48] sm:$0xff]
    %v3870 = vld [vmem:[#allocation8 + $0x50] sm:$0xff]
    %v3871 = vld [vmem:[#allocation8 + $0x58] sm:$0xff]
    %v3872 = vld [vmem:[#allocation8 + $0x60] sm:$0xff]
    %v3873 = vld [vmem:[#allocation8 + $0x68] sm:$0xff]
    %v3874 = vld [vmem:[#allocation8 + $0x70] sm:$0xff]
    %v3875 = vld [vmem:[#allocation8 + $0x78] sm:$0xff]
    %v3876 = vld [vmem:[#allocation8 + $0x80] sm:$0xff]
    %v3877 = vld [vmem:[#allocation8 + $0x88] sm:$0xff]
    %v3878 = vld [vmem:[#allocation8 + $0x90] sm:$0xff]
    %v3879 = vld [vmem:[#allocation8 + $0x98] sm:$0xff]
    %v3880 = vld [vmem:[#allocation8 + $0xa0] sm:$0xff]
    %v3881 = vld [vmem:[#allocation8 + $0xa8] sm:$0xff]
    %v3882 = vld [vmem:[#allocation8 + $0xb0] sm:$0xff]
    %v3883 = vld [vmem:[#allocation8 + $0xb8] sm:$0xff]
    %v3884 = vld [vmem:[#allocation8 + $0xc0] sm:$0xff]
    %v3885 = vld [vmem:[#allocation8 + $0xc8] sm:$0xff]
    %v3886 = vld [vmem:[#allocation8 + $0xd0] sm:$0xff]
    %v3887 = vld [vmem:[#allocation8 + $0xd8] sm:$0xff]
    %v3888 = vld [vmem:[#allocation8 + $0xe0] sm:$0xff]
    %v3889 = vld [vmem:[#allocation8 + $0xe8] sm:$0xff]
    %v3890 = vld [vmem:[#allocation8 + $0xf0] sm:$0xff]
    %v3891 = vld [vmem:[#allocation8 + $0xf8] sm:$0xff]
    %v3892 = vld [vmem:[#allocation8 + $0x100] sm:$0xff]
    %v3893 = vld [vmem:[#allocation8 + $0x108] sm:$0xff]
    %v3894 = vld [vmem:[#allocation8 + $0x110] sm:$0xff]
    %v3895 = vld [vmem:[#allocation8 + $0x118] sm:$0xff]
    %v3896 = vld [vmem:[#allocation8 + $0x120] sm:$0xff]
    %v3897 = vld [vmem:[#allocation8 + $0x128] sm:$0xff]
    %v3898 = vld [vmem:[#allocation8 + $0x130] sm:$0xff]
    %v3899 = vld [vmem:[#allocation8 + $0x138] sm:$0xff]
    %v3900 = vld [vmem:[#allocation8 + $0x140] sm:$0xff]
    %v3901 = vld [vmem:[#allocation8 + $0x148] sm:$0xff]
    %v3902 = vld [vmem:[#allocation8 + $0x150] sm:$0xff]
    %v3903 = vld [vmem:[#allocation8 + $0x158] sm:$0xff]
    %v3904 = vld [vmem:[#allocation8 + $0x160] sm:$0xff]
    %v3905 = vld [vmem:[#allocation8 + $0x168] sm:$0xff]
    %v3906 = vld [vmem:[#allocation8 + $0x170] sm:$0xff]
    %v3907 = vld [vmem:[#allocation8 + $0x178] sm:$0xff]
    %v3908 = vld [vmem:[#allocation8 + $0x180] sm:$0xff]
    %v3909 = vld [vmem:[#allocation8 + $0x188] sm:$0xff]
    %v3910 = vld [vmem:[#allocation8 + $0x190] sm:$0xff]
    %v3911 = vld [vmem:[#allocation8 + $0x198] sm:$0xff]
    %v3912 = vld [vmem:[#allocation8 + $0x1a0] sm:$0xff]
    %v3913 = vld [vmem:[#allocation8 + $0x1a8] sm:$0xff]
    %v3914 = vld [vmem:[#allocation8 + $0x1b0] sm:$0xff]
    %v3915 = vld [vmem:[#allocation8 + $0x1b8] sm:$0xff]
    %v3916 = vld [vmem:[#allocation8 + $0x1c0] sm:$0xff]
    %v3917 = vld [vmem:[#allocation8 + $0x1c8] sm:$0xff]
    %v3918 = vld [vmem:[#allocation8 + $0x1d0] sm:$0xff]
    %v3919 = vld [vmem:[#allocation8 + $0x1d8] sm:$0xff]
    %v3920 = vld [vmem:[#allocation8 + $0x1e0] sm:$0xff]
    %v3921 = vld [vmem:[#allocation8 + $0x1e8] sm:$0xff]
    %v3922 = vld [vmem:[#allocation8 + $0x1f0] sm:$0xff]
    %v3923 = vld [vmem:[#allocation8 + $0x1f8] sm:$0xff]
    %v3924 = vld [vmem:[#allocation8 + $0x200] sm:$0xff]
    %v3925 = vld [vmem:[#allocation8 + $0x208] sm:$0xff]
    %v3926 = vld [vmem:[#allocation8 + $0x210] sm:$0xff]
    %v3927 = vld [vmem:[#allocation8 + $0x218] sm:$0xff]
    %v3928 = vld [vmem:[#allocation8 + $0x220] sm:$0xff]
    %v3929 = vld [vmem:[#allocation8 + $0x228] sm:$0xff]
    %v3930 = vld [vmem:[#allocation8 + $0x230] sm:$0xff]
    %v3931 = vld [vmem:[#allocation8 + $0x238] sm:$0xff]
    %v3932 = vld [vmem:[#allocation8 + $0x240] sm:$0xff]
    %v3933 = vld [vmem:[#allocation8 + $0x248] sm:$0xff]
    %v3934 = vld [vmem:[#allocation8 + $0x250] sm:$0xff]
    %v3935 = vld [vmem:[#allocation8 + $0x258] sm:$0xff]
    %v3936 = vld [vmem:[#allocation8 + $0x260] sm:$0xff]
    %v3937 = vld [vmem:[#allocation8 + $0x268] sm:$0xff]
    %v3938 = vld [vmem:[#allocation8 + $0x270] sm:$0xff]
    %v3939 = vld [vmem:[#allocation8 + $0x278] sm:$0xff]
    %v3940 = vld [vmem:[#allocation8 + $0x280] sm:$0xff]
    %v3941 = vld [vmem:[#allocation8 + $0x288] sm:$0xff]
    %v3942 = vld [vmem:[#allocation8 + $0x290] sm:$0xff]
    %v3943 = vld [vmem:[#allocation8 + $0x298] sm:$0xff]
    %v3944 = vld [vmem:[#allocation8 + $0x2a0] sm:$0xff]
    %v3945 = vld [vmem:[#allocation8 + $0x2a8] sm:$0xff]
    %v3946 = vld [vmem:[#allocation8 + $0x2b0] sm:$0xff]
    %v3947 = vld [vmem:[#allocation8 + $0x2b8] sm:$0xff]
    %v3948 = vld [vmem:[#allocation8 + $0x2c0] sm:$0xff]
    %v3949 = vld [vmem:[#allocation8 + $0x2c8] sm:$0xff]
    %v3950 = vld [vmem:[#allocation8 + $0x2d0] sm:$0xff]
    %v3951 = vld [vmem:[#allocation8 + $0x2d8] sm:$0xff]
    %v3952 = vld [vmem:[#allocation8 + $0x2e0] sm:$0xff]
    %v3953 = vld [vmem:[#allocation8 + $0x2e8] sm:$0xff]
    %v3954 = vld [vmem:[#allocation8 + $0x2f0] sm:$0xff]
    %v3955 = vld [vmem:[#allocation8 + $0x2f8] sm:$0xff]
    %v3956 = vld [vmem:[#allocation8 + $0x300] sm:$0xff]
    %v3957 = vld [vmem:[#allocation8 + $0x308] sm:$0xff]
    %v3958 = vld [vmem:[#allocation8 + $0x310] sm:$0xff]
    %v3959 = vld [vmem:[#allocation8 + $0x318] sm:$0xff]
    %v3960 = vld [vmem:[#allocation8 + $0x320] sm:$0xff]
    %v3961 = vld [vmem:[#allocation8 + $0x328] sm:$0xff]
    %v3962 = vld [vmem:[#allocation8 + $0x330] sm:$0xff]
    %v3963 = vld [vmem:[#allocation8 + $0x338] sm:$0xff]
    %v3964 = vld [vmem:[#allocation8 + $0x340] sm:$0xff]
    %v3965 = vld [vmem:[#allocation8 + $0x348] sm:$0xff]
    %v3966 = vld [vmem:[#allocation8 + $0x350] sm:$0xff]
    %v3967 = vld [vmem:[#allocation8 + $0x358] sm:$0xff]
    %v3968 = vld [vmem:[#allocation8 + $0x360] sm:$0xff]
    %v3969 = vld [vmem:[#allocation8 + $0x368] sm:$0xff]
    %v3970 = vld [vmem:[#allocation8 + $0x370] sm:$0xff]
    %v3971 = vld [vmem:[#allocation8 + $0x378] sm:$0xff]
    %v3972 = vld [vmem:[#allocation8 + $0x380] sm:$0xff]
    %v3973 = vld [vmem:[#allocation8 + $0x388] sm:$0xff]
    %v3974 = vld [vmem:[#allocation8 + $0x390] sm:$0xff]
    %v3975 = vld [vmem:[#allocation8 + $0x398] sm:$0xff]
    %v3976 = vld [vmem:[#allocation8 + $0x3a0] sm:$0xff]
    %v3977 = vld [vmem:[#allocation8 + $0x3a8] sm:$0xff]
    %v3978 = vld [vmem:[#allocation8 + $0x3b0] sm:$0xff]
    %v3979 = vld [vmem:[#allocation8 + $0x3b8] sm:$0xff]
    %v3980 = vld [vmem:[#allocation8 + $0x3c0] sm:$0xff]
    %v3981 = vld [vmem:[#allocation8 + $0x3c8] sm:$0xff]
    %v3982 = vld [vmem:[#allocation8 + $0x3d0] sm:$0xff]
    %v3983 = vld [vmem:[#allocation8 + $0x3d8] sm:$0xff]
    %v3984 = vld [vmem:[#allocation8 + $0x3e0] sm:$0xff]
    %v3985 = vld [vmem:[#allocation8 + $0x3e8] sm:$0xff]
    %v3986 = vld [vmem:[#allocation8 + $0x3f0] sm:$0xff]
    %v3987 = vld [vmem:[#allocation8 + $0x3f8] sm:$0xff]
    %v3988 = vld [vmem:[#allocation8 + $0x400] sm:$0xff]
    %v3989 = vld [vmem:[#allocation8 + $0x408] sm:$0xff]
    %v3990 = vld [vmem:[#allocation8 + $0x410] sm:$0xff]
    %v3991 = vld [vmem:[#allocation8 + $0x418] sm:$0xff]
    %v3992 = vld [vmem:[#allocation8 + $0x420] sm:$0xff]
    %v3993 = vld [vmem:[#allocation8 + $0x428] sm:$0xff]
    %v3994 = vld [vmem:[#allocation8 + $0x430] sm:$0xff]
    %v3995 = vld [vmem:[#allocation8 + $0x438] sm:$0xff]
    %v3996 = vld [vmem:[#allocation8 + $0x440] sm:$0xff]
    %v3997 = vld [vmem:[#allocation8 + $0x448] sm:$0xff]
    %v3998 = vld [vmem:[#allocation8 + $0x450] sm:$0xff]
    %v3999 = vld [vmem:[#allocation8 + $0x458] sm:$0xff]
    %v4000 = vld [vmem:[#allocation8 + $0x460] sm:$0xff]
    %v4001 = vld [vmem:[#allocation8 + $0x468] sm:$0xff]
    %v4002 = vld [vmem:[#allocation8 + $0x470] sm:$0xff]
    %v4003 = vld [vmem:[#allocation8 + $0x478] sm:$0xff]
    %v4004 = vld [vmem:[#allocation8 + $0x480] sm:$0xff]
    %v4005 = vld [vmem:[#allocation8 + $0x488] sm:$0xff]
    %v4006 = vld [vmem:[#allocation8 + $0x490] sm:$0xff]
    %v4007 = vld [vmem:[#allocation8 + $0x498] sm:$0xff]
    %v4008 = vld [vmem:[#allocation8 + $0x4a0] sm:$0xff]
    %v4009 = vld [vmem:[#allocation8 + $0x4a8] sm:$0xff]
    %v4010 = vld [vmem:[#allocation8 + $0x4b0] sm:$0xff]
    %v4011 = vld [vmem:[#allocation8 + $0x4b8] sm:$0xff]
    %v4012 = vld [vmem:[#allocation8 + $0x4c0] sm:$0xff]
    %v4013 = vld [vmem:[#allocation8 + $0x4c8] sm:$0xff]
    %v4014 = vld [vmem:[#allocation8 + $0x4d0] sm:$0xff]
    %v4015 = vld [vmem:[#allocation8 + $0x4d8] sm:$0xff]
    %v4016 = vld [vmem:[#allocation8 + $0x4e0] sm:$0xff]
    %v4017 = vld [vmem:[#allocation8 + $0x4e8] sm:$0xff]
    %v4018 = vld [vmem:[#allocation8 + $0x4f0] sm:$0xff]
    %v4019 = vld [vmem:[#allocation8 + $0x4f8] sm:$0xff]
    %v4020 = vld [vmem:[#allocation8 + $0x500] sm:$0xff]
    %v4021 = vld [vmem:[#allocation8 + $0x508] sm:$0xff]
    %v4022 = vld [vmem:[#allocation8 + $0x510] sm:$0xff]
    %v4023 = vld [vmem:[#allocation8 + $0x518] sm:$0xff]
    %v4024 = vld [vmem:[#allocation8 + $0x520] sm:$0xff]
    %v4025 = vld [vmem:[#allocation8 + $0x528] sm:$0xff]
    %v4026 = vld [vmem:[#allocation8 + $0x530] sm:$0xff]
    %v4027 = vld [vmem:[#allocation8 + $0x538] sm:$0xff]
    %v4028 = vld [vmem:[#allocation8 + $0x540] sm:$0xff]
    %v4029 = vld [vmem:[#allocation8 + $0x548] sm:$0xff]
    %v4030 = vld [vmem:[#allocation8 + $0x550] sm:$0xff]
    %v4031 = vld [vmem:[#allocation8 + $0x558] sm:$0xff]
    %v4032 = vld [vmem:[#allocation8 + $0x560] sm:$0xff]
    %v4033 = vld [vmem:[#allocation8 + $0x568] sm:$0xff]
    %v4034 = vld [vmem:[#allocation8 + $0x570] sm:$0xff]
    %v4035 = vld [vmem:[#allocation8 + $0x578] sm:$0xff]
    %v4036 = vld [vmem:[#allocation8 + $0x580] sm:$0xff]
    %v4037 = vld [vmem:[#allocation8 + $0x588] sm:$0xff]
    %v4038 = vld [vmem:[#allocation8 + $0x590] sm:$0xff]
    %v4039 = vld [vmem:[#allocation8 + $0x598] sm:$0xff]
    %v4040 = vld [vmem:[#allocation8 + $0x5a0] sm:$0xff]
    %v4041 = vld [vmem:[#allocation8 + $0x5a8] sm:$0xff]
    %v4042 = vld [vmem:[#allocation8 + $0x5b0] sm:$0xff]
    %v4043 = vld [vmem:[#allocation8 + $0x5b8] sm:$0xff]
    %v4044 = vld [vmem:[#allocation8 + $0x5c0] sm:$0xff]
    %v4045 = vld [vmem:[#allocation8 + $0x5c8] sm:$0xff]
    %v4046 = vld [vmem:[#allocation8 + $0x5d0] sm:$0xff]
    %v4047 = vld [vmem:[#allocation8 + $0x5d8] sm:$0xff]
    %v4048 = vld [vmem:[#allocation8 + $0x5e0] sm:$0xff]
    %v4049 = vld [vmem:[#allocation8 + $0x5e8] sm:$0xff]
    %v4050 = vld [vmem:[#allocation8 + $0x5f0] sm:$0xff]
    %v4051 = vld [vmem:[#allocation8 + $0x5f8] sm:$0xff]
    %v4052 = vld [vmem:[#allocation8 + $0x600] sm:$0xff]
    %v4053 = vld [vmem:[#allocation8 + $0x608] sm:$0xff]
    %v4054 = vld [vmem:[#allocation8 + $0x610] sm:$0xff]
    %v4055 = vld [vmem:[#allocation8 + $0x618] sm:$0xff]
    %v4056 = vld [vmem:[#allocation8 + $0x620] sm:$0xff]
    %v4057 = vld [vmem:[#allocation8 + $0x628] sm:$0xff]
    %v4058 = vld [vmem:[#allocation8 + $0x630] sm:$0xff]
    %v4059 = vld [vmem:[#allocation8 + $0x638] sm:$0xff]
    %v4060 = vld [vmem:[#allocation8 + $0x640] sm:$0xff]
    %v4061 = vld [vmem:[#allocation8 + $0x648] sm:$0xff]
    %v4062 = vld [vmem:[#allocation8 + $0x650] sm:$0xff]
    %v4063 = vld [vmem:[#allocation8 + $0x658] sm:$0xff]
    %v4064 = vld [vmem:[#allocation8 + $0x660] sm:$0xff]
    %v4065 = vld [vmem:[#allocation8 + $0x668] sm:$0xff]
    %v4066 = vld [vmem:[#allocation8 + $0x670] sm:$0xff]
    %v4067 = vld [vmem:[#allocation8 + $0x678] sm:$0xff]
    %v4068 = vld [vmem:[#allocation8 + $0x680] sm:$0xff]
    %v4069 = vld [vmem:[#allocation8 + $0x688] sm:$0xff]
    %v4070 = vld [vmem:[#allocation8 + $0x690] sm:$0xff]
    %v4071 = vld [vmem:[#allocation8 + $0x698] sm:$0xff]
    %v4072 = vld [vmem:[#allocation8 + $0x6a0] sm:$0xff]
    %v4073 = vld [vmem:[#allocation8 + $0x6a8] sm:$0xff]
    %v4074 = vld [vmem:[#allocation8 + $0x6b0] sm:$0xff]
    %v4075 = vld [vmem:[#allocation8 + $0x6b8] sm:$0xff]
    %v4076 = vld [vmem:[#allocation8 + $0x6c0] sm:$0xff]
    %v4077 = vld [vmem:[#allocation8 + $0x6c8] sm:$0xff]
    %v4078 = vld [vmem:[#allocation8 + $0x6d0] sm:$0xff]
    %v4079 = vld [vmem:[#allocation8 + $0x6d8] sm:$0xff]
    %v4080 = vld [vmem:[#allocation8 + $0x6e0] sm:$0xff]
    %v4081 = vld [vmem:[#allocation8 + $0x6e8] sm:$0xff]
    %v4082 = vld [vmem:[#allocation8 + $0x6f0] sm:$0xff]
    %v4083 = vld [vmem:[#allocation8 + $0x6f8] sm:$0xff]
    %v4084 = vld [vmem:[#allocation8 + $0x700] sm:$0xff]
    %v4085 = vld [vmem:[#allocation8 + $0x708] sm:$0xff]
    %v4086 = vld [vmem:[#allocation8 + $0x710] sm:$0xff]
    %v4087 = vld [vmem:[#allocation8 + $0x718] sm:$0xff]
    %v4088 = vld [vmem:[#allocation8 + $0x720] sm:$0xff]
    %v4089 = vld [vmem:[#allocation8 + $0x728] sm:$0xff]
    %v4090 = vld [vmem:[#allocation8 + $0x730] sm:$0xff]
    %v4091 = vld [vmem:[#allocation8 + $0x738] sm:$0xff]
    %v4092 = vld [vmem:[#allocation8 + $0x740] sm:$0xff]
    %v4093 = vld [vmem:[#allocation8 + $0x748] sm:$0xff]
    %v4094 = vld [vmem:[#allocation8 + $0x750] sm:$0xff]
    %v4095 = vld [vmem:[#allocation8 + $0x758] sm:$0xff]
    %v4096 = vld [vmem:[#allocation8 + $0x760] sm:$0xff]
    %v4097 = vld [vmem:[#allocation8 + $0x768] sm:$0xff]
    %v4098 = vld [vmem:[#allocation8 + $0x770] sm:$0xff]
    %v4099 = vld [vmem:[#allocation8 + $0x778] sm:$0xff]
    %v4100 = vld [vmem:[#allocation8 + $0x780] sm:$0xff]
    %v4101 = vld [vmem:[#allocation8 + $0x788] sm:$0xff]
    %v4102 = vld [vmem:[#allocation8 + $0x790] sm:$0xff]
    %v4103 = vld [vmem:[#allocation8 + $0x798] sm:$0xff]
    %v4104 = vld [vmem:[#allocation8 + $0x7a0] sm:$0xff]
    %v4105 = vld [vmem:[#allocation8 + $0x7a8] sm:$0xff]
    %v4106 = vld [vmem:[#allocation8 + $0x7b0] sm:$0xff]
    %v4107 = vld [vmem:[#allocation8 + $0x7b8] sm:$0xff]
    %v4108 = vld [vmem:[#allocation8 + $0x7c0] sm:$0xff]
    %v4109 = vld [vmem:[#allocation8 + $0x7c8] sm:$0xff]
    %v4110 = vld [vmem:[#allocation8 + $0x7d0] sm:$0xff]
    %v4111 = vld [vmem:[#allocation8 + $0x7d8] sm:$0xff]
    %v4112 = vld [vmem:[#allocation8 + $0x7e0] sm:$0xff]
    %v4113 = vld [vmem:[#allocation8 + $0x7e8] sm:$0xff]
    %v4114 = vld [vmem:[#allocation8 + $0x7f0] sm:$0xff]
    %v4115 = vld [vmem:[#allocation8 + $0x7f8] sm:$0xff]
    %v4116 = vld [vmem:[#allocation8 + $0x800] sm:$0xff]
    %v4117 = vld [vmem:[#allocation8 + $0x808] sm:$0xff]
    %v4118 = vld [vmem:[#allocation8 + $0x810] sm:$0xff]
    %v4119 = vld [vmem:[#allocation8 + $0x818] sm:$0xff]
    %v4120 = vld [vmem:[#allocation8 + $0x820] sm:$0xff]
    %v4121 = vld [vmem:[#allocation8 + $0x828] sm:$0xff]
    %v4122 = vld [vmem:[#allocation8 + $0x830] sm:$0xff]
    %v4123 = vld [vmem:[#allocation8 + $0x838] sm:$0xff]
    %v4124 = vld [vmem:[#allocation8 + $0x840] sm:$0xff]
    %v4125 = vld [vmem:[#allocation8 + $0x848] sm:$0xff]
    %v4126 = vld [vmem:[#allocation8 + $0x850] sm:$0xff]
    %v4127 = vld [vmem:[#allocation8 + $0x858] sm:$0xff]
    %v4128 = vld [vmem:[#allocation8 + $0x860] sm:$0xff]
    %v4129 = vld [vmem:[#allocation8 + $0x868] sm:$0xff]
    %v4130 = vld [vmem:[#allocation8 + $0x870] sm:$0xff]
    %v4131 = vld [vmem:[#allocation8 + $0x878] sm:$0xff]
    %v4132 = vld [vmem:[#allocation8 + $0x880] sm:$0xff]
    %v4133 = vld [vmem:[#allocation8 + $0x888] sm:$0xff]
    %v4134 = vld [vmem:[#allocation8 + $0x890] sm:$0xff]
    %v4135 = vld [vmem:[#allocation8 + $0x898] sm:$0xff]
    %v4136 = vld [vmem:[#allocation8 + $0x8a0] sm:$0xff]
    %v4137 = vld [vmem:[#allocation8 + $0x8a8] sm:$0xff]
    %v4138 = vld [vmem:[#allocation8 + $0x8b0] sm:$0xff]
    %v4139 = vld [vmem:[#allocation8 + $0x8b8] sm:$0xff]
    %v4140 = vld [vmem:[#allocation8 + $0x8c0] sm:$0xff]
    %v4141 = vld [vmem:[#allocation8 + $0x8c8] sm:$0xff]
    %v4142 = vld [vmem:[#allocation8 + $0x8d0] sm:$0xff]
    %v4143 = vld [vmem:[#allocation8 + $0x8d8] sm:$0xff]
    %v4144 = vld [vmem:[#allocation8 + $0x8e0] sm:$0xff]
    %v4145 = vld [vmem:[#allocation8 + $0x8e8] sm:$0xff]
    %v4146 = vld [vmem:[#allocation8 + $0x8f0] sm:$0xff]
    %v4147 = vld [vmem:[#allocation8 + $0x8f8] sm:$0xff]
    %v4148 = vld [vmem:[#allocation8 + $0x900] sm:$0xff]
    %v4149 = vld [vmem:[#allocation8 + $0x908] sm:$0xff]
    %v4150 = vld [vmem:[#allocation8 + $0x910] sm:$0xff]
    %v4151 = vld [vmem:[#allocation8 + $0x918] sm:$0xff]
    %v4152 = vld [vmem:[#allocation8 + $0x920] sm:$0xff]
    %v4153 = vld [vmem:[#allocation8 + $0x928] sm:$0xff]
    %v4154 = vld [vmem:[#allocation8 + $0x930] sm:$0xff]
    %v4155 = vld [vmem:[#allocation8 + $0x938] sm:$0xff]
    %v4156 = vld [vmem:[#allocation8 + $0x940] sm:$0xff]
    %v4157 = vld [vmem:[#allocation8 + $0x948] sm:$0xff]
    %v4158 = vld [vmem:[#allocation8 + $0x950] sm:$0xff]
    %v4159 = vld [vmem:[#allocation8 + $0x958] sm:$0xff]
    %v4160 = vld [vmem:[#allocation8 + $0x960] sm:$0xff]
    %v4161 = vld [vmem:[#allocation8 + $0x968] sm:$0xff]
    %v4162 = vld [vmem:[#allocation8 + $0x970] sm:$0xff]
    %v4163 = vld [vmem:[#allocation8 + $0x978] sm:$0xff]
    %v4164 = vld [vmem:[#allocation8 + $0x980] sm:$0xff]
    %v4165 = vld [vmem:[#allocation8 + $0x988] sm:$0xff]
    %v4166 = vld [vmem:[#allocation8 + $0x990] sm:$0xff]
    %v4167 = vld [vmem:[#allocation8 + $0x998] sm:$0xff]
    %v4168 = vld [vmem:[#allocation8 + $0x9a0] sm:$0xff]
    %v4169 = vld [vmem:[#allocation8 + $0x9a8] sm:$0xff]
    %v4170 = vld [vmem:[#allocation8 + $0x9b0] sm:$0xff]
    %v4171 = vld [vmem:[#allocation8 + $0x9b8] sm:$0xff]
    %v4172 = vld [vmem:[#allocation8 + $0x9c0] sm:$0xff]
    %v4173 = vld [vmem:[#allocation8 + $0x9c8] sm:$0xff]
    %v4174 = vld [vmem:[#allocation8 + $0x9d0] sm:$0xff]
    %v4175 = vld [vmem:[#allocation8 + $0x9d8] sm:$0xff]
    %v4176 = vld [vmem:[#allocation8 + $0x9e0] sm:$0xff]
    %v4177 = vld [vmem:[#allocation8 + $0x9e8] sm:$0xff]
    %v4178 = vld [vmem:[#allocation8 + $0x9f0] sm:$0xff]
    %v4179 = vld [vmem:[#allocation8 + $0x9f8] sm:$0xff]
    %v4180 = vld [vmem:[#allocation8 + $0xa00] sm:$0xff]
    %v4181 = vld [vmem:[#allocation8 + $0xa08] sm:$0xff]
    %v4182 = vld [vmem:[#allocation8 + $0xa10] sm:$0xff]
    %v4183 = vld [vmem:[#allocation8 + $0xa18] sm:$0xff]
    %v4184 = vld [vmem:[#allocation8 + $0xa20] sm:$0xff]
    %v4185 = vld [vmem:[#allocation8 + $0xa28] sm:$0xff]
    %v4186 = vld [vmem:[#allocation8 + $0xa30] sm:$0xff]
    %v4187 = vld [vmem:[#allocation8 + $0xa38] sm:$0xff]
    %v4188 = vld [vmem:[#allocation8 + $0xa40] sm:$0xff]
    %v4189 = vld [vmem:[#allocation8 + $0xa48] sm:$0xff]
    %v4190 = vld [vmem:[#allocation8 + $0xa50] sm:$0xff]
    %v4191 = vld [vmem:[#allocation8 + $0xa58] sm:$0xff]
    %v4192 = vld [vmem:[#allocation8 + $0xa60] sm:$0xff]
    %v4193 = vld [vmem:[#allocation8 + $0xa68] sm:$0xff]
    %v4194 = vld [vmem:[#allocation8 + $0xa70] sm:$0xff]
    %v4195 = vld [vmem:[#allocation8 + $0xa78] sm:$0xff]
    %v4196 = vld [vmem:[#allocation8 + $0xa80] sm:$0xff]
    %v4197 = vld [vmem:[#allocation8 + $0xa88] sm:$0xff]
    %v4198 = vld [vmem:[#allocation8 + $0xa90] sm:$0xff]
    %v4199 = vld [vmem:[#allocation8 + $0xa98] sm:$0xff]
    %v4200 = vld [vmem:[#allocation8 + $0xaa0] sm:$0xff]
    %v4201 = vld [vmem:[#allocation8 + $0xaa8] sm:$0xff]
    %v4202 = vld [vmem:[#allocation8 + $0xab0] sm:$0xff]
    %v4203 = vld [vmem:[#allocation8 + $0xab8] sm:$0xff]
    %v4204 = vld [vmem:[#allocation8 + $0xac0] sm:$0xff]
    %v4205 = vld [vmem:[#allocation8 + $0xac8] sm:$0xff]
    %v4206 = vld [vmem:[#allocation8 + $0xad0] sm:$0xff]
    %v4207 = vld [vmem:[#allocation8 + $0xad8] sm:$0xff]
    %v4208 = vld [vmem:[#allocation8 + $0xae0] sm:$0xff]
    %v4209 = vld [vmem:[#allocation8 + $0xae8] sm:$0xff]
    %v4210 = vld [vmem:[#allocation8 + $0xaf0] sm:$0xff]
    %v4211 = vld [vmem:[#allocation8 + $0xaf8] sm:$0xff]
    %v4212 = vld [vmem:[#allocation8 + $0xb00] sm:$0xff]
    %v4213 = vld [vmem:[#allocation8 + $0xb08] sm:$0xff]
    %v4214 = vld [vmem:[#allocation8 + $0xb10] sm:$0xff]
    %v4215 = vld [vmem:[#allocation8 + $0xb18] sm:$0xff]
    %v4216 = vld [vmem:[#allocation8 + $0xb20] sm:$0xff]
    %v4217 = vld [vmem:[#allocation8 + $0xb28] sm:$0xff]
    %v4218 = vld [vmem:[#allocation8 + $0xb30] sm:$0xff]
    %v4219 = vld [vmem:[#allocation8 + $0xb38] sm:$0xff]
    %v4220 = vld [vmem:[#allocation8 + $0xb40] sm:$0xff]
    %v4221 = vld [vmem:[#allocation8 + $0xb48] sm:$0xff]
    %v4222 = vld [vmem:[#allocation8 + $0xb50] sm:$0xff]
    %v4223 = vld [vmem:[#allocation8 + $0xb58] sm:$0xff]
    %v4224 = vld [vmem:[#allocation8 + $0xb60] sm:$0xff]
    %v4225 = vld [vmem:[#allocation8 + $0xb68] sm:$0xff]
    %v4226 = vld [vmem:[#allocation8 + $0xb70] sm:$0xff]
    %v4227 = vld [vmem:[#allocation8 + $0xb78] sm:$0xff]
    %v4228 = vld [vmem:[#allocation8 + $0xb80] sm:$0xff]
    %v4229 = vld [vmem:[#allocation8 + $0xb88] sm:$0xff]
    %v4230 = vld [vmem:[#allocation8 + $0xb90] sm:$0xff]
    %v4231 = vld [vmem:[#allocation8 + $0xb98] sm:$0xff]
    %v4232 = vld [vmem:[#allocation8 + $0xba0] sm:$0xff]
    %v4233 = vld [vmem:[#allocation8 + $0xba8] sm:$0xff]
    %v4234 = vld [vmem:[#allocation8 + $0xbb0] sm:$0xff]
    %v4235 = vld [vmem:[#allocation8 + $0xbb8] sm:$0xff]
    %v4236 = vld [vmem:[#allocation8 + $0xbc0] sm:$0xff]
    %v4237 = vld [vmem:[#allocation8 + $0xbc8] sm:$0xff]
    %v4238 = vld [vmem:[#allocation8 + $0xbd0] sm:$0xff]
    %v4239 = vld [vmem:[#allocation8 + $0xbd8] sm:$0xff]
    %v4240 = vld [vmem:[#allocation8 + $0xbe0] sm:$0xff]
    %v4241 = vld [vmem:[#allocation8 + $0xbe8] sm:$0xff]
    %v4242 = vld [vmem:[#allocation8 + $0xbf0] sm:$0xff]
    %v4243 = vld [vmem:[#allocation8 + $0xbf8] sm:$0xff]
    %v4244 = vld [vmem:[#allocation8 + $0xc00] sm:$0xff]
    %v4245 = vld [vmem:[#allocation8 + $0xc08] sm:$0xff]
    %v4246 = vld [vmem:[#allocation8 + $0xc10] sm:$0xff]
    %v4247 = vld [vmem:[#allocation8 + $0xc18] sm:$0xff]
    %v4248 = vld [vmem:[#allocation8 + $0xc20] sm:$0xff]
    %v4249 = vld [vmem:[#allocation8 + $0xc28] sm:$0xff]
    %v4250 = vld [vmem:[#allocation8 + $0xc30] sm:$0xff]
    %v4251 = vld [vmem:[#allocation8 + $0xc38] sm:$0xff]
    %v4252 = vld [vmem:[#allocation8 + $0xc40] sm:$0xff]
    %v4253 = vld [vmem:[#allocation8 + $0xc48] sm:$0xff]
    %v4254 = vld [vmem:[#allocation8 + $0xc50] sm:$0xff]
    %v4255 = vld [vmem:[#allocation8 + $0xc58] sm:$0xff]
    %v4256 = vld [vmem:[#allocation8 + $0xc60] sm:$0xff]
    %v4257 = vld [vmem:[#allocation8 + $0xc68] sm:$0xff]
    %v4258 = vld [vmem:[#allocation8 + $0xc70] sm:$0xff]
    %v4259 = vld [vmem:[#allocation8 + $0xc78] sm:$0xff]
    %v4260 = vld [vmem:[#allocation8 + $0xc80] sm:$0xff]
    %v4261 = vld [vmem:[#allocation8 + $0xc88] sm:$0xff]
    %v4262 = vld [vmem:[#allocation8 + $0xc90] sm:$0xff]
    %v4263 = vld [vmem:[#allocation8 + $0xc98] sm:$0xff]
    %v4264 = vld [vmem:[#allocation8 + $0xca0] sm:$0xff]
    %v4265 = vld [vmem:[#allocation8 + $0xca8] sm:$0xff]
    %v4266 = vld [vmem:[#allocation8 + $0xcb0] sm:$0xff]
    %v4267 = vld [vmem:[#allocation8 + $0xcb8] sm:$0xff]
    %v4268 = vld [vmem:[#allocation8 + $0xcc0] sm:$0xff]
    %v4269 = vld [vmem:[#allocation8 + $0xcc8] sm:$0xff]
    %v4270 = vld [vmem:[#allocation8 + $0xcd0] sm:$0xff]
    %v4271 = vld [vmem:[#allocation8 + $0xcd8] sm:$0xff]
    %v4272 = vld [vmem:[#allocation8 + $0xce0] sm:$0xff]
    %v4273 = vld [vmem:[#allocation8 + $0xce8] sm:$0xff]
    %v4274 = vld [vmem:[#allocation8 + $0xcf0] sm:$0xff]
    %v4275 = vld [vmem:[#allocation8 + $0xcf8] sm:$0xff]
    %v4276 = vld [vmem:[#allocation8 + $0xd00] sm:$0xff]
    %v4277 = vld [vmem:[#allocation8 + $0xd08] sm:$0xff]
    %v4278 = vld [vmem:[#allocation8 + $0xd10] sm:$0xff]
    %v4279 = vld [vmem:[#allocation8 + $0xd18] sm:$0xff]
    %v4280 = vld [vmem:[#allocation8 + $0xd20] sm:$0xff]
    %v4281 = vld [vmem:[#allocation8 + $0xd28] sm:$0xff]
    %v4282 = vld [vmem:[#allocation8 + $0xd30] sm:$0xff]
    %v4283 = vld [vmem:[#allocation8 + $0xd38] sm:$0xff]
    %v4284 = vld [vmem:[#allocation8 + $0xd40] sm:$0xff]
    %v4285 = vld [vmem:[#allocation8 + $0xd48] sm:$0xff]
    %v4286 = vld [vmem:[#allocation8 + $0xd50] sm:$0xff]
    %v4287 = vld [vmem:[#allocation8 + $0xd58] sm:$0xff]
    %v4288 = vld [vmem:[#allocation8 + $0xd60] sm:$0xff]
    %v4289 = vld [vmem:[#allocation8 + $0xd68] sm:$0xff]
    %v4290 = vld [vmem:[#allocation8 + $0xd70] sm:$0xff]
    %v4291 = vld [vmem:[#allocation8 + $0xd78] sm:$0xff]
    %v4292 = vld [vmem:[#allocation8 + $0xd80] sm:$0xff]
    %v4293 = vld [vmem:[#allocation8 + $0xd88] sm:$0xff]
    %v4294 = vld [vmem:[#allocation8 + $0xd90] sm:$0xff]
    %v4295 = vld [vmem:[#allocation8 + $0xd98] sm:$0xff]
    %v4296 = vld [vmem:[#allocation8 + $0xda0] sm:$0xff]
    %v4297 = vld [vmem:[#allocation8 + $0xda8] sm:$0xff]
    %v4298 = vld [vmem:[#allocation8 + $0xdb0] sm:$0xff]
    %v4299 = vld [vmem:[#allocation8 + $0xdb8] sm:$0xff]
    %v4300 = vld [vmem:[#allocation8 + $0xdc0] sm:$0xff]
    %v4301 = vld [vmem:[#allocation8 + $0xdc8] sm:$0xff]
    %v4302 = vld [vmem:[#allocation8 + $0xdd0] sm:$0xff]
    %v4303 = vld [vmem:[#allocation8 + $0xdd8] sm:$0xff]
    %v4304 = vld [vmem:[#allocation8 + $0xde0] sm:$0xff]
    %v4305 = vld [vmem:[#allocation8 + $0xde8] sm:$0xff]
    %v4306 = vld [vmem:[#allocation8 + $0xdf0] sm:$0xff]
    %v4307 = vld [vmem:[#allocation8 + $0xdf8] sm:$0xff]
    %v4308 = vld [vmem:[#allocation8 + $0xe00] sm:$0xff]
    %v4309 = vld [vmem:[#allocation8 + $0xe08] sm:$0xff]
    %v4310 = vld [vmem:[#allocation8 + $0xe10] sm:$0xff]
    %v4311 = vld [vmem:[#allocation8 + $0xe18] sm:$0xff]
    %v4312 = vld [vmem:[#allocation8 + $0xe20] sm:$0xff]
    %v4313 = vld [vmem:[#allocation8 + $0xe28] sm:$0xff]
    %v4314 = vld [vmem:[#allocation8 + $0xe30] sm:$0xff]
    %v4315 = vld [vmem:[#allocation8 + $0xe38] sm:$0xff]
    %v4316 = vld [vmem:[#allocation8 + $0xe40] sm:$0xff]
    %v4317 = vld [vmem:[#allocation8 + $0xe48] sm:$0xff]
    %v4318 = vld [vmem:[#allocation8 + $0xe50] sm:$0xff]
    %v4319 = vld [vmem:[#allocation8 + $0xe58] sm:$0xff]
    %v4320 = vld [vmem:[#allocation8 + $0xe60] sm:$0xff]
    %v4321 = vld [vmem:[#allocation8 + $0xe68] sm:$0xff]
    %v4322 = vld [vmem:[#allocation8 + $0xe70] sm:$0xff]
    %v4323 = vld [vmem:[#allocation8 + $0xe78] sm:$0xff]
    %v4324 = vld [vmem:[#allocation8 + $0xe80] sm:$0xff]
    %v4325 = vld [vmem:[#allocation8 + $0xe88] sm:$0xff]
    %v4326 = vld [vmem:[#allocation8 + $0xe90] sm:$0xff]
    %v4327 = vld [vmem:[#allocation8 + $0xe98] sm:$0xff]
    %v4328 = vld [vmem:[#allocation8 + $0xea0] sm:$0xff]
    %v4329 = vld [vmem:[#allocation8 + $0xea8] sm:$0xff]
    %v4330 = vld [vmem:[#allocation8 + $0xeb0] sm:$0xff]
    %v4331 = vld [vmem:[#allocation8 + $0xeb8] sm:$0xff]
    %v4332 = vld [vmem:[#allocation8 + $0xec0] sm:$0xff]
    %v4333 = vld [vmem:[#allocation8 + $0xec8] sm:$0xff]
    %v4334 = vld [vmem:[#allocation8 + $0xed0] sm:$0xff]
    %v4335 = vld [vmem:[#allocation8 + $0xed8] sm:$0xff]
    %v4336 = vld [vmem:[#allocation8 + $0xee0] sm:$0xff]
    %v4337 = vld [vmem:[#allocation8 + $0xee8] sm:$0xff]
    %v4338 = vld [vmem:[#allocation8 + $0xef0] sm:$0xff]
    %v4339 = vld [vmem:[#allocation8 + $0xef8] sm:$0xff]
    %v4340 = vld [vmem:[#allocation8 + $0xf00] sm:$0xff]
    %v4341 = vld [vmem:[#allocation8 + $0xf08] sm:$0xff]
    %v4342 = vld [vmem:[#allocation8 + $0xf10] sm:$0xff]
    %v4343 = vld [vmem:[#allocation8 + $0xf18] sm:$0xff]
    %v4344 = vld [vmem:[#allocation8 + $0xf20] sm:$0xff]
    %v4345 = vld [vmem:[#allocation8 + $0xf28] sm:$0xff]
    %v4346 = vld [vmem:[#allocation8 + $0xf30] sm:$0xff]
    %v4347 = vld [vmem:[#allocation8 + $0xf38] sm:$0xff]
    %v4348 = vld [vmem:[#allocation8 + $0xf40] sm:$0xff]
    %v4349 = vld [vmem:[#allocation8 + $0xf48] sm:$0xff]
    %v4350 = vld [vmem:[#allocation8 + $0xf50] sm:$0xff]
    %v4351 = vld [vmem:[#allocation8 + $0xf58] sm:$0xff]
    %v4352 = vld [vmem:[#allocation8 + $0xf60] sm:$0xff]
    %v4353 = vld [vmem:[#allocation8 + $0xf68] sm:$0xff]
    %v4354 = vld [vmem:[#allocation8 + $0xf70] sm:$0xff]
    %v4355 = vld [vmem:[#allocation8 + $0xf78] sm:$0xff]
    %v4356 = vld [vmem:[#allocation8 + $0xf80] sm:$0xff]
    %v4357 = vld [vmem:[#allocation8 + $0xf88] sm:$0xff]
    %v4358 = vld [vmem:[#allocation8 + $0xf90] sm:$0xff]
    %v4359 = vld [vmem:[#allocation8 + $0xf98] sm:$0xff]
    %v4360 = vld [vmem:[#allocation8 + $0xfa0] sm:$0xff]
    %v4361 = vld [vmem:[#allocation8 + $0xfa8] sm:$0xff]
    %v4362 = vld [vmem:[#allocation8 + $0xfb0] sm:$0xff]
    %v4363 = vld [vmem:[#allocation8 + $0xfb8] sm:$0xff]
    %v4364 = vld [vmem:[#allocation8 + $0xfc0] sm:$0xff]
    %v4365 = vld [vmem:[#allocation8 + $0xfc8] sm:$0xff]
    %v4366 = vld [vmem:[#allocation8 + $0xfd0] sm:$0xff]
    %v4367 = vld [vmem:[#allocation8 + $0xfd8] sm:$0xff]
    %v4368 = vld [vmem:[#allocation8 + $0xfe0] sm:$0xff]
    %v4369 = vld [vmem:[#allocation8 + $0xfe8] sm:$0xff]
    %v4370 = vld [vmem:[#allocation8 + $0xff0] sm:$0xff]
    %v4371 = vld [vmem:[#allocation8 + $0xff8] sm:$0xff]
    %v4372 = vld [vmem:[#allocation8 + $0x1000] sm:$0xff]
    %v4373 = vld [vmem:[#allocation8 + $0x1008] sm:$0xff]
    %v4374 = vld [vmem:[#allocation8 + $0x1010] sm:$0xff]
    %v4375 = vld [vmem:[#allocation8 + $0x1018] sm:$0xff]
    %v4376 = vld [vmem:[#allocation8 + $0x1020] sm:$0xff]
    %v4377 = vld [vmem:[#allocation8 + $0x1028] sm:$0xff]
    %v4378 = vld [vmem:[#allocation8 + $0x1030] sm:$0xff]
    %v4379 = vld [vmem:[#allocation8 + $0x1038] sm:$0xff]
    %v4380 = vld [vmem:[#allocation8 + $0x1040] sm:$0xff]
    %v4381 = vld [vmem:[#allocation8 + $0x1048] sm:$0xff]
    %v4382 = vld [vmem:[#allocation8 + $0x1050] sm:$0xff]
    %v4383 = vld [vmem:[#allocation8 + $0x1058] sm:$0xff]
    %v4384 = vld [vmem:[#allocation8 + $0x1060] sm:$0xff]
    %v4385 = vld [vmem:[#allocation8 + $0x1068] sm:$0xff]
    %v4386 = vld [vmem:[#allocation8 + $0x1070] sm:$0xff]
    %v4387 = vld [vmem:[#allocation8 + $0x1078] sm:$0xff]
    %v4388 = vld [vmem:[#allocation8 + $0x1080] sm:$0xff]
    %v4389 = vld [vmem:[#allocation8 + $0x1088] sm:$0xff]
    %v4390 = vld [vmem:[#allocation8 + $0x1090] sm:$0xff]
    %v4391 = vld [vmem:[#allocation8 + $0x1098] sm:$0xff]
    %v4392 = vld [vmem:[#allocation8 + $0x10a0] sm:$0xff]
    %v4393 = vld [vmem:[#allocation8 + $0x10a8] sm:$0xff]
    %v4394 = vld [vmem:[#allocation8 + $0x10b0] sm:$0xff]
    %v4395 = vld [vmem:[#allocation8 + $0x10b8] sm:$0xff]
    %v4396 = vld [vmem:[#allocation8 + $0x10c0] sm:$0xff]
    %v4397 = vld [vmem:[#allocation8 + $0x10c8] sm:$0xff]
    %v4398 = vld [vmem:[#allocation8 + $0x10d0] sm:$0xff]
    %v4399 = vld [vmem:[#allocation8 + $0x10d8] sm:$0xff]
    %v4400 = vld [vmem:[#allocation8 + $0x10e0] sm:$0xff]
    %v4401 = vld [vmem:[#allocation8 + $0x10e8] sm:$0xff]
    %v4402 = vld [vmem:[#allocation8 + $0x10f0] sm:$0xff]
    %v4403 = vld [vmem:[#allocation8 + $0x10f8] sm:$0xff]
    %v4404 = vld [vmem:[#allocation8 + $0x1100] sm:$0xff]
    %v4405 = vld [vmem:[#allocation8 + $0x1108] sm:$0xff]
    %v4406 = vld [vmem:[#allocation8 + $0x1110] sm:$0xff]
    %v4407 = vld [vmem:[#allocation8 + $0x1118] sm:$0xff]
    %v4408 = vld [vmem:[#allocation8 + $0x1120] sm:$0xff]
    %v4409 = vld [vmem:[#allocation8 + $0x1128] sm:$0xff]
    %v4410 = vld [vmem:[#allocation8 + $0x1130] sm:$0xff]
    %v4411 = vld [vmem:[#allocation8 + $0x1138] sm:$0xff]
    %v4412 = vld [vmem:[#allocation8 + $0x1140] sm:$0xff]
    %v4413 = vld [vmem:[#allocation8 + $0x1148] sm:$0xff]
    %v4414 = vld [vmem:[#allocation8 + $0x1150] sm:$0xff]
    %v4415 = vld [vmem:[#allocation8 + $0x1158] sm:$0xff]
    %v4416 = vld [vmem:[#allocation8 + $0x1160] sm:$0xff]
    %v4417 = vld [vmem:[#allocation8 + $0x1168] sm:$0xff]
    %v4418 = vld [vmem:[#allocation8 + $0x1170] sm:$0xff]
    %v4419 = vld [vmem:[#allocation8 + $0x1178] sm:$0xff]
    %v4420 = vld [vmem:[#allocation8 + $0x1180] sm:$0xff]
    %v4421 = vld [vmem:[#allocation8 + $0x1188] sm:$0xff]
    %v4422 = vld [vmem:[#allocation8 + $0x1190] sm:$0xff]
    %v4423 = vld [vmem:[#allocation8 + $0x1198] sm:$0xff]
    %v4424 = vld [vmem:[#allocation8 + $0x11a0] sm:$0xff]
    %v4425 = vld [vmem:[#allocation8 + $0x11a8] sm:$0xff]
    %v4426 = vld [vmem:[#allocation8 + $0x11b0] sm:$0xff]
    %v4427 = vld [vmem:[#allocation8 + $0x11b8] sm:$0xff]
    %v4428 = vld [vmem:[#allocation8 + $0x11c0] sm:$0xff]
    %v4429 = vld [vmem:[#allocation8 + $0x11c8] sm:$0xff]
    %v4430 = vld [vmem:[#allocation8 + $0x11d0] sm:$0xff]
    %v4431 = vld [vmem:[#allocation8 + $0x11d8] sm:$0xff]
    %v4432 = vld [vmem:[#allocation8 + $0x11e0] sm:$0xff]
    %v4433 = vld [vmem:[#allocation8 + $0x11e8] sm:$0xff]
    %v4434 = vld [vmem:[#allocation8 + $0x11f0] sm:$0xff]
    %v4435 = vld [vmem:[#allocation8 + $0x11f8] sm:$0xff]
    %v4436 = vld [vmem:[#allocation8 + $0x1200] sm:$0xff]
    %v4437 = vld [vmem:[#allocation8 + $0x1208] sm:$0xff]
    %v4438 = vld [vmem:[#allocation8 + $0x1210] sm:$0xff]
    %v4439 = vld [vmem:[#allocation8 + $0x1218] sm:$0xff]
    %v4440 = vld [vmem:[#allocation8 + $0x1220] sm:$0xff]
    %v4441 = vld [vmem:[#allocation8 + $0x1228] sm:$0xff]
    %v4442 = vld [vmem:[#allocation8 + $0x1230] sm:$0xff]
    %v4443 = vld [vmem:[#allocation8 + $0x1238] sm:$0xff]
    %v4444 = vld [vmem:[#allocation8 + $0x1240] sm:$0xff]
    %v4445 = vld [vmem:[#allocation8 + $0x1248] sm:$0xff]
    %v4446 = vld [vmem:[#allocation8 + $0x1250] sm:$0xff]
    %v4447 = vld [vmem:[#allocation8 + $0x1258] sm:$0xff]
    %v4448 = vld [vmem:[#allocation8 + $0x1260] sm:$0xff]
    %v4449 = vld [vmem:[#allocation8 + $0x1268] sm:$0xff]
    %v4450 = vld [vmem:[#allocation8 + $0x1270] sm:$0xff]
    %v4451 = vld [vmem:[#allocation8 + $0x1278] sm:$0xff]
    %v4452 = vld [vmem:[#allocation8 + $0x1280] sm:$0xff]
    %v4453 = vld [vmem:[#allocation8 + $0x1288] sm:$0xff]
    %v4454 = vld [vmem:[#allocation8 + $0x1290] sm:$0xff]
    %v4455 = vld [vmem:[#allocation8 + $0x1298] sm:$0xff]
    %v4456 = vld [vmem:[#allocation8 + $0x12a0] sm:$0xff]
    %v4457 = vld [vmem:[#allocation8 + $0x12a8] sm:$0xff]
    %v4458 = vld [vmem:[#allocation8 + $0x12b0] sm:$0xff]
    %v4459 = vld [vmem:[#allocation8 + $0x12b8] sm:$0xff]
    %v4460 = vld [vmem:[#allocation8 + $0x12c0] sm:$0xff]
    %v4461 = vld [vmem:[#allocation8 + $0x12c8] sm:$0xff]
    %v4462 = vld [vmem:[#allocation8 + $0x12d0] sm:$0xff]
    %v4463 = vld [vmem:[#allocation8 + $0x12d8] sm:$0xff]
    %v4464 = vld [vmem:[#allocation8 + $0x12e0] sm:$0xff]
    %v4465 = vld [vmem:[#allocation8 + $0x12e8] sm:$0xff]
    %v4466 = vld [vmem:[#allocation8 + $0x12f0] sm:$0xff]
    %v4467 = vld [vmem:[#allocation8 + $0x12f8] sm:$0xff]
    %v4468 = vld [vmem:[#allocation8 + $0x1300] sm:$0xff]
    %v4469 = vld [vmem:[#allocation8 + $0x1308] sm:$0xff]
    %v4470 = vld [vmem:[#allocation8 + $0x1310] sm:$0xff]
    %v4471 = vld [vmem:[#allocation8 + $0x1318] sm:$0xff]
    %v4472 = vld [vmem:[#allocation8 + $0x1320] sm:$0xff]
    %v4473 = vld [vmem:[#allocation8 + $0x1328] sm:$0xff]
    %v4474 = vld [vmem:[#allocation8 + $0x1330] sm:$0xff]
    %v4475 = vld [vmem:[#allocation8 + $0x1338] sm:$0xff]
    %v4476 = vld [vmem:[#allocation8 + $0x1340] sm:$0xff]
    %v4477 = vld [vmem:[#allocation8 + $0x1348] sm:$0xff]
    %v4478 = vld [vmem:[#allocation8 + $0x1350] sm:$0xff]
    %v4479 = vld [vmem:[#allocation8 + $0x1358] sm:$0xff]
    %v4480 = vld [vmem:[#allocation8 + $0x1360] sm:$0xff]
    %v4481 = vld [vmem:[#allocation8 + $0x1368] sm:$0xff]
    %v4482 = vld [vmem:[#allocation8 + $0x1370] sm:$0xff]
    %v4483 = vld [vmem:[#allocation8 + $0x1378] sm:$0xff]
    %v4484 = vld [vmem:[#allocation8 + $0x1380] sm:$0xff]
    %v4485 = vld [vmem:[#allocation8 + $0x1388] sm:$0xff]
    %v4486 = vld [vmem:[#allocation8 + $0x1390] sm:$0xff]
    %v4487 = vld [vmem:[#allocation8 + $0x1398] sm:$0xff]
    %v4488 = vld [vmem:[#allocation8 + $0x13a0] sm:$0xff]
    %v4489 = vld [vmem:[#allocation8 + $0x13a8] sm:$0xff]
    %v4490 = vld [vmem:[#allocation8 + $0x13b0] sm:$0xff]
    %v4491 = vld [vmem:[#allocation8 + $0x13b8] sm:$0xff]
    %v4492 = vld [vmem:[#allocation8 + $0x13c0] sm:$0xff]
    %v4493 = vld [vmem:[#allocation8 + $0x13c8] sm:$0xff]
    %v4494 = vld [vmem:[#allocation8 + $0x13d0] sm:$0xff]
    %v4495 = vld [vmem:[#allocation8 + $0x13d8] sm:$0xff]
    %v4496 = vld [vmem:[#allocation8 + $0x13e0] sm:$0xff]
    %v4497 = vld [vmem:[#allocation8 + $0x13e8] sm:$0xff]
    %v4498 = vld [vmem:[#allocation8 + $0x13f0] sm:$0xff]
    %v4499 = vld [vmem:[#allocation8 + $0x13f8] sm:$0xff]
    %v4500 = vld [vmem:[#allocation8 + $0x1400] sm:$0xff]
    %v4501 = vld [vmem:[#allocation8 + $0x1408] sm:$0xff]
    %v4502 = vld [vmem:[#allocation8 + $0x1410] sm:$0xff]
    %v4503 = vld [vmem:[#allocation8 + $0x1418] sm:$0xff]
    %v4504 = vld [vmem:[#allocation8 + $0x1420] sm:$0xff]
    %v4505 = vld [vmem:[#allocation8 + $0x1428] sm:$0xff]
    %v4506 = vld [vmem:[#allocation8 + $0x1430] sm:$0xff]
    %v4507 = vld [vmem:[#allocation8 + $0x1438] sm:$0xff]
    %v4508 = vld [vmem:[#allocation8 + $0x1440] sm:$0xff]
    %v4509 = vld [vmem:[#allocation8 + $0x1448] sm:$0xff]
    %v4510 = vld [vmem:[#allocation8 + $0x1450] sm:$0xff]
    %v4511 = vld [vmem:[#allocation8 + $0x1458] sm:$0xff]
    %v4512 = vld [vmem:[#allocation8 + $0x1460] sm:$0xff]
    %v4513 = vld [vmem:[#allocation8 + $0x1468] sm:$0xff]
    %v4514 = vld [vmem:[#allocation8 + $0x1470] sm:$0xff]
    %v4515 = vld [vmem:[#allocation8 + $0x1478] sm:$0xff]
    %v4516 = vld [vmem:[#allocation8 + $0x1480] sm:$0xff]
    %v4517 = vld [vmem:[#allocation8 + $0x1488] sm:$0xff]
    %v4518 = vld [vmem:[#allocation8 + $0x1490] sm:$0xff]
    %v4519 = vld [vmem:[#allocation8 + $0x1498] sm:$0xff]
    %v4520 = vld [vmem:[#allocation8 + $0x14a0] sm:$0xff]
    %v4521 = vld [vmem:[#allocation8 + $0x14a8] sm:$0xff]
    %v4522 = vld [vmem:[#allocation8 + $0x14b0] sm:$0xff]
    %v4523 = vld [vmem:[#allocation8 + $0x14b8] sm:$0xff]
    %v4524 = vld [vmem:[#allocation8 + $0x14c0] sm:$0xff]
    %v4525 = vld [vmem:[#allocation8 + $0x14c8] sm:$0xff]
    %v4526 = vld [vmem:[#allocation8 + $0x14d0] sm:$0xff]
    %v4527 = vld [vmem:[#allocation8 + $0x14d8] sm:$0xff]
    %v4528 = vld [vmem:[#allocation8 + $0x14e0] sm:$0xff]
    %v4529 = vld [vmem:[#allocation8 + $0x14e8] sm:$0xff]
    %v4530 = vld [vmem:[#allocation8 + $0x14f0] sm:$0xff]
    %v4531 = vld [vmem:[#allocation8 + $0x14f8] sm:$0xff]
    %v4532 = vld [vmem:[#allocation8 + $0x1500] sm:$0xff]
    %v4533 = vld [vmem:[#allocation8 + $0x1508] sm:$0xff]
    %v4534 = vld [vmem:[#allocation8 + $0x1510] sm:$0xff]
    %v4535 = vld [vmem:[#allocation8 + $0x1518] sm:$0xff]
    %v4536 = vld [vmem:[#allocation8 + $0x1520] sm:$0xff]
    %v4537 = vld [vmem:[#allocation8 + $0x1528] sm:$0xff]
    %v4538 = vld [vmem:[#allocation8 + $0x1530] sm:$0xff]
    %v4539 = vld [vmem:[#allocation8 + $0x1538] sm:$0xff]
    %v4540 = vld [vmem:[#allocation8 + $0x1540] sm:$0xff]
    %v4541 = vld [vmem:[#allocation8 + $0x1548] sm:$0xff]
    %v4542 = vld [vmem:[#allocation8 + $0x1550] sm:$0xff]
    %v4543 = vld [vmem:[#allocation8 + $0x1558] sm:$0xff]
    %v4544 = vld [vmem:[#allocation8 + $0x1560] sm:$0xff]
    %v4545 = vld [vmem:[#allocation8 + $0x1568] sm:$0xff]
    %v4546 = vld [vmem:[#allocation8 + $0x1570] sm:$0xff]
    %v4547 = vld [vmem:[#allocation8 + $0x1578] sm:$0xff]
    %v4548 = vld [vmem:[#allocation8 + $0x1580] sm:$0xff]
    %v4549 = vld [vmem:[#allocation8 + $0x1588] sm:$0xff]
    %v4550 = vld [vmem:[#allocation8 + $0x1590] sm:$0xff]
    %v4551 = vld [vmem:[#allocation8 + $0x1598] sm:$0xff]
    %v4552 = vld [vmem:[#allocation8 + $0x15a0] sm:$0xff]
    %v4553 = vld [vmem:[#allocation8 + $0x15a8] sm:$0xff]
    %v4554 = vld [vmem:[#allocation8 + $0x15b0] sm:$0xff]
    %v4555 = vld [vmem:[#allocation8 + $0x15b8] sm:$0xff]
    %v4556 = vld [vmem:[#allocation8 + $0x15c0] sm:$0xff]
    %v4557 = vld [vmem:[#allocation8 + $0x15c8] sm:$0xff]
    %v4558 = vld [vmem:[#allocation8 + $0x15d0] sm:$0xff]
    %v4559 = vld [vmem:[#allocation8 + $0x15d8] sm:$0xff]
    %v4560 = vld [vmem:[#allocation8 + $0x15e0] sm:$0xff]
    %v4561 = vld [vmem:[#allocation8 + $0x15e8] sm:$0xff]
    %v4562 = vld [vmem:[#allocation8 + $0x15f0] sm:$0xff]
    %v4563 = vld [vmem:[#allocation8 + $0x15f8] sm:$0xff]
    %v4564 = vld [vmem:[#allocation8 + $0x1600] sm:$0xff]
    %v4565 = vld [vmem:[#allocation8 + $0x1608] sm:$0xff]
    %v4566 = vld [vmem:[#allocation8 + $0x1610] sm:$0xff]
    %v4567 = vld [vmem:[#allocation8 + $0x1618] sm:$0xff]
    %v4568 = vld [vmem:[#allocation8 + $0x1620] sm:$0xff]
    %v4569 = vld [vmem:[#allocation8 + $0x1628] sm:$0xff]
    %v4570 = vld [vmem:[#allocation8 + $0x1630] sm:$0xff]
    %v4571 = vld [vmem:[#allocation8 + $0x1638] sm:$0xff]
    %v4572 = vld [vmem:[#allocation8 + $0x1640] sm:$0xff]
    %v4573 = vld [vmem:[#allocation8 + $0x1648] sm:$0xff]
    %v4574 = vld [vmem:[#allocation8 + $0x1650] sm:$0xff]
    %v4575 = vld [vmem:[#allocation8 + $0x1658] sm:$0xff]
    %v4576 = vld [vmem:[#allocation8 + $0x1660] sm:$0xff]
    %v4577 = vld [vmem:[#allocation8 + $0x1668] sm:$0xff]
    %v4578 = vld [vmem:[#allocation8 + $0x1670] sm:$0xff]
    %v4579 = vld [vmem:[#allocation8 + $0x1678] sm:$0xff]
    %v4580 = vld [vmem:[#allocation8 + $0x1680] sm:$0xff]
    %v4581 = vld [vmem:[#allocation8 + $0x1688] sm:$0xff]
    %v4582 = vld [vmem:[#allocation8 + $0x1690] sm:$0xff]
    %v4583 = vld [vmem:[#allocation8 + $0x1698] sm:$0xff]
    %v4584 = vld [vmem:[#allocation8 + $0x16a0] sm:$0xff]
    %v4585 = vld [vmem:[#allocation8 + $0x16a8] sm:$0xff]
    %v4586 = vld [vmem:[#allocation8 + $0x16b0] sm:$0xff]
    %v4587 = vld [vmem:[#allocation8 + $0x16b8] sm:$0xff]
    %v4588 = vld [vmem:[#allocation8 + $0x16c0] sm:$0xff]
    %v4589 = vld [vmem:[#allocation8 + $0x16c8] sm:$0xff]
    %v4590 = vld [vmem:[#allocation8 + $0x16d0] sm:$0xff]
    %v4591 = vld [vmem:[#allocation8 + $0x16d8] sm:$0xff]
    %v4592 = vld [vmem:[#allocation8 + $0x16e0] sm:$0xff]
    %v4593 = vld [vmem:[#allocation8 + $0x16e8] sm:$0xff]
    %v4594 = vld [vmem:[#allocation8 + $0x16f0] sm:$0xff]
    %v4595 = vld [vmem:[#allocation8 + $0x16f8] sm:$0xff]
    %v4596 = vld [vmem:[#allocation8 + $0x1700] sm:$0xff]
    %v4597 = vld [vmem:[#allocation8 + $0x1708] sm:$0xff]
    %v4598 = vld [vmem:[#allocation8 + $0x1710] sm:$0xff]
    %v4599 = vld [vmem:[#allocation8 + $0x1718] sm:$0xff]
    %v4600 = vld [vmem:[#allocation8 + $0x1720] sm:$0xff]
    %v4601 = vld [vmem:[#allocation8 + $0x1728] sm:$0xff]
    %v4602 = vld [vmem:[#allocation8 + $0x1730] sm:$0xff]
    %v4603 = vld [vmem:[#allocation8 + $0x1738] sm:$0xff]
    %v4604 = vld [vmem:[#allocation8 + $0x1740] sm:$0xff]
    %v4605 = vld [vmem:[#allocation8 + $0x1748] sm:$0xff]
    %v4606 = vld [vmem:[#allocation8 + $0x1750] sm:$0xff]
    %v4607 = vld [vmem:[#allocation8 + $0x1758] sm:$0xff]
    %v4608 = vld [vmem:[#allocation8 + $0x1760] sm:$0xff]
    %v4609 = vld [vmem:[#allocation8 + $0x1768] sm:$0xff]
    %v4610 = vld [vmem:[#allocation8 + $0x1770] sm:$0xff]
    %v4611 = vld [vmem:[#allocation8 + $0x1778] sm:$0xff]
    %v4612 = vld [vmem:[#allocation8 + $0x1780] sm:$0xff]
    %v4613 = vld [vmem:[#allocation8 + $0x1788] sm:$0xff]
    %v4614 = vld [vmem:[#allocation8 + $0x1790] sm:$0xff]
    %v4615 = vld [vmem:[#allocation8 + $0x1798] sm:$0xff]
    %v4616 = vld [vmem:[#allocation8 + $0x17a0] sm:$0xff]
    %v4617 = vld [vmem:[#allocation8 + $0x17a8] sm:$0xff]
    %v4618 = vld [vmem:[#allocation8 + $0x17b0] sm:$0xff]
    %v4619 = vld [vmem:[#allocation8 + $0x17b8] sm:$0xff]
    %v4620 = vld [vmem:[#allocation8 + $0x17c0] sm:$0xff]
    %v4621 = vld [vmem:[#allocation8 + $0x17c8] sm:$0xff]
    %v4622 = vld [vmem:[#allocation8 + $0x17d0] sm:$0xff]
    %v4623 = vld [vmem:[#allocation8 + $0x17d8] sm:$0xff]
    %v4624 = vld [vmem:[#allocation8 + $0x17e0] sm:$0xff]
    %v4625 = vld [vmem:[#allocation8 + $0x17e8] sm:$0xff]
    %v4626 = vld [vmem:[#allocation8 + $0x17f0] sm:$0xff]
    %v4627 = vld [vmem:[#allocation8 + $0x17f8] sm:$0xff]
    %v4628 = vld [vmem:[#allocation8 + $0x1800] sm:$0xff]
    %v4629 = vld [vmem:[#allocation8 + $0x1808] sm:$0xff]
    %v4630 = vld [vmem:[#allocation8 + $0x1810] sm:$0xff]
    %v4631 = vld [vmem:[#allocation8 + $0x1818] sm:$0xff]
    %v4632 = vld [vmem:[#allocation8 + $0x1820] sm:$0xff]
    %v4633 = vld [vmem:[#allocation8 + $0x1828] sm:$0xff]
    %v4634 = vld [vmem:[#allocation8 + $0x1830] sm:$0xff]
    %v4635 = vld [vmem:[#allocation8 + $0x1838] sm:$0xff]
    %v4636 = vld [vmem:[#allocation8 + $0x1840] sm:$0xff]
    %v4637 = vld [vmem:[#allocation8 + $0x1848] sm:$0xff]
    %v4638 = vld [vmem:[#allocation8 + $0x1850] sm:$0xff]
    %v4639 = vld [vmem:[#allocation8 + $0x1858] sm:$0xff]
    %v4640 = vld [vmem:[#allocation8 + $0x1860] sm:$0xff]
    %v4641 = vld [vmem:[#allocation8 + $0x1868] sm:$0xff]
    %v4642 = vld [vmem:[#allocation8 + $0x1870] sm:$0xff]
    %v4643 = vld [vmem:[#allocation8 + $0x1878] sm:$0xff]
    %v4644 = vld [vmem:[#allocation8 + $0x1880] sm:$0xff]
    %v4645 = vld [vmem:[#allocation8 + $0x1888] sm:$0xff]
    %v4646 = vld [vmem:[#allocation8 + $0x1890] sm:$0xff]
    %v4647 = vld [vmem:[#allocation8 + $0x1898] sm:$0xff]
    %v4648 = vld [vmem:[#allocation8 + $0x18a0] sm:$0xff]
    %v4649 = vld [vmem:[#allocation8 + $0x18a8] sm:$0xff]
    %v4650 = vld [vmem:[#allocation8 + $0x18b0] sm:$0xff]
    %v4651 = vld [vmem:[#allocation8 + $0x18b8] sm:$0xff]
    %v4652 = vld [vmem:[#allocation8 + $0x18c0] sm:$0xff]
    %v4653 = vld [vmem:[#allocation8 + $0x18c8] sm:$0xff]
    %v4654 = vld [vmem:[#allocation8 + $0x18d0] sm:$0xff]
    %v4655 = vld [vmem:[#allocation8 + $0x18d8] sm:$0xff]
    %v4656 = vld [vmem:[#allocation8 + $0x18e0] sm:$0xff]
    %v4657 = vld [vmem:[#allocation8 + $0x18e8] sm:$0xff]
    %v4658 = vld [vmem:[#allocation8 + $0x18f0] sm:$0xff]
    %v4659 = vld [vmem:[#allocation8 + $0x18f8] sm:$0xff]
    %v4660 = vld [vmem:[#allocation8 + $0x1900] sm:$0xff]
    %v4661 = vld [vmem:[#allocation8 + $0x1908] sm:$0xff]
    %v4662 = vld [vmem:[#allocation8 + $0x1910] sm:$0xff]
    %v4663 = vld [vmem:[#allocation8 + $0x1918] sm:$0xff]
    %v4664 = vld [vmem:[#allocation8 + $0x1920] sm:$0xff]
    %v4665 = vld [vmem:[#allocation8 + $0x1928] sm:$0xff]
    %v4666 = vld [vmem:[#allocation8 + $0x1930] sm:$0xff]
    %v4667 = vld [vmem:[#allocation8 + $0x1938] sm:$0xff]
    %v4668 = vld [vmem:[#allocation8 + $0x1940] sm:$0xff]
    %v4669 = vld [vmem:[#allocation8 + $0x1948] sm:$0xff]
    %v4670 = vld [vmem:[#allocation8 + $0x1950] sm:$0xff]
    %v4671 = vld [vmem:[#allocation8 + $0x1958] sm:$0xff]
    %v4672 = vld [vmem:[#allocation8 + $0x1960] sm:$0xff]
    %v4673 = vld [vmem:[#allocation8 + $0x1968] sm:$0xff]
    %v4674 = vld [vmem:[#allocation8 + $0x1970] sm:$0xff]
    %v4675 = vld [vmem:[#allocation8 + $0x1978] sm:$0xff]
    %v4676 = vld [vmem:[#allocation8 + $0x1980] sm:$0xff]
    %v4677 = vld [vmem:[#allocation8 + $0x1988] sm:$0xff]
    %v4678 = vld [vmem:[#allocation8 + $0x1990] sm:$0xff]
    %v4679 = vld [vmem:[#allocation8 + $0x1998] sm:$0xff]
    %v4680 = vld [vmem:[#allocation8 + $0x19a0] sm:$0xff]
    %v4681 = vld [vmem:[#allocation8 + $0x19a8] sm:$0xff]
    %v4682 = vld [vmem:[#allocation8 + $0x19b0] sm:$0xff]
    %v4683 = vld [vmem:[#allocation8 + $0x19b8] sm:$0xff]
    %v4684 = vld [vmem:[#allocation8 + $0x19c0] sm:$0xff]
    %v4685 = vld [vmem:[#allocation8 + $0x19c8] sm:$0xff]
    %v4686 = vld [vmem:[#allocation8 + $0x19d0] sm:$0xff]
    %v4687 = vld [vmem:[#allocation8 + $0x19d8] sm:$0xff]
    %v4688 = vld [vmem:[#allocation8 + $0x19e0] sm:$0xff]
    %v4689 = vld [vmem:[#allocation8 + $0x19e8] sm:$0xff]
    %v4690 = vld [vmem:[#allocation8 + $0x19f0] sm:$0xff]
    %v4691 = vld [vmem:[#allocation8 + $0x19f8] sm:$0xff]
    %v4692 = vld [vmem:[#allocation8 + $0x1a00] sm:$0xff]
    %v4693 = vld [vmem:[#allocation8 + $0x1a08] sm:$0xff]
    %v4694 = vld [vmem:[#allocation8 + $0x1a10] sm:$0xff]
    %v4695 = vld [vmem:[#allocation8 + $0x1a18] sm:$0xff]
    %v4696 = vld [vmem:[#allocation8 + $0x1a20] sm:$0xff]
    %v4697 = vld [vmem:[#allocation8 + $0x1a28] sm:$0xff]
    %v4698 = vld [vmem:[#allocation8 + $0x1a30] sm:$0xff]
    %v4699 = vld [vmem:[#allocation8 + $0x1a38] sm:$0xff]
    %v4700 = vld [vmem:[#allocation8 + $0x1a40] sm:$0xff]
    %v4701 = vld [vmem:[#allocation8 + $0x1a48] sm:$0xff]
    %v4702 = vld [vmem:[#allocation8 + $0x1a50] sm:$0xff]
    %v4703 = vld [vmem:[#allocation8 + $0x1a58] sm:$0xff]
    %v4704 = vld [vmem:[#allocation8 + $0x1a60] sm:$0xff]
    %v4705 = vld [vmem:[#allocation8 + $0x1a68] sm:$0xff]
    %v4706 = vld [vmem:[#allocation8 + $0x1a70] sm:$0xff]
    %v4707 = vld [vmem:[#allocation8 + $0x1a78] sm:$0xff]
    %v4708 = vld [vmem:[#allocation8 + $0x1a80] sm:$0xff]
    %v4709 = vld [vmem:[#allocation8 + $0x1a88] sm:$0xff]
    %v4710 = vld [vmem:[#allocation8 + $0x1a90] sm:$0xff]
    %v4711 = vld [vmem:[#allocation8 + $0x1a98] sm:$0xff]
    %v4712 = vld [vmem:[#allocation8 + $0x1aa0] sm:$0xff]
    %v4713 = vld [vmem:[#allocation8 + $0x1aa8] sm:$0xff]
    %v4714 = vld [vmem:[#allocation8 + $0x1ab0] sm:$0xff]
    %v4715 = vld [vmem:[#allocation8 + $0x1ab8] sm:$0xff]
    %v4716 = vld [vmem:[#allocation8 + $0x1ac0] sm:$0xff]
    %v4717 = vld [vmem:[#allocation8 + $0x1ac8] sm:$0xff]
    %v4718 = vld [vmem:[#allocation8 + $0x1ad0] sm:$0xff]
    %v4719 = vld [vmem:[#allocation8 + $0x1ad8] sm:$0xff]
    %v4720 = vld [vmem:[#allocation8 + $0x1ae0] sm:$0xff]
    %v4721 = vld [vmem:[#allocation8 + $0x1ae8] sm:$0xff]
    %v4722 = vld [vmem:[#allocation8 + $0x1af0] sm:$0xff]
    %v4723 = vld [vmem:[#allocation8 + $0x1af8] sm:$0xff]
    %v4724 = vld [vmem:[#allocation8 + $0x1b00] sm:$0xff]
    %v4725 = vld [vmem:[#allocation8 + $0x1b08] sm:$0xff]
    %v4726 = vld [vmem:[#allocation8 + $0x1b10] sm:$0xff]
    %v4727 = vld [vmem:[#allocation8 + $0x1b18] sm:$0xff]
    %v4728 = vld [vmem:[#allocation8 + $0x1b20] sm:$0xff]
    %v4729 = vld [vmem:[#allocation8 + $0x1b28] sm:$0xff]
    %v4730 = vld [vmem:[#allocation8 + $0x1b30] sm:$0xff]
    %v4731 = vld [vmem:[#allocation8 + $0x1b38] sm:$0xff]
    %v4732 = vld [vmem:[#allocation8 + $0x1b40] sm:$0xff]
    %v4733 = vld [vmem:[#allocation8 + $0x1b48] sm:$0xff]
    %v4734 = vld [vmem:[#allocation8 + $0x1b50] sm:$0xff]
    %v4735 = vld [vmem:[#allocation8 + $0x1b58] sm:$0xff]
    %v4736 = vld [vmem:[#allocation8 + $0x1b60] sm:$0xff]
    %v4737 = vld [vmem:[#allocation8 + $0x1b68] sm:$0xff]
    %v4738 = vld [vmem:[#allocation8 + $0x1b70] sm:$0xff]
    %v4739 = vld [vmem:[#allocation8 + $0x1b78] sm:$0xff]
    %v4740 = vld [vmem:[#allocation8 + $0x1b80] sm:$0xff]
    %v4741 = vld [vmem:[#allocation8 + $0x1b88] sm:$0xff]
    %v4742 = vld [vmem:[#allocation8 + $0x1b90] sm:$0xff]
    %v4743 = vld [vmem:[#allocation8 + $0x1b98] sm:$0xff]
    %v4744 = vld [vmem:[#allocation8 + $0x1ba0] sm:$0xff]
    %v4745 = vld [vmem:[#allocation8 + $0x1ba8] sm:$0xff]
    %v4746 = vld [vmem:[#allocation8 + $0x1bb0] sm:$0xff]
    %v4747 = vld [vmem:[#allocation8 + $0x1bb8] sm:$0xff]
    %v4748 = vld [vmem:[#allocation8 + $0x1bc0] sm:$0xff]
    %v4749 = vld [vmem:[#allocation8 + $0x1bc8] sm:$0xff]
    %v4750 = vld [vmem:[#allocation8 + $0x1bd0] sm:$0xff]
    %v4751 = vld [vmem:[#allocation8 + $0x1bd8] sm:$0xff]
    %v4752 = vld [vmem:[#allocation8 + $0x1be0] sm:$0xff]
    %v4753 = vld [vmem:[#allocation8 + $0x1be8] sm:$0xff]
    %v4754 = vld [vmem:[#allocation8 + $0x1bf0] sm:$0xff]
    %v4755 = vld [vmem:[#allocation8 + $0x1bf8] sm:$0xff]
    %v4756 = vld [vmem:[#allocation8 + $0x1c00] sm:$0xff]
    %v4757 = vld [vmem:[#allocation8 + $0x1c08] sm:$0xff]
    %v4758 = vld [vmem:[#allocation8 + $0x1c10] sm:$0xff]
    %v4759 = vld [vmem:[#allocation8 + $0x1c18] sm:$0xff]
    %v4760 = vld [vmem:[#allocation8 + $0x1c20] sm:$0xff]
    %v4761 = vld [vmem:[#allocation8 + $0x1c28] sm:$0xff]
    %v4762 = vld [vmem:[#allocation8 + $0x1c30] sm:$0xff]
    %v4763 = vld [vmem:[#allocation8 + $0x1c38] sm:$0xff]
    %v4764 = vld [vmem:[#allocation8 + $0x1c40] sm:$0xff]
    %v4765 = vld [vmem:[#allocation8 + $0x1c48] sm:$0xff]
    %v4766 = vld [vmem:[#allocation8 + $0x1c50] sm:$0xff]
    %v4767 = vld [vmem:[#allocation8 + $0x1c58] sm:$0xff]
    %v4768 = vld [vmem:[#allocation8 + $0x1c60] sm:$0xff]
    %v4769 = vld [vmem:[#allocation8 + $0x1c68] sm:$0xff]
    %v4770 = vld [vmem:[#allocation8 + $0x1c70] sm:$0xff]
    %v4771 = vld [vmem:[#allocation8 + $0x1c78] sm:$0xff]
    %v4772 = vld [vmem:[#allocation8 + $0x1c80] sm:$0xff]
    %v4773 = vld [vmem:[#allocation8 + $0x1c88] sm:$0xff]
    %v4774 = vld [vmem:[#allocation8 + $0x1c90] sm:$0xff]
    %v4775 = vld [vmem:[#allocation8 + $0x1c98] sm:$0xff]
    %v4776 = vld [vmem:[#allocation8 + $0x1ca0] sm:$0xff]
    %v4777 = vld [vmem:[#allocation8 + $0x1ca8] sm:$0xff]
    %v4778 = vld [vmem:[#allocation8 + $0x1cb0] sm:$0xff]
    %v4779 = vld [vmem:[#allocation8 + $0x1cb8] sm:$0xff]
    %v4780 = vld [vmem:[#allocation8 + $0x1cc0] sm:$0xff]
    %v4781 = vld [vmem:[#allocation8 + $0x1cc8] sm:$0xff]
    %v4782 = vld [vmem:[#allocation8 + $0x1cd0] sm:$0xff]
    %v4783 = vld [vmem:[#allocation8 + $0x1cd8] sm:$0xff]
    %v4784 = vld [vmem:[#allocation8 + $0x1ce0] sm:$0xff]
    %v4785 = vld [vmem:[#allocation8 + $0x1ce8] sm:$0xff]
    %v4786 = vld [vmem:[#allocation8 + $0x1cf0] sm:$0xff]
    %v4787 = vld [vmem:[#allocation8 + $0x1cf8] sm:$0xff]
    %v4788 = vld [vmem:[#allocation8 + $0x1d00] sm:$0xff]
    %v4789 = vld [vmem:[#allocation8 + $0x1d08] sm:$0xff]
    %v4790 = vld [vmem:[#allocation8 + $0x1d10] sm:$0xff]
    %v4791 = vld [vmem:[#allocation8 + $0x1d18] sm:$0xff]
    %v4792 = vld [vmem:[#allocation8 + $0x1d20] sm:$0xff]
    %v4793 = vld [vmem:[#allocation8 + $0x1d28] sm:$0xff]
    %v4794 = vld [vmem:[#allocation8 + $0x1d30] sm:$0xff]
    %v4795 = vld [vmem:[#allocation8 + $0x1d38] sm:$0xff]
    %v4796 = vld [vmem:[#allocation8 + $0x1d40] sm:$0xff]
    %v4797 = vld [vmem:[#allocation8 + $0x1d48] sm:$0xff]
    %v4798 = vld [vmem:[#allocation8 + $0x1d50] sm:$0xff]
    %v4799 = vld [vmem:[#allocation8 + $0x1d58] sm:$0xff]
    %v4800 = vld [vmem:[#allocation8 + $0x1d60] sm:$0xff]
    %v4801 = vld [vmem:[#allocation8 + $0x1d68] sm:$0xff]
    %v4802 = vld [vmem:[#allocation8 + $0x1d70] sm:$0xff]
    %v4803 = vld [vmem:[#allocation8 + $0x1d78] sm:$0xff]
    %v4804 = vld [vmem:[#allocation8 + $0x1d80] sm:$0xff]
    %v4805 = vld [vmem:[#allocation8 + $0x1d88] sm:$0xff]
    %v4806 = vld [vmem:[#allocation8 + $0x1d90] sm:$0xff]
    %v4807 = vld [vmem:[#allocation8 + $0x1d98] sm:$0xff]
    %v4808 = vld [vmem:[#allocation8 + $0x1da0] sm:$0xff]
    %v4809 = vld [vmem:[#allocation8 + $0x1da8] sm:$0xff]
    %v4810 = vld [vmem:[#allocation8 + $0x1db0] sm:$0xff]
    %v4811 = vld [vmem:[#allocation8 + $0x1db8] sm:$0xff]
    %v4812 = vld [vmem:[#allocation8 + $0x1dc0] sm:$0xff]
    %v4813 = vld [vmem:[#allocation8 + $0x1dc8] sm:$0xff]
    %v4814 = vld [vmem:[#allocation8 + $0x1dd0] sm:$0xff]
    %v4815 = vld [vmem:[#allocation8 + $0x1dd8] sm:$0xff]
    %v4816 = vld [vmem:[#allocation8 + $0x1de0] sm:$0xff]
    %v4817 = vld [vmem:[#allocation8 + $0x1de8] sm:$0xff]
    %v4818 = vld [vmem:[#allocation8 + $0x1df0] sm:$0xff]
    %v4819 = vld [vmem:[#allocation8 + $0x1df8] sm:$0xff]
    %v4820 = vld [vmem:[#allocation8 + $0x1e00] sm:$0xff]
    %v4821 = vld [vmem:[#allocation8 + $0x1e08] sm:$0xff]
    %v4822 = vld [vmem:[#allocation8 + $0x1e10] sm:$0xff]
    %v4823 = vld [vmem:[#allocation8 + $0x1e18] sm:$0xff]
    %v4824 = vld [vmem:[#allocation8 + $0x1e20] sm:$0xff]
    %v4825 = vld [vmem:[#allocation8 + $0x1e28] sm:$0xff]
    %v4826 = vld [vmem:[#allocation8 + $0x1e30] sm:$0xff]
    %v4827 = vld [vmem:[#allocation8 + $0x1e38] sm:$0xff]
    %v4828 = vld [vmem:[#allocation8 + $0x1e40] sm:$0xff]
    %v4829 = vld [vmem:[#allocation8 + $0x1e48] sm:$0xff]
    %v4830 = vld [vmem:[#allocation8 + $0x1e50] sm:$0xff]
    %v4831 = vld [vmem:[#allocation8 + $0x1e58] sm:$0xff]
    %v4832 = vld [vmem:[#allocation8 + $0x1e60] sm:$0xff]
    %v4833 = vld [vmem:[#allocation8 + $0x1e68] sm:$0xff]
    %v4834 = vld [vmem:[#allocation8 + $0x1e70] sm:$0xff]
    %v4835 = vld [vmem:[#allocation8 + $0x1e78] sm:$0xff]
    %v4836 = vld [vmem:[#allocation8 + $0x1e80] sm:$0xff]
    %v4837 = vld [vmem:[#allocation8 + $0x1e88] sm:$0xff]
    %v4838 = vld [vmem:[#allocation8 + $0x1e90] sm:$0xff]
    %v4839 = vld [vmem:[#allocation8 + $0x1e98] sm:$0xff]
    %v4840 = vld [vmem:[#allocation8 + $0x1ea0] sm:$0xff]
    %v4841 = vld [vmem:[#allocation8 + $0x1ea8] sm:$0xff]
    %v4842 = vld [vmem:[#allocation8 + $0x1eb0] sm:$0xff]
    %v4843 = vld [vmem:[#allocation8 + $0x1eb8] sm:$0xff]
    %v4844 = vld [vmem:[#allocation8 + $0x1ec0] sm:$0xff]
    %v4845 = vld [vmem:[#allocation8 + $0x1ec8] sm:$0xff]
    %v4846 = vld [vmem:[#allocation8 + $0x1ed0] sm:$0xff]
    %v4847 = vld [vmem:[#allocation8 + $0x1ed8] sm:$0xff]
    %v4848 = vld [vmem:[#allocation8 + $0x1ee0] sm:$0xff]
    %v4849 = vld [vmem:[#allocation8 + $0x1ee8] sm:$0xff]
    %v4850 = vld [vmem:[#allocation8 + $0x1ef0] sm:$0xff]
    %v4851 = vld [vmem:[#allocation8 + $0x1ef8] sm:$0xff]
    %v4852 = vld [vmem:[#allocation8 + $0x1f00] sm:$0xff]
    %v4853 = vld [vmem:[#allocation8 + $0x1f08] sm:$0xff]
    %v4854 = vld [vmem:[#allocation8 + $0x1f10] sm:$0xff]
    %v4855 = vld [vmem:[#allocation8 + $0x1f18] sm:$0xff]
    %v4856 = vld [vmem:[#allocation8 + $0x1f20] sm:$0xff]
    %v4857 = vld [vmem:[#allocation8 + $0x1f28] sm:$0xff]
    %v4858 = vld [vmem:[#allocation8 + $0x1f30] sm:$0xff]
    %v4859 = vld [vmem:[#allocation8 + $0x1f38] sm:$0xff]
    %v4860 = vld [vmem:[#allocation8 + $0x1f40] sm:$0xff]
    %v4861 = vld [vmem:[#allocation8 + $0x1f48] sm:$0xff]
    %v4862 = vld [vmem:[#allocation8 + $0x1f50] sm:$0xff]
    %v4863 = vld [vmem:[#allocation8 + $0x1f58] sm:$0xff]
    %v4864 = vld [vmem:[#allocation8 + $0x1f60] sm:$0xff]
    %v4865 = vld [vmem:[#allocation8 + $0x1f68] sm:$0xff]
    %v4866 = vld [vmem:[#allocation8 + $0x1f70] sm:$0xff]
    %v4867 = vld [vmem:[#allocation8 + $0x1f78] sm:$0xff]
    %v4868 = vld [vmem:[#allocation8 + $0x1f80] sm:$0xff]
    %v4869 = vld [vmem:[#allocation8 + $0x1f88] sm:$0xff]
    %v4870 = vld [vmem:[#allocation8 + $0x1f90] sm:$0xff]
    %v4871 = vld [vmem:[#allocation8 + $0x1f98] sm:$0xff]
    %v4872 = vld [vmem:[#allocation8 + $0x1fa0] sm:$0xff]
    %v4873 = vld [vmem:[#allocation8 + $0x1fa8] sm:$0xff]
    %v4874 = vld [vmem:[#allocation8 + $0x1fb0] sm:$0xff]
    %v4875 = vld [vmem:[#allocation8 + $0x1fb8] sm:$0xff]
    %v4876 = vld [vmem:[#allocation8 + $0x1fc0] sm:$0xff]
    %v4877 = vld [vmem:[#allocation8 + $0x1fc8] sm:$0xff]
    %v4878 = vld [vmem:[#allocation8 + $0x1fd0] sm:$0xff]
    %v4879 = vld [vmem:[#allocation8 + $0x1fd8] sm:$0xff]
    %v4880 = vld [vmem:[#allocation8 + $0x1fe0] sm:$0xff]
    %v4881 = vld [vmem:[#allocation8 + $0x1fe8] sm:$0xff]
    %v4882 = vld [vmem:[#allocation8 + $0x1ff0] sm:$0xff]
    %v4883 = vld [vmem:[#allocation8 + $0x1ff8] sm:$0xff]
    %4884 = vmatprep.subr.mxu0 %v3921
    %4885 = vmatpush1.msra.mxu0 %v3920
    %4886 = vmatprep.subr.mxu0 %v3917
    %4887 = vmatpush1.msra.mxu0 %v3916
    %4888 = vmatprep.subr.mxu0 %v3913
    %4889 = vmatpush1.msra.mxu0 %v3912
    %4890 = vmatprep.subr.mxu0 %v3909
    %4891 = vmatpush1.msra.mxu0 %v3908
    %4892 = vmatprep.subr.mxu0 %v3905
    %4893 = vmatpush1.msra.mxu0 %v3904
    %4894 = vmatprep.subr.mxu0 %v3901
    %4895 = vmatpush1.msra.mxu0 %v3900
    %4896 = vmatprep.subr.mxu0 %v3897
    %4897 = vmatpush1.msra.mxu0 %v3896
    %4898 = vmatprep.subr.mxu0 %v3893
    %4899 = vmatpush1.msra.mxu0 %v3892
    %4900 = vmatprep.subr.mxu0 %v3889
    %4901 = vmatpush1.msra.mxu0 %v3888
    %4902 = vmatprep.subr.mxu0 %v3885
    %4903 = vmatpush1.msra.mxu0 %v3884
    %4904 = vmatprep.subr.mxu0 %v3881
    %4905 = vmatpush1.msra.mxu0 %v3880
    %4906 = vmatprep.subr.mxu0 %v3877
    %4907 = vmatpush1.msra.mxu0 %v3876
    %4908 = vmatprep.subr.mxu0 %v3873
    %4909 = vmatpush1.msra.mxu0 %v3872
    %4910 = vmatprep.subr.mxu0 %v3869
    %4911 = vmatpush1.msra.mxu0 %v3868
    %4912 = vmatprep.subr.mxu0 %v3865
    %4913 = vmatpush1.msra.mxu0 %v3864
    %4914 = vmatprep.subr.mxu0 %v3861
    %4915 = vmatpush1.msra.mxu0 %v3860
    %4916 = vmatprep.subr.mxu0 %v3985
    %4917 = vmatpush2.msra.mxu0 %v3984
    %4918 = vmatprep.subr.mxu0 %v3981
    %4919 = vmatpush2.msra.mxu0 %v3980
    %4920 = vmatprep.subr.mxu0 %v3977
    %4921 = vmatpush2.msra.mxu0 %v3976
    %4922 = vmatprep.subr.mxu0 %v3973
    %4923 = vmatpush2.msra.mxu0 %v3972
    %4924 = vmatprep.subr.mxu0 %v3969
    %4925 = vmatpush2.msra.mxu0 %v3968
    %4926 = vmatprep.subr.mxu0 %v3965
    %4927 = vmatpush2.msra.mxu0 %v3964
    %4928 = vmatprep.subr.mxu0 %v3961
    %4929 = vmatpush2.msra.mxu0 %v3960
    %4930 = vmatprep.subr.mxu0 %v3957
    %4931 = vmatpush2.msra.mxu0 %v3956
    %4932 = vmatprep.subr.mxu0 %v3953
    %4933 = vmatpush2.msra.mxu0 %v3952
    %4934 = vmatprep.subr.mxu0 %v3949
    %4935 = vmatpush2.msra.mxu0 %v3948
    %4936 = vmatprep.subr.mxu0 %v3945
    %4937 = vmatpush2.msra.mxu0 %v3944
    %4938 = vmatprep.subr.mxu0 %v3941
    %4939 = vmatpush2.msra.mxu0 %v3940
    %4940 = vmatprep.subr.mxu0 %v3937
    %4941 = vmatpush2.msra.mxu0 %v3936
    %4942 = vmatprep.subr.mxu0 %v3933
    %4943 = vmatpush2.msra.mxu0 %v3932
    %4944 = vmatprep.subr.mxu0 %v3929
    %4945 = vmatpush2.msra.mxu0 %v3928
    %4946 = vmatprep.subr.mxu0 %v3925
    %4947 = vmatpush2.msra.mxu0 %v3924
    %4948 = vmatprep.mubr.f32.mxu0 %v3829
    %4949 = vmatmul.mubr.f32.gmra.mxu0 %v3828
    %v4950 = vpop.f32.mrf.mxu0
    %v4951 = vadd.f32 %v1564, %v4950
    %v4952 = vpop.f32.mrf.mxu0
    %v4953 = vadd.f32 %v1565, %v4952
    %4954 = vmatprep.mubr.f32.mxu0 %v3845
    %4955 = vmatmul.mubr.f32.gmra.mxu0 %v3844
    %v4956 = vpop.f32.mrf.mxu0
    %v4957 = vadd.f32 %v1568, %v4956
    %v4958 = vpop.f32.mrf.mxu0
    %v4959 = vadd.f32 %v1569, %v4958
    %4960 = vdwg.mxu0
    %4961 = vmatprep.subr.mxu0 %v4049
    %4962 = vmatpush1.msra.mxu0 %v4048
    %4963 = vmatprep.subr.mxu0 %v4045
    %4964 = vmatpush1.msra.mxu0 %v4044
    %4965 = vmatprep.subr.mxu0 %v4041
    %4966 = vmatpush1.msra.mxu0 %v4040
    %4967 = vmatprep.subr.mxu0 %v4037
    %4968 = vmatpush1.msra.mxu0 %v4036
    %4969 = vmatprep.subr.mxu0 %v4033
    %4970 = vmatpush1.msra.mxu0 %v4032
    %4971 = vmatprep.subr.mxu0 %v4029
    %4972 = vmatpush1.msra.mxu0 %v4028
    %4973 = vmatprep.subr.mxu0 %v4025
    %4974 = vmatpush1.msra.mxu0 %v4024
    %4975 = vmatprep.subr.mxu0 %v4021
    %4976 = vmatpush1.msra.mxu0 %v4020
    %4977 = vmatprep.subr.mxu0 %v4017
    %4978 = vmatpush1.msra.mxu0 %v4016
    %4979 = vmatprep.subr.mxu0 %v4013
    %4980 = vmatpush1.msra.mxu0 %v4012
    %4981 = vmatprep.subr.mxu0 %v4009
    %4982 = vmatpush1.msra.mxu0 %v4008
    %4983 = vmatprep.subr.mxu0 %v4005
    %4984 = vmatpush1.msra.mxu0 %v4004
    %4985 = vmatprep.subr.mxu0 %v4001
    %4986 = vmatpush1.msra.mxu0 %v4000
    %4987 = vmatprep.subr.mxu0 %v3997
    %4988 = vmatpush1.msra.mxu0 %v3996
    %4989 = vmatprep.subr.mxu0 %v3993
    %4990 = vmatpush1.msra.mxu0 %v3992
    %4991 = vmatprep.subr.mxu0 %v3989
    %4992 = vmatpush1.msra.mxu0 %v3988
    %4993 = vmatprep.subr.mxu0 %v4113
    %4994 = vmatpush2.msra.mxu0 %v4112
    %4995 = vmatprep.subr.mxu0 %v4109
    %4996 = vmatpush2.msra.mxu0 %v4108
    %4997 = vmatprep.subr.mxu0 %v4105
    %4998 = vmatpush2.msra.mxu0 %v4104
    %4999 = vmatprep.subr.mxu0 %v4101
    %5000 = vmatpush2.msra.mxu0 %v4100
    %5001 = vmatprep.subr.mxu0 %v4097
    %5002 = vmatpush2.msra.mxu0 %v4096
    %5003 = vmatprep.subr.mxu0 %v4093
    %5004 = vmatpush2.msra.mxu0 %v4092
    %5005 = vmatprep.subr.mxu0 %v4089
    %5006 = vmatpush2.msra.mxu0 %v4088
    %5007 = vmatprep.subr.mxu0 %v4085
    %5008 = vmatpush2.msra.mxu0 %v4084
    %5009 = vmatprep.subr.mxu0 %v4081
    %5010 = vmatpush2.msra.mxu0 %v4080
    %5011 = vmatprep.subr.mxu0 %v4077
    %5012 = vmatpush2.msra.mxu0 %v4076
    %5013 = vmatprep.subr.mxu0 %v4073
    %5014 = vmatpush2.msra.mxu0 %v4072
    %5015 = vmatprep.subr.mxu0 %v4069
    %5016 = vmatpush2.msra.mxu0 %v4068
    %5017 = vmatprep.subr.mxu0 %v4065
    %5018 = vmatpush2.msra.mxu0 %v4064
    %5019 = vmatprep.subr.mxu0 %v4061
    %5020 = vmatpush2.msra.mxu0 %v4060
    %5021 = vmatprep.subr.mxu0 %v4057
    %5022 = vmatpush2.msra.mxu0 %v4056
    %5023 = vmatprep.subr.mxu0 %v4053
    %5024 = vmatpush2.msra.mxu0 %v4052
    %5025 = vmatprep.mubr.f32.mxu0 %v3831
    %5026 = vmatmul.mubr.f32.gmra.mxu0 %v3830
    %v5027 = vpop.f32.mrf.mxu0
    %v5028 = vadd.f32 %v4951, %v5027
    %v5029 = vpop.f32.mrf.mxu0
    %v5030 = vadd.f32 %v4953, %v5029
    %5031 = vmatprep.mubr.f32.mxu0 %v3847
    %5032 = vmatmul.mubr.f32.gmra.mxu0 %v3846
    %v5033 = vpop.f32.mrf.mxu0
    %v5034 = vadd.f32 %v4957, %v5033
    %v5035 = vpop.f32.mrf.mxu0
    %v5036 = vadd.f32 %v4959, %v5035
    %5037 = vdwg.mxu0
    %5038 = vmatprep.subr.mxu0 %v4177
    %5039 = vmatpush1.msra.mxu0 %v4176
    %5040 = vmatprep.subr.mxu0 %v4173
    %5041 = vmatpush1.msra.mxu0 %v4172
    %5042 = vmatprep.subr.mxu0 %v4169
    %5043 = vmatpush1.msra.mxu0 %v4168
    %5044 = vmatprep.subr.mxu0 %v4165
    %5045 = vmatpush1.msra.mxu0 %v4164
    %5046 = vmatprep.subr.mxu0 %v4161
    %5047 = vmatpush1.msra.mxu0 %v4160
    %5048 = vmatprep.subr.mxu0 %v4157
    %5049 = vmatpush1.msra.mxu0 %v4156
    %5050 = vmatprep.subr.mxu0 %v4153
    %5051 = vmatpush1.msra.mxu0 %v4152
    %5052 = vmatprep.subr.mxu0 %v4149
    %5053 = vmatpush1.msra.mxu0 %v4148
    %5054 = vmatprep.subr.mxu0 %v4145
    %5055 = vmatpush1.msra.mxu0 %v4144
    %5056 = vmatprep.subr.mxu0 %v4141
    %5057 = vmatpush1.msra.mxu0 %v4140
    %5058 = vmatprep.subr.mxu0 %v4137
    %5059 = vmatpush1.msra.mxu0 %v4136
    %5060 = vmatprep.subr.mxu0 %v4133
    %5061 = vmatpush1.msra.mxu0 %v4132
    %5062 = vmatprep.subr.mxu0 %v4129
    %5063 = vmatpush1.msra.mxu0 %v4128
    %5064 = vmatprep.subr.mxu0 %v4125
    %5065 = vmatpush1.msra.mxu0 %v4124
    %5066 = vmatprep.subr.mxu0 %v4121
    %5067 = vmatpush1.msra.mxu0 %v4120
    %5068 = vmatprep.subr.mxu0 %v4117
    %5069 = vmatpush1.msra.mxu0 %v4116
    %5070 = vmatprep.subr.mxu0 %v4241
    %5071 = vmatpush2.msra.mxu0 %v4240
    %5072 = vmatprep.subr.mxu0 %v4237
    %5073 = vmatpush2.msra.mxu0 %v4236
    %5074 = vmatprep.subr.mxu0 %v4233
    %5075 = vmatpush2.msra.mxu0 %v4232
    %5076 = vmatprep.subr.mxu0 %v4229
    %5077 = vmatpush2.msra.mxu0 %v4228
    %5078 = vmatprep.subr.mxu0 %v4225
    %5079 = vmatpush2.msra.mxu0 %v4224
    %5080 = vmatprep.subr.mxu0 %v4221
    %5081 = vmatpush2.msra.mxu0 %v4220
    %5082 = vmatprep.subr.mxu0 %v4217
    %5083 = vmatpush2.msra.mxu0 %v4216
    %5084 = vmatprep.subr.mxu0 %v4213
    %5085 = vmatpush2.msra.mxu0 %v4212
    %5086 = vmatprep.subr.mxu0 %v4209
    %5087 = vmatpush2.msra.mxu0 %v4208
    %5088 = vmatprep.subr.mxu0 %v4205
    %5089 = vmatpush2.msra.mxu0 %v4204
    %5090 = vmatprep.subr.mxu0 %v4201
    %5091 = vmatpush2.msra.mxu0 %v4200
    %5092 = vmatprep.subr.mxu0 %v4197
    %5093 = vmatpush2.msra.mxu0 %v4196
    %5094 = vmatprep.subr.mxu0 %v4193
    %5095 = vmatpush2.msra.mxu0 %v4192
    %5096 = vmatprep.subr.mxu0 %v4189
    %5097 = vmatpush2.msra.mxu0 %v4188
    %5098 = vmatprep.subr.mxu0 %v4185
    %5099 = vmatpush2.msra.mxu0 %v4184
    %5100 = vmatprep.subr.mxu0 %v4181
    %5101 = vmatpush2.msra.mxu0 %v4180
    %5102 = vmatprep.mubr.f32.mxu0 %v3833
    %5103 = vmatmul.mubr.f32.gmra.mxu0 %v3832
    %v5104 = vpop.f32.mrf.mxu0
    %v5105 = vadd.f32 %v5028, %v5104
    %v5106 = vpop.f32.mrf.mxu0
    %v5107 = vadd.f32 %v5030, %v5106
    %5108 = vmatprep.mubr.f32.mxu0 %v3849
    %5109 = vmatmul.mubr.f32.gmra.mxu0 %v3848
    %v5110 = vpop.f32.mrf.mxu0
    %v5111 = vadd.f32 %v5034, %v5110
    %v5112 = vpop.f32.mrf.mxu0
    %v5113 = vadd.f32 %v5036, %v5112
    %5114 = vdwg.mxu0
    %5115 = vmatprep.subr.mxu0 %v4305
    %5116 = vmatpush1.msra.mxu0 %v4304
    %5117 = vmatprep.subr.mxu0 %v4301
    %5118 = vmatpush1.msra.mxu0 %v4300
    %5119 = vmatprep.subr.mxu0 %v4297
    %5120 = vmatpush1.msra.mxu0 %v4296
    %5121 = vmatprep.subr.mxu0 %v4293
    %5122 = vmatpush1.msra.mxu0 %v4292
    %5123 = vmatprep.subr.mxu0 %v4289
    %5124 = vmatpush1.msra.mxu0 %v4288
    %5125 = vmatprep.subr.mxu0 %v4285
    %5126 = vmatpush1.msra.mxu0 %v4284
    %5127 = vmatprep.subr.mxu0 %v4281
    %5128 = vmatpush1.msra.mxu0 %v4280
    %5129 = vmatprep.subr.mxu0 %v4277
    %5130 = vmatpush1.msra.mxu0 %v4276
    %5131 = vmatprep.subr.mxu0 %v4273
    %5132 = vmatpush1.msra.mxu0 %v4272
    %5133 = vmatprep.subr.mxu0 %v4269
    %5134 = vmatpush1.msra.mxu0 %v4268
    %5135 = vmatprep.subr.mxu0 %v4265
    %5136 = vmatpush1.msra.mxu0 %v4264
    %5137 = vmatprep.subr.mxu0 %v4261
    %5138 = vmatpush1.msra.mxu0 %v4260
    %5139 = vmatprep.subr.mxu0 %v4257
    %5140 = vmatpush1.msra.mxu0 %v4256
    %5141 = vmatprep.subr.mxu0 %v4253
    %5142 = vmatpush1.msra.mxu0 %v4252
    %5143 = vmatprep.subr.mxu0 %v4249
    %5144 = vmatpush1.msra.mxu0 %v4248
    %5145 = vmatprep.subr.mxu0 %v4245
    %5146 = vmatpush1.msra.mxu0 %v4244
    %5147 = vmatprep.subr.mxu0 %v4369
    %5148 = vmatpush2.msra.mxu0 %v4368
    %5149 = vmatprep.subr.mxu0 %v4365
    %5150 = vmatpush2.msra.mxu0 %v4364
    %5151 = vmatprep.subr.mxu0 %v4361
    %5152 = vmatpush2.msra.mxu0 %v4360
    %5153 = vmatprep.subr.mxu0 %v4357
    %5154 = vmatpush2.msra.mxu0 %v4356
    %5155 = vmatprep.subr.mxu0 %v4353
    %5156 = vmatpush2.msra.mxu0 %v4352
    %5157 = vmatprep.subr.mxu0 %v4349
    %5158 = vmatpush2.msra.mxu0 %v4348
    %5159 = vmatprep.subr.mxu0 %v4345
    %5160 = vmatpush2.msra.mxu0 %v4344
    %5161 = vmatprep.subr.mxu0 %v4341
    %5162 = vmatpush2.msra.mxu0 %v4340
    %5163 = vmatprep.subr.mxu0 %v4337
    %5164 = vmatpush2.msra.mxu0 %v4336
    %5165 = vmatprep.subr.mxu0 %v4333
    %5166 = vmatpush2.msra.mxu0 %v4332
    %5167 = vmatprep.subr.mxu0 %v4329
    %5168 = vmatpush2.msra.mxu0 %v4328
    %5169 = vmatprep.subr.mxu0 %v4325
    %5170 = vmatpush2.msra.mxu0 %v4324
    %5171 = vmatprep.subr.mxu0 %v4321
    %5172 = vmatpush2.msra.mxu0 %v4320
    %5173 = vmatprep.subr.mxu0 %v4317
    %5174 = vmatpush2.msra.mxu0 %v4316
    %5175 = vmatprep.subr.mxu0 %v4313
    %5176 = vmatpush2.msra.mxu0 %v4312
    %5177 = vmatprep.subr.mxu0 %v4309
    %5178 = vmatpush2.msra.mxu0 %v4308
    %5179 = vmatprep.mubr.f32.mxu0 %v3835
    %5180 = vmatmul.mubr.f32.gmra.mxu0 %v3834
    %v5181 = vpop.f32.mrf.mxu0
    %v5182 = vadd.f32 %v5105, %v5181
    %v5183 = vpop.f32.mrf.mxu0
    %v5184 = vadd.f32 %v5107, %v5183
    %5185 = vmatprep.mubr.f32.mxu0 %v3851
    %5186 = vmatmul.mubr.f32.gmra.mxu0 %v3850
    %v5187 = vpop.f32.mrf.mxu0
    %v5188 = vadd.f32 %v5111, %v5187
    %v5189 = vpop.f32.mrf.mxu0
    %v5190 = vadd.f32 %v5113, %v5189
    %5191 = vdwg.mxu0
    %5192 = vmatprep.subr.mxu0 %v4433
    %5193 = vmatpush1.msra.mxu0 %v4432
    %5194 = vmatprep.subr.mxu0 %v4429
    %5195 = vmatpush1.msra.mxu0 %v4428
    %5196 = vmatprep.subr.mxu0 %v4425
    %5197 = vmatpush1.msra.mxu0 %v4424
    %5198 = vmatprep.subr.mxu0 %v4421
    %5199 = vmatpush1.msra.mxu0 %v4420
    %5200 = vmatprep.subr.mxu0 %v4417
    %5201 = vmatpush1.msra.mxu0 %v4416
    %5202 = vmatprep.subr.mxu0 %v4413
    %5203 = vmatpush1.msra.mxu0 %v4412
    %5204 = vmatprep.subr.mxu0 %v4409
    %5205 = vmatpush1.msra.mxu0 %v4408
    %5206 = vmatprep.subr.mxu0 %v4405
    %5207 = vmatpush1.msra.mxu0 %v4404
    %5208 = vmatprep.subr.mxu0 %v4401
    %5209 = vmatpush1.msra.mxu0 %v4400
    %5210 = vmatprep.subr.mxu0 %v4397
    %5211 = vmatpush1.msra.mxu0 %v4396
    %5212 = vmatprep.subr.mxu0 %v4393
    %5213 = vmatpush1.msra.mxu0 %v4392
    %5214 = vmatprep.subr.mxu0 %v4389
    %5215 = vmatpush1.msra.mxu0 %v4388
    %5216 = vmatprep.subr.mxu0 %v4385
    %5217 = vmatpush1.msra.mxu0 %v4384
    %5218 = vmatprep.subr.mxu0 %v4381
    %5219 = vmatpush1.msra.mxu0 %v4380
    %5220 = vmatprep.subr.mxu0 %v4377
    %5221 = vmatpush1.msra.mxu0 %v4376
    %5222 = vmatprep.subr.mxu0 %v4373
    %5223 = vmatpush1.msra.mxu0 %v4372
    %5224 = vmatprep.subr.mxu0 %v4497
    %5225 = vmatpush2.msra.mxu0 %v4496
    %5226 = vmatprep.subr.mxu0 %v4493
    %5227 = vmatpush2.msra.mxu0 %v4492
    %5228 = vmatprep.subr.mxu0 %v4489
    %5229 = vmatpush2.msra.mxu0 %v4488
    %5230 = vmatprep.subr.mxu0 %v4485
    %5231 = vmatpush2.msra.mxu0 %v4484
    %5232 = vmatprep.subr.mxu0 %v4481
    %5233 = vmatpush2.msra.mxu0 %v4480
    %5234 = vmatprep.subr.mxu0 %v4477
    %5235 = vmatpush2.msra.mxu0 %v4476
    %5236 = vmatprep.subr.mxu0 %v4473
    %5237 = vmatpush2.msra.mxu0 %v4472
    %5238 = vmatprep.subr.mxu0 %v4469
    %5239 = vmatpush2.msra.mxu0 %v4468
    %5240 = vmatprep.subr.mxu0 %v4465
    %5241 = vmatpush2.msra.mxu0 %v4464
    %5242 = vmatprep.subr.mxu0 %v4461
    %5243 = vmatpush2.msra.mxu0 %v4460
    %5244 = vmatprep.subr.mxu0 %v4457
    %5245 = vmatpush2.msra.mxu0 %v4456
    %5246 = vmatprep.subr.mxu0 %v4453
    %5247 = vmatpush2.msra.mxu0 %v4452
    %5248 = vmatprep.subr.mxu0 %v4449
    %5249 = vmatpush2.msra.mxu0 %v4448
    %5250 = vmatprep.subr.mxu0 %v4445
    %5251 = vmatpush2.msra.mxu0 %v4444
    %5252 = vmatprep.subr.mxu0 %v4441
    %5253 = vmatpush2.msra.mxu0 %v4440
    %5254 = vmatprep.subr.mxu0 %v4437
    %5255 = vmatpush2.msra.mxu0 %v4436
    %5256 = vmatprep.mubr.f32.mxu0 %v3837
    %5257 = vmatmul.mubr.f32.gmra.mxu0 %v3836
    %v5258 = vpop.f32.mrf.mxu0
    %v5259 = vadd.f32 %v5182, %v5258
    %v5260 = vpop.f32.mrf.mxu0
    %v5261 = vadd.f32 %v5184, %v5260
    %5262 = vmatprep.mubr.f32.mxu0 %v3853
    %5263 = vmatmul.mubr.f32.gmra.mxu0 %v3852
    %v5264 = vpop.f32.mrf.mxu0
    %v5265 = vadd.f32 %v5188, %v5264
    %v5266 = vpop.f32.mrf.mxu0
    %v5267 = vadd.f32 %v5190, %v5266
    %5268 = vdwg.mxu0
    %5269 = vmatprep.subr.mxu0 %v4561
    %5270 = vmatpush1.msra.mxu0 %v4560
    %5271 = vmatprep.subr.mxu0 %v4557
    %5272 = vmatpush1.msra.mxu0 %v4556
    %5273 = vmatprep.subr.mxu0 %v4553
    %5274 = vmatpush1.msra.mxu0 %v4552
    %5275 = vmatprep.subr.mxu0 %v4549
    %5276 = vmatpush1.msra.mxu0 %v4548
    %5277 = vmatprep.subr.mxu0 %v4545
    %5278 = vmatpush1.msra.mxu0 %v4544
    %5279 = vmatprep.subr.mxu0 %v4541
    %5280 = vmatpush1.msra.mxu0 %v4540
    %5281 = vmatprep.subr.mxu0 %v4537
    %5282 = vmatpush1.msra.mxu0 %v4536
    %5283 = vmatprep.subr.mxu0 %v4533
    %5284 = vmatpush1.msra.mxu0 %v4532
    %5285 = vmatprep.subr.mxu0 %v4529
    %5286 = vmatpush1.msra.mxu0 %v4528
    %5287 = vmatprep.subr.mxu0 %v4525
    %5288 = vmatpush1.msra.mxu0 %v4524
    %5289 = vmatprep.subr.mxu0 %v4521
    %5290 = vmatpush1.msra.mxu0 %v4520
    %5291 = vmatprep.subr.mxu0 %v4517
    %5292 = vmatpush1.msra.mxu0 %v4516
    %5293 = vmatprep.subr.mxu0 %v4513
    %5294 = vmatpush1.msra.mxu0 %v4512
    %5295 = vmatprep.subr.mxu0 %v4509
    %5296 = vmatpush1.msra.mxu0 %v4508
    %5297 = vmatprep.subr.mxu0 %v4505
    %5298 = vmatpush1.msra.mxu0 %v4504
    %5299 = vmatprep.subr.mxu0 %v4501
    %5300 = vmatpush1.msra.mxu0 %v4500
    %5301 = vmatprep.subr.mxu0 %v4625
    %5302 = vmatpush2.msra.mxu0 %v4624
    %5303 = vmatprep.subr.mxu0 %v4621
    %5304 = vmatpush2.msra.mxu0 %v4620
    %5305 = vmatprep.subr.mxu0 %v4617
    %5306 = vmatpush2.msra.mxu0 %v4616
    %5307 = vmatprep.subr.mxu0 %v4613
    %5308 = vmatpush2.msra.mxu0 %v4612
    %5309 = vmatprep.subr.mxu0 %v4609
    %5310 = vmatpush2.msra.mxu0 %v4608
    %5311 = vmatprep.subr.mxu0 %v4605
    %5312 = vmatpush2.msra.mxu0 %v4604
    %5313 = vmatprep.subr.mxu0 %v4601
    %5314 = vmatpush2.msra.mxu0 %v4600
    %5315 = vmatprep.subr.mxu0 %v4597
    %5316 = vmatpush2.msra.mxu0 %v4596
    %5317 = vmatprep.subr.mxu0 %v4593
    %5318 = vmatpush2.msra.mxu0 %v4592
    %5319 = vmatprep.subr.mxu0 %v4589
    %5320 = vmatpush2.msra.mxu0 %v4588
    %5321 = vmatprep.subr.mxu0 %v4585
    %5322 = vmatpush2.msra.mxu0 %v4584
    %5323 = vmatprep.subr.mxu0 %v4581
    %5324 = vmatpush2.msra.mxu0 %v4580
    %5325 = vmatprep.subr.mxu0 %v4577
    %5326 = vmatpush2.msra.mxu0 %v4576
    %5327 = vmatprep.subr.mxu0 %v4573
    %5328 = vmatpush2.msra.mxu0 %v4572
    %5329 = vmatprep.subr.mxu0 %v4569
    %5330 = vmatpush2.msra.mxu0 %v4568
    %5331 = vmatprep.subr.mxu0 %v4565
    %5332 = vmatpush2.msra.mxu0 %v4564
    %5333 = vmatprep.mubr.f32.mxu0 %v3839
    %5334 = vmatmul.mubr.f32.gmra.mxu0 %v3838
    %v5335 = vpop.f32.mrf.mxu0
    %v5336 = vadd.f32 %v5259, %v5335
    %v5337 = vpop.f32.mrf.mxu0
    %v5338 = vadd.f32 %v5261, %v5337
    %5339 = vmatprep.mubr.f32.mxu0 %v3855
    %5340 = vmatmul.mubr.f32.gmra.mxu0 %v3854
    %v5341 = vpop.f32.mrf.mxu0
    %v5342 = vadd.f32 %v5265, %v5341
    %v5343 = vpop.f32.mrf.mxu0
    %v5344 = vadd.f32 %v5267, %v5343
    %5345 = vdwg.mxu0
    %5346 = vmatprep.subr.mxu0 %v4689
    %5347 = vmatpush1.msra.mxu0 %v4688
    %5348 = vmatprep.subr.mxu0 %v4685
    %5349 = vmatpush1.msra.mxu0 %v4684
    %5350 = vmatprep.subr.mxu0 %v4681
    %5351 = vmatpush1.msra.mxu0 %v4680
    %5352 = vmatprep.subr.mxu0 %v4677
    %5353 = vmatpush1.msra.mxu0 %v4676
    %5354 = vmatprep.subr.mxu0 %v4673
    %5355 = vmatpush1.msra.mxu0 %v4672
    %5356 = vmatprep.subr.mxu0 %v4669
    %5357 = vmatpush1.msra.mxu0 %v4668
    %5358 = vmatprep.subr.mxu0 %v4665
    %5359 = vmatpush1.msra.mxu0 %v4664
    %5360 = vmatprep.subr.mxu0 %v4661
    %5361 = vmatpush1.msra.mxu0 %v4660
    %5362 = vmatprep.subr.mxu0 %v4657
    %5363 = vmatpush1.msra.mxu0 %v4656
    %5364 = vmatprep.subr.mxu0 %v4653
    %5365 = vmatpush1.msra.mxu0 %v4652
    %5366 = vmatprep.subr.mxu0 %v4649
    %5367 = vmatpush1.msra.mxu0 %v4648
    %5368 = vmatprep.subr.mxu0 %v4645
    %5369 = vmatpush1.msra.mxu0 %v4644
    %5370 = vmatprep.subr.mxu0 %v4641
    %5371 = vmatpush1.msra.mxu0 %v4640
    %5372 = vmatprep.subr.mxu0 %v4637
    %5373 = vmatpush1.msra.mxu0 %v4636
    %5374 = vmatprep.subr.mxu0 %v4633
    %5375 = vmatpush1.msra.mxu0 %v4632
    %5376 = vmatprep.subr.mxu0 %v4629
    %5377 = vmatpush1.msra.mxu0 %v4628
    %5378 = vmatprep.subr.mxu0 %v4753
    %5379 = vmatpush2.msra.mxu0 %v4752
    %5380 = vmatprep.subr.mxu0 %v4749
    %5381 = vmatpush2.msra.mxu0 %v4748
    %5382 = vmatprep.subr.mxu0 %v4745
    %5383 = vmatpush2.msra.mxu0 %v4744
    %5384 = vmatprep.subr.mxu0 %v4741
    %5385 = vmatpush2.msra.mxu0 %v4740
    %5386 = vmatprep.subr.mxu0 %v4737
    %5387 = vmatpush2.msra.mxu0 %v4736
    %5388 = vmatprep.subr.mxu0 %v4733
    %5389 = vmatpush2.msra.mxu0 %v4732
    %5390 = vmatprep.subr.mxu0 %v4729
    %5391 = vmatpush2.msra.mxu0 %v4728
    %5392 = vmatprep.subr.mxu0 %v4725
    %5393 = vmatpush2.msra.mxu0 %v4724
    %5394 = vmatprep.subr.mxu0 %v4721
    %5395 = vmatpush2.msra.mxu0 %v4720
    %5396 = vmatprep.subr.mxu0 %v4717
    %5397 = vmatpush2.msra.mxu0 %v4716
    %5398 = vmatprep.subr.mxu0 %v4713
    %5399 = vmatpush2.msra.mxu0 %v4712
    %5400 = vmatprep.subr.mxu0 %v4709
    %5401 = vmatpush2.msra.mxu0 %v4708
    %5402 = vmatprep.subr.mxu0 %v4705
    %5403 = vmatpush2.msra.mxu0 %v4704
    %5404 = vmatprep.subr.mxu0 %v4701
    %5405 = vmatpush2.msra.mxu0 %v4700
    %5406 = vmatprep.subr.mxu0 %v4697
    %5407 = vmatpush2.msra.mxu0 %v4696
    %5408 = vmatprep.subr.mxu0 %v4693
    %5409 = vmatpush2.msra.mxu0 %v4692
    %5410 = vmatprep.mubr.f32.mxu0 %v3841
    %5411 = vmatmul.mubr.f32.gmra.mxu0 %v3840
    %v5412 = vpop.f32.mrf.mxu0
    %v5413 = vadd.f32 %v5336, %v5412
    %v5414 = vpop.f32.mrf.mxu0
    %v5415 = vadd.f32 %v5338, %v5414
    %5416 = vmatprep.mubr.f32.mxu0 %v3857
    %5417 = vmatmul.mubr.f32.gmra.mxu0 %v3856
    %v5418 = vpop.f32.mrf.mxu0
    %v5419 = vadd.f32 %v5342, %v5418
    %v5420 = vpop.f32.mrf.mxu0
    %v5421 = vadd.f32 %v5344, %v5420
    %5422 = vdwg.mxu0
    %5423 = vmatprep.subr.mxu0 %v4817
    %5424 = vmatpush1.msra.mxu0 %v4816
    %5425 = vmatprep.subr.mxu0 %v4813
    %5426 = vmatpush1.msra.mxu0 %v4812
    %5427 = vmatprep.subr.mxu0 %v4809
    %5428 = vmatpush1.msra.mxu0 %v4808
    %5429 = vmatprep.subr.mxu0 %v4805
    %5430 = vmatpush1.msra.mxu0 %v4804
    %5431 = vmatprep.subr.mxu0 %v4801
    %5432 = vmatpush1.msra.mxu0 %v4800
    %5433 = vmatprep.subr.mxu0 %v4797
    %5434 = vmatpush1.msra.mxu0 %v4796
    %5435 = vmatprep.subr.mxu0 %v4793
    %5436 = vmatpush1.msra.mxu0 %v4792
    %5437 = vmatprep.subr.mxu0 %v4789
    %5438 = vmatpush1.msra.mxu0 %v4788
    %5439 = vmatprep.subr.mxu0 %v4785
    %5440 = vmatpush1.msra.mxu0 %v4784
    %5441 = vmatprep.subr.mxu0 %v4781
    %5442 = vmatpush1.msra.mxu0 %v4780
    %5443 = vmatprep.subr.mxu0 %v4777
    %5444 = vmatpush1.msra.mxu0 %v4776
    %5445 = vmatprep.subr.mxu0 %v4773
    %5446 = vmatpush1.msra.mxu0 %v4772
    %5447 = vmatprep.subr.mxu0 %v4769
    %5448 = vmatpush1.msra.mxu0 %v4768
    %5449 = vmatprep.subr.mxu0 %v4765
    %5450 = vmatpush1.msra.mxu0 %v4764
    %5451 = vmatprep.subr.mxu0 %v4761
    %5452 = vmatpush1.msra.mxu0 %v4760
    %5453 = vmatprep.subr.mxu0 %v4757
    %5454 = vmatpush1.msra.mxu0 %v4756
    %5455 = vmatprep.subr.mxu0 %v4881
    %5456 = vmatpush2.msra.mxu0 %v4880
    %5457 = vmatprep.subr.mxu0 %v4877
    %5458 = vmatpush2.msra.mxu0 %v4876
    %5459 = vmatprep.subr.mxu0 %v4873
    %5460 = vmatpush2.msra.mxu0 %v4872
    %5461 = vmatprep.subr.mxu0 %v4869
    %5462 = vmatpush2.msra.mxu0 %v4868
    %5463 = vmatprep.subr.mxu0 %v4865
    %5464 = vmatpush2.msra.mxu0 %v4864
    %5465 = vmatprep.subr.mxu0 %v4861
    %5466 = vmatpush2.msra.mxu0 %v4860
    %5467 = vmatprep.subr.mxu0 %v4857
    %5468 = vmatpush2.msra.mxu0 %v4856
    %5469 = vmatprep.subr.mxu0 %v4853
    %5470 = vmatpush2.msra.mxu0 %v4852
    %5471 = vmatprep.subr.mxu0 %v4849
    %5472 = vmatpush2.msra.mxu0 %v4848
    %5473 = vmatprep.subr.mxu0 %v4845
    %5474 = vmatpush2.msra.mxu0 %v4844
    %5475 = vmatprep.subr.mxu0 %v4841
    %5476 = vmatpush2.msra.mxu0 %v4840
    %5477 = vmatprep.subr.mxu0 %v4837
    %5478 = vmatpush2.msra.mxu0 %v4836
    %5479 = vmatprep.subr.mxu0 %v4833
    %5480 = vmatpush2.msra.mxu0 %v4832
    %5481 = vmatprep.subr.mxu0 %v4829
    %5482 = vmatpush2.msra.mxu0 %v4828
    %5483 = vmatprep.subr.mxu0 %v4825
    %5484 = vmatpush2.msra.mxu0 %v4824
    %5485 = vmatprep.subr.mxu0 %v4821
    %5486 = vmatpush2.msra.mxu0 %v4820
    %5487 = vmatprep.mubr.f32.mxu0 %v3843
    %5488 = vmatmul.mubr.f32.gmra.mxu0 %v3842
    %v5489 = vpop.f32.mrf.mxu0
    %v5490 = vadd.f32 %v5413, %v5489
    %v5491 = vpop.f32.mrf.mxu0
    %v5492 = vadd.f32 %v5415, %v5491
    %5493 = vmatprep.mubr.f32.mxu0 %v3859
    %5494 = vmatmul.mubr.f32.gmra.mxu0 %v3858
    %v5495 = vpop.f32.mrf.mxu0
    %v5496 = vadd.f32 %v5419, %v5495
    %v5497 = vpop.f32.mrf.mxu0
    %v5498 = vadd.f32 %v5421, %v5497
    %5499 = vdwg.mxu0
    %5500 = vmatprep.subr.mxu0 %v3923
    %5501 = vmatpush1.msra.mxu0 %v3922
    %5502 = vmatprep.subr.mxu0 %v3919
    %5503 = vmatpush1.msra.mxu0 %v3918
    %5504 = vmatprep.subr.mxu0 %v3915
    %5505 = vmatpush1.msra.mxu0 %v3914
    %5506 = vmatprep.subr.mxu0 %v3911
    %5507 = vmatpush1.msra.mxu0 %v3910
    %5508 = vmatprep.subr.mxu0 %v3907
    %5509 = vmatpush1.msra.mxu0 %v3906
    %5510 = vmatprep.subr.mxu0 %v3903
    %5511 = vmatpush1.msra.mxu0 %v3902
    %5512 = vmatprep.subr.mxu0 %v3899
    %5513 = vmatpush1.msra.mxu0 %v3898
    %5514 = vmatprep.subr.mxu0 %v3895
    %5515 = vmatpush1.msra.mxu0 %v3894
    %5516 = vmatprep.subr.mxu0 %v3891
    %5517 = vmatpush1.msra.mxu0 %v3890
    %5518 = vmatprep.subr.mxu0 %v3887
    %5519 = vmatpush1.msra.mxu0 %v3886
    %5520 = vmatprep.subr.mxu0 %v3883
    %5521 = vmatpush1.msra.mxu0 %v3882
    %5522 = vmatprep.subr.mxu0 %v3879
    %5523 = vmatpush1.msra.mxu0 %v3878
    %5524 = vmatprep.subr.mxu0 %v3875
    %5525 = vmatpush1.msra.mxu0 %v3874
    %5526 = vmatprep.subr.mxu0 %v3871
    %5527 = vmatpush1.msra.mxu0 %v3870
    %5528 = vmatprep.subr.mxu0 %v3867
    %5529 = vmatpush1.msra.mxu0 %v3866
    %5530 = vmatprep.subr.mxu0 %v3863
    %5531 = vmatpush1.msra.mxu0 %v3862
    %5532 = vmatprep.subr.mxu0 %v3987
    %5533 = vmatpush2.msra.mxu0 %v3986
    %5534 = vmatprep.subr.mxu0 %v3983
    %5535 = vmatpush2.msra.mxu0 %v3982
    %5536 = vmatprep.subr.mxu0 %v3979
    %5537 = vmatpush2.msra.mxu0 %v3978
    %5538 = vmatprep.subr.mxu0 %v3975
    %5539 = vmatpush2.msra.mxu0 %v3974
    %5540 = vmatprep.subr.mxu0 %v3971
    %5541 = vmatpush2.msra.mxu0 %v3970
    %5542 = vmatprep.subr.mxu0 %v3967
    %5543 = vmatpush2.msra.mxu0 %v3966
    %5544 = vmatprep.subr.mxu0 %v3963
    %5545 = vmatpush2.msra.mxu0 %v3962
    %5546 = vmatprep.subr.mxu0 %v3959
    %5547 = vmatpush2.msra.mxu0 %v3958
    %5548 = vmatprep.subr.mxu0 %v3955
    %5549 = vmatpush2.msra.mxu0 %v3954
    %5550 = vmatprep.subr.mxu0 %v3951
    %5551 = vmatpush2.msra.mxu0 %v3950
    %5552 = vmatprep.subr.mxu0 %v3947
    %5553 = vmatpush2.msra.mxu0 %v3946
    %5554 = vmatprep.subr.mxu0 %v3943
    %5555 = vmatpush2.msra.mxu0 %v3942
    %5556 = vmatprep.subr.mxu0 %v3939
    %5557 = vmatpush2.msra.mxu0 %v3938
    %5558 = vmatprep.subr.mxu0 %v3935
    %5559 = vmatpush2.msra.mxu0 %v3934
    %5560 = vmatprep.subr.mxu0 %v3931
    %5561 = vmatpush2.msra.mxu0 %v3930
    %5562 = vmatprep.subr.mxu0 %v3927
    %5563 = vmatpush2.msra.mxu0 %v3926
    %5564 = vmatprep.mubr.f32.mxu0 %v3829
    %5565 = vmatmul.mubr.f32.gmra.mxu0 %v3828
    %v5566 = vpop.f32.mrf.mxu0
    %v5567 = vadd.f32 %v1566, %v5566
    %v5568 = vpop.f32.mrf.mxu0
    %v5569 = vadd.f32 %v1567, %v5568
    %5570 = vmatprep.mubr.f32.mxu0 %v3845
    %5571 = vmatmul.mubr.f32.gmra.mxu0 %v3844
    %v5572 = vpop.f32.mrf.mxu0
    %v5573 = vadd.f32 %v1570, %v5572
    %v5574 = vpop.f32.mrf.mxu0
    %v5575 = vadd.f32 %v1571, %v5574
    %5576 = vdwg.mxu0
    %5577 = vmatprep.subr.mxu0 %v4051
    %5578 = vmatpush1.msra.mxu0 %v4050
    %5579 = vmatprep.subr.mxu0 %v4047
    %5580 = vmatpush1.msra.mxu0 %v4046
    %5581 = vmatprep.subr.mxu0 %v4043
    %5582 = vmatpush1.msra.mxu0 %v4042
    %5583 = vmatprep.subr.mxu0 %v4039
    %5584 = vmatpush1.msra.mxu0 %v4038
    %5585 = vmatprep.subr.mxu0 %v4035
    %5586 = vmatpush1.msra.mxu0 %v4034
    %5587 = vmatprep.subr.mxu0 %v4031
    %5588 = vmatpush1.msra.mxu0 %v4030
    %5589 = vmatprep.subr.mxu0 %v4027
    %5590 = vmatpush1.msra.mxu0 %v4026
    %5591 = vmatprep.subr.mxu0 %v4023
    %5592 = vmatpush1.msra.mxu0 %v4022
    %5593 = vmatprep.subr.mxu0 %v4019
    %5594 = vmatpush1.msra.mxu0 %v4018
    %5595 = vmatprep.subr.mxu0 %v4015
    %5596 = vmatpush1.msra.mxu0 %v4014
    %5597 = vmatprep.subr.mxu0 %v4011
    %5598 = vmatpush1.msra.mxu0 %v4010
    %5599 = vmatprep.subr.mxu0 %v4007
    %5600 = vmatpush1.msra.mxu0 %v4006
    %5601 = vmatprep.subr.mxu0 %v4003
    %5602 = vmatpush1.msra.mxu0 %v4002
    %5603 = vmatprep.subr.mxu0 %v3999
    %5604 = vmatpush1.msra.mxu0 %v3998
    %5605 = vmatprep.subr.mxu0 %v3995
    %5606 = vmatpush1.msra.mxu0 %v3994
    %5607 = vmatprep.subr.mxu0 %v3991
    %5608 = vmatpush1.msra.mxu0 %v3990
    %5609 = vmatprep.subr.mxu0 %v4115
    %5610 = vmatpush2.msra.mxu0 %v4114
    %5611 = vmatprep.subr.mxu0 %v4111
    %5612 = vmatpush2.msra.mxu0 %v4110
    %5613 = vmatprep.subr.mxu0 %v4107
    %5614 = vmatpush2.msra.mxu0 %v4106
    %5615 = vmatprep.subr.mxu0 %v4103
    %5616 = vmatpush2.msra.mxu0 %v4102
    %5617 = vmatprep.subr.mxu0 %v4099
    %5618 = vmatpush2.msra.mxu0 %v4098
    %5619 = vmatprep.subr.mxu0 %v4095
    %5620 = vmatpush2.msra.mxu0 %v4094
    %5621 = vmatprep.subr.mxu0 %v4091
    %5622 = vmatpush2.msra.mxu0 %v4090
    %5623 = vmatprep.subr.mxu0 %v4087
    %5624 = vmatpush2.msra.mxu0 %v4086
    %5625 = vmatprep.subr.mxu0 %v4083
    %5626 = vmatpush2.msra.mxu0 %v4082
    %5627 = vmatprep.subr.mxu0 %v4079
    %5628 = vmatpush2.msra.mxu0 %v4078
    %5629 = vmatprep.subr.mxu0 %v4075
    %5630 = vmatpush2.msra.mxu0 %v4074
    %5631 = vmatprep.subr.mxu0 %v4071
    %5632 = vmatpush2.msra.mxu0 %v4070
    %5633 = vmatprep.subr.mxu0 %v4067
    %5634 = vmatpush2.msra.mxu0 %v4066
    %5635 = vmatprep.subr.mxu0 %v4063
    %5636 = vmatpush2.msra.mxu0 %v4062
    %5637 = vmatprep.subr.mxu0 %v4059
    %5638 = vmatpush2.msra.mxu0 %v4058
    %5639 = vmatprep.subr.mxu0 %v4055
    %5640 = vmatpush2.msra.mxu0 %v4054
    %5641 = vmatprep.mubr.f32.mxu0 %v3831
    %5642 = vmatmul.mubr.f32.gmra.mxu0 %v3830
    %v5643 = vpop.f32.mrf.mxu0
    %v5644 = vadd.f32 %v5567, %v5643
    %v5645 = vpop.f32.mrf.mxu0
    %v5646 = vadd.f32 %v5569, %v5645
    %5647 = vmatprep.mubr.f32.mxu0 %v3847
    %5648 = vmatmul.mubr.f32.gmra.mxu0 %v3846
    %v5649 = vpop.f32.mrf.mxu0
    %v5650 = vadd.f32 %v5573, %v5649
    %v5651 = vpop.f32.mrf.mxu0
    %v5652 = vadd.f32 %v5575, %v5651
    %5653 = vdwg.mxu0
    %5654 = vmatprep.subr.mxu0 %v4179
    %5655 = vmatpush1.msra.mxu0 %v4178
    %5656 = vmatprep.subr.mxu0 %v4175
    %5657 = vmatpush1.msra.mxu0 %v4174
    %5658 = vmatprep.subr.mxu0 %v4171
    %5659 = vmatpush1.msra.mxu0 %v4170
    %5660 = vmatprep.subr.mxu0 %v4167
    %5661 = vmatpush1.msra.mxu0 %v4166
    %5662 = vmatprep.subr.mxu0 %v4163
    %5663 = vmatpush1.msra.mxu0 %v4162
    %5664 = vmatprep.subr.mxu0 %v4159
    %5665 = vmatpush1.msra.mxu0 %v4158
    %5666 = vmatprep.subr.mxu0 %v4155
    %5667 = vmatpush1.msra.mxu0 %v4154
    %5668 = vmatprep.subr.mxu0 %v4151
    %5669 = vmatpush1.msra.mxu0 %v4150
    %5670 = vmatprep.subr.mxu0 %v4147
    %5671 = vmatpush1.msra.mxu0 %v4146
    %5672 = vmatprep.subr.mxu0 %v4143
    %5673 = vmatpush1.msra.mxu0 %v4142
    %5674 = vmatprep.subr.mxu0 %v4139
    %5675 = vmatpush1.msra.mxu0 %v4138
    %5676 = vmatprep.subr.mxu0 %v4135
    %5677 = vmatpush1.msra.mxu0 %v4134
    %5678 = vmatprep.subr.mxu0 %v4131
    %5679 = vmatpush1.msra.mxu0 %v4130
    %5680 = vmatprep.subr.mxu0 %v4127
    %5681 = vmatpush1.msra.mxu0 %v4126
    %5682 = vmatprep.subr.mxu0 %v4123
    %5683 = vmatpush1.msra.mxu0 %v4122
    %5684 = vmatprep.subr.mxu0 %v4119
    %5685 = vmatpush1.msra.mxu0 %v4118
    %5686 = vmatprep.subr.mxu0 %v4243
    %5687 = vmatpush2.msra.mxu0 %v4242
    %5688 = vmatprep.subr.mxu0 %v4239
    %5689 = vmatpush2.msra.mxu0 %v4238
    %5690 = vmatprep.subr.mxu0 %v4235
    %5691 = vmatpush2.msra.mxu0 %v4234
    %5692 = vmatprep.subr.mxu0 %v4231
    %5693 = vmatpush2.msra.mxu0 %v4230
    %5694 = vmatprep.subr.mxu0 %v4227
    %5695 = vmatpush2.msra.mxu0 %v4226
    %5696 = vmatprep.subr.mxu0 %v4223
    %5697 = vmatpush2.msra.mxu0 %v4222
    %5698 = vmatprep.subr.mxu0 %v4219
    %5699 = vmatpush2.msra.mxu0 %v4218
    %5700 = vmatprep.subr.mxu0 %v4215
    %5701 = vmatpush2.msra.mxu0 %v4214
    %5702 = vmatprep.subr.mxu0 %v4211
    %5703 = vmatpush2.msra.mxu0 %v4210
    %5704 = vmatprep.subr.mxu0 %v4207
    %5705 = vmatpush2.msra.mxu0 %v4206
    %5706 = vmatprep.subr.mxu0 %v4203
    %5707 = vmatpush2.msra.mxu0 %v4202
    %5708 = vmatprep.subr.mxu0 %v4199
    %5709 = vmatpush2.msra.mxu0 %v4198
    %5710 = vmatprep.subr.mxu0 %v4195
    %5711 = vmatpush2.msra.mxu0 %v4194
    %5712 = vmatprep.subr.mxu0 %v4191
    %5713 = vmatpush2.msra.mxu0 %v4190
    %5714 = vmatprep.subr.mxu0 %v4187
    %5715 = vmatpush2.msra.mxu0 %v4186
    %5716 = vmatprep.subr.mxu0 %v4183
    %5717 = vmatpush2.msra.mxu0 %v4182
    %5718 = vmatprep.mubr.f32.mxu0 %v3833
    %5719 = vmatmul.mubr.f32.gmra.mxu0 %v3832
    %v5720 = vpop.f32.mrf.mxu0
    %v5721 = vadd.f32 %v5644, %v5720
    %v5722 = vpop.f32.mrf.mxu0
    %v5723 = vadd.f32 %v5646, %v5722
    %5724 = vmatprep.mubr.f32.mxu0 %v3849
    %5725 = vmatmul.mubr.f32.gmra.mxu0 %v3848
    %v5726 = vpop.f32.mrf.mxu0
    %v5727 = vadd.f32 %v5650, %v5726
    %v5728 = vpop.f32.mrf.mxu0
    %v5729 = vadd.f32 %v5652, %v5728
    %5730 = vdwg.mxu0
    %5731 = vmatprep.subr.mxu0 %v4307
    %5732 = vmatpush1.msra.mxu0 %v4306
    %5733 = vmatprep.subr.mxu0 %v4303
    %5734 = vmatpush1.msra.mxu0 %v4302
    %5735 = vmatprep.subr.mxu0 %v4299
    %5736 = vmatpush1.msra.mxu0 %v4298
    %5737 = vmatprep.subr.mxu0 %v4295
    %5738 = vmatpush1.msra.mxu0 %v4294
    %5739 = vmatprep.subr.mxu0 %v4291
    %5740 = vmatpush1.msra.mxu0 %v4290
    %5741 = vmatprep.subr.mxu0 %v4287
    %5742 = vmatpush1.msra.mxu0 %v4286
    %5743 = vmatprep.subr.mxu0 %v4283
    %5744 = vmatpush1.msra.mxu0 %v4282
    %5745 = vmatprep.subr.mxu0 %v4279
    %5746 = vmatpush1.msra.mxu0 %v4278
    %5747 = vmatprep.subr.mxu0 %v4275
    %5748 = vmatpush1.msra.mxu0 %v4274
    %5749 = vmatprep.subr.mxu0 %v4271
    %5750 = vmatpush1.msra.mxu0 %v4270
    %5751 = vmatprep.subr.mxu0 %v4267
    %5752 = vmatpush1.msra.mxu0 %v4266
    %5753 = vmatprep.subr.mxu0 %v4263
    %5754 = vmatpush1.msra.mxu0 %v4262
    %5755 = vmatprep.subr.mxu0 %v4259
    %5756 = vmatpush1.msra.mxu0 %v4258
    %5757 = vmatprep.subr.mxu0 %v4255
    %5758 = vmatpush1.msra.mxu0 %v4254
    %5759 = vmatprep.subr.mxu0 %v4251
    %5760 = vmatpush1.msra.mxu0 %v4250
    %5761 = vmatprep.subr.mxu0 %v4247
    %5762 = vmatpush1.msra.mxu0 %v4246
    %5763 = vmatprep.subr.mxu0 %v4371
    %5764 = vmatpush2.msra.mxu0 %v4370
    %5765 = vmatprep.subr.mxu0 %v4367
    %5766 = vmatpush2.msra.mxu0 %v4366
    %5767 = vmatprep.subr.mxu0 %v4363
    %5768 = vmatpush2.msra.mxu0 %v4362
    %5769 = vmatprep.subr.mxu0 %v4359
    %5770 = vmatpush2.msra.mxu0 %v4358
    %5771 = vmatprep.subr.mxu0 %v4355
    %5772 = vmatpush2.msra.mxu0 %v4354
    %5773 = vmatprep.subr.mxu0 %v4351
    %5774 = vmatpush2.msra.mxu0 %v4350
    %5775 = vmatprep.subr.mxu0 %v4347
    %5776 = vmatpush2.msra.mxu0 %v4346
    %5777 = vmatprep.subr.mxu0 %v4343
    %5778 = vmatpush2.msra.mxu0 %v4342
    %5779 = vmatprep.subr.mxu0 %v4339
    %5780 = vmatpush2.msra.mxu0 %v4338
    %5781 = vmatprep.subr.mxu0 %v4335
    %5782 = vmatpush2.msra.mxu0 %v4334
    %5783 = vmatprep.subr.mxu0 %v4331
    %5784 = vmatpush2.msra.mxu0 %v4330
    %5785 = vmatprep.subr.mxu0 %v4327
    %5786 = vmatpush2.msra.mxu0 %v4326
    %5787 = vmatprep.subr.mxu0 %v4323
    %5788 = vmatpush2.msra.mxu0 %v4322
    %5789 = vmatprep.subr.mxu0 %v4319
    %5790 = vmatpush2.msra.mxu0 %v4318
    %5791 = vmatprep.subr.mxu0 %v4315
    %5792 = vmatpush2.msra.mxu0 %v4314
    %5793 = vmatprep.subr.mxu0 %v4311
    %5794 = vmatpush2.msra.mxu0 %v4310
    %5795 = vmatprep.mubr.f32.mxu0 %v3835
    %5796 = vmatmul.mubr.f32.gmra.mxu0 %v3834
    %v5797 = vpop.f32.mrf.mxu0
    %v5798 = vadd.f32 %v5721, %v5797
    %v5799 = vpop.f32.mrf.mxu0
    %v5800 = vadd.f32 %v5723, %v5799
    %5801 = vmatprep.mubr.f32.mxu0 %v3851
    %5802 = vmatmul.mubr.f32.gmra.mxu0 %v3850
    %v5803 = vpop.f32.mrf.mxu0
    %v5804 = vadd.f32 %v5727, %v5803
    %v5805 = vpop.f32.mrf.mxu0
    %v5806 = vadd.f32 %v5729, %v5805
    %5807 = vdwg.mxu0
    %5808 = vmatprep.subr.mxu0 %v4435
    %5809 = vmatpush1.msra.mxu0 %v4434
    %5810 = vmatprep.subr.mxu0 %v4431
    %5811 = vmatpush1.msra.mxu0 %v4430
    %5812 = vmatprep.subr.mxu0 %v4427
    %5813 = vmatpush1.msra.mxu0 %v4426
    %5814 = vmatprep.subr.mxu0 %v4423
    %5815 = vmatpush1.msra.mxu0 %v4422
    %5816 = vmatprep.subr.mxu0 %v4419
    %5817 = vmatpush1.msra.mxu0 %v4418
    %5818 = vmatprep.subr.mxu0 %v4415
    %5819 = vmatpush1.msra.mxu0 %v4414
    %5820 = vmatprep.subr.mxu0 %v4411
    %5821 = vmatpush1.msra.mxu0 %v4410
    %5822 = vmatprep.subr.mxu0 %v4407
    %5823 = vmatpush1.msra.mxu0 %v4406
    %5824 = vmatprep.subr.mxu0 %v4403
    %5825 = vmatpush1.msra.mxu0 %v4402
    %5826 = vmatprep.subr.mxu0 %v4399
    %5827 = vmatpush1.msra.mxu0 %v4398
    %5828 = vmatprep.subr.mxu0 %v4395
    %5829 = vmatpush1.msra.mxu0 %v4394
    %5830 = vmatprep.subr.mxu0 %v4391
    %5831 = vmatpush1.msra.mxu0 %v4390
    %5832 = vmatprep.subr.mxu0 %v4387
    %5833 = vmatpush1.msra.mxu0 %v4386
    %5834 = vmatprep.subr.mxu0 %v4383
    %5835 = vmatpush1.msra.mxu0 %v4382
    %5836 = vmatprep.subr.mxu0 %v4379
    %5837 = vmatpush1.msra.mxu0 %v4378
    %5838 = vmatprep.subr.mxu0 %v4375
    %5839 = vmatpush1.msra.mxu0 %v4374
    %5840 = vmatprep.subr.mxu0 %v4499
    %5841 = vmatpush2.msra.mxu0 %v4498
    %5842 = vmatprep.subr.mxu0 %v4495
    %5843 = vmatpush2.msra.mxu0 %v4494
    %5844 = vmatprep.subr.mxu0 %v4491
    %5845 = vmatpush2.msra.mxu0 %v4490
    %5846 = vmatprep.subr.mxu0 %v4487
    %5847 = vmatpush2.msra.mxu0 %v4486
    %5848 = vmatprep.subr.mxu0 %v4483
    %5849 = vmatpush2.msra.mxu0 %v4482
    %5850 = vmatprep.subr.mxu0 %v4479
    %5851 = vmatpush2.msra.mxu0 %v4478
    %5852 = vmatprep.subr.mxu0 %v4475
    %5853 = vmatpush2.msra.mxu0 %v4474
    %5854 = vmatprep.subr.mxu0 %v4471
    %5855 = vmatpush2.msra.mxu0 %v4470
    %5856 = vmatprep.subr.mxu0 %v4467
    %5857 = vmatpush2.msra.mxu0 %v4466
    %5858 = vmatprep.subr.mxu0 %v4463
    %5859 = vmatpush2.msra.mxu0 %v4462
    %5860 = vmatprep.subr.mxu0 %v4459
    %5861 = vmatpush2.msra.mxu0 %v4458
    %5862 = vmatprep.subr.mxu0 %v4455
    %5863 = vmatpush2.msra.mxu0 %v4454
    %5864 = vmatprep.subr.mxu0 %v4451
    %5865 = vmatpush2.msra.mxu0 %v4450
    %5866 = vmatprep.subr.mxu0 %v4447
    %5867 = vmatpush2.msra.mxu0 %v4446
    %5868 = vmatprep.subr.mxu0 %v4443
    %5869 = vmatpush2.msra.mxu0 %v4442
    %5870 = vmatprep.subr.mxu0 %v4439
    %5871 = vmatpush2.msra.mxu0 %v4438
    %5872 = vmatprep.mubr.f32.mxu0 %v3837
    %5873 = vmatmul.mubr.f32.gmra.mxu0 %v3836
    %v5874 = vpop.f32.mrf.mxu0
    %v5875 = vadd.f32 %v5798, %v5874
    %v5876 = vpop.f32.mrf.mxu0
    %v5877 = vadd.f32 %v5800, %v5876
    %5878 = vmatprep.mubr.f32.mxu0 %v3853
    %5879 = vmatmul.mubr.f32.gmra.mxu0 %v3852
    %v5880 = vpop.f32.mrf.mxu0
    %v5881 = vadd.f32 %v5804, %v5880
    %v5882 = vpop.f32.mrf.mxu0
    %v5883 = vadd.f32 %v5806, %v5882
    %5884 = vdwg.mxu0
    %5885 = vmatprep.subr.mxu0 %v4563
    %5886 = vmatpush1.msra.mxu0 %v4562
    %5887 = vmatprep.subr.mxu0 %v4559
    %5888 = vmatpush1.msra.mxu0 %v4558
    %5889 = vmatprep.subr.mxu0 %v4555
    %5890 = vmatpush1.msra.mxu0 %v4554
    %5891 = vmatprep.subr.mxu0 %v4551
    %5892 = vmatpush1.msra.mxu0 %v4550
    %5893 = vmatprep.subr.mxu0 %v4547
    %5894 = vmatpush1.msra.mxu0 %v4546
    %5895 = vmatprep.subr.mxu0 %v4543
    %5896 = vmatpush1.msra.mxu0 %v4542
    %5897 = vmatprep.subr.mxu0 %v4539
    %5898 = vmatpush1.msra.mxu0 %v4538
    %5899 = vmatprep.subr.mxu0 %v4535
    %5900 = vmatpush1.msra.mxu0 %v4534
    %5901 = vmatprep.subr.mxu0 %v4531
    %5902 = vmatpush1.msra.mxu0 %v4530
    %5903 = vmatprep.subr.mxu0 %v4527
    %5904 = vmatpush1.msra.mxu0 %v4526
    %5905 = vmatprep.subr.mxu0 %v4523
    %5906 = vmatpush1.msra.mxu0 %v4522
    %5907 = vmatprep.subr.mxu0 %v4519
    %5908 = vmatpush1.msra.mxu0 %v4518
    %5909 = vmatprep.subr.mxu0 %v4515
    %5910 = vmatpush1.msra.mxu0 %v4514
    %5911 = vmatprep.subr.mxu0 %v4511
    %5912 = vmatpush1.msra.mxu0 %v4510
    %5913 = vmatprep.subr.mxu0 %v4507
    %5914 = vmatpush1.msra.mxu0 %v4506
    %5915 = vmatprep.subr.mxu0 %v4503
    %5916 = vmatpush1.msra.mxu0 %v4502
    %5917 = vmatprep.subr.mxu0 %v4627
    %5918 = vmatpush2.msra.mxu0 %v4626
    %5919 = vmatprep.subr.mxu0 %v4623
    %5920 = vmatpush2.msra.mxu0 %v4622
    %5921 = vmatprep.subr.mxu0 %v4619
    %5922 = vmatpush2.msra.mxu0 %v4618
    %5923 = vmatprep.subr.mxu0 %v4615
    %5924 = vmatpush2.msra.mxu0 %v4614
    %5925 = vmatprep.subr.mxu0 %v4611
    %5926 = vmatpush2.msra.mxu0 %v4610
    %5927 = vmatprep.subr.mxu0 %v4607
    %5928 = vmatpush2.msra.mxu0 %v4606
    %5929 = vmatprep.subr.mxu0 %v4603
    %5930 = vmatpush2.msra.mxu0 %v4602
    %5931 = vmatprep.subr.mxu0 %v4599
    %5932 = vmatpush2.msra.mxu0 %v4598
    %5933 = vmatprep.subr.mxu0 %v4595
    %5934 = vmatpush2.msra.mxu0 %v4594
    %5935 = vmatprep.subr.mxu0 %v4591
    %5936 = vmatpush2.msra.mxu0 %v4590
    %5937 = vmatprep.subr.mxu0 %v4587
    %5938 = vmatpush2.msra.mxu0 %v4586
    %5939 = vmatprep.subr.mxu0 %v4583
    %5940 = vmatpush2.msra.mxu0 %v4582
    %5941 = vmatprep.subr.mxu0 %v4579
    %5942 = vmatpush2.msra.mxu0 %v4578
    %5943 = vmatprep.subr.mxu0 %v4575
    %5944 = vmatpush2.msra.mxu0 %v4574
    %5945 = vmatprep.subr.mxu0 %v4571
    %5946 = vmatpush2.msra.mxu0 %v4570
    %5947 = vmatprep.subr.mxu0 %v4567
    %5948 = vmatpush2.msra.mxu0 %v4566
    %5949 = vmatprep.mubr.f32.mxu0 %v3839
    %5950 = vmatmul.mubr.f32.gmra.mxu0 %v3838
    %v5951 = vpop.f32.mrf.mxu0
    %v5952 = vadd.f32 %v5875, %v5951
    %v5953 = vpop.f32.mrf.mxu0
    %v5954 = vadd.f32 %v5877, %v5953
    %5955 = vmatprep.mubr.f32.mxu0 %v3855
    %5956 = vmatmul.mubr.f32.gmra.mxu0 %v3854
    %v5957 = vpop.f32.mrf.mxu0
    %v5958 = vadd.f32 %v5881, %v5957
    %v5959 = vpop.f32.mrf.mxu0
    %v5960 = vadd.f32 %v5883, %v5959
    %5961 = vdwg.mxu0
    %5962 = vmatprep.subr.mxu0 %v4691
    %5963 = vmatpush1.msra.mxu0 %v4690
    %5964 = vmatprep.subr.mxu0 %v4687
    %5965 = vmatpush1.msra.mxu0 %v4686
    %5966 = vmatprep.subr.mxu0 %v4683
    %5967 = vmatpush1.msra.mxu0 %v4682
    %5968 = vmatprep.subr.mxu0 %v4679
    %5969 = vmatpush1.msra.mxu0 %v4678
    %5970 = vmatprep.subr.mxu0 %v4675
    %5971 = vmatpush1.msra.mxu0 %v4674
    %5972 = vmatprep.subr.mxu0 %v4671
    %5973 = vmatpush1.msra.mxu0 %v4670
    %5974 = vmatprep.subr.mxu0 %v4667
    %5975 = vmatpush1.msra.mxu0 %v4666
    %5976 = vmatprep.subr.mxu0 %v4663
    %5977 = vmatpush1.msra.mxu0 %v4662
    %5978 = vmatprep.subr.mxu0 %v4659
    %5979 = vmatpush1.msra.mxu0 %v4658
    %5980 = vmatprep.subr.mxu0 %v4655
    %5981 = vmatpush1.msra.mxu0 %v4654
    %5982 = vmatprep.subr.mxu0 %v4651
    %5983 = vmatpush1.msra.mxu0 %v4650
    %5984 = vmatprep.subr.mxu0 %v4647
    %5985 = vmatpush1.msra.mxu0 %v4646
    %5986 = vmatprep.subr.mxu0 %v4643
    %5987 = vmatpush1.msra.mxu0 %v4642
    %5988 = vmatprep.subr.mxu0 %v4639
    %5989 = vmatpush1.msra.mxu0 %v4638
    %5990 = vmatprep.subr.mxu0 %v4635
    %5991 = vmatpush1.msra.mxu0 %v4634
    %5992 = vmatprep.subr.mxu0 %v4631
    %5993 = vmatpush1.msra.mxu0 %v4630
    %5994 = vmatprep.subr.mxu0 %v4755
    %5995 = vmatpush2.msra.mxu0 %v4754
    %5996 = vmatprep.subr.mxu0 %v4751
    %5997 = vmatpush2.msra.mxu0 %v4750
    %5998 = vmatprep.subr.mxu0 %v4747
    %5999 = vmatpush2.msra.mxu0 %v4746
    %6000 = vmatprep.subr.mxu0 %v4743
    %6001 = vmatpush2.msra.mxu0 %v4742
    %6002 = vmatprep.subr.mxu0 %v4739
    %6003 = vmatpush2.msra.mxu0 %v4738
    %6004 = vmatprep.subr.mxu0 %v4735
    %6005 = vmatpush2.msra.mxu0 %v4734
    %6006 = vmatprep.subr.mxu0 %v4731
    %6007 = vmatpush2.msra.mxu0 %v4730
    %6008 = vmatprep.subr.mxu0 %v4727
    %6009 = vmatpush2.msra.mxu0 %v4726
    %6010 = vmatprep.subr.mxu0 %v4723
    %6011 = vmatpush2.msra.mxu0 %v4722
    %6012 = vmatprep.subr.mxu0 %v4719
    %6013 = vmatpush2.msra.mxu0 %v4718
    %6014 = vmatprep.subr.mxu0 %v4715
    %6015 = vmatpush2.msra.mxu0 %v4714
    %6016 = vmatprep.subr.mxu0 %v4711
    %6017 = vmatpush2.msra.mxu0 %v4710
    %6018 = vmatprep.subr.mxu0 %v4707
    %6019 = vmatpush2.msra.mxu0 %v4706
    %6020 = vmatprep.subr.mxu0 %v4703
    %6021 = vmatpush2.msra.mxu0 %v4702
    %6022 = vmatprep.subr.mxu0 %v4699
    %6023 = vmatpush2.msra.mxu0 %v4698
    %6024 = vmatprep.subr.mxu0 %v4695
    %6025 = vmatpush2.msra.mxu0 %v4694
    %6026 = vmatprep.mubr.f32.mxu0 %v3841
    %6027 = vmatmul.mubr.f32.gmra.mxu0 %v3840
    %v6028 = vpop.f32.mrf.mxu0
    %v6029 = vadd.f32 %v5952, %v6028
    %v6030 = vpop.f32.mrf.mxu0
    %v6031 = vadd.f32 %v5954, %v6030
    %6032 = vmatprep.mubr.f32.mxu0 %v3857
    %6033 = vmatmul.mubr.f32.gmra.mxu0 %v3856
    %v6034 = vpop.f32.mrf.mxu0
    %v6035 = vadd.f32 %v5958, %v6034
    %v6036 = vpop.f32.mrf.mxu0
    %v6037 = vadd.f32 %v5960, %v6036
    %6038 = vdwg.mxu0
    %6039 = vmatprep.subr.mxu0 %v4819
    %6040 = vmatpush1.msra.mxu0 %v4818
    %6041 = vmatprep.subr.mxu0 %v4815
    %6042 = vmatpush1.msra.mxu0 %v4814
    %6043 = vmatprep.subr.mxu0 %v4811
    %6044 = vmatpush1.msra.mxu0 %v4810
    %6045 = vmatprep.subr.mxu0 %v4807
    %6046 = vmatpush1.msra.mxu0 %v4806
    %6047 = vmatprep.subr.mxu0 %v4803
    %6048 = vmatpush1.msra.mxu0 %v4802
    %6049 = vmatprep.subr.mxu0 %v4799
    %6050 = vmatpush1.msra.mxu0 %v4798
    %6051 = vmatprep.subr.mxu0 %v4795
    %6052 = vmatpush1.msra.mxu0 %v4794
    %6053 = vmatprep.subr.mxu0 %v4791
    %6054 = vmatpush1.msra.mxu0 %v4790
    %6055 = vmatprep.subr.mxu0 %v4787
    %6056 = vmatpush1.msra.mxu0 %v4786
    %6057 = vmatprep.subr.mxu0 %v4783
    %6058 = vmatpush1.msra.mxu0 %v4782
    %6059 = vmatprep.subr.mxu0 %v4779
    %6060 = vmatpush1.msra.mxu0 %v4778
    %6061 = vmatprep.subr.mxu0 %v4775
    %6062 = vmatpush1.msra.mxu0 %v4774
    %6063 = vmatprep.subr.mxu0 %v4771
    %6064 = vmatpush1.msra.mxu0 %v4770
    %6065 = vmatprep.subr.mxu0 %v4767
    %6066 = vmatpush1.msra.mxu0 %v4766
    %6067 = vmatprep.subr.mxu0 %v4763
    %6068 = vmatpush1.msra.mxu0 %v4762
    %6069 = vmatprep.subr.mxu0 %v4759
    %6070 = vmatpush1.msra.mxu0 %v4758
    %6071 = vmatprep.subr.mxu0 %v4883
    %6072 = vmatpush2.msra.mxu0 %v4882
    %6073 = vmatprep.subr.mxu0 %v4879
    %6074 = vmatpush2.msra.mxu0 %v4878
    %6075 = vmatprep.subr.mxu0 %v4875
    %6076 = vmatpush2.msra.mxu0 %v4874
    %6077 = vmatprep.subr.mxu0 %v4871
    %6078 = vmatpush2.msra.mxu0 %v4870
    %6079 = vmatprep.subr.mxu0 %v4867
    %6080 = vmatpush2.msra.mxu0 %v4866
    %6081 = vmatprep.subr.mxu0 %v4863
    %6082 = vmatpush2.msra.mxu0 %v4862
    %6083 = vmatprep.subr.mxu0 %v4859
    %6084 = vmatpush2.msra.mxu0 %v4858
    %6085 = vmatprep.subr.mxu0 %v4855
    %6086 = vmatpush2.msra.mxu0 %v4854
    %6087 = vmatprep.subr.mxu0 %v4851
    %6088 = vmatpush2.msra.mxu0 %v4850
    %6089 = vmatprep.subr.mxu0 %v4847
    %6090 = vmatpush2.msra.mxu0 %v4846
    %6091 = vmatprep.subr.mxu0 %v4843
    %6092 = vmatpush2.msra.mxu0 %v4842
    %6093 = vmatprep.subr.mxu0 %v4839
    %6094 = vmatpush2.msra.mxu0 %v4838
    %6095 = vmatprep.subr.mxu0 %v4835
    %6096 = vmatpush2.msra.mxu0 %v4834
    %6097 = vmatprep.subr.mxu0 %v4831
    %6098 = vmatpush2.msra.mxu0 %v4830
    %6099 = vmatprep.subr.mxu0 %v4827
    %6100 = vmatpush2.msra.mxu0 %v4826
    %6101 = vmatprep.subr.mxu0 %v4823
    %6102 = vmatpush2.msra.mxu0 %v4822
    %6103 = vmatprep.mubr.f32.mxu0 %v3843
    %6104 = vmatmul.mubr.f32.gmra.mxu0 %v3842
    %v6105 = vpop.f32.mrf.mxu0
    %v6106 = vadd.f32 %v6029, %v6105
    %v6107 = vpop.f32.mrf.mxu0
    %v6108 = vadd.f32 %v6031, %v6107
    %6109 = vmatprep.mubr.f32.mxu0 %v3859
    %6110 = vmatmul.mubr.f32.gmra.mxu0 %v3858
    %v6111 = vpop.f32.mrf.mxu0
    %v6112 = vadd.f32 %v6035, %v6111
    %v6113 = vpop.f32.mrf.mxu0
    %v6114 = vadd.f32 %v6037, %v6113
    %6115 = vdwg.mxu0
    %v6116 = vadd.f32 %v5490, %v5492
    %v6117 = vadd.f32 %v6116, %v6106
    %v6118 = vadd.f32 %v6117, %v6108
    %6119 = vadd.xlane.f32.xlu0 %v6118
    %v6120 = vpop.xlane.xlu0 %6119
    %v6121 = vadd.f32 %v5496, %v5498
    %v6122 = vadd.f32 %v6121, %v6112
    %v6123 = vadd.f32 %v6122, %v6114
    %6124 = vadd.xlane.f32.xlu0 %v6123
    %v6125 = vpop.xlane.xlu0 %6124
    %v6126 = vmul.f32 %v6120, %v1529
    %v6127 = vmul.f32 %v6125, %v1529
    %v6128 = vsub.f32 %v5490, %v6126
    %v6129 = vsub.f32 %v5492, %v6126
    %v6130 = vsub.f32 %v6106, %v6126
    %v6131 = vsub.f32 %v6108, %v6126
    %v6132 = vsub.f32 %v5496, %v6127
    %v6133 = vsub.f32 %v5498, %v6127
    %v6134 = vsub.f32 %v6112, %v6127
    %v6135 = vsub.f32 %v6114, %v6127
    %v6136 = vmul.f32 %v6128, %v6128
    %v6137 = vmul.f32 %v6129, %v6129
    %v6138 = vmul.f32 %v6130, %v6130
    %v6139 = vmul.f32 %v6131, %v6131
    %v6140 = vmul.f32 %v6132, %v6132
    %v6141 = vmul.f32 %v6133, %v6133
    %v6142 = vmul.f32 %v6134, %v6134
    %v6143 = vmul.f32 %v6135, %v6135
    %v6144 = vadd.f32 %v6136, %v6137
    %v6145 = vadd.f32 %v6144, %v6138
    %v6146 = vadd.f32 %v6145, %v6139
    %6147 = vadd.xlane.f32.xlu0 %v6146
    %v6148 = vpop.xlane.xlu0 %6147
    %v6149 = vadd.f32 %v6140, %v6141
    %v6150 = vadd.f32 %v6149, %v6142
    %v6151 = vadd.f32 %v6150, %v6143
    %6152 = vadd.xlane.f32.xlu0 %v6151
    %v6153 = vpop.xlane.xlu0 %6152
    %v6154 = vmul.f32 %v6148, %v1529
    %v6155 = vmul.f32 %v6153, %v1529
    %v6156 = vadd.f32 %v6154, 1e-05
    %v6157 = vadd.f32 %v6155, 1e-05
    %v6158 = vrsqrt.pop %v6156
    %v6159 = vrsqrt.pop %v6157
    %v6160 = vmul.f32 %v6128, %v6158
    %v6161 = vmul.f32 %v6129, %v6158
    %v6162 = vmul.f32 %v6130, %v6158
    %v6163 = vmul.f32 %v6131, %v6158
    %v6164 = vmul.f32 %v6132, %v6159
    %v6165 = vmul.f32 %v6133, %v6159
    %v6166 = vmul.f32 %v6134, %v6159
    %v6167 = vmul.f32 %v6135, %v6159
    %6168 = vst [vmem:[#allocation10] sm:$0xff] %v6160
    %6169 = vst [vmem:[#allocation10 + $0x8] sm:$0xff] %v6161
    %6170 = vst [vmem:[#allocation10 + $0x10] sm:$0xff] %v6162
    %6171 = vst [vmem:[#allocation10 + $0x18] sm:$0xff] %v6163
    %6172 = vst [vmem:[#allocation10 + $0x20] sm:$0xff] %v6164
    %6173 = vst [vmem:[#allocation10 + $0x28] sm:$0xff] %v6165
    %6174 = vst [vmem:[#allocation10 + $0x30] sm:$0xff] %v6166
    %6175 = vst [vmem:[#allocation10 + $0x38] sm:$0xff] %v6167
    // Predicated region
    $region46: #{_encoder_forward_impl.1} parent=1 // pred_check
      _
    $region47: #{_encoder_forward_impl.1} parent=1 // pred_check_branch
      %6177 = sbr.rel (0) target = $region49
    $region48: #{_encoder_forward_impl.1} parent=1 // pred_region
      %s6179 = ssub.s32 1024, 1024
      %6180 = vsyncadd [#allocation4], %s6179
      %s6181 = sshll.u32 [#allocation10], 4
      %s6182 = int_to_ptr.vmem [resolvable:$true] %s6181
      %6187 = dma.vmem_to_hbm [thread:$0]  %s6182, 1024, %s7, [#allocation4], 512, 512, 32
    $region49: #{_encoder_forward_impl.1} parent=1 // pred_fallthru
      _
    // Predicated region
    $region50: #{_encoder_forward_impl.1} parent=1 // pred_check
      _
    $region51: #{_encoder_forward_impl.1} parent=1 // pred_check_branch
      %6189 = sbr.rel (0) target = $region53
    $region52: #{_encoder_forward_impl.1} parent=1 // pred_region
      %6190 = dma.done [#allocation4], 1024
    $region53: #{_encoder_forward_impl.1} parent=1 // pred_fallthru
      _
    %6191 = vsyncpa [#allocation3], 1
    %6192 = vsyncpa [#allocation6], 1
    %6193 = vsyncpa [#allocation9], 1
    %6194 = vsyncpa [#allocation4], 1

</llo_original>
